<compile_context>
chip_gen: v7x
topology: tpu7x:2x2x1
jax: 0.10.0
libtpu: 0.0.40
codegen_flags: <defaults>
</compile_context>

<pallas_src>
import functools

import jax
import jax.numpy as jnp
from jax.experimental import pallas as pl
from jax.experimental.pallas import tpu as pltpu


# ------------------------------ fused kernel --------------------------------

def _encode_layer_kernel(q_ref, k_ref, v_ref, seg_ref, segt_ref,
                         w_ref, b_ref, o_ref, *, num_kv, channels, eps):
    f32 = jnp.float32
    bf16 = jnp.bfloat16
    C = channels
    N = num_kv

    def mm(a, b):
        # bf16 MXU operands, f32 accumulation.
        return jnp.dot(a.astype(bf16), b.astype(bf16), preferred_element_type=f32)

    # Stacked weights (bf16, attention scale already folded into wq):
    # rows = [wq | wk | wv | wo | w1 | w2], each (C, C).  Static, tile-aligned slices.
    wq = w_ref[0 * C:1 * C, :]
    wk = w_ref[1 * C:2 * C, :]
    wv = w_ref[2 * C:3 * C, :]
    wo = w_ref[3 * C:4 * C, :]
    w1 = w_ref[4 * C:5 * C, :]
    w2 = w_ref[5 * C:6 * C, :]

    # Bias / LayerNorm slab (f32), one coalesced load:
    # rows = [bq*scale, bv, bo, ln1_g, ln1_b, b1, b2, ln2_g, ln2_b, <pad>...]
    b = b_ref[...]
    bq, bv, bo = b[0:1], b[1:2], b[2:3]
    g1, beta1 = b[3:4], b[4:5]
    b1, b2 = b[5:6], b[6:7]
    g2, beta2 = b[7:8], b[8:9]

    q_in = q_ref[...].astype(f32)                               # (TB, C)
    TB = q_in.shape[0]

    # ---- projections (batched over the N key/value agents) ----
    qh = mm(q_in, wq) + bq                                      # (TB, C), scale folded
    k_all = k_ref[...].reshape(N * TB, C)                       # bf16, layout-free reshape
    v_all = v_ref[...].reshape(N * TB, C)
    kh_all = mm(k_all, wk)                                      # (N*TB, C)  (bk cancels in softmax)
    vh_all = mm(v_all, wv)                                      # (N*TB, C)  (bv added after prob sum)

    # ---- per-head scores via block-diagonal segment matmul, batched over n ----
    prod = kh_all.reshape(N, TB, C) * qh[None]                  # (N, TB, C)
    s = jnp.dot(prod.reshape(N * TB, C).astype(bf16), seg_ref[...],
                preferred_element_type=f32)                     # (N*TB, nh)
    nh = s.shape[-1]
    s = s.reshape(N, TB, nh)

    # ---- softmax over the N keys (query length is 1) ----
    m = s.max(axis=0)                                           # (TB, nh)
    e = jnp.exp(s - m[None])                                    # (N, TB, nh)
    denom = e.sum(axis=0)                                       # (TB, nh)
    inv = pl.reciprocal(denom, approx=True)
    p = e * inv[None]                                           # (N, TB, nh)

    # ---- probability expansion + weighted sum of values ----
    p_wide = jnp.dot(p.reshape(N * TB, nh).astype(bf16), segt_ref[...],
                     preferred_element_type=f32)                # (N*TB, C)
    ctx = (p_wide.reshape(N, TB, C) * vh_all.reshape(N, TB, C)).sum(axis=0) + bv

    attn_out = mm(ctx, wo) + bo                                 # (TB, C)

    # ---- residual + LayerNorm1 ----
    y = q_in + attn_out
    mu = jnp.mean(y, axis=-1, keepdims=True)
    var = jnp.mean((y - mu) ** 2, axis=-1, keepdims=True)
    out1 = (y - mu) * jax.lax.rsqrt(var + eps) * g1 + beta1

    # ---- FFN: linear2(relu(linear1(out1))) ----
    h = jnp.maximum(mm(out1, w1) + b1, 0.0)
    ffn = mm(h, w2) + b2

    # ---- residual + LayerNorm2 ----
    y2 = out1 + ffn
    mu2 = jnp.mean(y2, axis=-1, keepdims=True)
    var2 = jnp.mean((y2 - mu2) ** 2, axis=-1, keepdims=True)
    out2 = (y2 - mu2) * jax.lax.rsqrt(var2 + eps) * g2 + beta2

    o_ref[...] = out2.astype(o_ref.dtype)


# ------------------------------ wrapper --------------------------------------

def _num_tensorcores():
    """Per-chip TensorCore count (1 on v5e/v6e, 2 on v7x and v4/v5p megacore)."""
    try:
        info = pltpu.get_tpu_info()
        for attr in ("num_cores_per_chip", "cores_per_chip",
                     "tensorcore_count", "num_tensorcores"):
            n = getattr(info, attr, None)
            if isinstance(n, int) and n > 0:
                return max(1, min(n, 2))
    except Exception:
        pass
    try:
        kind = jax.devices()[0].device_kind.lower()
        if ("v7" in kind) or ("v4" in kind) or ("v5p" in kind):
            return 2
    except Exception:
        pass
    return 1


def _pick_row_tile(b, n_cores):
    # Single grid step on single-TC parts; even split across cores otherwise.
    if n_cores > 1 and b % n_cores == 0 and (b // n_cores) % 8 == 0:
        return b // n_cores
    return b


def encode_layer_forward(params, q, k, v, *, n_head=8, eps=1e-5):
    """q: (1, B, C), k/v: (N, B, C)  ->  (1, B, C)."""
    lq, B, C = q.shape
    assert lq == 1, "EncodeLayer query sequence length is 1"
    assert C % n_head == 0
    N = k.shape[0]
    dh = C // n_head
    scale = dh ** -0.5

    TB = _pick_row_tile(B, _num_tensorcores())
    grid = (B // TB,)

    bf16 = jnp.bfloat16

    # One stacked weight slab (bf16, scale folded into wq).
    w_stack = jnp.concatenate(
        [params['wq'] * scale, params['wk'], params['wv'],
         params['wo'], params['w1'], params['w2']], axis=0).astype(bf16)   # (6C, C)

    # One stacked bias / LayerNorm slab (f32), padded to 16 rows.
    zrow = jnp.zeros((C,), jnp.float32)
    b_stack = jnp.stack(
        [params['bq'] * scale, params['bv'], params['bo'],
         params['ln1_g'], params['ln1_b'],
         params['b1'], params['b2'],
         params['ln2_g'], params['ln2_b'],
         zrow, zrow, zrow, zrow, zrow, zrow, zrow], axis=0)                # (16, C)

    # Block-diagonal head-segment matrix: seg[c, h] = 1 iff channel c is in head h.
    seg = (jnp.arange(C)[:, None] // dh ==
           jnp.arange(n_head)[None, :]).astype(bf16)                      # (C, nh)
    segt = seg.T                                                          # (nh, C)

    q2 = q.reshape(B, C)
    k_b = k.astype(bf16)
    v_b = v.astype(bf16)

    row = pl.BlockSpec((TB, C), lambda i: (i, 0))
    kv_spec = pl.BlockSpec((N, TB, C), lambda i: (0, i, 0))

    def full(shape):
        nd = len(shape)
        return pl.BlockSpec(shape, lambda i: (0,) * nd)

    out = pl.pallas_call(
        functools.partial(_encode_layer_kernel, num_kv=N, channels=C, eps=eps),
        out_shape=jax.ShapeDtypeStruct((B, C), q.dtype),
        grid=grid,
        in_specs=[
            row,                       # q
            kv_spec,                   # k (bf16)
            kv_spec,                   # v (bf16)
            full((C, n_head)),         # seg
            full((n_head, C)),         # seg^T
            full((6 * C, C)),          # stacked weights (bf16)
            full((16, C)),             # bias / LayerNorm slab (f32)
        ],
        out_specs=pl.BlockSpec((TB, C), lambda i: (i, 0)),
        compiler_params=pltpu.CompilerParams(
            dimension_semantics=("parallel",)),
    )(q2, k_b, v_b, seg, segt, w_stack, b_stack)
    return out.reshape(1, B, C)


# ------------------------- pure-JAX reference --------------------------------

def _ln(x, g, b, eps=1e-5):
    mu = jnp.mean(x, axis=-1, keepdims=True)
    var = jnp.mean((x - mu) ** 2, axis=-1, keepdims=True)
    return (x - mu) * jax.lax.rsqrt(var + eps) * g + b


def encode_layer_reference(params, q, k, v, *, n_head=8):
    lq, B, C = q.shape
    N = k.shape[0]
    dh = C // n_head
    qh = (q.reshape(B, C) @ params['wq'] + params['bq']).reshape(B, n_head, dh)
    kh = (k @ params['wk'] + params['bk']).reshape(N, B, n_head, dh)
    vh = (v @ params['wv'] + params['bv']).reshape(N, B, n_head, dh)
    s = jnp.einsum('bhd,nbhd->bhn', qh, kh) * (dh ** -0.5)
    p = jax.nn.softmax(s, axis=-1)
    ctx = jnp.einsum('bhn,nbhd->bhd', p, vh).reshape(B, C)
    attn = ctx @ params['wo'] + params['bo']
    out1 = _ln(q.reshape(B, C) + attn, params['ln1_g'], params['ln1_b'])
    h = jnp.maximum(out1 @ params['w1'] + params['b1'], 0.0)
    ffn = h @ params['w2'] + params['b2']
    out2 = _ln(out1 + ffn, params['ln2_g'], params['ln2_b'])
    return out2.reshape(1, B, C)


# ------------------------------ params ---------------------------------------

def init_params(key, C):
    ks = jax.random.split(key, 12)

    def dense(k, fi, fo):
        return 0.05 * jax.random.normal(k, (fi, fo), jnp.float32)

    def bias(k, n):
        return 0.01 * jax.random.normal(k, (n,), jnp.float32)

    return dict(
        wq=dense(ks[0], C, C), bq=bias(ks[6], C),
        wk=dense(ks[1], C, C), bk=bias(ks[7], C),
        wv=dense(ks[2], C, C), bv=bias(ks[8], C),
        wo=dense(ks[3], C, C), bo=bias(ks[9], C),
        ln1_g=jnp.ones((C,), jnp.float32), ln1_b=jnp.zeros((C,), jnp.float32),
        w1=dense(ks[4], C, C), b1=bias(ks[10], C),
        w2=dense(ks[5], C, C), b2=bias(ks[11], C),
        ln2_g=jnp.ones((C,), jnp.float32), ln2_b=jnp.zeros((C,), jnp.float32),
    )


# -------------------------------- main ----------------------------------------

if __name__ == "__main__":
    C = 128            # channels (divisible by default n_head=8 -> head_dim 16)
    n_head = 8
    H = W = 16
    B = H * W          # attention "batch" = spatial positions = 256
    N = 4              # number of key/value agents (source sequence length)

    key = jax.random.PRNGKey(0)
    kq, kk, kv_, kp = jax.random.split(key, 4)
    params = init_params(kp, C)

    q = jax.random.normal(kq, (1, B, C), jnp.float32)
    k = jax.random.normal(kk, (N, B, C), jnp.float32)
    v = jax.random.normal(kv_, (N, B, C), jnp.float32)

    out = encode_layer_forward(params, q, k, v, n_head=n_head)
    out = jax.block_until_ready(out)

    assert out.shape == (1, B, C)
    assert bool(jnp.all(jnp.isfinite(out)))

    ref = encode_layer_reference(params, q, k, v, n_head=n_head)
    err = float(jnp.max(jnp.abs(out - ref)))
    assert err < 5e-2, f"max abs error vs reference too large: {err}"

    print("KERNEL_OK")
</pallas_src>

<mosaic_0001>
module attributes {stable_mosaic.version = 11 : i64} {
  func.func @_encode_layer_kernel(%arg0: i32, %arg1: memref<256x128xf32, #tpu.memory_space<vmem>>, %arg2: memref<4x256x128xbf16, #tpu.memory_space<vmem>>, %arg3: memref<4x256x128xbf16, #tpu.memory_space<vmem>>, %arg4: memref<128x8xbf16, #tpu.memory_space<vmem>>, %arg5: memref<8x128xbf16, #tpu.memory_space<vmem>>, %arg6: memref<768x128xbf16, #tpu.memory_space<vmem>>, %arg7: memref<16x128xf32, #tpu.memory_space<vmem>>, %arg8: memref<256x128xf32, #tpu.memory_space<vmem>>) attributes {dimension_semantics = [#tpu.dimension_semantics<parallel>], iteration_bounds = array<i64: 1>, scalar_prefetch = 0 : i64, scratch_operands = 0 : i64, tpu.core_type = #tpu.core_type<tc>, window_params = [{transform_indices = @transform_0, window_bounds = array<i64: 256, 128>}, {transform_indices = @transform_1, window_bounds = array<i64: 4, 256, 128>}, {transform_indices = @transform_2, window_bounds = array<i64: 4, 256, 128>}, {pipeline_mode = #tpu.pipeline_mode<synchronous>, transform_indices = @transform_3, window_bounds = array<i64: 128, 8>}, {pipeline_mode = #tpu.pipeline_mode<synchronous>, transform_indices = @transform_4, window_bounds = array<i64: 8, 128>}, {pipeline_mode = #tpu.pipeline_mode<synchronous>, transform_indices = @transform_5, window_bounds = array<i64: 768, 128>}, {pipeline_mode = #tpu.pipeline_mode<synchronous>, transform_indices = @transform_6, window_bounds = array<i64: 16, 128>}, {transform_indices = @transform_7, window_bounds = array<i64: 256, 128>}]} {
    %c0 = arith.constant 0 : index
    %c0_0 = arith.constant 0 : index
    %0 = vector.load %arg6[%c0, %c0_0] : memref<768x128xbf16, #tpu.memory_space<vmem>>, vector<128x128xbf16>
    %c128 = arith.constant 128 : index
    %c0_1 = arith.constant 0 : index
    %1 = vector.load %arg6[%c128, %c0_1] : memref<768x128xbf16, #tpu.memory_space<vmem>>, vector<128x128xbf16>
    %c256 = arith.constant 256 : index
    %c0_2 = arith.constant 0 : index
    %2 = vector.load %arg6[%c256, %c0_2] : memref<768x128xbf16, #tpu.memory_space<vmem>>, vector<128x128xbf16>
    %c384 = arith.constant 384 : index
    %c0_3 = arith.constant 0 : index
    %3 = vector.load %arg6[%c384, %c0_3] : memref<768x128xbf16, #tpu.memory_space<vmem>>, vector<128x128xbf16>
    %c512 = arith.constant 512 : index
    %c0_4 = arith.constant 0 : index
    %4 = vector.load %arg6[%c512, %c0_4] : memref<768x128xbf16, #tpu.memory_space<vmem>>, vector<128x128xbf16>
    %c640 = arith.constant 640 : index
    %c0_5 = arith.constant 0 : index
    %5 = vector.load %arg6[%c640, %c0_5] : memref<768x128xbf16, #tpu.memory_space<vmem>>, vector<128x128xbf16>
    %c0_6 = arith.constant 0 : index
    %c0_7 = arith.constant 0 : index
    %6 = vector.load %arg7[%c0_6, %c0_7] : memref<16x128xf32, #tpu.memory_space<vmem>>, vector<16x128xf32>
    %7 = vector.extract_strided_slice %6 {offsets = [0, 0], sizes = [1, 128], strides = [1, 1]} : vector<16x128xf32> to vector<1x128xf32>
    %8 = vector.extract_strided_slice %6 {offsets = [1, 0], sizes = [1, 128], strides = [1, 1]} : vector<16x128xf32> to vector<1x128xf32>
    %9 = vector.extract_strided_slice %6 {offsets = [2, 0], sizes = [1, 128], strides = [1, 1]} : vector<16x128xf32> to vector<1x128xf32>
    %10 = vector.extract_strided_slice %6 {offsets = [3, 0], sizes = [1, 128], strides = [1, 1]} : vector<16x128xf32> to vector<1x128xf32>
    %11 = vector.extract_strided_slice %6 {offsets = [4, 0], sizes = [1, 128], strides = [1, 1]} : vector<16x128xf32> to vector<1x128xf32>
    %12 = vector.extract_strided_slice %6 {offsets = [5, 0], sizes = [1, 128], strides = [1, 1]} : vector<16x128xf32> to vector<1x128xf32>
    %13 = vector.extract_strided_slice %6 {offsets = [6, 0], sizes = [1, 128], strides = [1, 1]} : vector<16x128xf32> to vector<1x128xf32>
    %14 = vector.extract_strided_slice %6 {offsets = [7, 0], sizes = [1, 128], strides = [1, 1]} : vector<16x128xf32> to vector<1x128xf32>
    %15 = vector.extract_strided_slice %6 {offsets = [8, 0], sizes = [1, 128], strides = [1, 1]} : vector<16x128xf32> to vector<1x128xf32>
    %c0_8 = arith.constant 0 : index
    %c0_9 = arith.constant 0 : index
    %16 = vector.load %arg1[%c0_8, %c0_9] : memref<256x128xf32, #tpu.memory_space<vmem>>, vector<256x128xf32>
    %17 = arith.truncf %16 : vector<256x128xf32> to vector<256x128xbf16>
    %cst = arith.constant dense<0.000000e+00> : vector<256x128xf32>
    %18 = tpu.matmul %17, %0, %cst {dimension_numbers = #tpu.dot_dimension_numbers<[1], [0], [0], [1], [0, 0, 1, 1], [], []>} : vector<256x128xbf16>, vector<128x128xbf16>, vector<256x128xf32> -> vector<256x128xf32>
    %19 = vector.broadcast %7 : vector<1x128xf32> to vector<256x128xf32>
    %20 = arith.addf %18, %19 : vector<256x128xf32>
    %c0_10 = arith.constant 0 : index
    %c0_11 = arith.constant 0 : index
    %c0_12 = arith.constant 0 : index
    %21 = vector.load %arg2[%c0_10, %c0_11, %c0_12] : memref<4x256x128xbf16, #tpu.memory_space<vmem>>, vector<4x256x128xbf16>
    %22 = vector.shape_cast %21 : vector<4x256x128xbf16> to vector<1024x128xbf16>
    %c0_13 = arith.constant 0 : index
    %c0_14 = arith.constant 0 : index
    %c0_15 = arith.constant 0 : index
    %23 = vector.load %arg3[%c0_13, %c0_14, %c0_15] : memref<4x256x128xbf16, #tpu.memory_space<vmem>>, vector<4x256x128xbf16>
    %24 = vector.shape_cast %23 : vector<4x256x128xbf16> to vector<1024x128xbf16>
    %cst_16 = arith.constant dense<0.000000e+00> : vector<1024x128xf32>
    %25 = tpu.matmul %22, %1, %cst_16 {dimension_numbers = #tpu.dot_dimension_numbers<[1], [0], [0], [1], [0, 0, 1, 1], [], []>} : vector<1024x128xbf16>, vector<128x128xbf16>, vector<1024x128xf32> -> vector<1024x128xf32>
    %cst_17 = arith.constant dense<0.000000e+00> : vector<1024x128xf32>
    %26 = tpu.matmul %24, %2, %cst_17 {dimension_numbers = #tpu.dot_dimension_numbers<[1], [0], [0], [1], [0, 0, 1, 1], [], []>} : vector<1024x128xbf16>, vector<128x128xbf16>, vector<1024x128xf32> -> vector<1024x128xf32>
    %27 = vector.shape_cast %25 : vector<1024x128xf32> to vector<4x256x128xf32>
    %28 = vector.shape_cast %20 : vector<256x128xf32> to vector<1x256x128xf32>
    %29 = vector.broadcast %28 : vector<1x256x128xf32> to vector<4x256x128xf32>
    %30 = arith.mulf %27, %29 : vector<4x256x128xf32>
    %31 = vector.shape_cast %30 : vector<4x256x128xf32> to vector<1024x128xf32>
    %32 = arith.truncf %31 : vector<1024x128xf32> to vector<1024x128xbf16>
    %c0_18 = arith.constant 0 : index
    %c0_19 = arith.constant 0 : index
    %33 = vector.load %arg4[%c0_18, %c0_19] : memref<128x8xbf16, #tpu.memory_space<vmem>>, vector<128x8xbf16>
    %cst_20 = arith.constant dense<0.000000e+00> : vector<1024x8xf32>
    %34 = tpu.matmul %32, %33, %cst_20 {dimension_numbers = #tpu.dot_dimension_numbers<[1], [0], [0], [1], [0, 0, 1, 1], [], []>} : vector<1024x128xbf16>, vector<128x8xbf16>, vector<1024x8xf32> -> vector<1024x8xf32>
    %35 = vector.shape_cast %34 : vector<1024x8xf32> to vector<4x256x8xf32>
    %cst_21 = arith.constant dense<0xFF800000> : vector<256x8xf32>
    %36 = vector.multi_reduction <maximumf>, %35, %cst_21 [0] : vector<4x256x8xf32> to vector<256x8xf32>
    %37 = vector.shape_cast %36 : vector<256x8xf32> to vector<1x256x8xf32>
    %38 = vector.broadcast %37 : vector<1x256x8xf32> to vector<4x256x8xf32>
    %39 = arith.subf %35, %38 : vector<4x256x8xf32>
    %40 = math.exp %39 : vector<4x256x8xf32>
    %cst_22 = arith.constant dense<0.000000e+00> : vector<256x8xf32>
    %41 = vector.multi_reduction <add>, %40, %cst_22 [0] : vector<4x256x8xf32> to vector<256x8xf32>
    %42 = tpu.reciprocal %41 {approx = true} : vector<256x8xf32> -> vector<256x8xf32>
    %43 = vector.shape_cast %42 : vector<256x8xf32> to vector<1x256x8xf32>
    %44 = vector.broadcast %43 : vector<1x256x8xf32> to vector<4x256x8xf32>
    %45 = arith.mulf %40, %44 : vector<4x256x8xf32>
    %46 = vector.shape_cast %45 : vector<4x256x8xf32> to vector<1024x8xf32>
    %47 = arith.truncf %46 : vector<1024x8xf32> to vector<1024x8xbf16>
    %c0_23 = arith.constant 0 : index
    %c0_24 = arith.constant 0 : index
    %48 = vector.load %arg5[%c0_23, %c0_24] : memref<8x128xbf16, #tpu.memory_space<vmem>>, vector<8x128xbf16>
    %cst_25 = arith.constant dense<0.000000e+00> : vector<1024x128xf32>
    %49 = tpu.matmul %47, %48, %cst_25 {dimension_numbers = #tpu.dot_dimension_numbers<[1], [0], [0], [1], [0, 0, 1, 1], [], []>} : vector<1024x8xbf16>, vector<8x128xbf16>, vector<1024x128xf32> -> vector<1024x128xf32>
    %50 = vector.shape_cast %49 : vector<1024x128xf32> to vector<4x256x128xf32>
    %51 = vector.shape_cast %26 : vector<1024x128xf32> to vector<4x256x128xf32>
    %52 = arith.mulf %50, %51 : vector<4x256x128xf32>
    %cst_26 = arith.constant dense<0.000000e+00> : vector<256x128xf32>
    %53 = vector.multi_reduction <add>, %52, %cst_26 [0] : vector<4x256x128xf32> to vector<256x128xf32>
    %54 = vector.broadcast %8 : vector<1x128xf32> to vector<256x128xf32>
    %55 = arith.addf %53, %54 : vector<256x128xf32>
    %56 = arith.truncf %55 : vector<256x128xf32> to vector<256x128xbf16>
    %cst_27 = arith.constant dense<0.000000e+00> : vector<256x128xf32>
    %57 = tpu.matmul %56, %3, %cst_27 {dimension_numbers = #tpu.dot_dimension_numbers<[1], [0], [0], [1], [0, 0, 1, 1], [], []>} : vector<256x128xbf16>, vector<128x128xbf16>, vector<256x128xf32> -> vector<256x128xf32>
    %58 = vector.broadcast %9 : vector<1x128xf32> to vector<256x128xf32>
    %59 = arith.addf %57, %58 : vector<256x128xf32>
    %60 = arith.addf %16, %59 : vector<256x128xf32>
    %cst_28 = arith.constant dense<0.000000e+00> : vector<256xf32>
    %61 = vector.multi_reduction <add>, %60, %cst_28 [1] : vector<256x128xf32> to vector<256xf32>
    %62 = vector.shape_cast %61 : vector<256xf32> to vector<256x1xf32>
    %cst_29 = arith.constant 1.280000e+02 : f32
    %63 = vector.broadcast %cst_29 : f32 to vector<256x1xf32>
    %64 = arith.divf %62, %63 : vector<256x1xf32>
    %65 = vector.broadcast %64 : vector<256x1xf32> to vector<256x128xf32>
    %66 = arith.subf %60, %65 : vector<256x128xf32>
    %67 = arith.mulf %66, %66 : vector<256x128xf32>
    %cst_30 = arith.constant dense<0.000000e+00> : vector<256xf32>
    %68 = vector.multi_reduction <add>, %67, %cst_30 [1] : vector<256x128xf32> to vector<256xf32>
    %69 = vector.shape_cast %68 : vector<256xf32> to vector<256x1xf32>
    %cst_31 = arith.constant 1.280000e+02 : f32
    %70 = vector.broadcast %cst_31 : f32 to vector<256x1xf32>
    %71 = arith.divf %69, %70 : vector<256x1xf32>
    %72 = vector.broadcast %64 : vector<256x1xf32> to vector<256x128xf32>
    %73 = arith.subf %60, %72 : vector<256x128xf32>
    %cst_32 = arith.constant 9.99999974E-6 : f32
    %74 = vector.broadcast %cst_32 : f32 to vector<256x1xf32>
    %75 = arith.addf %71, %74 : vector<256x1xf32>
    %76 = math.rsqrt %75 : vector<256x1xf32>
    %77 = vector.broadcast %76 : vector<256x1xf32> to vector<256x128xf32>
    %78 = arith.mulf %73, %77 : vector<256x128xf32>
    %79 = vector.broadcast %10 : vector<1x128xf32> to vector<256x128xf32>
    %80 = arith.mulf %78, %79 : vector<256x128xf32>
    %81 = vector.broadcast %11 : vector<1x128xf32> to vector<256x128xf32>
    %82 = arith.addf %80, %81 : vector<256x128xf32>
    %83 = arith.truncf %82 : vector<256x128xf32> to vector<256x128xbf16>
    %cst_33 = arith.constant dense<0.000000e+00> : vector<256x128xf32>
    %84 = tpu.matmul %83, %4, %cst_33 {dimension_numbers = #tpu.dot_dimension_numbers<[1], [0], [0], [1], [0, 0, 1, 1], [], []>} : vector<256x128xbf16>, vector<128x128xbf16>, vector<256x128xf32> -> vector<256x128xf32>
    %85 = vector.broadcast %12 : vector<1x128xf32> to vector<256x128xf32>
    %86 = arith.addf %84, %85 : vector<256x128xf32>
    %cst_34 = arith.constant 0.000000e+00 : f32
    %87 = vector.broadcast %cst_34 : f32 to vector<256x128xf32>
    %88 = arith.maximumf %86, %87 : vector<256x128xf32>
    %89 = arith.truncf %88 : vector<256x128xf32> to vector<256x128xbf16>
    %cst_35 = arith.constant dense<0.000000e+00> : vector<256x128xf32>
    %90 = tpu.matmul %89, %5, %cst_35 {dimension_numbers = #tpu.dot_dimension_numbers<[1], [0], [0], [1], [0, 0, 1, 1], [], []>} : vector<256x128xbf16>, vector<128x128xbf16>, vector<256x128xf32> -> vector<256x128xf32>
    %91 = vector.broadcast %13 : vector<1x128xf32> to vector<256x128xf32>
    %92 = arith.addf %90, %91 : vector<256x128xf32>
    %93 = arith.addf %82, %92 : vector<256x128xf32>
    %cst_36 = arith.constant dense<0.000000e+00> : vector<256xf32>
    %94 = vector.multi_reduction <add>, %93, %cst_36 [1] : vector<256x128xf32> to vector<256xf32>
    %95 = vector.shape_cast %94 : vector<256xf32> to vector<256x1xf32>
    %cst_37 = arith.constant 1.280000e+02 : f32
    %96 = vector.broadcast %cst_37 : f32 to vector<256x1xf32>
    %97 = arith.divf %95, %96 : vector<256x1xf32>
    %98 = vector.broadcast %97 : vector<256x1xf32> to vector<256x128xf32>
    %99 = arith.subf %93, %98 : vector<256x128xf32>
    %100 = arith.mulf %99, %99 : vector<256x128xf32>
    %cst_38 = arith.constant dense<0.000000e+00> : vector<256xf32>
    %101 = vector.multi_reduction <add>, %100, %cst_38 [1] : vector<256x128xf32> to vector<256xf32>
    %102 = vector.shape_cast %101 : vector<256xf32> to vector<256x1xf32>
    %cst_39 = arith.constant 1.280000e+02 : f32
    %103 = vector.broadcast %cst_39 : f32 to vector<256x1xf32>
    %104 = arith.divf %102, %103 : vector<256x1xf32>
    %105 = vector.broadcast %97 : vector<256x1xf32> to vector<256x128xf32>
    %106 = arith.subf %93, %105 : vector<256x128xf32>
    %cst_40 = arith.constant 9.99999974E-6 : f32
    %107 = vector.broadcast %cst_40 : f32 to vector<256x1xf32>
    %108 = arith.addf %104, %107 : vector<256x1xf32>
    %109 = math.rsqrt %108 : vector<256x1xf32>
    %110 = vector.broadcast %109 : vector<256x1xf32> to vector<256x128xf32>
    %111 = arith.mulf %106, %110 : vector<256x128xf32>
    %112 = vector.broadcast %14 : vector<1x128xf32> to vector<256x128xf32>
    %113 = arith.mulf %111, %112 : vector<256x128xf32>
    %114 = vector.broadcast %15 : vector<1x128xf32> to vector<256x128xf32>
    %115 = arith.addf %113, %114 : vector<256x128xf32>
    %c0_41 = arith.constant 0 : index
    %c0_42 = arith.constant 0 : index
    %116 = vector.load %arg8[%c0_41, %c0_42] : memref<256x128xf32, #tpu.memory_space<vmem>>, vector<256x128xf32>
    tpu.vector_store %arg8[%c0_41, %c0_42], %115 {strides = array<i32>} : memref<256x128xf32, #tpu.memory_space<vmem>>, vector<256x128xf32>,
    return
  }
  func.func @transform_0(%arg0: i32) -> (i32, i32) {
    %c0_i32 = arith.constant 0 : i32
    %c0_i32_0 = arith.constant 0 : i32
    return %arg0, %c0_i32 : i32, i32
  }
  func.func @transform_1(%arg0: i32) -> (i32, i32, i32) {
    %c0_i32 = arith.constant 0 : i32
    %c0_i32_0 = arith.constant 0 : i32
    %c0_i32_1 = arith.constant 0 : i32
    return %c0_i32, %arg0, %c0_i32_0 : i32, i32, i32
  }
  func.func @transform_2(%arg0: i32) -> (i32, i32, i32) {
    %c0_i32 = arith.constant 0 : i32
    %c0_i32_0 = arith.constant 0 : i32
    %c0_i32_1 = arith.constant 0 : i32
    return %c0_i32, %arg0, %c0_i32_0 : i32, i32, i32
  }
  func.func @transform_3(%arg0: i32) -> (i32, i32) {
    %c0_i32 = arith.constant 0 : i32
    %c0_i32_0 = arith.constant 0 : i32
    %c0_i32_1 = arith.constant 0 : i32
    return %c0_i32, %c0_i32_0 : i32, i32
  }
  func.func @transform_4(%arg0: i32) -> (i32, i32) {
    %c0_i32 = arith.constant 0 : i32
    %c0_i32_0 = arith.constant 0 : i32
    %c0_i32_1 = arith.constant 0 : i32
    return %c0_i32, %c0_i32_0 : i32, i32
  }
  func.func @transform_5(%arg0: i32) -> (i32, i32) {
    %c0_i32 = arith.constant 0 : i32
    %c0_i32_0 = arith.constant 0 : i32
    %c0_i32_1 = arith.constant 0 : i32
    return %c0_i32, %c0_i32_0 : i32, i32
  }
  func.func @transform_6(%arg0: i32) -> (i32, i32) {
    %c0_i32 = arith.constant 0 : i32
    %c0_i32_0 = arith.constant 0 : i32
    %c0_i32_1 = arith.constant 0 : i32
    return %c0_i32, %c0_i32_0 : i32, i32
  }
  func.func @transform_7(%arg0: i32) -> (i32, i32) {
    %c0_i32 = arith.constant 0 : i32
    %c0_i32_0 = arith.constant 0 : i32
    return %arg0, %c0_i32 : i32, i32
  }
}

</mosaic_0001>

<llo_original>
// kernel: tpu_custom_call.1
$region0: #{tpu_custom_call.1}
  #allocation0 [shape = 'u32[]', space=smem, size = 0x4, offset = 0x4, fixed_abs, tag = 'smem constant byte address 0x4 - core index']
  #allocation1 [shape = 'u32[144,128]{1,0:T(1,128)}', space=vmem, size = 0x12000, scoped, tag = 'internal scratch']
  %s0 = inlined_call_operand.hbm [shape: f32[256,128], index: 0, kind: input, shape index: {}]
  %s1 = inlined_call_operand.hbm [shape: bf16[4,256,128], index: 1, kind: input, shape index: {}]
  %s2 = inlined_call_operand.hbm [shape: bf16[4,256,128], index: 2, kind: input, shape index: {}]
  %s3 = inlined_call_operand.vmem [shape: bf16[128,8], index: 3, kind: input, shape index: {}]
  %s4 = inlined_call_operand.vmem [shape: bf16[8,128], index: 4, kind: input, shape index: {}]
  %s5 = inlined_call_operand.hbm [shape: bf16[768,128], index: 5, kind: input, shape index: {}]
  %s6 = inlined_call_operand.vmem [shape: f32[16,128], index: 6, kind: input, shape index: {}]
  %s7 = inlined_call_operand.hbm [shape: f32[256,128], index: 7, kind: output, shape index: {}]
  %s8 = sld [smem:[#allocation0]]
  $region54: #{tpu_custom_call.1} parent=0
    _
  %s10 = ssub.s32 1, %s8
  %s11 = scalar_select 0, %s10, %s8
  $region1: #{tpu_custom_call.1} parent=0
    #allocation2 [shape = 'u8[131072]{0}', space=vmem, size = 0x20000, scoped, tag = 'input window, operand 0, single buffered']
    #allocation3 [shape = 's32[1]{0}', space=sflag, size = 0x4, scoped, tag = 'scoped memory for tpu_custom_call.1']
    #allocation4 [shape = 's32[1]{0}', space=sflag, size = 0x4, scoped, tag = 'scoped memory for tpu_custom_call.1']
    #allocation5 [shape = 'u8[262144]{0}', space=vmem, size = 0x40000, scoped, tag = 'input window, operand 1, single buffered']
    #allocation6 [shape = 's32[1]{0}', space=sflag, size = 0x4, scoped, tag = 'scoped memory for tpu_custom_call.1']
    #allocation7 [shape = 'u8[262144]{0}', space=vmem, size = 0x40000, scoped, tag = 'input window, operand 2, single buffered']
    #allocation8 [shape = 'u8[196608]{0}', space=vmem, size = 0x30000, scoped, tag = 'input window, operand 5, single buffered']
    #allocation9 [shape = 's32[1]{0}', space=sflag, size = 0x4, scoped, tag = 'scoped memory for tpu_custom_call.1']
    #allocation10 [shape = 'u8[131072]{0}', space=vmem, size = 0x20000, scoped, tag = 'output window, operand 0, single buffered']
    %12 = vsyncpa [#allocation3], 0
    %13 = vsyncpa [#allocation6], 0
    %14 = vsyncpa [#allocation9], 0
    %15 = vsyncpa [#allocation4], 0
    // Predicated region
    $region2: #{tpu_custom_call.1} parent=1 // pred_check
      _
    $region3: #{tpu_custom_call.1} parent=1 // pred_check_branch
      %17 = sbr.rel (0) target = $region5
    $region4: #{tpu_custom_call.1} parent=1 // pred_region
      %s19 = ssub.s32 4096, 4096
      %20 = vsyncadd [#allocation3], %s19
      %s21 = sshll.u32 [#allocation2], 4
      %s22 = int_to_ptr.vmem [resolvable:$true] %s21
      %27 = dma.hbm_to_vmem [thread:$0]  %s0, 4096, %s22, [#allocation3], 128, 128, 8
    $region5: #{tpu_custom_call.1} parent=1 // pred_fallthru
      _
    // Predicated region
    $region6: #{tpu_custom_call.1} parent=1 // pred_check
      _
    $region7: #{tpu_custom_call.1} parent=1 // pred_check_branch
      %29 = sbr.rel (0) target = $region9
    $region8: #{tpu_custom_call.1} parent=1 // pred_region
      %s31 = ssub.s32 8192, 8192
      %32 = vsyncadd [#allocation6], %s31
      %s33 = sshll.u32 [#allocation5], 4
      %s34 = int_to_ptr.vmem [resolvable:$true] %s33
      %39 = dma.hbm_to_vmem [thread:$0]  %s1, 8192, %s34, [#allocation6], 64, 64, 4
    $region9: #{tpu_custom_call.1} parent=1 // pred_fallthru
      _
    // Predicated region
    $region10: #{tpu_custom_call.1} parent=1 // pred_check
      _
    $region11: #{tpu_custom_call.1} parent=1 // pred_check_branch
      %41 = sbr.rel (0) target = $region13
    $region12: #{tpu_custom_call.1} parent=1 // pred_region
      %s43 = ssub.s32 8192, 8192
      %44 = vsyncadd [#allocation6], %s43
      %s45 = sshll.u32 [#allocation7], 4
      %s46 = int_to_ptr.vmem [resolvable:$true] %s45
      %51 = dma.hbm_to_vmem [thread:$0]  %s2, 8192, %s46, [#allocation6], 64, 64, 4
    $region13: #{tpu_custom_call.1} parent=1 // pred_fallthru
      _
    // Predicated region
    $region14: #{tpu_custom_call.1} parent=1 // pred_check
      _
    $region15: #{tpu_custom_call.1} parent=1 // pred_check_branch
      %53 = sbr.rel (0) target = $region17
    $region16: #{tpu_custom_call.1} parent=1 // pred_region
      _
    $region17: #{tpu_custom_call.1} parent=1 // pred_fallthru
      _
    // Predicated region
    $region18: #{tpu_custom_call.1} parent=1 // pred_check
      _
    $region19: #{tpu_custom_call.1} parent=1 // pred_check_branch
      %55 = sbr.rel (0) target = $region21
    $region20: #{tpu_custom_call.1} parent=1 // pred_region
      _
    $region21: #{tpu_custom_call.1} parent=1 // pred_fallthru
      _
    // Predicated region
    $region22: #{tpu_custom_call.1} parent=1 // pred_check
      _
    $region23: #{tpu_custom_call.1} parent=1 // pred_check_branch
      %57 = sbr.rel (0) target = $region25
    $region24: #{tpu_custom_call.1} parent=1 // pred_region
      %s59 = ssub.s32 6144, 6144
      %60 = vsyncadd [#allocation9], %s59
      %s61 = sshll.u32 [#allocation8], 4
      %s62 = int_to_ptr.vmem [resolvable:$true] %s61
      %67 = dma.hbm_to_vmem [thread:$0]  %s5, 6144, %s62, [#allocation9], 64, 64, 4
    $region25: #{tpu_custom_call.1} parent=1 // pred_fallthru
      _
    // Predicated region
    $region26: #{tpu_custom_call.1} parent=1 // pred_check
      _
    $region27: #{tpu_custom_call.1} parent=1 // pred_check_branch
      %69 = sbr.rel (0) target = $region29
    $region28: #{tpu_custom_call.1} parent=1 // pred_region
      _
    $region29: #{tpu_custom_call.1} parent=1 // pred_fallthru
      _
    // Predicated region
    $region30: #{tpu_custom_call.1} parent=1 // pred_check
      _
    $region31: #{tpu_custom_call.1} parent=1 // pred_check_branch
      %71 = sbr.rel (0) target = $region33
    $region32: #{tpu_custom_call.1} parent=1 // pred_region
      %72 = dma.done [#allocation3], 4096
    $region33: #{tpu_custom_call.1} parent=1 // pred_fallthru
      _
    // Predicated region
    $region34: #{tpu_custom_call.1} parent=1 // pred_check
      _
    $region35: #{tpu_custom_call.1} parent=1 // pred_check_branch
      %74 = sbr.rel (0) target = $region37
    $region36: #{tpu_custom_call.1} parent=1 // pred_region
      %75 = dma.done [#allocation6], 8192
    $region37: #{tpu_custom_call.1} parent=1 // pred_fallthru
      _
    // Predicated region
    $region38: #{tpu_custom_call.1} parent=1 // pred_check
      _
    $region39: #{tpu_custom_call.1} parent=1 // pred_check_branch
      %77 = sbr.rel (0) target = $region41
    $region40: #{tpu_custom_call.1} parent=1 // pred_region
      %78 = dma.done [#allocation6], 8192
    $region41: #{tpu_custom_call.1} parent=1 // pred_fallthru
      _
    // Predicated region
    $region42: #{tpu_custom_call.1} parent=1 // pred_check
      _
    $region43: #{tpu_custom_call.1} parent=1 // pred_check_branch
      %80 = sbr.rel (0) target = $region45
    $region44: #{tpu_custom_call.1} parent=1 // pred_region
      %81 = dma.done [#allocation9], 6144
    $region45: #{tpu_custom_call.1} parent=1 // pred_fallthru
      _
    %v83 = vld [vmem:[#allocation8] sm:$0xf]
    %v84 = vld [vmem:[#allocation8 + $0x4] sm:$0xf]
    %v85 = vld [vmem:[#allocation8 + $0x8] sm:$0xf]
    %v86 = vld [vmem:[#allocation8 + $0xc] sm:$0xf]
    %v87 = vld [vmem:[#allocation8 + $0x10] sm:$0xf]
    %v88 = vld [vmem:[#allocation8 + $0x14] sm:$0xf]
    %v89 = vld [vmem:[#allocation8 + $0x18] sm:$0xf]
    %v90 = vld [vmem:[#allocation8 + $0x1c] sm:$0xf]
    %v91 = vld [vmem:[#allocation8 + $0x20] sm:$0xf]
    %v92 = vld [vmem:[#allocation8 + $0x24] sm:$0xf]
    %v93 = vld [vmem:[#allocation8 + $0x28] sm:$0xf]
    %v94 = vld [vmem:[#allocation8 + $0x2c] sm:$0xf]
    %v95 = vld [vmem:[#allocation8 + $0x30] sm:$0xf]
    %v96 = vld [vmem:[#allocation8 + $0x34] sm:$0xf]
    %v97 = vld [vmem:[#allocation8 + $0x38] sm:$0xf]
    %v98 = vld [vmem:[#allocation8 + $0x3c] sm:$0xf]
    %v99 = vld [vmem:[#allocation8 + $0x40] sm:$0xf]
    %v100 = vld [vmem:[#allocation8 + $0x44] sm:$0xf]
    %v101 = vld [vmem:[#allocation8 + $0x48] sm:$0xf]
    %v102 = vld [vmem:[#allocation8 + $0x4c] sm:$0xf]
    %v103 = vld [vmem:[#allocation8 + $0x50] sm:$0xf]
    %v104 = vld [vmem:[#allocation8 + $0x54] sm:$0xf]
    %v105 = vld [vmem:[#allocation8 + $0x58] sm:$0xf]
    %v106 = vld [vmem:[#allocation8 + $0x5c] sm:$0xf]
    %v107 = vld [vmem:[#allocation8 + $0x60] sm:$0xf]
    %v108 = vld [vmem:[#allocation8 + $0x64] sm:$0xf]
    %v109 = vld [vmem:[#allocation8 + $0x68] sm:$0xf]
    %v110 = vld [vmem:[#allocation8 + $0x6c] sm:$0xf]
    %v111 = vld [vmem:[#allocation8 + $0x70] sm:$0xf]
    %v112 = vld [vmem:[#allocation8 + $0x74] sm:$0xf]
    %v113 = vld [vmem:[#allocation8 + $0x78] sm:$0xf]
    %v114 = vld [vmem:[#allocation8 + $0x7c] sm:$0xf]
    %v115 = vld [vmem:[#allocation8 + $0x80] sm:$0xf]
    %v116 = vld [vmem:[#allocation8 + $0x84] sm:$0xf]
    %v117 = vld [vmem:[#allocation8 + $0x88] sm:$0xf]
    %v118 = vld [vmem:[#allocation8 + $0x8c] sm:$0xf]
    %v119 = vld [vmem:[#allocation8 + $0x90] sm:$0xf]
    %v120 = vld [vmem:[#allocation8 + $0x94] sm:$0xf]
    %v121 = vld [vmem:[#allocation8 + $0x98] sm:$0xf]
    %v122 = vld [vmem:[#allocation8 + $0x9c] sm:$0xf]
    %v123 = vld [vmem:[#allocation8 + $0xa0] sm:$0xf]
    %v124 = vld [vmem:[#allocation8 + $0xa4] sm:$0xf]
    %v125 = vld [vmem:[#allocation8 + $0xa8] sm:$0xf]
    %v126 = vld [vmem:[#allocation8 + $0xac] sm:$0xf]
    %v127 = vld [vmem:[#allocation8 + $0xb0] sm:$0xf]
    %v128 = vld [vmem:[#allocation8 + $0xb4] sm:$0xf]
    %v129 = vld [vmem:[#allocation8 + $0xb8] sm:$0xf]
    %v130 = vld [vmem:[#allocation8 + $0xbc] sm:$0xf]
    %v131 = vld [vmem:[#allocation8 + $0xc0] sm:$0xf]
    %v132 = vld [vmem:[#allocation8 + $0xc4] sm:$0xf]
    %v133 = vld [vmem:[#allocation8 + $0xc8] sm:$0xf]
    %v134 = vld [vmem:[#allocation8 + $0xcc] sm:$0xf]
    %v135 = vld [vmem:[#allocation8 + $0xd0] sm:$0xf]
    %v136 = vld [vmem:[#allocation8 + $0xd4] sm:$0xf]
    %v137 = vld [vmem:[#allocation8 + $0xd8] sm:$0xf]
    %v138 = vld [vmem:[#allocation8 + $0xdc] sm:$0xf]
    %v139 = vld [vmem:[#allocation8 + $0xe0] sm:$0xf]
    %v140 = vld [vmem:[#allocation8 + $0xe4] sm:$0xf]
    %v141 = vld [vmem:[#allocation8 + $0xe8] sm:$0xf]
    %v142 = vld [vmem:[#allocation8 + $0xec] sm:$0xf]
    %v143 = vld [vmem:[#allocation8 + $0xf0] sm:$0xf]
    %v144 = vld [vmem:[#allocation8 + $0xf4] sm:$0xf]
    %v145 = vld [vmem:[#allocation8 + $0xf8] sm:$0xf]
    %v146 = vld [vmem:[#allocation8 + $0xfc] sm:$0xf]
    %v147 = vld [vmem:[#allocation8 + $0x100] sm:$0xf]
    %v148 = vld [vmem:[#allocation8 + $0x104] sm:$0xf]
    %v149 = vld [vmem:[#allocation8 + $0x108] sm:$0xf]
    %v150 = vld [vmem:[#allocation8 + $0x10c] sm:$0xf]
    %v151 = vld [vmem:[#allocation8 + $0x110] sm:$0xf]
    %v152 = vld [vmem:[#allocation8 + $0x114] sm:$0xf]
    %v153 = vld [vmem:[#allocation8 + $0x118] sm:$0xf]
    %v154 = vld [vmem:[#allocation8 + $0x11c] sm:$0xf]
    %v155 = vld [vmem:[#allocation8 + $0x120] sm:$0xf]
    %v156 = vld [vmem:[#allocation8 + $0x124] sm:$0xf]
    %v157 = vld [vmem:[#allocation8 + $0x128] sm:$0xf]
    %v158 = vld [vmem:[#allocation8 + $0x12c] sm:$0xf]
    %v159 = vld [vmem:[#allocation8 + $0x130] sm:$0xf]
    %v160 = vld [vmem:[#allocation8 + $0x134] sm:$0xf]
    %v161 = vld [vmem:[#allocation8 + $0x138] sm:$0xf]
    %v162 = vld [vmem:[#allocation8 + $0x13c] sm:$0xf]
    %v163 = vld [vmem:[#allocation8 + $0x140] sm:$0xf]
    %v164 = vld [vmem:[#allocation8 + $0x144] sm:$0xf]
    %v165 = vld [vmem:[#allocation8 + $0x148] sm:$0xf]
    %v166 = vld [vmem:[#allocation8 + $0x14c] sm:$0xf]
    %v167 = vld [vmem:[#allocation8 + $0x150] sm:$0xf]
    %v168 = vld [vmem:[#allocation8 + $0x154] sm:$0xf]
    %v169 = vld [vmem:[#allocation8 + $0x158] sm:$0xf]
    %v170 = vld [vmem:[#allocation8 + $0x15c] sm:$0xf]
    %v171 = vld [vmem:[#allocation8 + $0x160] sm:$0xf]
    %v172 = vld [vmem:[#allocation8 + $0x164] sm:$0xf]
    %v173 = vld [vmem:[#allocation8 + $0x168] sm:$0xf]
    %v174 = vld [vmem:[#allocation8 + $0x16c] sm:$0xf]
    %v175 = vld [vmem:[#allocation8 + $0x170] sm:$0xf]
    %v176 = vld [vmem:[#allocation8 + $0x174] sm:$0xf]
    %v177 = vld [vmem:[#allocation8 + $0x178] sm:$0xf]
    %v178 = vld [vmem:[#allocation8 + $0x17c] sm:$0xf]
    %v179 = vld [vmem:[%s6] sm:$0xff]
    %v180 = vld [vmem:[%s6 + $0x8] sm:$0xff]
    %v181 = vld [vmem:[#allocation2] sm:$0xff]
    %v182 = vld [vmem:[#allocation2 + $0x8] sm:$0xff]
    %v183 = vld [vmem:[#allocation2 + $0x10] sm:$0xff]
    %v184 = vld [vmem:[#allocation2 + $0x18] sm:$0xff]
    %v185 = vld [vmem:[#allocation2 + $0x20] sm:$0xff]
    %v186 = vld [vmem:[#allocation2 + $0x28] sm:$0xff]
    %v187 = vld [vmem:[#allocation2 + $0x30] sm:$0xff]
    %v188 = vld [vmem:[#allocation2 + $0x38] sm:$0xff]
    %v189 = vld [vmem:[#allocation2 + $0x40] sm:$0xff]
    %v190 = vld [vmem:[#allocation2 + $0x48] sm:$0xff]
    %v191 = vld [vmem:[#allocation2 + $0x50] sm:$0xff]
    %v192 = vld [vmem:[#allocation2 + $0x58] sm:$0xff]
    %v193 = vld [vmem:[#allocation2 + $0x60] sm:$0xff]
    %v194 = vld [vmem:[#allocation2 + $0x68] sm:$0xff]
    %v195 = vld [vmem:[#allocation2 + $0x70] sm:$0xff]
    %v196 = vld [vmem:[#allocation2 + $0x78] sm:$0xff]
    %v197 = vld [vmem:[#allocation2 + $0x80] sm:$0xff]
    %v198 = vld [vmem:[#allocation2 + $0x88] sm:$0xff]
    %v199 = vld [vmem:[#allocation2 + $0x90] sm:$0xff]
    %v200 = vld [vmem:[#allocation2 + $0x98] sm:$0xff]
    %v201 = vld [vmem:[#allocation2 + $0xa0] sm:$0xff]
    %v202 = vld [vmem:[#allocation2 + $0xa8] sm:$0xff]
    %v203 = vld [vmem:[#allocation2 + $0xb0] sm:$0xff]
    %v204 = vld [vmem:[#allocation2 + $0xb8] sm:$0xff]
    %v205 = vld [vmem:[#allocation2 + $0xc0] sm:$0xff]
    %v206 = vld [vmem:[#allocation2 + $0xc8] sm:$0xff]
    %v207 = vld [vmem:[#allocation2 + $0xd0] sm:$0xff]
    %v208 = vld [vmem:[#allocation2 + $0xd8] sm:$0xff]
    %v209 = vld [vmem:[#allocation2 + $0xe0] sm:$0xff]
    %v210 = vld [vmem:[#allocation2 + $0xe8] sm:$0xff]
    %v211 = vld [vmem:[#allocation2 + $0xf0] sm:$0xff]
    %v212 = vld [vmem:[#allocation2 + $0xf8] sm:$0xff]
    %v213 = vpack.c.bf16 %v182, %v181
    %v214 = vpack.c.bf16 %v184, %v183
    %v215 = vpack.c.bf16 %v186, %v185
    %v216 = vpack.c.bf16 %v188, %v187
    %v217 = vpack.c.bf16 %v190, %v189
    %v218 = vpack.c.bf16 %v192, %v191
    %v219 = vpack.c.bf16 %v194, %v193
    %v220 = vpack.c.bf16 %v196, %v195
    %v221 = vpack.c.bf16 %v198, %v197
    %v222 = vpack.c.bf16 %v200, %v199
    %v223 = vpack.c.bf16 %v202, %v201
    %v224 = vpack.c.bf16 %v204, %v203
    %v225 = vpack.c.bf16 %v206, %v205
    %v226 = vpack.c.bf16 %v208, %v207
    %v227 = vpack.c.bf16 %v210, %v209
    %v228 = vpack.c.bf16 %v212, %v211
    %v229 = vlaneseq
    %v230 = vshrl.u32 %v229, 7
    %v231 = vsub.s32 0, %v230
    %v232 = vrot.slane %v179, %v231
    %v249 = vunpack.c.l.b16 %v83
    %v250 = vunpack.c.l.b16 %v84
    %v251 = vunpack.c.l.b16 %v85
    %v252 = vunpack.c.l.b16 %v86
    %v253 = vunpack.c.l.b16 %v87
    %v254 = vunpack.c.l.b16 %v88
    %v255 = vunpack.c.l.b16 %v89
    %v256 = vunpack.c.l.b16 %v90
    %v257 = vunpack.c.l.b16 %v91
    %v258 = vunpack.c.l.b16 %v92
    %v259 = vunpack.c.l.b16 %v93
    %v260 = vunpack.c.l.b16 %v94
    %v261 = vunpack.c.l.b16 %v95
    %v262 = vunpack.c.l.b16 %v96
    %v263 = vunpack.c.l.b16 %v97
    %v264 = vunpack.c.l.b16 %v98
    %v265 = vpack.c.b16 %v250, %v249
    %v266 = vpack.c.b16 %v252, %v251
    %v267 = vpack.c.b16 %v254, %v253
    %v268 = vpack.c.b16 %v256, %v255
    %v269 = vpack.c.b16 %v258, %v257
    %v270 = vpack.c.b16 %v260, %v259
    %v271 = vpack.c.b16 %v262, %v261
    %v272 = vpack.c.b16 %v264, %v263
    %281 = vmatprep.subr.bf16.mxu0 0
    %282 = vmatpush1.bf16.msra.mxu0 %v265
    %283 = vmatprep.subr.bf16.mxu0 0
    %284 = vmatpush1.bf16.msra.mxu0 %v266
    %285 = vmatprep.subr.bf16.mxu0 0
    %286 = vmatpush1.bf16.msra.mxu0 %v267
    %287 = vmatprep.subr.bf16.mxu0 0
    %288 = vmatpush1.bf16.msra.mxu0 %v268
    %289 = vmatprep.subr.bf16.mxu0 0
    %290 = vmatpush1.bf16.msra.mxu0 %v269
    %291 = vmatprep.subr.bf16.mxu0 0
    %292 = vmatpush1.bf16.msra.mxu0 %v270
    %293 = vmatprep.subr.bf16.mxu0 0
    %294 = vmatpush1.bf16.msra.mxu0 %v271
    %295 = vmatprep.subr.bf16.mxu0 0
    %296 = vmatpush1.bf16.msra.mxu0 %v272
    %297 = vmatprep.subr.bf16.mxu0 0
    %298 = vmatpush1.bf16.msra.mxu0 0
    %299 = vmatprep.subr.bf16.mxu0 0
    %300 = vmatpush1.bf16.msra.mxu0 0
    %301 = vmatprep.subr.bf16.mxu0 0
    %302 = vmatpush1.bf16.msra.mxu0 0
    %303 = vmatprep.subr.bf16.mxu0 0
    %304 = vmatpush1.bf16.msra.mxu0 0
    %305 = vmatprep.subr.bf16.mxu0 0
    %306 = vmatpush1.bf16.msra.mxu0 0
    %307 = vmatprep.subr.bf16.mxu0 0
    %308 = vmatpush1.bf16.msra.mxu0 0
    %309 = vmatprep.subr.bf16.mxu0 0
    %310 = vmatpush1.bf16.msra.mxu0 0
    %311 = vmatprep.subr.bf16.mxu0 0
    %312 = vmatpush1.bf16.msra.mxu0 0
    %313 = vmatprep.mubr.bf16.mxu0 0
    %314 = vmatmul.mubr.bf16.gmra.mrb[0].mxu0 %v213
    %v315 = vpop.f32.mrb[0].mxu0
    %v316 = vadd.f32 %v232, %v315
    %v317 = vpop.f32.mrb[0].mxu0
    %v318 = vpop.f32.mrb[0].mxu0
    %v319 = vadd.f32 %v232, %v318
    %v320 = vpop.f32.mrb[0].mxu0
    %321 = vmatprep.mubr.bf16.mxu0 0
    %322 = vmatmul.mubr.bf16.gmra.mrb[0].mxu0 %v214
    %v323 = vpop.f32.mrb[0].mxu0
    %v324 = vadd.f32 %v232, %v323
    %v325 = vpop.f32.mrb[0].mxu0
    %v326 = vpop.f32.mrb[0].mxu0
    %v327 = vadd.f32 %v232, %v326
    %v328 = vpop.f32.mrb[0].mxu0
    %329 = vmatprep.mubr.bf16.mxu0 0
    %330 = vmatmul.mubr.bf16.gmra.mrb[0].mxu0 %v215
    %v331 = vpop.f32.mrb[0].mxu0
    %v332 = vadd.f32 %v232, %v331
    %v333 = vpop.f32.mrb[0].mxu0
    %v334 = vpop.f32.mrb[0].mxu0
    %v335 = vadd.f32 %v232, %v334
    %v336 = vpop.f32.mrb[0].mxu0
    %337 = vmatprep.mubr.bf16.mxu0 0
    %338 = vmatmul.mubr.bf16.gmra.mrb[0].mxu0 %v216
    %v339 = vpop.f32.mrb[0].mxu0
    %v340 = vadd.f32 %v232, %v339
    %v341 = vpop.f32.mrb[0].mxu0
    %v342 = vpop.f32.mrb[0].mxu0
    %v343 = vadd.f32 %v232, %v342
    %v344 = vpop.f32.mrb[0].mxu0
    %345 = vmatprep.mubr.bf16.mxu0 0
    %346 = vmatmul.mubr.bf16.gmra.mrb[0].mxu0 %v217
    %v347 = vpop.f32.mrb[0].mxu0
    %v348 = vadd.f32 %v232, %v347
    %v349 = vpop.f32.mrb[0].mxu0
    %v350 = vpop.f32.mrb[0].mxu0
    %v351 = vadd.f32 %v232, %v350
    %v352 = vpop.f32.mrb[0].mxu0
    %353 = vmatprep.mubr.bf16.mxu0 0
    %354 = vmatmul.mubr.bf16.gmra.mrb[0].mxu0 %v218
    %v355 = vpop.f32.mrb[0].mxu0
    %v356 = vadd.f32 %v232, %v355
    %v357 = vpop.f32.mrb[0].mxu0
    %v358 = vpop.f32.mrb[0].mxu0
    %v359 = vadd.f32 %v232, %v358
    %v360 = vpop.f32.mrb[0].mxu0
    %361 = vmatprep.mubr.bf16.mxu0 0
    %362 = vmatmul.mubr.bf16.gmra.mrb[0].mxu0 %v219
    %v363 = vpop.f32.mrb[0].mxu0
    %v364 = vadd.f32 %v232, %v363
    %v365 = vpop.f32.mrb[0].mxu0
    %v366 = vpop.f32.mrb[0].mxu0
    %v367 = vadd.f32 %v232, %v366
    %v368 = vpop.f32.mrb[0].mxu0
    %369 = vmatprep.mubr.bf16.mxu0 0
    %370 = vmatmul.mubr.bf16.gmra.mrb[0].mxu0 %v220
    %v371 = vpop.f32.mrb[0].mxu0
    %v372 = vadd.f32 %v232, %v371
    %v373 = vpop.f32.mrb[0].mxu0
    %v374 = vpop.f32.mrb[0].mxu0
    %v375 = vadd.f32 %v232, %v374
    %v376 = vpop.f32.mrb[0].mxu0
    %377 = vmatprep.mubr.bf16.mxu0 0
    %378 = vmatmul.mubr.bf16.gmra.mrb[0].mxu0 %v221
    %v379 = vpop.f32.mrb[0].mxu0
    %v380 = vadd.f32 %v232, %v379
    %v381 = vpop.f32.mrb[0].mxu0
    %v382 = vpop.f32.mrb[0].mxu0
    %v383 = vadd.f32 %v232, %v382
    %v384 = vpop.f32.mrb[0].mxu0
    %385 = vmatprep.mubr.bf16.mxu0 0
    %386 = vmatmul.mubr.bf16.gmra.mrb[0].mxu0 %v222
    %v387 = vpop.f32.mrb[0].mxu0
    %v388 = vadd.f32 %v232, %v387
    %v389 = vpop.f32.mrb[0].mxu0
    %v390 = vpop.f32.mrb[0].mxu0
    %v391 = vadd.f32 %v232, %v390
    %v392 = vpop.f32.mrb[0].mxu0
    %393 = vmatprep.mubr.bf16.mxu0 0
    %394 = vmatmul.mubr.bf16.gmra.mrb[0].mxu0 %v223
    %v395 = vpop.f32.mrb[0].mxu0
    %v396 = vadd.f32 %v232, %v395
    %v397 = vpop.f32.mrb[0].mxu0
    %v398 = vpop.f32.mrb[0].mxu0
    %v399 = vadd.f32 %v232, %v398
    %v400 = vpop.f32.mrb[0].mxu0
    %401 = vmatprep.mubr.bf16.mxu0 0
    %402 = vmatmul.mubr.bf16.gmra.mrb[0].mxu0 %v224
    %v403 = vpop.f32.mrb[0].mxu0
    %v404 = vadd.f32 %v232, %v403
    %v405 = vpop.f32.mrb[0].mxu0
    %v406 = vpop.f32.mrb[0].mxu0
    %v407 = vadd.f32 %v232, %v406
    %v408 = vpop.f32.mrb[0].mxu0
    %409 = vmatprep.mubr.bf16.mxu0 0
    %410 = vmatmul.mubr.bf16.gmra.mrb[0].mxu0 %v225
    %v411 = vpop.f32.mrb[0].mxu0
    %v412 = vadd.f32 %v232, %v411
    %v413 = vpop.f32.mrb[0].mxu0
    %v414 = vpop.f32.mrb[0].mxu0
    %v415 = vadd.f32 %v232, %v414
    %v416 = vpop.f32.mrb[0].mxu0
    %417 = vmatprep.mubr.bf16.mxu0 0
    %418 = vmatmul.mubr.bf16.gmra.mrb[0].mxu0 %v226
    %v419 = vpop.f32.mrb[0].mxu0
    %v420 = vadd.f32 %v232, %v419
    %v421 = vpop.f32.mrb[0].mxu0
    %v422 = vpop.f32.mrb[0].mxu0
    %v423 = vadd.f32 %v232, %v422
    %v424 = vpop.f32.mrb[0].mxu0
    %425 = vmatprep.mubr.bf16.mxu0 0
    %426 = vmatmul.mubr.bf16.gmra.mrb[0].mxu0 %v227
    %v427 = vpop.f32.mrb[0].mxu0
    %v428 = vadd.f32 %v232, %v427
    %v429 = vpop.f32.mrb[0].mxu0
    %v430 = vpop.f32.mrb[0].mxu0
    %v431 = vadd.f32 %v232, %v430
    %v432 = vpop.f32.mrb[0].mxu0
    %433 = vmatprep.mubr.bf16.mxu0 0
    %434 = vmatmul.mubr.bf16.gmra.mrb[0].mxu0 %v228
    %v435 = vpop.f32.mrb[0].mxu0
    %v436 = vadd.f32 %v232, %v435
    %v437 = vpop.f32.mrb[0].mxu0
    %v438 = vpop.f32.mrb[0].mxu0
    %v439 = vadd.f32 %v232, %v438
    %v440 = vpop.f32.mrb[0].mxu0
    %441 = vdwg.mxu0
    %v442 = vld [vmem:[#allocation5] sm:$0xf]
    %v443 = vld [vmem:[#allocation5 + $0x4] sm:$0xf]
    %v444 = vld [vmem:[#allocation5 + $0x8] sm:$0xf]
    %v445 = vld [vmem:[#allocation5 + $0xc] sm:$0xf]
    %v446 = vld [vmem:[#allocation5 + $0x10] sm:$0xf]
    %v447 = vld [vmem:[#allocation5 + $0x14] sm:$0xf]
    %v448 = vld [vmem:[#allocation5 + $0x18] sm:$0xf]
    %v449 = vld [vmem:[#allocation5 + $0x1c] sm:$0xf]
    %v450 = vld [vmem:[#allocation5 + $0x20] sm:$0xf]
    %v451 = vld [vmem:[#allocation5 + $0x24] sm:$0xf]
    %v452 = vld [vmem:[#allocation5 + $0x28] sm:$0xf]
    %v453 = vld [vmem:[#allocation5 + $0x2c] sm:$0xf]
    %v454 = vld [vmem:[#allocation5 + $0x30] sm:$0xf]
    %v455 = vld [vmem:[#allocation5 + $0x34] sm:$0xf]
    %v456 = vld [vmem:[#allocation5 + $0x38] sm:$0xf]
    %v457 = vld [vmem:[#allocation5 + $0x3c] sm:$0xf]
    %v458 = vld [vmem:[#allocation5 + $0x40] sm:$0xf]
    %v459 = vld [vmem:[#allocation5 + $0x44] sm:$0xf]
    %v460 = vld [vmem:[#allocation5 + $0x48] sm:$0xf]
    %v461 = vld [vmem:[#allocation5 + $0x4c] sm:$0xf]
    %v462 = vld [vmem:[#allocation5 + $0x50] sm:$0xf]
    %v463 = vld [vmem:[#allocation5 + $0x54] sm:$0xf]
    %v464 = vld [vmem:[#allocation5 + $0x58] sm:$0xf]
    %v465 = vld [vmem:[#allocation5 + $0x5c] sm:$0xf]
    %v466 = vld [vmem:[#allocation5 + $0x60] sm:$0xf]
    %v467 = vld [vmem:[#allocation5 + $0x64] sm:$0xf]
    %v468 = vld [vmem:[#allocation5 + $0x68] sm:$0xf]
    %v469 = vld [vmem:[#allocation5 + $0x6c] sm:$0xf]
    %v470 = vld [vmem:[#allocation5 + $0x70] sm:$0xf]
    %v471 = vld [vmem:[#allocation5 + $0x74] sm:$0xf]
    %v472 = vld [vmem:[#allocation5 + $0x78] sm:$0xf]
    %v473 = vld [vmem:[#allocation5 + $0x7c] sm:$0xf]
    %v474 = vld [vmem:[#allocation5 + $0x80] sm:$0xf]
    %v475 = vld [vmem:[#allocation5 + $0x84] sm:$0xf]
    %v476 = vld [vmem:[#allocation5 + $0x88] sm:$0xf]
    %v477 = vld [vmem:[#allocation5 + $0x8c] sm:$0xf]
    %v478 = vld [vmem:[#allocation5 + $0x90] sm:$0xf]
    %v479 = vld [vmem:[#allocation5 + $0x94] sm:$0xf]
    %v480 = vld [vmem:[#allocation5 + $0x98] sm:$0xf]
    %v481 = vld [vmem:[#allocation5 + $0x9c] sm:$0xf]
    %v482 = vld [vmem:[#allocation5 + $0xa0] sm:$0xf]
    %v483 = vld [vmem:[#allocation5 + $0xa4] sm:$0xf]
    %v484 = vld [vmem:[#allocation5 + $0xa8] sm:$0xf]
    %v485 = vld [vmem:[#allocation5 + $0xac] sm:$0xf]
    %v486 = vld [vmem:[#allocation5 + $0xb0] sm:$0xf]
    %v487 = vld [vmem:[#allocation5 + $0xb4] sm:$0xf]
    %v488 = vld [vmem:[#allocation5 + $0xb8] sm:$0xf]
    %v489 = vld [vmem:[#allocation5 + $0xbc] sm:$0xf]
    %v490 = vld [vmem:[#allocation5 + $0xc0] sm:$0xf]
    %v491 = vld [vmem:[#allocation5 + $0xc4] sm:$0xf]
    %v492 = vld [vmem:[#allocation5 + $0xc8] sm:$0xf]
    %v493 = vld [vmem:[#allocation5 + $0xcc] sm:$0xf]
    %v494 = vld [vmem:[#allocation5 + $0xd0] sm:$0xf]
    %v495 = vld [vmem:[#allocation5 + $0xd4] sm:$0xf]
    %v496 = vld [vmem:[#allocation5 + $0xd8] sm:$0xf]
    %v497 = vld [vmem:[#allocation5 + $0xdc] sm:$0xf]
    %v498 = vld [vmem:[#allocation5 + $0xe0] sm:$0xf]
    %v499 = vld [vmem:[#allocation5 + $0xe4] sm:$0xf]
    %v500 = vld [vmem:[#allocation5 + $0xe8] sm:$0xf]
    %v501 = vld [vmem:[#allocation5 + $0xec] sm:$0xf]
    %v502 = vld [vmem:[#allocation5 + $0xf0] sm:$0xf]
    %v503 = vld [vmem:[#allocation5 + $0xf4] sm:$0xf]
    %v504 = vld [vmem:[#allocation5 + $0xf8] sm:$0xf]
    %v505 = vld [vmem:[#allocation5 + $0xfc] sm:$0xf]
    %v506 = vld [vmem:[#allocation5 + $0x100] sm:$0xf]
    %v507 = vld [vmem:[#allocation5 + $0x104] sm:$0xf]
    %v508 = vld [vmem:[#allocation5 + $0x108] sm:$0xf]
    %v509 = vld [vmem:[#allocation5 + $0x10c] sm:$0xf]
    %v510 = vld [vmem:[#allocation5 + $0x110] sm:$0xf]
    %v511 = vld [vmem:[#allocation5 + $0x114] sm:$0xf]
    %v512 = vld [vmem:[#allocation5 + $0x118] sm:$0xf]
    %v513 = vld [vmem:[#allocation5 + $0x11c] sm:$0xf]
    %v514 = vld [vmem:[#allocation5 + $0x120] sm:$0xf]
    %v515 = vld [vmem:[#allocation5 + $0x124] sm:$0xf]
    %v516 = vld [vmem:[#allocation5 + $0x128] sm:$0xf]
    %v517 = vld [vmem:[#allocation5 + $0x12c] sm:$0xf]
    %v518 = vld [vmem:[#allocation5 + $0x130] sm:$0xf]
    %v519 = vld [vmem:[#allocation5 + $0x134] sm:$0xf]
    %v520 = vld [vmem:[#allocation5 + $0x138] sm:$0xf]
    %v521 = vld [vmem:[#allocation5 + $0x13c] sm:$0xf]
    %v522 = vld [vmem:[#allocation5 + $0x140] sm:$0xf]
    %v523 = vld [vmem:[#allocation5 + $0x144] sm:$0xf]
    %v524 = vld [vmem:[#allocation5 + $0x148] sm:$0xf]
    %v525 = vld [vmem:[#allocation5 + $0x14c] sm:$0xf]
    %v526 = vld [vmem:[#allocation5 + $0x150] sm:$0xf]
    %v527 = vld [vmem:[#allocation5 + $0x154] sm:$0xf]
    %v528 = vld [vmem:[#allocation5 + $0x158] sm:$0xf]
    %v529 = vld [vmem:[#allocation5 + $0x15c] sm:$0xf]
    %v530 = vld [vmem:[#allocation5 + $0x160] sm:$0xf]
    %v531 = vld [vmem:[#allocation5 + $0x164] sm:$0xf]
    %v532 = vld [vmem:[#allocation5 + $0x168] sm:$0xf]
    %v533 = vld [vmem:[#allocation5 + $0x16c] sm:$0xf]
    %v534 = vld [vmem:[#allocation5 + $0x170] sm:$0xf]
    %v535 = vld [vmem:[#allocation5 + $0x174] sm:$0xf]
    %v536 = vld [vmem:[#allocation5 + $0x178] sm:$0xf]
    %v537 = vld [vmem:[#allocation5 + $0x17c] sm:$0xf]
    %v538 = vld [vmem:[#allocation5 + $0x180] sm:$0xf]
    %v539 = vld [vmem:[#allocation5 + $0x184] sm:$0xf]
    %v540 = vld [vmem:[#allocation5 + $0x188] sm:$0xf]
    %v541 = vld [vmem:[#allocation5 + $0x18c] sm:$0xf]
    %v542 = vld [vmem:[#allocation5 + $0x190] sm:$0xf]
    %v543 = vld [vmem:[#allocation5 + $0x194] sm:$0xf]
    %v544 = vld [vmem:[#allocation5 + $0x198] sm:$0xf]
    %v545 = vld [vmem:[#allocation5 + $0x19c] sm:$0xf]
    %v546 = vld [vmem:[#allocation5 + $0x1a0] sm:$0xf]
    %v547 = vld [vmem:[#allocation5 + $0x1a4] sm:$0xf]
    %v548 = vld [vmem:[#allocation5 + $0x1a8] sm:$0xf]
    %v549 = vld [vmem:[#allocation5 + $0x1ac] sm:$0xf]
    %v550 = vld [vmem:[#allocation5 + $0x1b0] sm:$0xf]
    %v551 = vld [vmem:[#allocation5 + $0x1b4] sm:$0xf]
    %v552 = vld [vmem:[#allocation5 + $0x1b8] sm:$0xf]
    %v553 = vld [vmem:[#allocation5 + $0x1bc] sm:$0xf]
    %v554 = vld [vmem:[#allocation5 + $0x1c0] sm:$0xf]
    %v555 = vld [vmem:[#allocation5 + $0x1c4] sm:$0xf]
    %v556 = vld [vmem:[#allocation5 + $0x1c8] sm:$0xf]
    %v557 = vld [vmem:[#allocation5 + $0x1cc] sm:$0xf]
    %v558 = vld [vmem:[#allocation5 + $0x1d0] sm:$0xf]
    %v559 = vld [vmem:[#allocation5 + $0x1d4] sm:$0xf]
    %v560 = vld [vmem:[#allocation5 + $0x1d8] sm:$0xf]
    %v561 = vld [vmem:[#allocation5 + $0x1dc] sm:$0xf]
    %v562 = vld [vmem:[#allocation5 + $0x1e0] sm:$0xf]
    %v563 = vld [vmem:[#allocation5 + $0x1e4] sm:$0xf]
    %v564 = vld [vmem:[#allocation5 + $0x1e8] sm:$0xf]
    %v565 = vld [vmem:[#allocation5 + $0x1ec] sm:$0xf]
    %v566 = vld [vmem:[#allocation5 + $0x1f0] sm:$0xf]
    %v567 = vld [vmem:[#allocation5 + $0x1f4] sm:$0xf]
    %v568 = vld [vmem:[#allocation5 + $0x1f8] sm:$0xf]
    %v569 = vld [vmem:[#allocation5 + $0x1fc] sm:$0xf]
    %v570 = vld [vmem:[#allocation7] sm:$0xf]
    %v571 = vld [vmem:[#allocation7 + $0x4] sm:$0xf]
    %v572 = vld [vmem:[#allocation7 + $0x8] sm:$0xf]
    %v573 = vld [vmem:[#allocation7 + $0xc] sm:$0xf]
    %v574 = vld [vmem:[#allocation7 + $0x10] sm:$0xf]
    %v575 = vld [vmem:[#allocation7 + $0x14] sm:$0xf]
    %v576 = vld [vmem:[#allocation7 + $0x18] sm:$0xf]
    %v577 = vld [vmem:[#allocation7 + $0x1c] sm:$0xf]
    %v578 = vld [vmem:[#allocation7 + $0x20] sm:$0xf]
    %v579 = vld [vmem:[#allocation7 + $0x24] sm:$0xf]
    %v580 = vld [vmem:[#allocation7 + $0x28] sm:$0xf]
    %v581 = vld [vmem:[#allocation7 + $0x2c] sm:$0xf]
    %v582 = vld [vmem:[#allocation7 + $0x30] sm:$0xf]
    %v583 = vld [vmem:[#allocation7 + $0x34] sm:$0xf]
    %v584 = vld [vmem:[#allocation7 + $0x38] sm:$0xf]
    %v585 = vld [vmem:[#allocation7 + $0x3c] sm:$0xf]
    %v586 = vld [vmem:[#allocation7 + $0x40] sm:$0xf]
    %v587 = vld [vmem:[#allocation7 + $0x44] sm:$0xf]
    %v588 = vld [vmem:[#allocation7 + $0x48] sm:$0xf]
    %v589 = vld [vmem:[#allocation7 + $0x4c] sm:$0xf]
    %v590 = vld [vmem:[#allocation7 + $0x50] sm:$0xf]
    %v591 = vld [vmem:[#allocation7 + $0x54] sm:$0xf]
    %v592 = vld [vmem:[#allocation7 + $0x58] sm:$0xf]
    %v593 = vld [vmem:[#allocation7 + $0x5c] sm:$0xf]
    %v594 = vld [vmem:[#allocation7 + $0x60] sm:$0xf]
    %v595 = vld [vmem:[#allocation7 + $0x64] sm:$0xf]
    %v596 = vld [vmem:[#allocation7 + $0x68] sm:$0xf]
    %v597 = vld [vmem:[#allocation7 + $0x6c] sm:$0xf]
    %v598 = vld [vmem:[#allocation7 + $0x70] sm:$0xf]
    %v599 = vld [vmem:[#allocation7 + $0x74] sm:$0xf]
    %v600 = vld [vmem:[#allocation7 + $0x78] sm:$0xf]
    %v601 = vld [vmem:[#allocation7 + $0x7c] sm:$0xf]
    %v602 = vld [vmem:[#allocation7 + $0x80] sm:$0xf]
    %v603 = vld [vmem:[#allocation7 + $0x84] sm:$0xf]
    %v604 = vld [vmem:[#allocation7 + $0x88] sm:$0xf]
    %v605 = vld [vmem:[#allocation7 + $0x8c] sm:$0xf]
    %v606 = vld [vmem:[#allocation7 + $0x90] sm:$0xf]
    %v607 = vld [vmem:[#allocation7 + $0x94] sm:$0xf]
    %v608 = vld [vmem:[#allocation7 + $0x98] sm:$0xf]
    %v609 = vld [vmem:[#allocation7 + $0x9c] sm:$0xf]
    %v610 = vld [vmem:[#allocation7 + $0xa0] sm:$0xf]
    %v611 = vld [vmem:[#allocation7 + $0xa4] sm:$0xf]
    %v612 = vld [vmem:[#allocation7 + $0xa8] sm:$0xf]
    %v613 = vld [vmem:[#allocation7 + $0xac] sm:$0xf]
    %v614 = vld [vmem:[#allocation7 + $0xb0] sm:$0xf]
    %v615 = vld [vmem:[#allocation7 + $0xb4] sm:$0xf]
    %v616 = vld [vmem:[#allocation7 + $0xb8] sm:$0xf]
    %v617 = vld [vmem:[#allocation7 + $0xbc] sm:$0xf]
    %v618 = vld [vmem:[#allocation7 + $0xc0] sm:$0xf]
    %v619 = vld [vmem:[#allocation7 + $0xc4] sm:$0xf]
    %v620 = vld [vmem:[#allocation7 + $0xc8] sm:$0xf]
    %v621 = vld [vmem:[#allocation7 + $0xcc] sm:$0xf]
    %v622 = vld [vmem:[#allocation7 + $0xd0] sm:$0xf]
    %v623 = vld [vmem:[#allocation7 + $0xd4] sm:$0xf]
    %v624 = vld [vmem:[#allocation7 + $0xd8] sm:$0xf]
    %v625 = vld [vmem:[#allocation7 + $0xdc] sm:$0xf]
    %v626 = vld [vmem:[#allocation7 + $0xe0] sm:$0xf]
    %v627 = vld [vmem:[#allocation7 + $0xe4] sm:$0xf]
    %v628 = vld [vmem:[#allocation7 + $0xe8] sm:$0xf]
    %v629 = vld [vmem:[#allocation7 + $0xec] sm:$0xf]
    %v630 = vld [vmem:[#allocation7 + $0xf0] sm:$0xf]
    %v631 = vld [vmem:[#allocation7 + $0xf4] sm:$0xf]
    %v632 = vld [vmem:[#allocation7 + $0xf8] sm:$0xf]
    %v633 = vld [vmem:[#allocation7 + $0xfc] sm:$0xf]
    %v634 = vld [vmem:[#allocation7 + $0x100] sm:$0xf]
    %v635 = vld [vmem:[#allocation7 + $0x104] sm:$0xf]
    %v636 = vld [vmem:[#allocation7 + $0x108] sm:$0xf]
    %v637 = vld [vmem:[#allocation7 + $0x10c] sm:$0xf]
    %v638 = vld [vmem:[#allocation7 + $0x110] sm:$0xf]
    %v639 = vld [vmem:[#allocation7 + $0x114] sm:$0xf]
    %v640 = vld [vmem:[#allocation7 + $0x118] sm:$0xf]
    %v641 = vld [vmem:[#allocation7 + $0x11c] sm:$0xf]
    %v642 = vld [vmem:[#allocation7 + $0x120] sm:$0xf]
    %v643 = vld [vmem:[#allocation7 + $0x124] sm:$0xf]
    %v644 = vld [vmem:[#allocation7 + $0x128] sm:$0xf]
    %v645 = vld [vmem:[#allocation7 + $0x12c] sm:$0xf]
    %v646 = vld [vmem:[#allocation7 + $0x130] sm:$0xf]
    %v647 = vld [vmem:[#allocation7 + $0x134] sm:$0xf]
    %v648 = vld [vmem:[#allocation7 + $0x138] sm:$0xf]
    %v649 = vld [vmem:[#allocation7 + $0x13c] sm:$0xf]
    %v650 = vld [vmem:[#allocation7 + $0x140] sm:$0xf]
    %v651 = vld [vmem:[#allocation7 + $0x144] sm:$0xf]
    %v652 = vld [vmem:[#allocation7 + $0x148] sm:$0xf]
    %v653 = vld [vmem:[#allocation7 + $0x14c] sm:$0xf]
    %v654 = vld [vmem:[#allocation7 + $0x150] sm:$0xf]
    %v655 = vld [vmem:[#allocation7 + $0x154] sm:$0xf]
    %v656 = vld [vmem:[#allocation7 + $0x158] sm:$0xf]
    %v657 = vld [vmem:[#allocation7 + $0x15c] sm:$0xf]
    %v658 = vld [vmem:[#allocation7 + $0x160] sm:$0xf]
    %v659 = vld [vmem:[#allocation7 + $0x164] sm:$0xf]
    %v660 = vld [vmem:[#allocation7 + $0x168] sm:$0xf]
    %v661 = vld [vmem:[#allocation7 + $0x16c] sm:$0xf]
    %v662 = vld [vmem:[#allocation7 + $0x170] sm:$0xf]
    %v663 = vld [vmem:[#allocation7 + $0x174] sm:$0xf]
    %v664 = vld [vmem:[#allocation7 + $0x178] sm:$0xf]
    %v665 = vld [vmem:[#allocation7 + $0x17c] sm:$0xf]
    %v666 = vld [vmem:[#allocation7 + $0x180] sm:$0xf]
    %v667 = vld [vmem:[#allocation7 + $0x184] sm:$0xf]
    %v668 = vld [vmem:[#allocation7 + $0x188] sm:$0xf]
    %v669 = vld [vmem:[#allocation7 + $0x18c] sm:$0xf]
    %v670 = vld [vmem:[#allocation7 + $0x190] sm:$0xf]
    %v671 = vld [vmem:[#allocation7 + $0x194] sm:$0xf]
    %v672 = vld [vmem:[#allocation7 + $0x198] sm:$0xf]
    %v673 = vld [vmem:[#allocation7 + $0x19c] sm:$0xf]
    %v674 = vld [vmem:[#allocation7 + $0x1a0] sm:$0xf]
    %v675 = vld [vmem:[#allocation7 + $0x1a4] sm:$0xf]
    %v676 = vld [vmem:[#allocation7 + $0x1a8] sm:$0xf]
    %v677 = vld [vmem:[#allocation7 + $0x1ac] sm:$0xf]
    %v678 = vld [vmem:[#allocation7 + $0x1b0] sm:$0xf]
    %v679 = vld [vmem:[#allocation7 + $0x1b4] sm:$0xf]
    %v680 = vld [vmem:[#allocation7 + $0x1b8] sm:$0xf]
    %v681 = vld [vmem:[#allocation7 + $0x1bc] sm:$0xf]
    %v682 = vld [vmem:[#allocation7 + $0x1c0] sm:$0xf]
    %v683 = vld [vmem:[#allocation7 + $0x1c4] sm:$0xf]
    %v684 = vld [vmem:[#allocation7 + $0x1c8] sm:$0xf]
    %v685 = vld [vmem:[#allocation7 + $0x1cc] sm:$0xf]
    %v686 = vld [vmem:[#allocation7 + $0x1d0] sm:$0xf]
    %v687 = vld [vmem:[#allocation7 + $0x1d4] sm:$0xf]
    %v688 = vld [vmem:[#allocation7 + $0x1d8] sm:$0xf]
    %v689 = vld [vmem:[#allocation7 + $0x1dc] sm:$0xf]
    %v690 = vld [vmem:[#allocation7 + $0x1e0] sm:$0xf]
    %v691 = vld [vmem:[#allocation7 + $0x1e4] sm:$0xf]
    %v692 = vld [vmem:[#allocation7 + $0x1e8] sm:$0xf]
    %v693 = vld [vmem:[#allocation7 + $0x1ec] sm:$0xf]
    %v694 = vld [vmem:[#allocation7 + $0x1f0] sm:$0xf]
    %v695 = vld [vmem:[#allocation7 + $0x1f4] sm:$0xf]
    %v696 = vld [vmem:[#allocation7 + $0x1f8] sm:$0xf]
    %v697 = vld [vmem:[#allocation7 + $0x1fc] sm:$0xf]
    %v826 = vunpack.c.l.b16 %v442
    %v827 = vunpack.c.l.b16 %v443
    %v828 = vunpack.c.l.b16 %v444
    %v829 = vunpack.c.l.b16 %v445
    %v830 = vunpack.c.l.b16 %v446
    %v831 = vunpack.c.l.b16 %v447
    %v832 = vunpack.c.l.b16 %v448
    %v833 = vunpack.c.l.b16 %v449
    %v834 = vunpack.c.l.b16 %v450
    %v835 = vunpack.c.l.b16 %v451
    %v836 = vunpack.c.l.b16 %v452
    %v837 = vunpack.c.l.b16 %v453
    %v838 = vunpack.c.l.b16 %v454
    %v839 = vunpack.c.l.b16 %v455
    %v840 = vunpack.c.l.b16 %v456
    %v841 = vunpack.c.l.b16 %v457
    %v842 = vunpack.c.l.b16 %v458
    %v843 = vunpack.c.l.b16 %v459
    %v844 = vunpack.c.l.b16 %v460
    %v845 = vunpack.c.l.b16 %v461
    %v846 = vunpack.c.l.b16 %v462
    %v847 = vunpack.c.l.b16 %v463
    %v848 = vunpack.c.l.b16 %v464
    %v849 = vunpack.c.l.b16 %v465
    %v850 = vunpack.c.l.b16 %v466
    %v851 = vunpack.c.l.b16 %v467
    %v852 = vunpack.c.l.b16 %v468
    %v853 = vunpack.c.l.b16 %v469
    %v854 = vunpack.c.l.b16 %v470
    %v855 = vunpack.c.l.b16 %v471
    %v856 = vunpack.c.l.b16 %v472
    %v857 = vunpack.c.l.b16 %v473
    %v858 = vunpack.c.l.b16 %v474
    %v859 = vunpack.c.l.b16 %v475
    %v860 = vunpack.c.l.b16 %v476
    %v861 = vunpack.c.l.b16 %v477
    %v862 = vunpack.c.l.b16 %v478
    %v863 = vunpack.c.l.b16 %v479
    %v864 = vunpack.c.l.b16 %v480
    %v865 = vunpack.c.l.b16 %v481
    %v866 = vunpack.c.l.b16 %v482
    %v867 = vunpack.c.l.b16 %v483
    %v868 = vunpack.c.l.b16 %v484
    %v869 = vunpack.c.l.b16 %v485
    %v870 = vunpack.c.l.b16 %v486
    %v871 = vunpack.c.l.b16 %v487
    %v872 = vunpack.c.l.b16 %v488
    %v873 = vunpack.c.l.b16 %v489
    %v874 = vunpack.c.l.b16 %v490
    %v875 = vunpack.c.l.b16 %v491
    %v876 = vunpack.c.l.b16 %v492
    %v877 = vunpack.c.l.b16 %v493
    %v878 = vunpack.c.l.b16 %v494
    %v879 = vunpack.c.l.b16 %v495
    %v880 = vunpack.c.l.b16 %v496
    %v881 = vunpack.c.l.b16 %v497
    %v882 = vunpack.c.l.b16 %v498
    %v883 = vunpack.c.l.b16 %v499
    %v884 = vunpack.c.l.b16 %v500
    %v885 = vunpack.c.l.b16 %v501
    %v886 = vunpack.c.l.b16 %v502
    %v887 = vunpack.c.l.b16 %v503
    %v888 = vunpack.c.l.b16 %v504
    %v889 = vunpack.c.l.b16 %v505
    %v890 = vunpack.c.l.b16 %v506
    %v891 = vunpack.c.l.b16 %v507
    %v892 = vunpack.c.l.b16 %v508
    %v893 = vunpack.c.l.b16 %v509
    %v894 = vunpack.c.l.b16 %v510
    %v895 = vunpack.c.l.b16 %v511
    %v896 = vunpack.c.l.b16 %v512
    %v897 = vunpack.c.l.b16 %v513
    %v898 = vunpack.c.l.b16 %v514
    %v899 = vunpack.c.l.b16 %v515
    %v900 = vunpack.c.l.b16 %v516
    %v901 = vunpack.c.l.b16 %v517
    %v902 = vunpack.c.l.b16 %v518
    %v903 = vunpack.c.l.b16 %v519
    %v904 = vunpack.c.l.b16 %v520
    %v905 = vunpack.c.l.b16 %v521
    %v906 = vunpack.c.l.b16 %v522
    %v907 = vunpack.c.l.b16 %v523
    %v908 = vunpack.c.l.b16 %v524
    %v909 = vunpack.c.l.b16 %v525
    %v910 = vunpack.c.l.b16 %v526
    %v911 = vunpack.c.l.b16 %v527
    %v912 = vunpack.c.l.b16 %v528
    %v913 = vunpack.c.l.b16 %v529
    %v914 = vunpack.c.l.b16 %v530
    %v915 = vunpack.c.l.b16 %v531
    %v916 = vunpack.c.l.b16 %v532
    %v917 = vunpack.c.l.b16 %v533
    %v918 = vunpack.c.l.b16 %v534
    %v919 = vunpack.c.l.b16 %v535
    %v920 = vunpack.c.l.b16 %v536
    %v921 = vunpack.c.l.b16 %v537
    %v922 = vunpack.c.l.b16 %v538
    %v923 = vunpack.c.l.b16 %v539
    %v924 = vunpack.c.l.b16 %v540
    %v925 = vunpack.c.l.b16 %v541
    %v926 = vunpack.c.l.b16 %v542
    %v927 = vunpack.c.l.b16 %v543
    %v928 = vunpack.c.l.b16 %v544
    %v929 = vunpack.c.l.b16 %v545
    %v930 = vunpack.c.l.b16 %v546
    %v931 = vunpack.c.l.b16 %v547
    %v932 = vunpack.c.l.b16 %v548
    %v933 = vunpack.c.l.b16 %v549
    %v934 = vunpack.c.l.b16 %v550
    %v935 = vunpack.c.l.b16 %v551
    %v936 = vunpack.c.l.b16 %v552
    %v937 = vunpack.c.l.b16 %v553
    %v938 = vunpack.c.l.b16 %v554
    %v939 = vunpack.c.l.b16 %v555
    %v940 = vunpack.c.l.b16 %v556
    %v941 = vunpack.c.l.b16 %v557
    %v942 = vunpack.c.l.b16 %v558
    %v943 = vunpack.c.l.b16 %v559
    %v944 = vunpack.c.l.b16 %v560
    %v945 = vunpack.c.l.b16 %v561
    %v946 = vunpack.c.l.b16 %v562
    %v947 = vunpack.c.l.b16 %v563
    %v948 = vunpack.c.l.b16 %v564
    %v949 = vunpack.c.l.b16 %v565
    %v950 = vunpack.c.l.b16 %v566
    %v951 = vunpack.c.l.b16 %v567
    %v952 = vunpack.c.l.b16 %v568
    %v953 = vunpack.c.l.b16 %v569
    %v954 = vpack.c.b16 %v827, %v826
    %v955 = vpack.c.b16 %v829, %v828
    %v956 = vpack.c.b16 %v831, %v830
    %v957 = vpack.c.b16 %v833, %v832
    %v958 = vpack.c.b16 %v835, %v834
    %v959 = vpack.c.b16 %v837, %v836
    %v960 = vpack.c.b16 %v839, %v838
    %v961 = vpack.c.b16 %v841, %v840
    %v962 = vpack.c.b16 %v843, %v842
    %v963 = vpack.c.b16 %v845, %v844
    %v964 = vpack.c.b16 %v847, %v846
    %v965 = vpack.c.b16 %v849, %v848
    %v966 = vpack.c.b16 %v851, %v850
    %v967 = vpack.c.b16 %v853, %v852
    %v968 = vpack.c.b16 %v855, %v854
    %v969 = vpack.c.b16 %v857, %v856
    %v970 = vpack.c.b16 %v859, %v858
    %v971 = vpack.c.b16 %v861, %v860
    %v972 = vpack.c.b16 %v863, %v862
    %v973 = vpack.c.b16 %v865, %v864
    %v974 = vpack.c.b16 %v867, %v866
    %v975 = vpack.c.b16 %v869, %v868
    %v976 = vpack.c.b16 %v871, %v870
    %v977 = vpack.c.b16 %v873, %v872
    %v978 = vpack.c.b16 %v875, %v874
    %v979 = vpack.c.b16 %v877, %v876
    %v980 = vpack.c.b16 %v879, %v878
    %v981 = vpack.c.b16 %v881, %v880
    %v982 = vpack.c.b16 %v883, %v882
    %v983 = vpack.c.b16 %v885, %v884
    %v984 = vpack.c.b16 %v887, %v886
    %v985 = vpack.c.b16 %v889, %v888
    %v986 = vpack.c.b16 %v891, %v890
    %v987 = vpack.c.b16 %v893, %v892
    %v988 = vpack.c.b16 %v895, %v894
    %v989 = vpack.c.b16 %v897, %v896
    %v990 = vpack.c.b16 %v899, %v898
    %v991 = vpack.c.b16 %v901, %v900
    %v992 = vpack.c.b16 %v903, %v902
    %v993 = vpack.c.b16 %v905, %v904
    %v994 = vpack.c.b16 %v907, %v906
    %v995 = vpack.c.b16 %v909, %v908
    %v996 = vpack.c.b16 %v911, %v910
    %v997 = vpack.c.b16 %v913, %v912
    %v998 = vpack.c.b16 %v915, %v914
    %v999 = vpack.c.b16 %v917, %v916
    %v1000 = vpack.c.b16 %v919, %v918
    %v1001 = vpack.c.b16 %v921, %v920
    %v1002 = vpack.c.b16 %v923, %v922
    %v1003 = vpack.c.b16 %v925, %v924
    %v1004 = vpack.c.b16 %v927, %v926
    %v1005 = vpack.c.b16 %v929, %v928
    %v1006 = vpack.c.b16 %v931, %v930
    %v1007 = vpack.c.b16 %v933, %v932
    %v1008 = vpack.c.b16 %v935, %v934
    %v1009 = vpack.c.b16 %v937, %v936
    %v1010 = vpack.c.b16 %v939, %v938
    %v1011 = vpack.c.b16 %v941, %v940
    %v1012 = vpack.c.b16 %v943, %v942
    %v1013 = vpack.c.b16 %v945, %v944
    %v1014 = vpack.c.b16 %v947, %v946
    %v1015 = vpack.c.b16 %v949, %v948
    %v1016 = vpack.c.b16 %v951, %v950
    %v1017 = vpack.c.b16 %v953, %v952
    %v1098 = vunpack.c.l.b16 %v99
    %v1099 = vunpack.c.l.b16 %v100
    %v1100 = vunpack.c.l.b16 %v101
    %v1101 = vunpack.c.l.b16 %v102
    %v1102 = vunpack.c.l.b16 %v103
    %v1103 = vunpack.c.l.b16 %v104
    %v1104 = vunpack.c.l.b16 %v105
    %v1105 = vunpack.c.l.b16 %v106
    %v1106 = vunpack.c.l.b16 %v107
    %v1107 = vunpack.c.l.b16 %v108
    %v1108 = vunpack.c.l.b16 %v109
    %v1109 = vunpack.c.l.b16 %v110
    %v1110 = vunpack.c.l.b16 %v111
    %v1111 = vunpack.c.l.b16 %v112
    %v1112 = vunpack.c.l.b16 %v113
    %v1113 = vunpack.c.l.b16 %v114
    %v1114 = vpack.c.b16 %v1099, %v1098
    %v1115 = vpack.c.b16 %v1101, %v1100
    %v1116 = vpack.c.b16 %v1103, %v1102
    %v1117 = vpack.c.b16 %v1105, %v1104
    %v1118 = vpack.c.b16 %v1107, %v1106
    %v1119 = vpack.c.b16 %v1109, %v1108
    %v1120 = vpack.c.b16 %v1111, %v1110
    %v1121 = vpack.c.b16 %v1113, %v1112
    %1130 = vmatprep.subr.bf16.mxu0 0
    %1131 = vmatpush1.bf16.msra.mxu0 %v1114
    %1132 = vmatprep.subr.bf16.mxu0 0
    %1133 = vmatpush1.bf16.msra.mxu0 %v1115
    %1134 = vmatprep.subr.bf16.mxu0 0
    %1135 = vmatpush1.bf16.msra.mxu0 %v1116
    %1136 = vmatprep.subr.bf16.mxu0 0
    %1137 = vmatpush1.bf16.msra.mxu0 %v1117
    %1138 = vmatprep.subr.bf16.mxu0 0
    %1139 = vmatpush1.bf16.msra.mxu0 %v1118
    %1140 = vmatprep.subr.bf16.mxu0 0
    %1141 = vmatpush1.bf16.msra.mxu0 %v1119
    %1142 = vmatprep.subr.bf16.mxu0 0
    %1143 = vmatpush1.bf16.msra.mxu0 %v1120
    %1144 = vmatprep.subr.bf16.mxu0 0
    %1145 = vmatpush1.bf16.msra.mxu0 %v1121
    %1146 = vmatprep.subr.bf16.mxu0 0
    %1147 = vmatpush1.bf16.msra.mxu0 0
    %1148 = vmatprep.subr.bf16.mxu0 0
    %1149 = vmatpush1.bf16.msra.mxu0 0
    %1150 = vmatprep.subr.bf16.mxu0 0
    %1151 = vmatpush1.bf16.msra.mxu0 0
    %1152 = vmatprep.subr.bf16.mxu0 0
    %1153 = vmatpush1.bf16.msra.mxu0 0
    %1154 = vmatprep.subr.bf16.mxu0 0
    %1155 = vmatpush1.bf16.msra.mxu0 0
    %1156 = vmatprep.subr.bf16.mxu0 0
    %1157 = vmatpush1.bf16.msra.mxu0 0
    %1158 = vmatprep.subr.bf16.mxu0 0
    %1159 = vmatpush1.bf16.msra.mxu0 0
    %1160 = vmatprep.subr.bf16.mxu0 0
    %1161 = vmatpush1.bf16.msra.mxu0 0
    %1162 = vmatprep.mubr.bf16.mxu0 0
    %1163 = vmatmul.mubr.bf16.gmra.mrb[0].mxu0 %v954
    %v1164 = vpop.f32.mrb[0].mxu0
    %v1165 = vadd.f32 0.0, %v1164
    %v1166 = vpop.f32.mrb[0].mxu0
    %v1167 = vpop.f32.mrb[0].mxu0
    %v1168 = vadd.f32 0.0, %v1167
    %v1169 = vpop.f32.mrb[0].mxu0
    %1170 = vmatprep.mubr.bf16.mxu0 0
    %1171 = vmatmul.mubr.bf16.gmra.mrb[0].mxu0 %v955
    %v1172 = vpop.f32.mrb[0].mxu0
    %v1173 = vadd.f32 0.0, %v1172
    %v1174 = vpop.f32.mrb[0].mxu0
    %v1175 = vpop.f32.mrb[0].mxu0
    %v1176 = vadd.f32 0.0, %v1175
    %v1177 = vpop.f32.mrb[0].mxu0
    %1178 = vmatprep.mubr.bf16.mxu0 0
    %1179 = vmatmul.mubr.bf16.gmra.mrb[0].mxu0 %v956
    %v1180 = vpop.f32.mrb[0].mxu0
    %v1181 = vadd.f32 0.0, %v1180
    %v1182 = vpop.f32.mrb[0].mxu0
    %v1183 = vpop.f32.mrb[0].mxu0
    %v1184 = vadd.f32 0.0, %v1183
    %v1185 = vpop.f32.mrb[0].mxu0
    %1186 = vmatprep.mubr.bf16.mxu0 0
    %1187 = vmatmul.mubr.bf16.gmra.mrb[0].mxu0 %v957
    %v1188 = vpop.f32.mrb[0].mxu0
    %v1189 = vadd.f32 0.0, %v1188
    %v1190 = vpop.f32.mrb[0].mxu0
    %v1191 = vpop.f32.mrb[0].mxu0
    %v1192 = vadd.f32 0.0, %v1191
    %v1193 = vpop.f32.mrb[0].mxu0
    %1194 = vmatprep.mubr.bf16.mxu0 0
    %1195 = vmatmul.mubr.bf16.gmra.mrb[0].mxu0 %v958
    %v1196 = vpop.f32.mrb[0].mxu0
    %v1197 = vadd.f32 0.0, %v1196
    %v1198 = vpop.f32.mrb[0].mxu0
    %v1199 = vpop.f32.mrb[0].mxu0
    %v1200 = vadd.f32 0.0, %v1199
    %v1201 = vpop.f32.mrb[0].mxu0
    %1202 = vmatprep.mubr.bf16.mxu0 0
    %1203 = vmatmul.mubr.bf16.gmra.mrb[0].mxu0 %v959
    %v1204 = vpop.f32.mrb[0].mxu0
    %v1205 = vadd.f32 0.0, %v1204
    %v1206 = vpop.f32.mrb[0].mxu0
    %v1207 = vpop.f32.mrb[0].mxu0
    %v1208 = vadd.f32 0.0, %v1207
    %v1209 = vpop.f32.mrb[0].mxu0
    %1210 = vmatprep.mubr.bf16.mxu0 0
    %1211 = vmatmul.mubr.bf16.gmra.mrb[0].mxu0 %v960
    %v1212 = vpop.f32.mrb[0].mxu0
    %v1213 = vadd.f32 0.0, %v1212
    %v1214 = vpop.f32.mrb[0].mxu0
    %v1215 = vpop.f32.mrb[0].mxu0
    %v1216 = vadd.f32 0.0, %v1215
    %v1217 = vpop.f32.mrb[0].mxu0
    %1218 = vmatprep.mubr.bf16.mxu0 0
    %1219 = vmatmul.mubr.bf16.gmra.mrb[0].mxu0 %v961
    %v1220 = vpop.f32.mrb[0].mxu0
    %v1221 = vadd.f32 0.0, %v1220
    %v1222 = vpop.f32.mrb[0].mxu0
    %v1223 = vpop.f32.mrb[0].mxu0
    %v1224 = vadd.f32 0.0, %v1223
    %v1225 = vpop.f32.mrb[0].mxu0
    %1226 = vmatprep.mubr.bf16.mxu0 0
    %1227 = vmatmul.mubr.bf16.gmra.mrb[0].mxu0 %v962
    %v1228 = vpop.f32.mrb[0].mxu0
    %v1229 = vadd.f32 0.0, %v1228
    %v1230 = vpop.f32.mrb[0].mxu0
    %v1231 = vpop.f32.mrb[0].mxu0
    %v1232 = vadd.f32 0.0, %v1231
    %v1233 = vpop.f32.mrb[0].mxu0
    %1234 = vmatprep.mubr.bf16.mxu0 0
    %1235 = vmatmul.mubr.bf16.gmra.mrb[0].mxu0 %v963
    %v1236 = vpop.f32.mrb[0].mxu0
    %v1237 = vadd.f32 0.0, %v1236
    %v1238 = vpop.f32.mrb[0].mxu0
    %v1239 = vpop.f32.mrb[0].mxu0
    %v1240 = vadd.f32 0.0, %v1239
    %v1241 = vpop.f32.mrb[0].mxu0
    %1242 = vmatprep.mubr.bf16.mxu0 0
    %1243 = vmatmul.mubr.bf16.gmra.mrb[0].mxu0 %v964
    %v1244 = vpop.f32.mrb[0].mxu0
    %v1245 = vadd.f32 0.0, %v1244
    %v1246 = vpop.f32.mrb[0].mxu0
    %v1247 = vpop.f32.mrb[0].mxu0
    %v1248 = vadd.f32 0.0, %v1247
    %v1249 = vpop.f32.mrb[0].mxu0
    %1250 = vmatprep.mubr.bf16.mxu0 0
    %1251 = vmatmul.mubr.bf16.gmra.mrb[0].mxu0 %v965
    %v1252 = vpop.f32.mrb[0].mxu0
    %v1253 = vadd.f32 0.0, %v1252
    %v1254 = vpop.f32.mrb[0].mxu0
    %v1255 = vpop.f32.mrb[0].mxu0
    %v1256 = vadd.f32 0.0, %v1255
    %v1257 = vpop.f32.mrb[0].mxu0
    %1258 = vmatprep.mubr.bf16.mxu0 0
    %1259 = vmatmul.mubr.bf16.gmra.mrb[0].mxu0 %v966
    %v1260 = vpop.f32.mrb[0].mxu0
    %v1261 = vadd.f32 0.0, %v1260
    %v1262 = vpop.f32.mrb[0].mxu0
    %v1263 = vpop.f32.mrb[0].mxu0
    %v1264 = vadd.f32 0.0, %v1263
    %v1265 = vpop.f32.mrb[0].mxu0
    %1266 = vmatprep.mubr.bf16.mxu0 0
    %1267 = vmatmul.mubr.bf16.gmra.mrb[0].mxu0 %v967
    %v1268 = vpop.f32.mrb[0].mxu0
    %v1269 = vadd.f32 0.0, %v1268
    %v1270 = vpop.f32.mrb[0].mxu0
    %v1271 = vpop.f32.mrb[0].mxu0
    %v1272 = vadd.f32 0.0, %v1271
    %v1273 = vpop.f32.mrb[0].mxu0
    %1274 = vmatprep.mubr.bf16.mxu0 0
    %1275 = vmatmul.mubr.bf16.gmra.mrb[0].mxu0 %v968
    %v1276 = vpop.f32.mrb[0].mxu0
    %v1277 = vadd.f32 0.0, %v1276
    %v1278 = vpop.f32.mrb[0].mxu0
    %v1279 = vpop.f32.mrb[0].mxu0
    %v1280 = vadd.f32 0.0, %v1279
    %v1281 = vpop.f32.mrb[0].mxu0
    %1282 = vmatprep.mubr.bf16.mxu0 0
    %1283 = vmatmul.mubr.bf16.gmra.mrb[0].mxu0 %v969
    %v1284 = vpop.f32.mrb[0].mxu0
    %v1285 = vadd.f32 0.0, %v1284
    %v1286 = vpop.f32.mrb[0].mxu0
    %v1287 = vpop.f32.mrb[0].mxu0
    %v1288 = vadd.f32 0.0, %v1287
    %v1289 = vpop.f32.mrb[0].mxu0
    %1290 = vmatprep.mubr.bf16.mxu0 0
    %1291 = vmatmul.mubr.bf16.gmra.mrb[0].mxu0 %v970
    %v1292 = vpop.f32.mrb[0].mxu0
    %v1293 = vadd.f32 0.0, %v1292
    %v1294 = vpop.f32.mrb[0].mxu0
    %v1295 = vpop.f32.mrb[0].mxu0
    %v1296 = vadd.f32 0.0, %v1295
    %v1297 = vpop.f32.mrb[0].mxu0
    %1298 = vmatprep.mubr.bf16.mxu0 0
    %1299 = vmatmul.mubr.bf16.gmra.mrb[0].mxu0 %v971
    %v1300 = vpop.f32.mrb[0].mxu0
    %v1301 = vadd.f32 0.0, %v1300
    %v1302 = vpop.f32.mrb[0].mxu0
    %v1303 = vpop.f32.mrb[0].mxu0
    %v1304 = vadd.f32 0.0, %v1303
    %v1305 = vpop.f32.mrb[0].mxu0
    %1306 = vmatprep.mubr.bf16.mxu0 0
    %1307 = vmatmul.mubr.bf16.gmra.mrb[0].mxu0 %v972
    %v1308 = vpop.f32.mrb[0].mxu0
    %v1309 = vadd.f32 0.0, %v1308
    %v1310 = vpop.f32.mrb[0].mxu0
    %v1311 = vpop.f32.mrb[0].mxu0
    %v1312 = vadd.f32 0.0, %v1311
    %v1313 = vpop.f32.mrb[0].mxu0
    %1314 = vmatprep.mubr.bf16.mxu0 0
    %1315 = vmatmul.mubr.bf16.gmra.mrb[0].mxu0 %v973
    %v1316 = vpop.f32.mrb[0].mxu0
    %v1317 = vadd.f32 0.0, %v1316
    %v1318 = vpop.f32.mrb[0].mxu0
    %v1319 = vpop.f32.mrb[0].mxu0
    %v1320 = vadd.f32 0.0, %v1319
    %v1321 = vpop.f32.mrb[0].mxu0
    %1322 = vmatprep.mubr.bf16.mxu0 0
    %1323 = vmatmul.mubr.bf16.gmra.mrb[0].mxu0 %v974
    %v1324 = vpop.f32.mrb[0].mxu0
    %v1325 = vadd.f32 0.0, %v1324
    %v1326 = vpop.f32.mrb[0].mxu0
    %v1327 = vpop.f32.mrb[0].mxu0
    %v1328 = vadd.f32 0.0, %v1327
    %v1329 = vpop.f32.mrb[0].mxu0
    %1330 = vmatprep.mubr.bf16.mxu0 0
    %1331 = vmatmul.mubr.bf16.gmra.mrb[0].mxu0 %v975
    %v1332 = vpop.f32.mrb[0].mxu0
    %v1333 = vadd.f32 0.0, %v1332
    %v1334 = vpop.f32.mrb[0].mxu0
    %v1335 = vpop.f32.mrb[0].mxu0
    %v1336 = vadd.f32 0.0, %v1335
    %v1337 = vpop.f32.mrb[0].mxu0
    %1338 = vmatprep.mubr.bf16.mxu0 0
    %1339 = vmatmul.mubr.bf16.gmra.mrb[0].mxu0 %v976
    %v1340 = vpop.f32.mrb[0].mxu0
    %v1341 = vadd.f32 0.0, %v1340
    %v1342 = vpop.f32.mrb[0].mxu0
    %v1343 = vpop.f32.mrb[0].mxu0
    %v1344 = vadd.f32 0.0, %v1343
    %v1345 = vpop.f32.mrb[0].mxu0
    %1346 = vmatprep.mubr.bf16.mxu0 0
    %1347 = vmatmul.mubr.bf16.gmra.mrb[0].mxu0 %v977
    %v1348 = vpop.f32.mrb[0].mxu0
    %v1349 = vadd.f32 0.0, %v1348
    %v1350 = vpop.f32.mrb[0].mxu0
    %v1351 = vpop.f32.mrb[0].mxu0
    %v1352 = vadd.f32 0.0, %v1351
    %v1353 = vpop.f32.mrb[0].mxu0
    %1354 = vmatprep.mubr.bf16.mxu0 0
    %1355 = vmatmul.mubr.bf16.gmra.mrb[0].mxu0 %v978
    %v1356 = vpop.f32.mrb[0].mxu0
    %v1357 = vadd.f32 0.0, %v1356
    %v1358 = vpop.f32.mrb[0].mxu0
    %v1359 = vpop.f32.mrb[0].mxu0
    %v1360 = vadd.f32 0.0, %v1359
    %v1361 = vpop.f32.mrb[0].mxu0
    %1362 = vmatprep.mubr.bf16.mxu0 0
    %1363 = vmatmul.mubr.bf16.gmra.mrb[0].mxu0 %v979
    %v1364 = vpop.f32.mrb[0].mxu0
    %v1365 = vadd.f32 0.0, %v1364
    %v1366 = vpop.f32.mrb[0].mxu0
    %v1367 = vpop.f32.mrb[0].mxu0
    %v1368 = vadd.f32 0.0, %v1367
    %v1369 = vpop.f32.mrb[0].mxu0
    %1370 = vmatprep.mubr.bf16.mxu0 0
    %1371 = vmatmul.mubr.bf16.gmra.mrb[0].mxu0 %v980
    %v1372 = vpop.f32.mrb[0].mxu0
    %v1373 = vadd.f32 0.0, %v1372
    %v1374 = vpop.f32.mrb[0].mxu0
    %v1375 = vpop.f32.mrb[0].mxu0
    %v1376 = vadd.f32 0.0, %v1375
    %v1377 = vpop.f32.mrb[0].mxu0
    %1378 = vmatprep.mubr.bf16.mxu0 0
    %1379 = vmatmul.mubr.bf16.gmra.mrb[0].mxu0 %v981
    %v1380 = vpop.f32.mrb[0].mxu0
    %v1381 = vadd.f32 0.0, %v1380
    %v1382 = vpop.f32.mrb[0].mxu0
    %v1383 = vpop.f32.mrb[0].mxu0
    %v1384 = vadd.f32 0.0, %v1383
    %v1385 = vpop.f32.mrb[0].mxu0
    %1386 = vmatprep.mubr.bf16.mxu0 0
    %1387 = vmatmul.mubr.bf16.gmra.mrb[0].mxu0 %v982
    %v1388 = vpop.f32.mrb[0].mxu0
    %v1389 = vadd.f32 0.0, %v1388
    %v1390 = vpop.f32.mrb[0].mxu0
    %v1391 = vpop.f32.mrb[0].mxu0
    %v1392 = vadd.f32 0.0, %v1391
    %v1393 = vpop.f32.mrb[0].mxu0
    %1394 = vmatprep.mubr.bf16.mxu0 0
    %1395 = vmatmul.mubr.bf16.gmra.mrb[0].mxu0 %v983
    %v1396 = vpop.f32.mrb[0].mxu0
    %v1397 = vadd.f32 0.0, %v1396
    %v1398 = vpop.f32.mrb[0].mxu0
    %v1399 = vpop.f32.mrb[0].mxu0
    %v1400 = vadd.f32 0.0, %v1399
    %v1401 = vpop.f32.mrb[0].mxu0
    %1402 = vmatprep.mubr.bf16.mxu0 0
    %1403 = vmatmul.mubr.bf16.gmra.mrb[0].mxu0 %v984
    %v1404 = vpop.f32.mrb[0].mxu0
    %v1405 = vadd.f32 0.0, %v1404
    %v1406 = vpop.f32.mrb[0].mxu0
    %v1407 = vpop.f32.mrb[0].mxu0
    %v1408 = vadd.f32 0.0, %v1407
    %v1409 = vpop.f32.mrb[0].mxu0
    %1410 = vmatprep.mubr.bf16.mxu0 0
    %1411 = vmatmul.mubr.bf16.gmra.mrb[0].mxu0 %v985
    %v1412 = vpop.f32.mrb[0].mxu0
    %v1413 = vadd.f32 0.0, %v1412
    %v1414 = vpop.f32.mrb[0].mxu0
    %v1415 = vpop.f32.mrb[0].mxu0
    %v1416 = vadd.f32 0.0, %v1415
    %v1417 = vpop.f32.mrb[0].mxu0
    %1418 = vmatprep.mubr.bf16.mxu0 0
    %1419 = vmatmul.mubr.bf16.gmra.mrb[0].mxu0 %v986
    %v1420 = vpop.f32.mrb[0].mxu0
    %v1421 = vadd.f32 0.0, %v1420
    %v1422 = vpop.f32.mrb[0].mxu0
    %v1423 = vpop.f32.mrb[0].mxu0
    %v1424 = vadd.f32 0.0, %v1423
    %v1425 = vpop.f32.mrb[0].mxu0
    %1426 = vmatprep.mubr.bf16.mxu0 0
    %1427 = vmatmul.mubr.bf16.gmra.mrb[0].mxu0 %v987
    %v1428 = vpop.f32.mrb[0].mxu0
    %v1429 = vadd.f32 0.0, %v1428
    %v1430 = vpop.f32.mrb[0].mxu0
    %v1431 = vpop.f32.mrb[0].mxu0
    %v1432 = vadd.f32 0.0, %v1431
    %v1433 = vpop.f32.mrb[0].mxu0
    %1434 = vmatprep.mubr.bf16.mxu0 0
    %1435 = vmatmul.mubr.bf16.gmra.mrb[0].mxu0 %v988
    %v1436 = vpop.f32.mrb[0].mxu0
    %v1437 = vadd.f32 0.0, %v1436
    %v1438 = vpop.f32.mrb[0].mxu0
    %v1439 = vpop.f32.mrb[0].mxu0
    %v1440 = vadd.f32 0.0, %v1439
    %v1441 = vpop.f32.mrb[0].mxu0
    %1442 = vmatprep.mubr.bf16.mxu0 0
    %1443 = vmatmul.mubr.bf16.gmra.mrb[0].mxu0 %v989
    %v1444 = vpop.f32.mrb[0].mxu0
    %v1445 = vadd.f32 0.0, %v1444
    %v1446 = vpop.f32.mrb[0].mxu0
    %v1447 = vpop.f32.mrb[0].mxu0
    %v1448 = vadd.f32 0.0, %v1447
    %v1449 = vpop.f32.mrb[0].mxu0
    %1450 = vmatprep.mubr.bf16.mxu0 0
    %1451 = vmatmul.mubr.bf16.gmra.mrb[0].mxu0 %v990
    %v1452 = vpop.f32.mrb[0].mxu0
    %v1453 = vadd.f32 0.0, %v1452
    %v1454 = vpop.f32.mrb[0].mxu0
    %v1455 = vpop.f32.mrb[0].mxu0
    %v1456 = vadd.f32 0.0, %v1455
    %v1457 = vpop.f32.mrb[0].mxu0
    %1458 = vmatprep.mubr.bf16.mxu0 0
    %1459 = vmatmul.mubr.bf16.gmra.mrb[0].mxu0 %v991
    %v1460 = vpop.f32.mrb[0].mxu0
    %v1461 = vadd.f32 0.0, %v1460
    %v1462 = vpop.f32.mrb[0].mxu0
    %v1463 = vpop.f32.mrb[0].mxu0
    %v1464 = vadd.f32 0.0, %v1463
    %v1465 = vpop.f32.mrb[0].mxu0
    %1466 = vmatprep.mubr.bf16.mxu0 0
    %1467 = vmatmul.mubr.bf16.gmra.mrb[0].mxu0 %v992
    %v1468 = vpop.f32.mrb[0].mxu0
    %v1469 = vadd.f32 0.0, %v1468
    %v1470 = vpop.f32.mrb[0].mxu0
    %v1471 = vpop.f32.mrb[0].mxu0
    %v1472 = vadd.f32 0.0, %v1471
    %v1473 = vpop.f32.mrb[0].mxu0
    %1474 = vmatprep.mubr.bf16.mxu0 0
    %1475 = vmatmul.mubr.bf16.gmra.mrb[0].mxu0 %v993
    %v1476 = vpop.f32.mrb[0].mxu0
    %v1477 = vadd.f32 0.0, %v1476
    %v1478 = vpop.f32.mrb[0].mxu0
    %v1479 = vpop.f32.mrb[0].mxu0
    %v1480 = vadd.f32 0.0, %v1479
    %v1481 = vpop.f32.mrb[0].mxu0
    %1482 = vmatprep.mubr.bf16.mxu0 0
    %1483 = vmatmul.mubr.bf16.gmra.mrb[0].mxu0 %v994
    %v1484 = vpop.f32.mrb[0].mxu0
    %v1485 = vadd.f32 0.0, %v1484
    %v1486 = vpop.f32.mrb[0].mxu0
    %v1487 = vpop.f32.mrb[0].mxu0
    %v1488 = vadd.f32 0.0, %v1487
    %v1489 = vpop.f32.mrb[0].mxu0
    %1490 = vmatprep.mubr.bf16.mxu0 0
    %1491 = vmatmul.mubr.bf16.gmra.mrb[0].mxu0 %v995
    %v1492 = vpop.f32.mrb[0].mxu0
    %v1493 = vadd.f32 0.0, %v1492
    %v1494 = vpop.f32.mrb[0].mxu0
    %v1495 = vpop.f32.mrb[0].mxu0
    %v1496 = vadd.f32 0.0, %v1495
    %v1497 = vpop.f32.mrb[0].mxu0
    %1498 = vmatprep.mubr.bf16.mxu0 0
    %1499 = vmatmul.mubr.bf16.gmra.mrb[0].mxu0 %v996
    %v1500 = vpop.f32.mrb[0].mxu0
    %v1501 = vadd.f32 0.0, %v1500
    %v1502 = vpop.f32.mrb[0].mxu0
    %v1503 = vpop.f32.mrb[0].mxu0
    %v1504 = vadd.f32 0.0, %v1503
    %v1505 = vpop.f32.mrb[0].mxu0
    %1506 = vmatprep.mubr.bf16.mxu0 0
    %1507 = vmatmul.mubr.bf16.gmra.mrb[0].mxu0 %v997
    %v1508 = vpop.f32.mrb[0].mxu0
    %v1509 = vadd.f32 0.0, %v1508
    %v1510 = vpop.f32.mrb[0].mxu0
    %v1511 = vpop.f32.mrb[0].mxu0
    %v1512 = vadd.f32 0.0, %v1511
    %v1513 = vpop.f32.mrb[0].mxu0
    %1514 = vmatprep.mubr.bf16.mxu0 0
    %1515 = vmatmul.mubr.bf16.gmra.mrb[0].mxu0 %v998
    %v1516 = vpop.f32.mrb[0].mxu0
    %v1517 = vadd.f32 0.0, %v1516
    %v1518 = vpop.f32.mrb[0].mxu0
    %v1519 = vpop.f32.mrb[0].mxu0
    %v1520 = vadd.f32 0.0, %v1519
    %v1521 = vpop.f32.mrb[0].mxu0
    %1522 = vmatprep.mubr.bf16.mxu0 0
    %1523 = vmatmul.mubr.bf16.gmra.mrb[0].mxu0 %v999
    %v1524 = vpop.f32.mrb[0].mxu0
    %v1525 = vadd.f32 0.0, %v1524
    %v1526 = vpop.f32.mrb[0].mxu0
    %v1527 = vpop.f32.mrb[0].mxu0
    %v1528 = vadd.f32 0.0, %v1527
    %v1529 = vpop.f32.mrb[0].mxu0
    %1530 = vmatprep.mubr.bf16.mxu0 0
    %1531 = vmatmul.mubr.bf16.gmra.mrb[0].mxu0 %v1000
    %v1532 = vpop.f32.mrb[0].mxu0
    %v1533 = vadd.f32 0.0, %v1532
    %v1534 = vpop.f32.mrb[0].mxu0
    %v1535 = vpop.f32.mrb[0].mxu0
    %v1536 = vadd.f32 0.0, %v1535
    %v1537 = vpop.f32.mrb[0].mxu0
    %1538 = vmatprep.mubr.bf16.mxu0 0
    %1539 = vmatmul.mubr.bf16.gmra.mrb[0].mxu0 %v1001
    %v1540 = vpop.f32.mrb[0].mxu0
    %v1541 = vadd.f32 0.0, %v1540
    %v1542 = vpop.f32.mrb[0].mxu0
    %v1543 = vpop.f32.mrb[0].mxu0
    %v1544 = vadd.f32 0.0, %v1543
    %v1545 = vpop.f32.mrb[0].mxu0
    %1546 = vmatprep.mubr.bf16.mxu0 0
    %1547 = vmatmul.mubr.bf16.gmra.mrb[0].mxu0 %v1002
    %v1548 = vpop.f32.mrb[0].mxu0
    %v1549 = vadd.f32 0.0, %v1548
    %v1550 = vpop.f32.mrb[0].mxu0
    %v1551 = vpop.f32.mrb[0].mxu0
    %v1552 = vadd.f32 0.0, %v1551
    %v1553 = vpop.f32.mrb[0].mxu0
    %1554 = vmatprep.mubr.bf16.mxu0 0
    %1555 = vmatmul.mubr.bf16.gmra.mrb[0].mxu0 %v1003
    %v1556 = vpop.f32.mrb[0].mxu0
    %v1557 = vadd.f32 0.0, %v1556
    %v1558 = vpop.f32.mrb[0].mxu0
    %v1559 = vpop.f32.mrb[0].mxu0
    %v1560 = vadd.f32 0.0, %v1559
    %v1561 = vpop.f32.mrb[0].mxu0
    %1562 = vmatprep.mubr.bf16.mxu0 0
    %1563 = vmatmul.mubr.bf16.gmra.mrb[0].mxu0 %v1004
    %v1564 = vpop.f32.mrb[0].mxu0
    %v1565 = vadd.f32 0.0, %v1564
    %v1566 = vpop.f32.mrb[0].mxu0
    %v1567 = vpop.f32.mrb[0].mxu0
    %v1568 = vadd.f32 0.0, %v1567
    %v1569 = vpop.f32.mrb[0].mxu0
    %1570 = vmatprep.mubr.bf16.mxu0 0
    %1571 = vmatmul.mubr.bf16.gmra.mrb[0].mxu0 %v1005
    %v1572 = vpop.f32.mrb[0].mxu0
    %v1573 = vadd.f32 0.0, %v1572
    %v1574 = vpop.f32.mrb[0].mxu0
    %v1575 = vpop.f32.mrb[0].mxu0
    %v1576 = vadd.f32 0.0, %v1575
    %v1577 = vpop.f32.mrb[0].mxu0
    %1578 = vmatprep.mubr.bf16.mxu0 0
    %1579 = vmatmul.mubr.bf16.gmra.mrb[0].mxu0 %v1006
    %v1580 = vpop.f32.mrb[0].mxu0
    %v1581 = vadd.f32 0.0, %v1580
    %v1582 = vpop.f32.mrb[0].mxu0
    %v1583 = vpop.f32.mrb[0].mxu0
    %v1584 = vadd.f32 0.0, %v1583
    %v1585 = vpop.f32.mrb[0].mxu0
    %1586 = vmatprep.mubr.bf16.mxu0 0
    %1587 = vmatmul.mubr.bf16.gmra.mrb[0].mxu0 %v1007
    %v1588 = vpop.f32.mrb[0].mxu0
    %v1589 = vadd.f32 0.0, %v1588
    %v1590 = vpop.f32.mrb[0].mxu0
    %v1591 = vpop.f32.mrb[0].mxu0
    %v1592 = vadd.f32 0.0, %v1591
    %v1593 = vpop.f32.mrb[0].mxu0
    %1594 = vmatprep.mubr.bf16.mxu0 0
    %1595 = vmatmul.mubr.bf16.gmra.mrb[0].mxu0 %v1008
    %v1596 = vpop.f32.mrb[0].mxu0
    %v1597 = vadd.f32 0.0, %v1596
    %v1598 = vpop.f32.mrb[0].mxu0
    %v1599 = vpop.f32.mrb[0].mxu0
    %v1600 = vadd.f32 0.0, %v1599
    %v1601 = vpop.f32.mrb[0].mxu0
    %1602 = vmatprep.mubr.bf16.mxu0 0
    %1603 = vmatmul.mubr.bf16.gmra.mrb[0].mxu0 %v1009
    %v1604 = vpop.f32.mrb[0].mxu0
    %v1605 = vadd.f32 0.0, %v1604
    %v1606 = vpop.f32.mrb[0].mxu0
    %v1607 = vpop.f32.mrb[0].mxu0
    %v1608 = vadd.f32 0.0, %v1607
    %v1609 = vpop.f32.mrb[0].mxu0
    %1610 = vmatprep.mubr.bf16.mxu0 0
    %1611 = vmatmul.mubr.bf16.gmra.mrb[0].mxu0 %v1010
    %v1612 = vpop.f32.mrb[0].mxu0
    %v1613 = vadd.f32 0.0, %v1612
    %v1614 = vpop.f32.mrb[0].mxu0
    %v1615 = vpop.f32.mrb[0].mxu0
    %v1616 = vadd.f32 0.0, %v1615
    %v1617 = vpop.f32.mrb[0].mxu0
    %1618 = vmatprep.mubr.bf16.mxu0 0
    %1619 = vmatmul.mubr.bf16.gmra.mrb[0].mxu0 %v1011
    %v1620 = vpop.f32.mrb[0].mxu0
    %v1621 = vadd.f32 0.0, %v1620
    %v1622 = vpop.f32.mrb[0].mxu0
    %v1623 = vpop.f32.mrb[0].mxu0
    %v1624 = vadd.f32 0.0, %v1623
    %v1625 = vpop.f32.mrb[0].mxu0
    %1626 = vmatprep.mubr.bf16.mxu0 0
    %1627 = vmatmul.mubr.bf16.gmra.mrb[0].mxu0 %v1012
    %v1628 = vpop.f32.mrb[0].mxu0
    %v1629 = vadd.f32 0.0, %v1628
    %v1630 = vpop.f32.mrb[0].mxu0
    %v1631 = vpop.f32.mrb[0].mxu0
    %v1632 = vadd.f32 0.0, %v1631
    %v1633 = vpop.f32.mrb[0].mxu0
    %1634 = vmatprep.mubr.bf16.mxu0 0
    %1635 = vmatmul.mubr.bf16.gmra.mrb[0].mxu0 %v1013
    %v1636 = vpop.f32.mrb[0].mxu0
    %v1637 = vadd.f32 0.0, %v1636
    %v1638 = vpop.f32.mrb[0].mxu0
    %v1639 = vpop.f32.mrb[0].mxu0
    %v1640 = vadd.f32 0.0, %v1639
    %v1641 = vpop.f32.mrb[0].mxu0
    %1642 = vmatprep.mubr.bf16.mxu0 0
    %1643 = vmatmul.mubr.bf16.gmra.mrb[0].mxu0 %v1014
    %v1644 = vpop.f32.mrb[0].mxu0
    %v1645 = vadd.f32 0.0, %v1644
    %v1646 = vpop.f32.mrb[0].mxu0
    %v1647 = vpop.f32.mrb[0].mxu0
    %v1648 = vadd.f32 0.0, %v1647
    %v1649 = vpop.f32.mrb[0].mxu0
    %1650 = vmatprep.mubr.bf16.mxu0 0
    %1651 = vmatmul.mubr.bf16.gmra.mrb[0].mxu0 %v1015
    %v1652 = vpop.f32.mrb[0].mxu0
    %v1653 = vadd.f32 0.0, %v1652
    %v1654 = vpop.f32.mrb[0].mxu0
    %v1655 = vpop.f32.mrb[0].mxu0
    %v1656 = vadd.f32 0.0, %v1655
    %v1657 = vpop.f32.mrb[0].mxu0
    %1658 = vmatprep.mubr.bf16.mxu0 0
    %1659 = vmatmul.mubr.bf16.gmra.mrb[0].mxu0 %v1016
    %v1660 = vpop.f32.mrb[0].mxu0
    %v1661 = vadd.f32 0.0, %v1660
    %v1662 = vpop.f32.mrb[0].mxu0
    %v1663 = vpop.f32.mrb[0].mxu0
    %v1664 = vadd.f32 0.0, %v1663
    %v1665 = vpop.f32.mrb[0].mxu0
    %1666 = vmatprep.mubr.bf16.mxu0 0
    %1667 = vmatmul.mubr.bf16.gmra.mrb[0].mxu0 %v1017
    %v1668 = vpop.f32.mrb[0].mxu0
    %v1669 = vadd.f32 0.0, %v1668
    %v1670 = vpop.f32.mrb[0].mxu0
    %v1671 = vpop.f32.mrb[0].mxu0
    %v1672 = vadd.f32 0.0, %v1671
    %v1673 = vpop.f32.mrb[0].mxu0
    %1674 = vdwg.mxu0
    %v1803 = vunpack.c.l.b16 %v570
    %v1804 = vunpack.c.l.b16 %v571
    %v1805 = vunpack.c.l.b16 %v572
    %v1806 = vunpack.c.l.b16 %v573
    %v1807 = vunpack.c.l.b16 %v574
    %v1808 = vunpack.c.l.b16 %v575
    %v1809 = vunpack.c.l.b16 %v576
    %v1810 = vunpack.c.l.b16 %v577
    %v1811 = vunpack.c.l.b16 %v578
    %v1812 = vunpack.c.l.b16 %v579
    %v1813 = vunpack.c.l.b16 %v580
    %v1814 = vunpack.c.l.b16 %v581
    %v1815 = vunpack.c.l.b16 %v582
    %v1816 = vunpack.c.l.b16 %v583
    %v1817 = vunpack.c.l.b16 %v584
    %v1818 = vunpack.c.l.b16 %v585
    %v1819 = vunpack.c.l.b16 %v586
    %v1820 = vunpack.c.l.b16 %v587
    %v1821 = vunpack.c.l.b16 %v588
    %v1822 = vunpack.c.l.b16 %v589
    %v1823 = vunpack.c.l.b16 %v590
    %v1824 = vunpack.c.l.b16 %v591
    %v1825 = vunpack.c.l.b16 %v592
    %v1826 = vunpack.c.l.b16 %v593
    %v1827 = vunpack.c.l.b16 %v594
    %v1828 = vunpack.c.l.b16 %v595
    %v1829 = vunpack.c.l.b16 %v596
    %v1830 = vunpack.c.l.b16 %v597
    %v1831 = vunpack.c.l.b16 %v598
    %v1832 = vunpack.c.l.b16 %v599
    %v1833 = vunpack.c.l.b16 %v600
    %v1834 = vunpack.c.l.b16 %v601
    %v1835 = vunpack.c.l.b16 %v602
    %v1836 = vunpack.c.l.b16 %v603
    %v1837 = vunpack.c.l.b16 %v604
    %v1838 = vunpack.c.l.b16 %v605
    %v1839 = vunpack.c.l.b16 %v606
    %v1840 = vunpack.c.l.b16 %v607
    %v1841 = vunpack.c.l.b16 %v608
    %v1842 = vunpack.c.l.b16 %v609
    %v1843 = vunpack.c.l.b16 %v610
    %v1844 = vunpack.c.l.b16 %v611
    %v1845 = vunpack.c.l.b16 %v612
    %v1846 = vunpack.c.l.b16 %v613
    %v1847 = vunpack.c.l.b16 %v614
    %v1848 = vunpack.c.l.b16 %v615
    %v1849 = vunpack.c.l.b16 %v616
    %v1850 = vunpack.c.l.b16 %v617
    %v1851 = vunpack.c.l.b16 %v618
    %v1852 = vunpack.c.l.b16 %v619
    %v1853 = vunpack.c.l.b16 %v620
    %v1854 = vunpack.c.l.b16 %v621
    %v1855 = vunpack.c.l.b16 %v622
    %v1856 = vunpack.c.l.b16 %v623
    %v1857 = vunpack.c.l.b16 %v624
    %v1858 = vunpack.c.l.b16 %v625
    %v1859 = vunpack.c.l.b16 %v626
    %v1860 = vunpack.c.l.b16 %v627
    %v1861 = vunpack.c.l.b16 %v628
    %v1862 = vunpack.c.l.b16 %v629
    %v1863 = vunpack.c.l.b16 %v630
    %v1864 = vunpack.c.l.b16 %v631
    %v1865 = vunpack.c.l.b16 %v632
    %v1866 = vunpack.c.l.b16 %v633
    %v1867 = vunpack.c.l.b16 %v634
    %v1868 = vunpack.c.l.b16 %v635
    %v1869 = vunpack.c.l.b16 %v636
    %v1870 = vunpack.c.l.b16 %v637
    %v1871 = vunpack.c.l.b16 %v638
    %v1872 = vunpack.c.l.b16 %v639
    %v1873 = vunpack.c.l.b16 %v640
    %v1874 = vunpack.c.l.b16 %v641
    %v1875 = vunpack.c.l.b16 %v642
    %v1876 = vunpack.c.l.b16 %v643
    %v1877 = vunpack.c.l.b16 %v644
    %v1878 = vunpack.c.l.b16 %v645
    %v1879 = vunpack.c.l.b16 %v646
    %v1880 = vunpack.c.l.b16 %v647
    %v1881 = vunpack.c.l.b16 %v648
    %v1882 = vunpack.c.l.b16 %v649
    %v1883 = vunpack.c.l.b16 %v650
    %v1884 = vunpack.c.l.b16 %v651
    %v1885 = vunpack.c.l.b16 %v652
    %v1886 = vunpack.c.l.b16 %v653
    %v1887 = vunpack.c.l.b16 %v654
    %v1888 = vunpack.c.l.b16 %v655
    %v1889 = vunpack.c.l.b16 %v656
    %v1890 = vunpack.c.l.b16 %v657
    %v1891 = vunpack.c.l.b16 %v658
    %v1892 = vunpack.c.l.b16 %v659
    %v1893 = vunpack.c.l.b16 %v660
    %v1894 = vunpack.c.l.b16 %v661
    %v1895 = vunpack.c.l.b16 %v662
    %v1896 = vunpack.c.l.b16 %v663
    %v1897 = vunpack.c.l.b16 %v664
    %v1898 = vunpack.c.l.b16 %v665
    %v1899 = vunpack.c.l.b16 %v666
    %v1900 = vunpack.c.l.b16 %v667
    %v1901 = vunpack.c.l.b16 %v668
    %v1902 = vunpack.c.l.b16 %v669
    %v1903 = vunpack.c.l.b16 %v670
    %v1904 = vunpack.c.l.b16 %v671
    %v1905 = vunpack.c.l.b16 %v672
    %v1906 = vunpack.c.l.b16 %v673
    %v1907 = vunpack.c.l.b16 %v674
    %v1908 = vunpack.c.l.b16 %v675
    %v1909 = vunpack.c.l.b16 %v676
    %v1910 = vunpack.c.l.b16 %v677
    %v1911 = vunpack.c.l.b16 %v678
    %v1912 = vunpack.c.l.b16 %v679
    %v1913 = vunpack.c.l.b16 %v680
    %v1914 = vunpack.c.l.b16 %v681
    %v1915 = vunpack.c.l.b16 %v682
    %v1916 = vunpack.c.l.b16 %v683
    %v1917 = vunpack.c.l.b16 %v684
    %v1918 = vunpack.c.l.b16 %v685
    %v1919 = vunpack.c.l.b16 %v686
    %v1920 = vunpack.c.l.b16 %v687
    %v1921 = vunpack.c.l.b16 %v688
    %v1922 = vunpack.c.l.b16 %v689
    %v1923 = vunpack.c.l.b16 %v690
    %v1924 = vunpack.c.l.b16 %v691
    %v1925 = vunpack.c.l.b16 %v692
    %v1926 = vunpack.c.l.b16 %v693
    %v1927 = vunpack.c.l.b16 %v694
    %v1928 = vunpack.c.l.b16 %v695
    %v1929 = vunpack.c.l.b16 %v696
    %v1930 = vunpack.c.l.b16 %v697
    %v1931 = vpack.c.b16 %v1804, %v1803
    %v1932 = vpack.c.b16 %v1806, %v1805
    %v1933 = vpack.c.b16 %v1808, %v1807
    %v1934 = vpack.c.b16 %v1810, %v1809
    %v1935 = vpack.c.b16 %v1812, %v1811
    %v1936 = vpack.c.b16 %v1814, %v1813
    %v1937 = vpack.c.b16 %v1816, %v1815
    %v1938 = vpack.c.b16 %v1818, %v1817
    %v1939 = vpack.c.b16 %v1820, %v1819
    %v1940 = vpack.c.b16 %v1822, %v1821
    %v1941 = vpack.c.b16 %v1824, %v1823
    %v1942 = vpack.c.b16 %v1826, %v1825
    %v1943 = vpack.c.b16 %v1828, %v1827
    %v1944 = vpack.c.b16 %v1830, %v1829
    %v1945 = vpack.c.b16 %v1832, %v1831
    %v1946 = vpack.c.b16 %v1834, %v1833
    %v1947 = vpack.c.b16 %v1836, %v1835
    %v1948 = vpack.c.b16 %v1838, %v1837
    %v1949 = vpack.c.b16 %v1840, %v1839
    %v1950 = vpack.c.b16 %v1842, %v1841
    %v1951 = vpack.c.b16 %v1844, %v1843
    %v1952 = vpack.c.b16 %v1846, %v1845
    %v1953 = vpack.c.b16 %v1848, %v1847
    %v1954 = vpack.c.b16 %v1850, %v1849
    %v1955 = vpack.c.b16 %v1852, %v1851
    %v1956 = vpack.c.b16 %v1854, %v1853
    %v1957 = vpack.c.b16 %v1856, %v1855
    %v1958 = vpack.c.b16 %v1858, %v1857
    %v1959 = vpack.c.b16 %v1860, %v1859
    %v1960 = vpack.c.b16 %v1862, %v1861
    %v1961 = vpack.c.b16 %v1864, %v1863
    %v1962 = vpack.c.b16 %v1866, %v1865
    %v1963 = vpack.c.b16 %v1868, %v1867
    %v1964 = vpack.c.b16 %v1870, %v1869
    %v1965 = vpack.c.b16 %v1872, %v1871
    %v1966 = vpack.c.b16 %v1874, %v1873
    %v1967 = vpack.c.b16 %v1876, %v1875
    %v1968 = vpack.c.b16 %v1878, %v1877
    %v1969 = vpack.c.b16 %v1880, %v1879
    %v1970 = vpack.c.b16 %v1882, %v1881
    %v1971 = vpack.c.b16 %v1884, %v1883
    %v1972 = vpack.c.b16 %v1886, %v1885
    %v1973 = vpack.c.b16 %v1888, %v1887
    %v1974 = vpack.c.b16 %v1890, %v1889
    %v1975 = vpack.c.b16 %v1892, %v1891
    %v1976 = vpack.c.b16 %v1894, %v1893
    %v1977 = vpack.c.b16 %v1896, %v1895
    %v1978 = vpack.c.b16 %v1898, %v1897
    %v1979 = vpack.c.b16 %v1900, %v1899
    %v1980 = vpack.c.b16 %v1902, %v1901
    %v1981 = vpack.c.b16 %v1904, %v1903
    %v1982 = vpack.c.b16 %v1906, %v1905
    %v1983 = vpack.c.b16 %v1908, %v1907
    %v1984 = vpack.c.b16 %v1910, %v1909
    %v1985 = vpack.c.b16 %v1912, %v1911
    %v1986 = vpack.c.b16 %v1914, %v1913
    %v1987 = vpack.c.b16 %v1916, %v1915
    %v1988 = vpack.c.b16 %v1918, %v1917
    %v1989 = vpack.c.b16 %v1920, %v1919
    %v1990 = vpack.c.b16 %v1922, %v1921
    %v1991 = vpack.c.b16 %v1924, %v1923
    %v1992 = vpack.c.b16 %v1926, %v1925
    %v1993 = vpack.c.b16 %v1928, %v1927
    %v1994 = vpack.c.b16 %v1930, %v1929
    %v2075 = vunpack.c.l.b16 %v115
    %v2076 = vunpack.c.l.b16 %v116
    %v2077 = vunpack.c.l.b16 %v117
    %v2078 = vunpack.c.l.b16 %v118
    %v2079 = vunpack.c.l.b16 %v119
    %v2080 = vunpack.c.l.b16 %v120
    %v2081 = vunpack.c.l.b16 %v121
    %v2082 = vunpack.c.l.b16 %v122
    %v2083 = vunpack.c.l.b16 %v123
    %v2084 = vunpack.c.l.b16 %v124
    %v2085 = vunpack.c.l.b16 %v125
    %v2086 = vunpack.c.l.b16 %v126
    %v2087 = vunpack.c.l.b16 %v127
    %v2088 = vunpack.c.l.b16 %v128
    %v2089 = vunpack.c.l.b16 %v129
    %v2090 = vunpack.c.l.b16 %v130
    %v2091 = vpack.c.b16 %v2076, %v2075
    %v2092 = vpack.c.b16 %v2078, %v2077
    %v2093 = vpack.c.b16 %v2080, %v2079
    %v2094 = vpack.c.b16 %v2082, %v2081
    %v2095 = vpack.c.b16 %v2084, %v2083
    %v2096 = vpack.c.b16 %v2086, %v2085
    %v2097 = vpack.c.b16 %v2088, %v2087
    %v2098 = vpack.c.b16 %v2090, %v2089
    %2107 = vmatprep.subr.bf16.mxu0 0
    %2108 = vmatpush1.bf16.msra.mxu0 %v2091
    %2109 = vmatprep.subr.bf16.mxu0 0
    %2110 = vmatpush1.bf16.msra.mxu0 %v2092
    %2111 = vmatprep.subr.bf16.mxu0 0
    %2112 = vmatpush1.bf16.msra.mxu0 %v2093
    %2113 = vmatprep.subr.bf16.mxu0 0
    %2114 = vmatpush1.bf16.msra.mxu0 %v2094
    %2115 = vmatprep.subr.bf16.mxu0 0
    %2116 = vmatpush1.bf16.msra.mxu0 %v2095
    %2117 = vmatprep.subr.bf16.mxu0 0
    %2118 = vmatpush1.bf16.msra.mxu0 %v2096
    %2119 = vmatprep.subr.bf16.mxu0 0
    %2120 = vmatpush1.bf16.msra.mxu0 %v2097
    %2121 = vmatprep.subr.bf16.mxu0 0
    %2122 = vmatpush1.bf16.msra.mxu0 %v2098
    %2123 = vmatprep.subr.bf16.mxu0 0
    %2124 = vmatpush1.bf16.msra.mxu0 0
    %2125 = vmatprep.subr.bf16.mxu0 0
    %2126 = vmatpush1.bf16.msra.mxu0 0
    %2127 = vmatprep.subr.bf16.mxu0 0
    %2128 = vmatpush1.bf16.msra.mxu0 0
    %2129 = vmatprep.subr.bf16.mxu0 0
    %2130 = vmatpush1.bf16.msra.mxu0 0
    %2131 = vmatprep.subr.bf16.mxu0 0
    %2132 = vmatpush1.bf16.msra.mxu0 0
    %2133 = vmatprep.subr.bf16.mxu0 0
    %2134 = vmatpush1.bf16.msra.mxu0 0
    %2135 = vmatprep.subr.bf16.mxu0 0
    %2136 = vmatpush1.bf16.msra.mxu0 0
    %2137 = vmatprep.subr.bf16.mxu0 0
    %2138 = vmatpush1.bf16.msra.mxu0 0
    %2139 = vmatprep.mubr.bf16.mxu0 0
    %2140 = vmatmul.mubr.bf16.gmra.mrb[0].mxu0 %v1931
    %v2141 = vpop.f32.mrb[0].mxu0
    %v2142 = vadd.f32 0.0, %v2141
    %v2143 = vpop.f32.mrb[0].mxu0
    %v2144 = vpop.f32.mrb[0].mxu0
    %v2145 = vadd.f32 0.0, %v2144
    %v2146 = vpop.f32.mrb[0].mxu0
    %2147 = vmatprep.mubr.bf16.mxu0 0
    %2148 = vmatmul.mubr.bf16.gmra.mrb[0].mxu0 %v1932
    %v2149 = vpop.f32.mrb[0].mxu0
    %v2150 = vadd.f32 0.0, %v2149
    %v2151 = vpop.f32.mrb[0].mxu0
    %v2152 = vpop.f32.mrb[0].mxu0
    %v2153 = vadd.f32 0.0, %v2152
    %v2154 = vpop.f32.mrb[0].mxu0
    %2155 = vmatprep.mubr.bf16.mxu0 0
    %2156 = vmatmul.mubr.bf16.gmra.mrb[0].mxu0 %v1933
    %v2157 = vpop.f32.mrb[0].mxu0
    %v2158 = vadd.f32 0.0, %v2157
    %v2159 = vpop.f32.mrb[0].mxu0
    %v2160 = vpop.f32.mrb[0].mxu0
    %v2161 = vadd.f32 0.0, %v2160
    %v2162 = vpop.f32.mrb[0].mxu0
    %2163 = vmatprep.mubr.bf16.mxu0 0
    %2164 = vmatmul.mubr.bf16.gmra.mrb[0].mxu0 %v1934
    %v2165 = vpop.f32.mrb[0].mxu0
    %v2166 = vadd.f32 0.0, %v2165
    %v2167 = vpop.f32.mrb[0].mxu0
    %v2168 = vpop.f32.mrb[0].mxu0
    %v2169 = vadd.f32 0.0, %v2168
    %v2170 = vpop.f32.mrb[0].mxu0
    %2171 = vmatprep.mubr.bf16.mxu0 0
    %2172 = vmatmul.mubr.bf16.gmra.mrb[0].mxu0 %v1935
    %v2173 = vpop.f32.mrb[0].mxu0
    %v2174 = vadd.f32 0.0, %v2173
    %v2175 = vpop.f32.mrb[0].mxu0
    %v2176 = vpop.f32.mrb[0].mxu0
    %v2177 = vadd.f32 0.0, %v2176
    %v2178 = vpop.f32.mrb[0].mxu0
    %2179 = vmatprep.mubr.bf16.mxu0 0
    %2180 = vmatmul.mubr.bf16.gmra.mrb[0].mxu0 %v1936
    %v2181 = vpop.f32.mrb[0].mxu0
    %v2182 = vadd.f32 0.0, %v2181
    %v2183 = vpop.f32.mrb[0].mxu0
    %v2184 = vpop.f32.mrb[0].mxu0
    %v2185 = vadd.f32 0.0, %v2184
    %v2186 = vpop.f32.mrb[0].mxu0
    %2187 = vmatprep.mubr.bf16.mxu0 0
    %2188 = vmatmul.mubr.bf16.gmra.mrb[0].mxu0 %v1937
    %v2189 = vpop.f32.mrb[0].mxu0
    %v2190 = vadd.f32 0.0, %v2189
    %v2191 = vpop.f32.mrb[0].mxu0
    %v2192 = vpop.f32.mrb[0].mxu0
    %v2193 = vadd.f32 0.0, %v2192
    %v2194 = vpop.f32.mrb[0].mxu0
    %2195 = vmatprep.mubr.bf16.mxu0 0
    %2196 = vmatmul.mubr.bf16.gmra.mrb[0].mxu0 %v1938
    %v2197 = vpop.f32.mrb[0].mxu0
    %v2198 = vadd.f32 0.0, %v2197
    %v2199 = vpop.f32.mrb[0].mxu0
    %v2200 = vpop.f32.mrb[0].mxu0
    %v2201 = vadd.f32 0.0, %v2200
    %v2202 = vpop.f32.mrb[0].mxu0
    %2203 = vmatprep.mubr.bf16.mxu0 0
    %2204 = vmatmul.mubr.bf16.gmra.mrb[0].mxu0 %v1939
    %v2205 = vpop.f32.mrb[0].mxu0
    %v2206 = vadd.f32 0.0, %v2205
    %v2207 = vpop.f32.mrb[0].mxu0
    %v2208 = vpop.f32.mrb[0].mxu0
    %v2209 = vadd.f32 0.0, %v2208
    %v2210 = vpop.f32.mrb[0].mxu0
    %2211 = vmatprep.mubr.bf16.mxu0 0
    %2212 = vmatmul.mubr.bf16.gmra.mrb[0].mxu0 %v1940
    %v2213 = vpop.f32.mrb[0].mxu0
    %v2214 = vadd.f32 0.0, %v2213
    %v2215 = vpop.f32.mrb[0].mxu0
    %v2216 = vpop.f32.mrb[0].mxu0
    %v2217 = vadd.f32 0.0, %v2216
    %v2218 = vpop.f32.mrb[0].mxu0
    %2219 = vmatprep.mubr.bf16.mxu0 0
    %2220 = vmatmul.mubr.bf16.gmra.mrb[0].mxu0 %v1941
    %v2221 = vpop.f32.mrb[0].mxu0
    %v2222 = vadd.f32 0.0, %v2221
    %v2223 = vpop.f32.mrb[0].mxu0
    %v2224 = vpop.f32.mrb[0].mxu0
    %v2225 = vadd.f32 0.0, %v2224
    %v2226 = vpop.f32.mrb[0].mxu0
    %2227 = vmatprep.mubr.bf16.mxu0 0
    %2228 = vmatmul.mubr.bf16.gmra.mrb[0].mxu0 %v1942
    %v2229 = vpop.f32.mrb[0].mxu0
    %v2230 = vadd.f32 0.0, %v2229
    %v2231 = vpop.f32.mrb[0].mxu0
    %v2232 = vpop.f32.mrb[0].mxu0
    %v2233 = vadd.f32 0.0, %v2232
    %v2234 = vpop.f32.mrb[0].mxu0
    %2235 = vmatprep.mubr.bf16.mxu0 0
    %2236 = vmatmul.mubr.bf16.gmra.mrb[0].mxu0 %v1943
    %v2237 = vpop.f32.mrb[0].mxu0
    %v2238 = vadd.f32 0.0, %v2237
    %v2239 = vpop.f32.mrb[0].mxu0
    %v2240 = vpop.f32.mrb[0].mxu0
    %v2241 = vadd.f32 0.0, %v2240
    %v2242 = vpop.f32.mrb[0].mxu0
    %2243 = vmatprep.mubr.bf16.mxu0 0
    %2244 = vmatmul.mubr.bf16.gmra.mrb[0].mxu0 %v1944
    %v2245 = vpop.f32.mrb[0].mxu0
    %v2246 = vadd.f32 0.0, %v2245
    %v2247 = vpop.f32.mrb[0].mxu0
    %v2248 = vpop.f32.mrb[0].mxu0
    %v2249 = vadd.f32 0.0, %v2248
    %v2250 = vpop.f32.mrb[0].mxu0
    %2251 = vmatprep.mubr.bf16.mxu0 0
    %2252 = vmatmul.mubr.bf16.gmra.mrb[0].mxu0 %v1945
    %v2253 = vpop.f32.mrb[0].mxu0
    %v2254 = vadd.f32 0.0, %v2253
    %v2255 = vpop.f32.mrb[0].mxu0
    %v2256 = vpop.f32.mrb[0].mxu0
    %v2257 = vadd.f32 0.0, %v2256
    %v2258 = vpop.f32.mrb[0].mxu0
    %2259 = vmatprep.mubr.bf16.mxu0 0
    %2260 = vmatmul.mubr.bf16.gmra.mrb[0].mxu0 %v1946
    %v2261 = vpop.f32.mrb[0].mxu0
    %v2262 = vadd.f32 0.0, %v2261
    %v2263 = vpop.f32.mrb[0].mxu0
    %v2264 = vpop.f32.mrb[0].mxu0
    %v2265 = vadd.f32 0.0, %v2264
    %v2266 = vpop.f32.mrb[0].mxu0
    %2267 = vmatprep.mubr.bf16.mxu0 0
    %2268 = vmatmul.mubr.bf16.gmra.mrb[0].mxu0 %v1947
    %v2269 = vpop.f32.mrb[0].mxu0
    %v2270 = vadd.f32 0.0, %v2269
    %v2271 = vpop.f32.mrb[0].mxu0
    %v2272 = vpop.f32.mrb[0].mxu0
    %v2273 = vadd.f32 0.0, %v2272
    %v2274 = vpop.f32.mrb[0].mxu0
    %2275 = vmatprep.mubr.bf16.mxu0 0
    %2276 = vmatmul.mubr.bf16.gmra.mrb[0].mxu0 %v1948
    %v2277 = vpop.f32.mrb[0].mxu0
    %v2278 = vadd.f32 0.0, %v2277
    %v2279 = vpop.f32.mrb[0].mxu0
    %v2280 = vpop.f32.mrb[0].mxu0
    %v2281 = vadd.f32 0.0, %v2280
    %v2282 = vpop.f32.mrb[0].mxu0
    %2283 = vmatprep.mubr.bf16.mxu0 0
    %2284 = vmatmul.mubr.bf16.gmra.mrb[0].mxu0 %v1949
    %v2285 = vpop.f32.mrb[0].mxu0
    %v2286 = vadd.f32 0.0, %v2285
    %v2287 = vpop.f32.mrb[0].mxu0
    %v2288 = vpop.f32.mrb[0].mxu0
    %v2289 = vadd.f32 0.0, %v2288
    %v2290 = vpop.f32.mrb[0].mxu0
    %2291 = vmatprep.mubr.bf16.mxu0 0
    %2292 = vmatmul.mubr.bf16.gmra.mrb[0].mxu0 %v1950
    %v2293 = vpop.f32.mrb[0].mxu0
    %v2294 = vadd.f32 0.0, %v2293
    %v2295 = vpop.f32.mrb[0].mxu0
    %v2296 = vpop.f32.mrb[0].mxu0
    %v2297 = vadd.f32 0.0, %v2296
    %v2298 = vpop.f32.mrb[0].mxu0
    %2299 = vmatprep.mubr.bf16.mxu0 0
    %2300 = vmatmul.mubr.bf16.gmra.mrb[0].mxu0 %v1951
    %v2301 = vpop.f32.mrb[0].mxu0
    %v2302 = vadd.f32 0.0, %v2301
    %v2303 = vpop.f32.mrb[0].mxu0
    %v2304 = vpop.f32.mrb[0].mxu0
    %v2305 = vadd.f32 0.0, %v2304
    %v2306 = vpop.f32.mrb[0].mxu0
    %2307 = vmatprep.mubr.bf16.mxu0 0
    %2308 = vmatmul.mubr.bf16.gmra.mrb[0].mxu0 %v1952
    %v2309 = vpop.f32.mrb[0].mxu0
    %v2310 = vadd.f32 0.0, %v2309
    %v2311 = vpop.f32.mrb[0].mxu0
    %v2312 = vpop.f32.mrb[0].mxu0
    %v2313 = vadd.f32 0.0, %v2312
    %v2314 = vpop.f32.mrb[0].mxu0
    %2315 = vmatprep.mubr.bf16.mxu0 0
    %2316 = vmatmul.mubr.bf16.gmra.mrb[0].mxu0 %v1953
    %v2317 = vpop.f32.mrb[0].mxu0
    %v2318 = vadd.f32 0.0, %v2317
    %v2319 = vpop.f32.mrb[0].mxu0
    %v2320 = vpop.f32.mrb[0].mxu0
    %v2321 = vadd.f32 0.0, %v2320
    %v2322 = vpop.f32.mrb[0].mxu0
    %2323 = vmatprep.mubr.bf16.mxu0 0
    %2324 = vmatmul.mubr.bf16.gmra.mrb[0].mxu0 %v1954
    %v2325 = vpop.f32.mrb[0].mxu0
    %v2326 = vadd.f32 0.0, %v2325
    %v2327 = vpop.f32.mrb[0].mxu0
    %v2328 = vpop.f32.mrb[0].mxu0
    %v2329 = vadd.f32 0.0, %v2328
    %v2330 = vpop.f32.mrb[0].mxu0
    %2331 = vmatprep.mubr.bf16.mxu0 0
    %2332 = vmatmul.mubr.bf16.gmra.mrb[0].mxu0 %v1955
    %v2333 = vpop.f32.mrb[0].mxu0
    %v2334 = vadd.f32 0.0, %v2333
    %v2335 = vpop.f32.mrb[0].mxu0
    %v2336 = vpop.f32.mrb[0].mxu0
    %v2337 = vadd.f32 0.0, %v2336
    %v2338 = vpop.f32.mrb[0].mxu0
    %2339 = vmatprep.mubr.bf16.mxu0 0
    %2340 = vmatmul.mubr.bf16.gmra.mrb[0].mxu0 %v1956
    %v2341 = vpop.f32.mrb[0].mxu0
    %v2342 = vadd.f32 0.0, %v2341
    %v2343 = vpop.f32.mrb[0].mxu0
    %v2344 = vpop.f32.mrb[0].mxu0
    %v2345 = vadd.f32 0.0, %v2344
    %v2346 = vpop.f32.mrb[0].mxu0
    %2347 = vmatprep.mubr.bf16.mxu0 0
    %2348 = vmatmul.mubr.bf16.gmra.mrb[0].mxu0 %v1957
    %v2349 = vpop.f32.mrb[0].mxu0
    %v2350 = vadd.f32 0.0, %v2349
    %v2351 = vpop.f32.mrb[0].mxu0
    %v2352 = vpop.f32.mrb[0].mxu0
    %v2353 = vadd.f32 0.0, %v2352
    %v2354 = vpop.f32.mrb[0].mxu0
    %2355 = vmatprep.mubr.bf16.mxu0 0
    %2356 = vmatmul.mubr.bf16.gmra.mrb[0].mxu0 %v1958
    %v2357 = vpop.f32.mrb[0].mxu0
    %v2358 = vadd.f32 0.0, %v2357
    %v2359 = vpop.f32.mrb[0].mxu0
    %v2360 = vpop.f32.mrb[0].mxu0
    %v2361 = vadd.f32 0.0, %v2360
    %v2362 = vpop.f32.mrb[0].mxu0
    %2363 = vmatprep.mubr.bf16.mxu0 0
    %2364 = vmatmul.mubr.bf16.gmra.mrb[0].mxu0 %v1959
    %v2365 = vpop.f32.mrb[0].mxu0
    %v2366 = vadd.f32 0.0, %v2365
    %v2367 = vpop.f32.mrb[0].mxu0
    %v2368 = vpop.f32.mrb[0].mxu0
    %v2369 = vadd.f32 0.0, %v2368
    %v2370 = vpop.f32.mrb[0].mxu0
    %2371 = vmatprep.mubr.bf16.mxu0 0
    %2372 = vmatmul.mubr.bf16.gmra.mrb[0].mxu0 %v1960
    %v2373 = vpop.f32.mrb[0].mxu0
    %v2374 = vadd.f32 0.0, %v2373
    %v2375 = vpop.f32.mrb[0].mxu0
    %v2376 = vpop.f32.mrb[0].mxu0
    %v2377 = vadd.f32 0.0, %v2376
    %v2378 = vpop.f32.mrb[0].mxu0
    %2379 = vmatprep.mubr.bf16.mxu0 0
    %2380 = vmatmul.mubr.bf16.gmra.mrb[0].mxu0 %v1961
    %v2381 = vpop.f32.mrb[0].mxu0
    %v2382 = vadd.f32 0.0, %v2381
    %v2383 = vpop.f32.mrb[0].mxu0
    %v2384 = vpop.f32.mrb[0].mxu0
    %v2385 = vadd.f32 0.0, %v2384
    %v2386 = vpop.f32.mrb[0].mxu0
    %2387 = vmatprep.mubr.bf16.mxu0 0
    %2388 = vmatmul.mubr.bf16.gmra.mrb[0].mxu0 %v1962
    %v2389 = vpop.f32.mrb[0].mxu0
    %v2390 = vadd.f32 0.0, %v2389
    %v2391 = vpop.f32.mrb[0].mxu0
    %v2392 = vpop.f32.mrb[0].mxu0
    %v2393 = vadd.f32 0.0, %v2392
    %v2394 = vpop.f32.mrb[0].mxu0
    %2395 = vmatprep.mubr.bf16.mxu0 0
    %2396 = vmatmul.mubr.bf16.gmra.mrb[0].mxu0 %v1963
    %v2397 = vpop.f32.mrb[0].mxu0
    %v2398 = vadd.f32 0.0, %v2397
    %v2399 = vpop.f32.mrb[0].mxu0
    %v2400 = vpop.f32.mrb[0].mxu0
    %v2401 = vadd.f32 0.0, %v2400
    %v2402 = vpop.f32.mrb[0].mxu0
    %2403 = vmatprep.mubr.bf16.mxu0 0
    %2404 = vmatmul.mubr.bf16.gmra.mrb[0].mxu0 %v1964
    %v2405 = vpop.f32.mrb[0].mxu0
    %v2406 = vadd.f32 0.0, %v2405
    %v2407 = vpop.f32.mrb[0].mxu0
    %v2408 = vpop.f32.mrb[0].mxu0
    %v2409 = vadd.f32 0.0, %v2408
    %v2410 = vpop.f32.mrb[0].mxu0
    %2411 = vmatprep.mubr.bf16.mxu0 0
    %2412 = vmatmul.mubr.bf16.gmra.mrb[0].mxu0 %v1965
    %v2413 = vpop.f32.mrb[0].mxu0
    %v2414 = vadd.f32 0.0, %v2413
    %v2415 = vpop.f32.mrb[0].mxu0
    %v2416 = vpop.f32.mrb[0].mxu0
    %v2417 = vadd.f32 0.0, %v2416
    %v2418 = vpop.f32.mrb[0].mxu0
    %2419 = vmatprep.mubr.bf16.mxu0 0
    %2420 = vmatmul.mubr.bf16.gmra.mrb[0].mxu0 %v1966
    %v2421 = vpop.f32.mrb[0].mxu0
    %v2422 = vadd.f32 0.0, %v2421
    %v2423 = vpop.f32.mrb[0].mxu0
    %v2424 = vpop.f32.mrb[0].mxu0
    %v2425 = vadd.f32 0.0, %v2424
    %v2426 = vpop.f32.mrb[0].mxu0
    %2427 = vmatprep.mubr.bf16.mxu0 0
    %2428 = vmatmul.mubr.bf16.gmra.mrb[0].mxu0 %v1967
    %v2429 = vpop.f32.mrb[0].mxu0
    %v2430 = vadd.f32 0.0, %v2429
    %v2431 = vpop.f32.mrb[0].mxu0
    %v2432 = vpop.f32.mrb[0].mxu0
    %v2433 = vadd.f32 0.0, %v2432
    %v2434 = vpop.f32.mrb[0].mxu0
    %2435 = vmatprep.mubr.bf16.mxu0 0
    %2436 = vmatmul.mubr.bf16.gmra.mrb[0].mxu0 %v1968
    %v2437 = vpop.f32.mrb[0].mxu0
    %v2438 = vadd.f32 0.0, %v2437
    %v2439 = vpop.f32.mrb[0].mxu0
    %v2440 = vpop.f32.mrb[0].mxu0
    %v2441 = vadd.f32 0.0, %v2440
    %v2442 = vpop.f32.mrb[0].mxu0
    %2443 = vmatprep.mubr.bf16.mxu0 0
    %2444 = vmatmul.mubr.bf16.gmra.mrb[0].mxu0 %v1969
    %v2445 = vpop.f32.mrb[0].mxu0
    %v2446 = vadd.f32 0.0, %v2445
    %v2447 = vpop.f32.mrb[0].mxu0
    %v2448 = vpop.f32.mrb[0].mxu0
    %v2449 = vadd.f32 0.0, %v2448
    %v2450 = vpop.f32.mrb[0].mxu0
    %2451 = vmatprep.mubr.bf16.mxu0 0
    %2452 = vmatmul.mubr.bf16.gmra.mrb[0].mxu0 %v1970
    %v2453 = vpop.f32.mrb[0].mxu0
    %v2454 = vadd.f32 0.0, %v2453
    %v2455 = vpop.f32.mrb[0].mxu0
    %v2456 = vpop.f32.mrb[0].mxu0
    %v2457 = vadd.f32 0.0, %v2456
    %v2458 = vpop.f32.mrb[0].mxu0
    %2459 = vmatprep.mubr.bf16.mxu0 0
    %2460 = vmatmul.mubr.bf16.gmra.mrb[0].mxu0 %v1971
    %v2461 = vpop.f32.mrb[0].mxu0
    %v2462 = vadd.f32 0.0, %v2461
    %v2463 = vpop.f32.mrb[0].mxu0
    %v2464 = vpop.f32.mrb[0].mxu0
    %v2465 = vadd.f32 0.0, %v2464
    %v2466 = vpop.f32.mrb[0].mxu0
    %2467 = vmatprep.mubr.bf16.mxu0 0
    %2468 = vmatmul.mubr.bf16.gmra.mrb[0].mxu0 %v1972
    %v2469 = vpop.f32.mrb[0].mxu0
    %v2470 = vadd.f32 0.0, %v2469
    %v2471 = vpop.f32.mrb[0].mxu0
    %v2472 = vpop.f32.mrb[0].mxu0
    %v2473 = vadd.f32 0.0, %v2472
    %v2474 = vpop.f32.mrb[0].mxu0
    %2475 = vmatprep.mubr.bf16.mxu0 0
    %2476 = vmatmul.mubr.bf16.gmra.mrb[0].mxu0 %v1973
    %v2477 = vpop.f32.mrb[0].mxu0
    %v2478 = vadd.f32 0.0, %v2477
    %v2479 = vpop.f32.mrb[0].mxu0
    %v2480 = vpop.f32.mrb[0].mxu0
    %v2481 = vadd.f32 0.0, %v2480
    %v2482 = vpop.f32.mrb[0].mxu0
    %2483 = vmatprep.mubr.bf16.mxu0 0
    %2484 = vmatmul.mubr.bf16.gmra.mrb[0].mxu0 %v1974
    %v2485 = vpop.f32.mrb[0].mxu0
    %v2486 = vadd.f32 0.0, %v2485
    %v2487 = vpop.f32.mrb[0].mxu0
    %v2488 = vpop.f32.mrb[0].mxu0
    %v2489 = vadd.f32 0.0, %v2488
    %v2490 = vpop.f32.mrb[0].mxu0
    %2491 = vmatprep.mubr.bf16.mxu0 0
    %2492 = vmatmul.mubr.bf16.gmra.mrb[0].mxu0 %v1975
    %v2493 = vpop.f32.mrb[0].mxu0
    %v2494 = vadd.f32 0.0, %v2493
    %v2495 = vpop.f32.mrb[0].mxu0
    %v2496 = vpop.f32.mrb[0].mxu0
    %v2497 = vadd.f32 0.0, %v2496
    %v2498 = vpop.f32.mrb[0].mxu0
    %2499 = vmatprep.mubr.bf16.mxu0 0
    %2500 = vmatmul.mubr.bf16.gmra.mrb[0].mxu0 %v1976
    %v2501 = vpop.f32.mrb[0].mxu0
    %v2502 = vadd.f32 0.0, %v2501
    %v2503 = vpop.f32.mrb[0].mxu0
    %v2504 = vpop.f32.mrb[0].mxu0
    %v2505 = vadd.f32 0.0, %v2504
    %v2506 = vpop.f32.mrb[0].mxu0
    %2507 = vmatprep.mubr.bf16.mxu0 0
    %2508 = vmatmul.mubr.bf16.gmra.mrb[0].mxu0 %v1977
    %v2509 = vpop.f32.mrb[0].mxu0
    %v2510 = vadd.f32 0.0, %v2509
    %v2511 = vpop.f32.mrb[0].mxu0
    %v2512 = vpop.f32.mrb[0].mxu0
    %v2513 = vadd.f32 0.0, %v2512
    %v2514 = vpop.f32.mrb[0].mxu0
    %2515 = vmatprep.mubr.bf16.mxu0 0
    %2516 = vmatmul.mubr.bf16.gmra.mrb[0].mxu0 %v1978
    %v2517 = vpop.f32.mrb[0].mxu0
    %v2518 = vadd.f32 0.0, %v2517
    %v2519 = vpop.f32.mrb[0].mxu0
    %v2520 = vpop.f32.mrb[0].mxu0
    %v2521 = vadd.f32 0.0, %v2520
    %v2522 = vpop.f32.mrb[0].mxu0
    %2523 = vmatprep.mubr.bf16.mxu0 0
    %2524 = vmatmul.mubr.bf16.gmra.mrb[0].mxu0 %v1979
    %v2525 = vpop.f32.mrb[0].mxu0
    %v2526 = vadd.f32 0.0, %v2525
    %v2527 = vpop.f32.mrb[0].mxu0
    %v2528 = vpop.f32.mrb[0].mxu0
    %v2529 = vadd.f32 0.0, %v2528
    %v2530 = vpop.f32.mrb[0].mxu0
    %2531 = vmatprep.mubr.bf16.mxu0 0
    %2532 = vmatmul.mubr.bf16.gmra.mrb[0].mxu0 %v1980
    %v2533 = vpop.f32.mrb[0].mxu0
    %v2534 = vadd.f32 0.0, %v2533
    %v2535 = vpop.f32.mrb[0].mxu0
    %v2536 = vpop.f32.mrb[0].mxu0
    %v2537 = vadd.f32 0.0, %v2536
    %v2538 = vpop.f32.mrb[0].mxu0
    %2539 = vmatprep.mubr.bf16.mxu0 0
    %2540 = vmatmul.mubr.bf16.gmra.mrb[0].mxu0 %v1981
    %v2541 = vpop.f32.mrb[0].mxu0
    %v2542 = vadd.f32 0.0, %v2541
    %v2543 = vpop.f32.mrb[0].mxu0
    %v2544 = vpop.f32.mrb[0].mxu0
    %v2545 = vadd.f32 0.0, %v2544
    %v2546 = vpop.f32.mrb[0].mxu0
    %2547 = vmatprep.mubr.bf16.mxu0 0
    %2548 = vmatmul.mubr.bf16.gmra.mrb[0].mxu0 %v1982
    %v2549 = vpop.f32.mrb[0].mxu0
    %v2550 = vadd.f32 0.0, %v2549
    %v2551 = vpop.f32.mrb[0].mxu0
    %v2552 = vpop.f32.mrb[0].mxu0
    %v2553 = vadd.f32 0.0, %v2552
    %v2554 = vpop.f32.mrb[0].mxu0
    %2555 = vmatprep.mubr.bf16.mxu0 0
    %2556 = vmatmul.mubr.bf16.gmra.mrb[0].mxu0 %v1983
    %v2557 = vpop.f32.mrb[0].mxu0
    %v2558 = vadd.f32 0.0, %v2557
    %v2559 = vpop.f32.mrb[0].mxu0
    %v2560 = vpop.f32.mrb[0].mxu0
    %v2561 = vadd.f32 0.0, %v2560
    %v2562 = vpop.f32.mrb[0].mxu0
    %2563 = vmatprep.mubr.bf16.mxu0 0
    %2564 = vmatmul.mubr.bf16.gmra.mrb[0].mxu0 %v1984
    %v2565 = vpop.f32.mrb[0].mxu0
    %v2566 = vadd.f32 0.0, %v2565
    %v2567 = vpop.f32.mrb[0].mxu0
    %v2568 = vpop.f32.mrb[0].mxu0
    %v2569 = vadd.f32 0.0, %v2568
    %v2570 = vpop.f32.mrb[0].mxu0
    %2571 = vmatprep.mubr.bf16.mxu0 0
    %2572 = vmatmul.mubr.bf16.gmra.mrb[0].mxu0 %v1985
    %v2573 = vpop.f32.mrb[0].mxu0
    %v2574 = vadd.f32 0.0, %v2573
    %v2575 = vpop.f32.mrb[0].mxu0
    %v2576 = vpop.f32.mrb[0].mxu0
    %v2577 = vadd.f32 0.0, %v2576
    %v2578 = vpop.f32.mrb[0].mxu0
    %2579 = vmatprep.mubr.bf16.mxu0 0
    %2580 = vmatmul.mubr.bf16.gmra.mrb[0].mxu0 %v1986
    %v2581 = vpop.f32.mrb[0].mxu0
    %v2582 = vadd.f32 0.0, %v2581
    %v2583 = vpop.f32.mrb[0].mxu0
    %v2584 = vpop.f32.mrb[0].mxu0
    %v2585 = vadd.f32 0.0, %v2584
    %v2586 = vpop.f32.mrb[0].mxu0
    %2587 = vmatprep.mubr.bf16.mxu0 0
    %2588 = vmatmul.mubr.bf16.gmra.mrb[0].mxu0 %v1987
    %v2589 = vpop.f32.mrb[0].mxu0
    %v2590 = vadd.f32 0.0, %v2589
    %v2591 = vpop.f32.mrb[0].mxu0
    %v2592 = vpop.f32.mrb[0].mxu0
    %v2593 = vadd.f32 0.0, %v2592
    %v2594 = vpop.f32.mrb[0].mxu0
    %2595 = vmatprep.mubr.bf16.mxu0 0
    %2596 = vmatmul.mubr.bf16.gmra.mrb[0].mxu0 %v1988
    %v2597 = vpop.f32.mrb[0].mxu0
    %v2598 = vadd.f32 0.0, %v2597
    %v2599 = vpop.f32.mrb[0].mxu0
    %v2600 = vpop.f32.mrb[0].mxu0
    %v2601 = vadd.f32 0.0, %v2600
    %v2602 = vpop.f32.mrb[0].mxu0
    %2603 = vmatprep.mubr.bf16.mxu0 0
    %2604 = vmatmul.mubr.bf16.gmra.mrb[0].mxu0 %v1989
    %v2605 = vpop.f32.mrb[0].mxu0
    %v2606 = vadd.f32 0.0, %v2605
    %v2607 = vpop.f32.mrb[0].mxu0
    %v2608 = vpop.f32.mrb[0].mxu0
    %v2609 = vadd.f32 0.0, %v2608
    %v2610 = vpop.f32.mrb[0].mxu0
    %2611 = vmatprep.mubr.bf16.mxu0 0
    %2612 = vmatmul.mubr.bf16.gmra.mrb[0].mxu0 %v1990
    %v2613 = vpop.f32.mrb[0].mxu0
    %v2614 = vadd.f32 0.0, %v2613
    %v2615 = vpop.f32.mrb[0].mxu0
    %v2616 = vpop.f32.mrb[0].mxu0
    %v2617 = vadd.f32 0.0, %v2616
    %v2618 = vpop.f32.mrb[0].mxu0
    %2619 = vmatprep.mubr.bf16.mxu0 0
    %2620 = vmatmul.mubr.bf16.gmra.mrb[0].mxu0 %v1991
    %v2621 = vpop.f32.mrb[0].mxu0
    %v2622 = vadd.f32 0.0, %v2621
    %v2623 = vpop.f32.mrb[0].mxu0
    %v2624 = vpop.f32.mrb[0].mxu0
    %v2625 = vadd.f32 0.0, %v2624
    %v2626 = vpop.f32.mrb[0].mxu0
    %2627 = vmatprep.mubr.bf16.mxu0 0
    %2628 = vmatmul.mubr.bf16.gmra.mrb[0].mxu0 %v1992
    %v2629 = vpop.f32.mrb[0].mxu0
    %v2630 = vadd.f32 0.0, %v2629
    %v2631 = vpop.f32.mrb[0].mxu0
    %v2632 = vpop.f32.mrb[0].mxu0
    %v2633 = vadd.f32 0.0, %v2632
    %v2634 = vpop.f32.mrb[0].mxu0
    %2635 = vmatprep.mubr.bf16.mxu0 0
    %2636 = vmatmul.mubr.bf16.gmra.mrb[0].mxu0 %v1993
    %v2637 = vpop.f32.mrb[0].mxu0
    %v2638 = vadd.f32 0.0, %v2637
    %v2639 = vpop.f32.mrb[0].mxu0
    %v2640 = vpop.f32.mrb[0].mxu0
    %v2641 = vadd.f32 0.0, %v2640
    %v2642 = vpop.f32.mrb[0].mxu0
    %2643 = vmatprep.mubr.bf16.mxu0 0
    %2644 = vmatmul.mubr.bf16.gmra.mrb[0].mxu0 %v1994
    %v2645 = vpop.f32.mrb[0].mxu0
    %v2646 = vadd.f32 0.0, %v2645
    %v2647 = vpop.f32.mrb[0].mxu0
    %v2648 = vpop.f32.mrb[0].mxu0
    %v2649 = vadd.f32 0.0, %v2648
    %v2650 = vpop.f32.mrb[0].mxu0
    %2651 = vdwg.mxu0
    %v2652 = vmul.f32 %v1165, %v316
    %v2653 = vmul.f32 %v1168, %v319
    %v2654 = vmul.f32 %v1173, %v324
    %v2655 = vmul.f32 %v1176, %v327
    %v2656 = vmul.f32 %v1181, %v332
    %v2657 = vmul.f32 %v1184, %v335
    %v2658 = vmul.f32 %v1189, %v340
    %v2659 = vmul.f32 %v1192, %v343
    %v2660 = vmul.f32 %v1197, %v348
    %v2661 = vmul.f32 %v1200, %v351
    %v2662 = vmul.f32 %v1205, %v356
    %v2663 = vmul.f32 %v1208, %v359
    %v2664 = vmul.f32 %v1213, %v364
    %v2665 = vmul.f32 %v1216, %v367
    %v2666 = vmul.f32 %v1221, %v372
    %v2667 = vmul.f32 %v1224, %v375
    %v2668 = vmul.f32 %v1229, %v380
    %v2669 = vmul.f32 %v1232, %v383
    %v2670 = vmul.f32 %v1237, %v388
    %v2671 = vmul.f32 %v1240, %v391
    %v2672 = vmul.f32 %v1245, %v396
    %v2673 = vmul.f32 %v1248, %v399
    %v2674 = vmul.f32 %v1253, %v404
    %v2675 = vmul.f32 %v1256, %v407
    %v2676 = vmul.f32 %v1261, %v412
    %v2677 = vmul.f32 %v1264, %v415
    %v2678 = vmul.f32 %v1269, %v420
    %v2679 = vmul.f32 %v1272, %v423
    %v2680 = vmul.f32 %v1277, %v428
    %v2681 = vmul.f32 %v1280, %v431
    %v2682 = vmul.f32 %v1285, %v436
    %v2683 = vmul.f32 %v1288, %v439
    %v2684 = vmul.f32 %v1293, %v316
    %v2685 = vmul.f32 %v1296, %v319
    %v2686 = vmul.f32 %v1301, %v324
    %v2687 = vmul.f32 %v1304, %v327
    %v2688 = vmul.f32 %v1309, %v332
    %v2689 = vmul.f32 %v1312, %v335
    %v2690 = vmul.f32 %v1317, %v340
    %v2691 = vmul.f32 %v1320, %v343
    %v2692 = vmul.f32 %v1325, %v348
    %v2693 = vmul.f32 %v1328, %v351
    %v2694 = vmul.f32 %v1333, %v356
    %v2695 = vmul.f32 %v1336, %v359
    %v2696 = vmul.f32 %v1341, %v364
    %v2697 = vmul.f32 %v1344, %v367
    %v2698 = vmul.f32 %v1349, %v372
    %v2699 = vmul.f32 %v1352, %v375
    %v2700 = vmul.f32 %v1357, %v380
    %v2701 = vmul.f32 %v1360, %v383
    %v2702 = vmul.f32 %v1365, %v388
    %v2703 = vmul.f32 %v1368, %v391
    %v2704 = vmul.f32 %v1373, %v396
    %v2705 = vmul.f32 %v1376, %v399
    %v2706 = vmul.f32 %v1381, %v404
    %v2707 = vmul.f32 %v1384, %v407
    %v2708 = vmul.f32 %v1389, %v412
    %v2709 = vmul.f32 %v1392, %v415
    %v2710 = vmul.f32 %v1397, %v420
    %v2711 = vmul.f32 %v1400, %v423
    %v2712 = vmul.f32 %v1405, %v428
    %v2713 = vmul.f32 %v1408, %v431
    %v2714 = vmul.f32 %v1413, %v436
    %v2715 = vmul.f32 %v1416, %v439
    %v2716 = vmul.f32 %v1421, %v316
    %v2717 = vmul.f32 %v1424, %v319
    %v2718 = vmul.f32 %v1429, %v324
    %v2719 = vmul.f32 %v1432, %v327
    %v2720 = vmul.f32 %v1437, %v332
    %v2721 = vmul.f32 %v1440, %v335
    %v2722 = vmul.f32 %v1445, %v340
    %v2723 = vmul.f32 %v1448, %v343
    %v2724 = vmul.f32 %v1453, %v348
    %v2725 = vmul.f32 %v1456, %v351
    %v2726 = vmul.f32 %v1461, %v356
    %v2727 = vmul.f32 %v1464, %v359
    %v2728 = vmul.f32 %v1469, %v364
    %v2729 = vmul.f32 %v1472, %v367
    %v2730 = vmul.f32 %v1477, %v372
    %v2731 = vmul.f32 %v1480, %v375
    %v2732 = vmul.f32 %v1485, %v380
    %v2733 = vmul.f32 %v1488, %v383
    %v2734 = vmul.f32 %v1493, %v388
    %v2735 = vmul.f32 %v1496, %v391
    %v2736 = vmul.f32 %v1501, %v396
    %v2737 = vmul.f32 %v1504, %v399
    %v2738 = vmul.f32 %v1509, %v404
    %v2739 = vmul.f32 %v1512, %v407
    %v2740 = vmul.f32 %v1517, %v412
    %v2741 = vmul.f32 %v1520, %v415
    %v2742 = vmul.f32 %v1525, %v420
    %v2743 = vmul.f32 %v1528, %v423
    %v2744 = vmul.f32 %v1533, %v428
    %v2745 = vmul.f32 %v1536, %v431
    %v2746 = vmul.f32 %v1541, %v436
    %v2747 = vmul.f32 %v1544, %v439
    %v2748 = vmul.f32 %v1549, %v316
    %v2749 = vmul.f32 %v1552, %v319
    %v2750 = vmul.f32 %v1557, %v324
    %v2751 = vmul.f32 %v1560, %v327
    %v2752 = vmul.f32 %v1565, %v332
    %v2753 = vmul.f32 %v1568, %v335
    %v2754 = vmul.f32 %v1573, %v340
    %v2755 = vmul.f32 %v1576, %v343
    %v2756 = vmul.f32 %v1581, %v348
    %v2757 = vmul.f32 %v1584, %v351
    %v2758 = vmul.f32 %v1589, %v356
    %v2759 = vmul.f32 %v1592, %v359
    %v2760 = vmul.f32 %v1597, %v364
    %v2761 = vmul.f32 %v1600, %v367
    %v2762 = vmul.f32 %v1605, %v372
    %v2763 = vmul.f32 %v1608, %v375
    %v2764 = vmul.f32 %v1613, %v380
    %v2765 = vmul.f32 %v1616, %v383
    %v2766 = vmul.f32 %v1621, %v388
    %v2767 = vmul.f32 %v1624, %v391
    %v2768 = vmul.f32 %v1629, %v396
    %v2769 = vmul.f32 %v1632, %v399
    %v2770 = vmul.f32 %v1637, %v404
    %v2771 = vmul.f32 %v1640, %v407
    %v2772 = vmul.f32 %v1645, %v412
    %v2773 = vmul.f32 %v1648, %v415
    %v2774 = vmul.f32 %v1653, %v420
    %v2775 = vmul.f32 %v1656, %v423
    %v2776 = vmul.f32 %v1661, %v428
    %v2777 = vmul.f32 %v1664, %v431
    %v2778 = vmul.f32 %v1669, %v436
    %v2779 = vmul.f32 %v1672, %v439
    %v2780 = vpack.c.bf16 %v2653, %v2652
    %v2781 = vpack.c.bf16 %v2655, %v2654
    %v2782 = vpack.c.bf16 %v2657, %v2656
    %v2783 = vpack.c.bf16 %v2659, %v2658
    %v2784 = vpack.c.bf16 %v2661, %v2660
    %v2785 = vpack.c.bf16 %v2663, %v2662
    %v2786 = vpack.c.bf16 %v2665, %v2664
    %v2787 = vpack.c.bf16 %v2667, %v2666
    %v2788 = vpack.c.bf16 %v2669, %v2668
    %v2789 = vpack.c.bf16 %v2671, %v2670
    %v2790 = vpack.c.bf16 %v2673, %v2672
    %v2791 = vpack.c.bf16 %v2675, %v2674
    %v2792 = vpack.c.bf16 %v2677, %v2676
    %v2793 = vpack.c.bf16 %v2679, %v2678
    %v2794 = vpack.c.bf16 %v2681, %v2680
    %v2795 = vpack.c.bf16 %v2683, %v2682
    %v2796 = vpack.c.bf16 %v2685, %v2684
    %v2797 = vpack.c.bf16 %v2687, %v2686
    %v2798 = vpack.c.bf16 %v2689, %v2688
    %v2799 = vpack.c.bf16 %v2691, %v2690
    %v2800 = vpack.c.bf16 %v2693, %v2692
    %v2801 = vpack.c.bf16 %v2695, %v2694
    %v2802 = vpack.c.bf16 %v2697, %v2696
    %v2803 = vpack.c.bf16 %v2699, %v2698
    %v2804 = vpack.c.bf16 %v2701, %v2700
    %v2805 = vpack.c.bf16 %v2703, %v2702
    %v2806 = vpack.c.bf16 %v2705, %v2704
    %v2807 = vpack.c.bf16 %v2707, %v2706
    %v2808 = vpack.c.bf16 %v2709, %v2708
    %v2809 = vpack.c.bf16 %v2711, %v2710
    %v2810 = vpack.c.bf16 %v2713, %v2712
    %v2811 = vpack.c.bf16 %v2715, %v2714
    %v2812 = vpack.c.bf16 %v2717, %v2716
    %v2813 = vpack.c.bf16 %v2719, %v2718
    %v2814 = vpack.c.bf16 %v2721, %v2720
    %v2815 = vpack.c.bf16 %v2723, %v2722
    %v2816 = vpack.c.bf16 %v2725, %v2724
    %v2817 = vpack.c.bf16 %v2727, %v2726
    %v2818 = vpack.c.bf16 %v2729, %v2728
    %v2819 = vpack.c.bf16 %v2731, %v2730
    %v2820 = vpack.c.bf16 %v2733, %v2732
    %v2821 = vpack.c.bf16 %v2735, %v2734
    %v2822 = vpack.c.bf16 %v2737, %v2736
    %v2823 = vpack.c.bf16 %v2739, %v2738
    %v2824 = vpack.c.bf16 %v2741, %v2740
    %v2825 = vpack.c.bf16 %v2743, %v2742
    %v2826 = vpack.c.bf16 %v2745, %v2744
    %v2827 = vpack.c.bf16 %v2747, %v2746
    %v2828 = vpack.c.bf16 %v2749, %v2748
    %v2829 = vpack.c.bf16 %v2751, %v2750
    %v2830 = vpack.c.bf16 %v2753, %v2752
    %v2831 = vpack.c.bf16 %v2755, %v2754
    %v2832 = vpack.c.bf16 %v2757, %v2756
    %v2833 = vpack.c.bf16 %v2759, %v2758
    %v2834 = vpack.c.bf16 %v2761, %v2760
    %v2835 = vpack.c.bf16 %v2763, %v2762
    %v2836 = vpack.c.bf16 %v2765, %v2764
    %v2837 = vpack.c.bf16 %v2767, %v2766
    %v2838 = vpack.c.bf16 %v2769, %v2768
    %v2839 = vpack.c.bf16 %v2771, %v2770
    %v2840 = vpack.c.bf16 %v2773, %v2772
    %v2841 = vpack.c.bf16 %v2775, %v2774
    %v2842 = vpack.c.bf16 %v2777, %v2776
    %v2843 = vpack.c.bf16 %v2779, %v2778
    %v2844 = vld [vmem:[%s3] sm:$0xf]
    %v2845 = vld [vmem:[%s3 + $0x4] sm:$0xf]
    %v2846 = vld [vmem:[%s3 + $0x8] sm:$0xf]
    %v2847 = vld [vmem:[%s3 + $0xc] sm:$0xf]
    %v2848 = vld [vmem:[%s3 + $0x10] sm:$0xf]
    %v2849 = vld [vmem:[%s3 + $0x14] sm:$0xf]
    %v2850 = vld [vmem:[%s3 + $0x18] sm:$0xf]
    %v2851 = vld [vmem:[%s3 + $0x1c] sm:$0xf]
    %v2852 = vld [vmem:[%s3 + $0x20] sm:$0xf]
    %v2853 = vld [vmem:[%s3 + $0x24] sm:$0xf]
    %v2854 = vld [vmem:[%s3 + $0x28] sm:$0xf]
    %v2855 = vld [vmem:[%s3 + $0x2c] sm:$0xf]
    %v2856 = vld [vmem:[%s3 + $0x30] sm:$0xf]
    %v2857 = vld [vmem:[%s3 + $0x34] sm:$0xf]
    %v2858 = vld [vmem:[%s3 + $0x38] sm:$0xf]
    %v2859 = vld [vmem:[%s3 + $0x3c] sm:$0xf]
    %v2876 = vunpack.c.l.b16 %v2844
    %v2877 = vunpack.c.l.b16 %v2845
    %v2878 = vunpack.c.l.b16 %v2846
    %v2879 = vunpack.c.l.b16 %v2847
    %v2880 = vunpack.c.l.b16 %v2848
    %v2881 = vunpack.c.l.b16 %v2849
    %v2882 = vunpack.c.l.b16 %v2850
    %v2883 = vunpack.c.l.b16 %v2851
    %v2884 = vunpack.c.l.b16 %v2852
    %v2885 = vunpack.c.l.b16 %v2853
    %v2886 = vunpack.c.l.b16 %v2854
    %v2887 = vunpack.c.l.b16 %v2855
    %v2888 = vunpack.c.l.b16 %v2856
    %v2889 = vunpack.c.l.b16 %v2857
    %v2890 = vunpack.c.l.b16 %v2858
    %v2891 = vunpack.c.l.b16 %v2859
    %v2892 = vpack.c.b16 %v2877, %v2876
    %v2893 = vpack.c.b16 %v2879, %v2878
    %v2894 = vpack.c.b16 %v2881, %v2880
    %v2895 = vpack.c.b16 %v2883, %v2882
    %v2896 = vpack.c.b16 %v2885, %v2884
    %v2897 = vpack.c.b16 %v2887, %v2886
    %v2898 = vpack.c.b16 %v2889, %v2888
    %v2899 = vpack.c.b16 %v2891, %v2890
    %2908 = vmatprep.subr.bf16.mxu0 0
    %2909 = vmatpush1.bf16.msra.mxu0 %v2892
    %2910 = vmatprep.subr.bf16.mxu0 0
    %2911 = vmatpush1.bf16.msra.mxu0 %v2893
    %2912 = vmatprep.subr.bf16.mxu0 0
    %2913 = vmatpush1.bf16.msra.mxu0 %v2894
    %2914 = vmatprep.subr.bf16.mxu0 0
    %2915 = vmatpush1.bf16.msra.mxu0 %v2895
    %2916 = vmatprep.subr.bf16.mxu0 0
    %2917 = vmatpush1.bf16.msra.mxu0 %v2896
    %2918 = vmatprep.subr.bf16.mxu0 0
    %2919 = vmatpush1.bf16.msra.mxu0 %v2897
    %2920 = vmatprep.subr.bf16.mxu0 0
    %2921 = vmatpush1.bf16.msra.mxu0 %v2898
    %2922 = vmatprep.subr.bf16.mxu0 0
    %2923 = vmatpush1.bf16.msra.mxu0 %v2899
    %2924 = vmatprep.subr.bf16.mxu0 0
    %2925 = vmatpush1.bf16.msra.mxu0 0
    %2926 = vmatprep.subr.bf16.mxu0 0
    %2927 = vmatpush1.bf16.msra.mxu0 0
    %2928 = vmatprep.subr.bf16.mxu0 0
    %2929 = vmatpush1.bf16.msra.mxu0 0
    %2930 = vmatprep.subr.bf16.mxu0 0
    %2931 = vmatpush1.bf16.msra.mxu0 0
    %2932 = vmatprep.subr.bf16.mxu0 0
    %2933 = vmatpush1.bf16.msra.mxu0 0
    %2934 = vmatprep.subr.bf16.mxu0 0
    %2935 = vmatpush1.bf16.msra.mxu0 0
    %2936 = vmatprep.subr.bf16.mxu0 0
    %2937 = vmatpush1.bf16.msra.mxu0 0
    %2938 = vmatprep.subr.bf16.mxu0 0
    %2939 = vmatpush1.bf16.msra.mxu0 0
    %2940 = vmatprep.mubr.bf16.mxu0 0
    %2941 = vmatmul.mubr.bf16.gmra.mrb[0].mxu0 %v2780
    %v2942 = vpop.f32.mrb[0].mxu0
    %v2943 = vadd.f32 0.0, %v2942
    %v2944 = vpop.f32.mrb[0].mxu0
    %v2945 = vpop.f32.mrb[0].mxu0
    %v2946 = vadd.f32 0.0, %v2945
    %v2947 = vpop.f32.mrb[0].mxu0
    %2948 = vmatprep.mubr.bf16.mxu0 0
    %2949 = vmatmul.mubr.bf16.gmra.mrb[0].mxu0 %v2781
    %v2950 = vpop.f32.mrb[0].mxu0
    %v2951 = vadd.f32 0.0, %v2950
    %v2952 = vpop.f32.mrb[0].mxu0
    %v2953 = vpop.f32.mrb[0].mxu0
    %v2954 = vadd.f32 0.0, %v2953
    %v2955 = vpop.f32.mrb[0].mxu0
    %2956 = vmatprep.mubr.bf16.mxu0 0
    %2957 = vmatmul.mubr.bf16.gmra.mrb[0].mxu0 %v2782
    %v2958 = vpop.f32.mrb[0].mxu0
    %v2959 = vadd.f32 0.0, %v2958
    %v2960 = vpop.f32.mrb[0].mxu0
    %v2961 = vpop.f32.mrb[0].mxu0
    %v2962 = vadd.f32 0.0, %v2961
    %v2963 = vpop.f32.mrb[0].mxu0
    %2964 = vmatprep.mubr.bf16.mxu0 0
    %2965 = vmatmul.mubr.bf16.gmra.mrb[0].mxu0 %v2783
    %v2966 = vpop.f32.mrb[0].mxu0
    %v2967 = vadd.f32 0.0, %v2966
    %v2968 = vpop.f32.mrb[0].mxu0
    %v2969 = vpop.f32.mrb[0].mxu0
    %v2970 = vadd.f32 0.0, %v2969
    %v2971 = vpop.f32.mrb[0].mxu0
    %2972 = vmatprep.mubr.bf16.mxu0 0
    %2973 = vmatmul.mubr.bf16.gmra.mrb[0].mxu0 %v2784
    %v2974 = vpop.f32.mrb[0].mxu0
    %v2975 = vadd.f32 0.0, %v2974
    %v2976 = vpop.f32.mrb[0].mxu0
    %v2977 = vpop.f32.mrb[0].mxu0
    %v2978 = vadd.f32 0.0, %v2977
    %v2979 = vpop.f32.mrb[0].mxu0
    %2980 = vmatprep.mubr.bf16.mxu0 0
    %2981 = vmatmul.mubr.bf16.gmra.mrb[0].mxu0 %v2785
    %v2982 = vpop.f32.mrb[0].mxu0
    %v2983 = vadd.f32 0.0, %v2982
    %v2984 = vpop.f32.mrb[0].mxu0
    %v2985 = vpop.f32.mrb[0].mxu0
    %v2986 = vadd.f32 0.0, %v2985
    %v2987 = vpop.f32.mrb[0].mxu0
    %2988 = vmatprep.mubr.bf16.mxu0 0
    %2989 = vmatmul.mubr.bf16.gmra.mrb[0].mxu0 %v2786
    %v2990 = vpop.f32.mrb[0].mxu0
    %v2991 = vadd.f32 0.0, %v2990
    %v2992 = vpop.f32.mrb[0].mxu0
    %v2993 = vpop.f32.mrb[0].mxu0
    %v2994 = vadd.f32 0.0, %v2993
    %v2995 = vpop.f32.mrb[0].mxu0
    %2996 = vmatprep.mubr.bf16.mxu0 0
    %2997 = vmatmul.mubr.bf16.gmra.mrb[0].mxu0 %v2787
    %v2998 = vpop.f32.mrb[0].mxu0
    %v2999 = vadd.f32 0.0, %v2998
    %v3000 = vpop.f32.mrb[0].mxu0
    %v3001 = vpop.f32.mrb[0].mxu0
    %v3002 = vadd.f32 0.0, %v3001
    %v3003 = vpop.f32.mrb[0].mxu0
    %3004 = vmatprep.mubr.bf16.mxu0 0
    %3005 = vmatmul.mubr.bf16.gmra.mrb[0].mxu0 %v2788
    %v3006 = vpop.f32.mrb[0].mxu0
    %v3007 = vadd.f32 0.0, %v3006
    %v3008 = vpop.f32.mrb[0].mxu0
    %v3009 = vpop.f32.mrb[0].mxu0
    %v3010 = vadd.f32 0.0, %v3009
    %v3011 = vpop.f32.mrb[0].mxu0
    %3012 = vmatprep.mubr.bf16.mxu0 0
    %3013 = vmatmul.mubr.bf16.gmra.mrb[0].mxu0 %v2789
    %v3014 = vpop.f32.mrb[0].mxu0
    %v3015 = vadd.f32 0.0, %v3014
    %v3016 = vpop.f32.mrb[0].mxu0
    %v3017 = vpop.f32.mrb[0].mxu0
    %v3018 = vadd.f32 0.0, %v3017
    %v3019 = vpop.f32.mrb[0].mxu0
    %3020 = vmatprep.mubr.bf16.mxu0 0
    %3021 = vmatmul.mubr.bf16.gmra.mrb[0].mxu0 %v2790
    %v3022 = vpop.f32.mrb[0].mxu0
    %v3023 = vadd.f32 0.0, %v3022
    %v3024 = vpop.f32.mrb[0].mxu0
    %v3025 = vpop.f32.mrb[0].mxu0
    %v3026 = vadd.f32 0.0, %v3025
    %v3027 = vpop.f32.mrb[0].mxu0
    %3028 = vmatprep.mubr.bf16.mxu0 0
    %3029 = vmatmul.mubr.bf16.gmra.mrb[0].mxu0 %v2791
    %v3030 = vpop.f32.mrb[0].mxu0
    %v3031 = vadd.f32 0.0, %v3030
    %v3032 = vpop.f32.mrb[0].mxu0
    %v3033 = vpop.f32.mrb[0].mxu0
    %v3034 = vadd.f32 0.0, %v3033
    %v3035 = vpop.f32.mrb[0].mxu0
    %3036 = vmatprep.mubr.bf16.mxu0 0
    %3037 = vmatmul.mubr.bf16.gmra.mrb[0].mxu0 %v2792
    %v3038 = vpop.f32.mrb[0].mxu0
    %v3039 = vadd.f32 0.0, %v3038
    %v3040 = vpop.f32.mrb[0].mxu0
    %v3041 = vpop.f32.mrb[0].mxu0
    %v3042 = vadd.f32 0.0, %v3041
    %v3043 = vpop.f32.mrb[0].mxu0
    %3044 = vmatprep.mubr.bf16.mxu0 0
    %3045 = vmatmul.mubr.bf16.gmra.mrb[0].mxu0 %v2793
    %v3046 = vpop.f32.mrb[0].mxu0
    %v3047 = vadd.f32 0.0, %v3046
    %v3048 = vpop.f32.mrb[0].mxu0
    %v3049 = vpop.f32.mrb[0].mxu0
    %v3050 = vadd.f32 0.0, %v3049
    %v3051 = vpop.f32.mrb[0].mxu0
    %3052 = vmatprep.mubr.bf16.mxu0 0
    %3053 = vmatmul.mubr.bf16.gmra.mrb[0].mxu0 %v2794
    %v3054 = vpop.f32.mrb[0].mxu0
    %v3055 = vadd.f32 0.0, %v3054
    %v3056 = vpop.f32.mrb[0].mxu0
    %v3057 = vpop.f32.mrb[0].mxu0
    %v3058 = vadd.f32 0.0, %v3057
    %v3059 = vpop.f32.mrb[0].mxu0
    %3060 = vmatprep.mubr.bf16.mxu0 0
    %3061 = vmatmul.mubr.bf16.gmra.mrb[0].mxu0 %v2795
    %v3062 = vpop.f32.mrb[0].mxu0
    %v3063 = vadd.f32 0.0, %v3062
    %v3064 = vpop.f32.mrb[0].mxu0
    %v3065 = vpop.f32.mrb[0].mxu0
    %v3066 = vadd.f32 0.0, %v3065
    %v3067 = vpop.f32.mrb[0].mxu0
    %3068 = vmatprep.mubr.bf16.mxu0 0
    %3069 = vmatmul.mubr.bf16.gmra.mrb[0].mxu0 %v2796
    %v3070 = vpop.f32.mrb[0].mxu0
    %v3071 = vadd.f32 0.0, %v3070
    %v3072 = vpop.f32.mrb[0].mxu0
    %v3073 = vpop.f32.mrb[0].mxu0
    %v3074 = vadd.f32 0.0, %v3073
    %v3075 = vpop.f32.mrb[0].mxu0
    %3076 = vmatprep.mubr.bf16.mxu0 0
    %3077 = vmatmul.mubr.bf16.gmra.mrb[0].mxu0 %v2797
    %v3078 = vpop.f32.mrb[0].mxu0
    %v3079 = vadd.f32 0.0, %v3078
    %v3080 = vpop.f32.mrb[0].mxu0
    %v3081 = vpop.f32.mrb[0].mxu0
    %v3082 = vadd.f32 0.0, %v3081
    %v3083 = vpop.f32.mrb[0].mxu0
    %3084 = vmatprep.mubr.bf16.mxu0 0
    %3085 = vmatmul.mubr.bf16.gmra.mrb[0].mxu0 %v2798
    %v3086 = vpop.f32.mrb[0].mxu0
    %v3087 = vadd.f32 0.0, %v3086
    %v3088 = vpop.f32.mrb[0].mxu0
    %v3089 = vpop.f32.mrb[0].mxu0
    %v3090 = vadd.f32 0.0, %v3089
    %v3091 = vpop.f32.mrb[0].mxu0
    %3092 = vmatprep.mubr.bf16.mxu0 0
    %3093 = vmatmul.mubr.bf16.gmra.mrb[0].mxu0 %v2799
    %v3094 = vpop.f32.mrb[0].mxu0
    %v3095 = vadd.f32 0.0, %v3094
    %v3096 = vpop.f32.mrb[0].mxu0
    %v3097 = vpop.f32.mrb[0].mxu0
    %v3098 = vadd.f32 0.0, %v3097
    %v3099 = vpop.f32.mrb[0].mxu0
    %3100 = vmatprep.mubr.bf16.mxu0 0
    %3101 = vmatmul.mubr.bf16.gmra.mrb[0].mxu0 %v2800
    %v3102 = vpop.f32.mrb[0].mxu0
    %v3103 = vadd.f32 0.0, %v3102
    %v3104 = vpop.f32.mrb[0].mxu0
    %v3105 = vpop.f32.mrb[0].mxu0
    %v3106 = vadd.f32 0.0, %v3105
    %v3107 = vpop.f32.mrb[0].mxu0
    %3108 = vmatprep.mubr.bf16.mxu0 0
    %3109 = vmatmul.mubr.bf16.gmra.mrb[0].mxu0 %v2801
    %v3110 = vpop.f32.mrb[0].mxu0
    %v3111 = vadd.f32 0.0, %v3110
    %v3112 = vpop.f32.mrb[0].mxu0
    %v3113 = vpop.f32.mrb[0].mxu0
    %v3114 = vadd.f32 0.0, %v3113
    %v3115 = vpop.f32.mrb[0].mxu0
    %3116 = vmatprep.mubr.bf16.mxu0 0
    %3117 = vmatmul.mubr.bf16.gmra.mrb[0].mxu0 %v2802
    %v3118 = vpop.f32.mrb[0].mxu0
    %v3119 = vadd.f32 0.0, %v3118
    %v3120 = vpop.f32.mrb[0].mxu0
    %v3121 = vpop.f32.mrb[0].mxu0
    %v3122 = vadd.f32 0.0, %v3121
    %v3123 = vpop.f32.mrb[0].mxu0
    %3124 = vmatprep.mubr.bf16.mxu0 0
    %3125 = vmatmul.mubr.bf16.gmra.mrb[0].mxu0 %v2803
    %v3126 = vpop.f32.mrb[0].mxu0
    %v3127 = vadd.f32 0.0, %v3126
    %v3128 = vpop.f32.mrb[0].mxu0
    %v3129 = vpop.f32.mrb[0].mxu0
    %v3130 = vadd.f32 0.0, %v3129
    %v3131 = vpop.f32.mrb[0].mxu0
    %3132 = vmatprep.mubr.bf16.mxu0 0
    %3133 = vmatmul.mubr.bf16.gmra.mrb[0].mxu0 %v2804
    %v3134 = vpop.f32.mrb[0].mxu0
    %v3135 = vadd.f32 0.0, %v3134
    %v3136 = vpop.f32.mrb[0].mxu0
    %v3137 = vpop.f32.mrb[0].mxu0
    %v3138 = vadd.f32 0.0, %v3137
    %v3139 = vpop.f32.mrb[0].mxu0
    %3140 = vmatprep.mubr.bf16.mxu0 0
    %3141 = vmatmul.mubr.bf16.gmra.mrb[0].mxu0 %v2805
    %v3142 = vpop.f32.mrb[0].mxu0
    %v3143 = vadd.f32 0.0, %v3142
    %v3144 = vpop.f32.mrb[0].mxu0
    %v3145 = vpop.f32.mrb[0].mxu0
    %v3146 = vadd.f32 0.0, %v3145
    %v3147 = vpop.f32.mrb[0].mxu0
    %3148 = vmatprep.mubr.bf16.mxu0 0
    %3149 = vmatmul.mubr.bf16.gmra.mrb[0].mxu0 %v2806
    %v3150 = vpop.f32.mrb[0].mxu0
    %v3151 = vadd.f32 0.0, %v3150
    %v3152 = vpop.f32.mrb[0].mxu0
    %v3153 = vpop.f32.mrb[0].mxu0
    %v3154 = vadd.f32 0.0, %v3153
    %v3155 = vpop.f32.mrb[0].mxu0
    %3156 = vmatprep.mubr.bf16.mxu0 0
    %3157 = vmatmul.mubr.bf16.gmra.mrb[0].mxu0 %v2807
    %v3158 = vpop.f32.mrb[0].mxu0
    %v3159 = vadd.f32 0.0, %v3158
    %v3160 = vpop.f32.mrb[0].mxu0
    %v3161 = vpop.f32.mrb[0].mxu0
    %v3162 = vadd.f32 0.0, %v3161
    %v3163 = vpop.f32.mrb[0].mxu0
    %3164 = vmatprep.mubr.bf16.mxu0 0
    %3165 = vmatmul.mubr.bf16.gmra.mrb[0].mxu0 %v2808
    %v3166 = vpop.f32.mrb[0].mxu0
    %v3167 = vadd.f32 0.0, %v3166
    %v3168 = vpop.f32.mrb[0].mxu0
    %v3169 = vpop.f32.mrb[0].mxu0
    %v3170 = vadd.f32 0.0, %v3169
    %v3171 = vpop.f32.mrb[0].mxu0
    %3172 = vmatprep.mubr.bf16.mxu0 0
    %3173 = vmatmul.mubr.bf16.gmra.mrb[0].mxu0 %v2809
    %v3174 = vpop.f32.mrb[0].mxu0
    %v3175 = vadd.f32 0.0, %v3174
    %v3176 = vpop.f32.mrb[0].mxu0
    %v3177 = vpop.f32.mrb[0].mxu0
    %v3178 = vadd.f32 0.0, %v3177
    %v3179 = vpop.f32.mrb[0].mxu0
    %3180 = vmatprep.mubr.bf16.mxu0 0
    %3181 = vmatmul.mubr.bf16.gmra.mrb[0].mxu0 %v2810
    %v3182 = vpop.f32.mrb[0].mxu0
    %v3183 = vadd.f32 0.0, %v3182
    %v3184 = vpop.f32.mrb[0].mxu0
    %v3185 = vpop.f32.mrb[0].mxu0
    %v3186 = vadd.f32 0.0, %v3185
    %v3187 = vpop.f32.mrb[0].mxu0
    %3188 = vmatprep.mubr.bf16.mxu0 0
    %3189 = vmatmul.mubr.bf16.gmra.mrb[0].mxu0 %v2811
    %v3190 = vpop.f32.mrb[0].mxu0
    %v3191 = vadd.f32 0.0, %v3190
    %v3192 = vpop.f32.mrb[0].mxu0
    %v3193 = vpop.f32.mrb[0].mxu0
    %v3194 = vadd.f32 0.0, %v3193
    %v3195 = vpop.f32.mrb[0].mxu0
    %3196 = vmatprep.mubr.bf16.mxu0 0
    %3197 = vmatmul.mubr.bf16.gmra.mrb[0].mxu0 %v2812
    %v3198 = vpop.f32.mrb[0].mxu0
    %v3199 = vadd.f32 0.0, %v3198
    %v3200 = vpop.f32.mrb[0].mxu0
    %v3201 = vpop.f32.mrb[0].mxu0
    %v3202 = vadd.f32 0.0, %v3201
    %v3203 = vpop.f32.mrb[0].mxu0
    %3204 = vmatprep.mubr.bf16.mxu0 0
    %3205 = vmatmul.mubr.bf16.gmra.mrb[0].mxu0 %v2813
    %v3206 = vpop.f32.mrb[0].mxu0
    %v3207 = vadd.f32 0.0, %v3206
    %v3208 = vpop.f32.mrb[0].mxu0
    %v3209 = vpop.f32.mrb[0].mxu0
    %v3210 = vadd.f32 0.0, %v3209
    %v3211 = vpop.f32.mrb[0].mxu0
    %3212 = vmatprep.mubr.bf16.mxu0 0
    %3213 = vmatmul.mubr.bf16.gmra.mrb[0].mxu0 %v2814
    %v3214 = vpop.f32.mrb[0].mxu0
    %v3215 = vadd.f32 0.0, %v3214
    %v3216 = vpop.f32.mrb[0].mxu0
    %v3217 = vpop.f32.mrb[0].mxu0
    %v3218 = vadd.f32 0.0, %v3217
    %v3219 = vpop.f32.mrb[0].mxu0
    %3220 = vmatprep.mubr.bf16.mxu0 0
    %3221 = vmatmul.mubr.bf16.gmra.mrb[0].mxu0 %v2815
    %v3222 = vpop.f32.mrb[0].mxu0
    %v3223 = vadd.f32 0.0, %v3222
    %v3224 = vpop.f32.mrb[0].mxu0
    %v3225 = vpop.f32.mrb[0].mxu0
    %v3226 = vadd.f32 0.0, %v3225
    %v3227 = vpop.f32.mrb[0].mxu0
    %3228 = vmatprep.mubr.bf16.mxu0 0
    %3229 = vmatmul.mubr.bf16.gmra.mrb[0].mxu0 %v2816
    %v3230 = vpop.f32.mrb[0].mxu0
    %v3231 = vadd.f32 0.0, %v3230
    %v3232 = vpop.f32.mrb[0].mxu0
    %v3233 = vpop.f32.mrb[0].mxu0
    %v3234 = vadd.f32 0.0, %v3233
    %v3235 = vpop.f32.mrb[0].mxu0
    %3236 = vmatprep.mubr.bf16.mxu0 0
    %3237 = vmatmul.mubr.bf16.gmra.mrb[0].mxu0 %v2817
    %v3238 = vpop.f32.mrb[0].mxu0
    %v3239 = vadd.f32 0.0, %v3238
    %v3240 = vpop.f32.mrb[0].mxu0
    %v3241 = vpop.f32.mrb[0].mxu0
    %v3242 = vadd.f32 0.0, %v3241
    %v3243 = vpop.f32.mrb[0].mxu0
    %3244 = vmatprep.mubr.bf16.mxu0 0
    %3245 = vmatmul.mubr.bf16.gmra.mrb[0].mxu0 %v2818
    %v3246 = vpop.f32.mrb[0].mxu0
    %v3247 = vadd.f32 0.0, %v3246
    %v3248 = vpop.f32.mrb[0].mxu0
    %v3249 = vpop.f32.mrb[0].mxu0
    %v3250 = vadd.f32 0.0, %v3249
    %v3251 = vpop.f32.mrb[0].mxu0
    %3252 = vmatprep.mubr.bf16.mxu0 0
    %3253 = vmatmul.mubr.bf16.gmra.mrb[0].mxu0 %v2819
    %v3254 = vpop.f32.mrb[0].mxu0
    %v3255 = vadd.f32 0.0, %v3254
    %v3256 = vpop.f32.mrb[0].mxu0
    %v3257 = vpop.f32.mrb[0].mxu0
    %v3258 = vadd.f32 0.0, %v3257
    %v3259 = vpop.f32.mrb[0].mxu0
    %3260 = vmatprep.mubr.bf16.mxu0 0
    %3261 = vmatmul.mubr.bf16.gmra.mrb[0].mxu0 %v2820
    %v3262 = vpop.f32.mrb[0].mxu0
    %v3263 = vadd.f32 0.0, %v3262
    %v3264 = vpop.f32.mrb[0].mxu0
    %v3265 = vpop.f32.mrb[0].mxu0
    %v3266 = vadd.f32 0.0, %v3265
    %v3267 = vpop.f32.mrb[0].mxu0
    %3268 = vmatprep.mubr.bf16.mxu0 0
    %3269 = vmatmul.mubr.bf16.gmra.mrb[0].mxu0 %v2821
    %v3270 = vpop.f32.mrb[0].mxu0
    %v3271 = vadd.f32 0.0, %v3270
    %v3272 = vpop.f32.mrb[0].mxu0
    %v3273 = vpop.f32.mrb[0].mxu0
    %v3274 = vadd.f32 0.0, %v3273
    %v3275 = vpop.f32.mrb[0].mxu0
    %3276 = vmatprep.mubr.bf16.mxu0 0
    %3277 = vmatmul.mubr.bf16.gmra.mrb[0].mxu0 %v2822
    %v3278 = vpop.f32.mrb[0].mxu0
    %v3279 = vadd.f32 0.0, %v3278
    %v3280 = vpop.f32.mrb[0].mxu0
    %v3281 = vpop.f32.mrb[0].mxu0
    %v3282 = vadd.f32 0.0, %v3281
    %v3283 = vpop.f32.mrb[0].mxu0
    %3284 = vmatprep.mubr.bf16.mxu0 0
    %3285 = vmatmul.mubr.bf16.gmra.mrb[0].mxu0 %v2823
    %v3286 = vpop.f32.mrb[0].mxu0
    %v3287 = vadd.f32 0.0, %v3286
    %v3288 = vpop.f32.mrb[0].mxu0
    %v3289 = vpop.f32.mrb[0].mxu0
    %v3290 = vadd.f32 0.0, %v3289
    %v3291 = vpop.f32.mrb[0].mxu0
    %3292 = vmatprep.mubr.bf16.mxu0 0
    %3293 = vmatmul.mubr.bf16.gmra.mrb[0].mxu0 %v2824
    %v3294 = vpop.f32.mrb[0].mxu0
    %v3295 = vadd.f32 0.0, %v3294
    %v3296 = vpop.f32.mrb[0].mxu0
    %v3297 = vpop.f32.mrb[0].mxu0
    %v3298 = vadd.f32 0.0, %v3297
    %v3299 = vpop.f32.mrb[0].mxu0
    %3300 = vmatprep.mubr.bf16.mxu0 0
    %3301 = vmatmul.mubr.bf16.gmra.mrb[0].mxu0 %v2825
    %v3302 = vpop.f32.mrb[0].mxu0
    %v3303 = vadd.f32 0.0, %v3302
    %v3304 = vpop.f32.mrb[0].mxu0
    %v3305 = vpop.f32.mrb[0].mxu0
    %v3306 = vadd.f32 0.0, %v3305
    %v3307 = vpop.f32.mrb[0].mxu0
    %3308 = vmatprep.mubr.bf16.mxu0 0
    %3309 = vmatmul.mubr.bf16.gmra.mrb[0].mxu0 %v2826
    %v3310 = vpop.f32.mrb[0].mxu0
    %v3311 = vadd.f32 0.0, %v3310
    %v3312 = vpop.f32.mrb[0].mxu0
    %v3313 = vpop.f32.mrb[0].mxu0
    %v3314 = vadd.f32 0.0, %v3313
    %v3315 = vpop.f32.mrb[0].mxu0
    %3316 = vmatprep.mubr.bf16.mxu0 0
    %3317 = vmatmul.mubr.bf16.gmra.mrb[0].mxu0 %v2827
    %v3318 = vpop.f32.mrb[0].mxu0
    %v3319 = vadd.f32 0.0, %v3318
    %v3320 = vpop.f32.mrb[0].mxu0
    %v3321 = vpop.f32.mrb[0].mxu0
    %v3322 = vadd.f32 0.0, %v3321
    %v3323 = vpop.f32.mrb[0].mxu0
    %3324 = vmatprep.mubr.bf16.mxu0 0
    %3325 = vmatmul.mubr.bf16.gmra.mrb[0].mxu0 %v2828
    %v3326 = vpop.f32.mrb[0].mxu0
    %v3327 = vadd.f32 0.0, %v3326
    %v3328 = vpop.f32.mrb[0].mxu0
    %v3329 = vpop.f32.mrb[0].mxu0
    %v3330 = vadd.f32 0.0, %v3329
    %v3331 = vpop.f32.mrb[0].mxu0
    %3332 = vmatprep.mubr.bf16.mxu0 0
    %3333 = vmatmul.mubr.bf16.gmra.mrb[0].mxu0 %v2829
    %v3334 = vpop.f32.mrb[0].mxu0
    %v3335 = vadd.f32 0.0, %v3334
    %v3336 = vpop.f32.mrb[0].mxu0
    %v3337 = vpop.f32.mrb[0].mxu0
    %v3338 = vadd.f32 0.0, %v3337
    %v3339 = vpop.f32.mrb[0].mxu0
    %3340 = vmatprep.mubr.bf16.mxu0 0
    %3341 = vmatmul.mubr.bf16.gmra.mrb[0].mxu0 %v2830
    %v3342 = vpop.f32.mrb[0].mxu0
    %v3343 = vadd.f32 0.0, %v3342
    %v3344 = vpop.f32.mrb[0].mxu0
    %v3345 = vpop.f32.mrb[0].mxu0
    %v3346 = vadd.f32 0.0, %v3345
    %v3347 = vpop.f32.mrb[0].mxu0
    %3348 = vmatprep.mubr.bf16.mxu0 0
    %3349 = vmatmul.mubr.bf16.gmra.mrb[0].mxu0 %v2831
    %v3350 = vpop.f32.mrb[0].mxu0
    %v3351 = vadd.f32 0.0, %v3350
    %v3352 = vpop.f32.mrb[0].mxu0
    %v3353 = vpop.f32.mrb[0].mxu0
    %v3354 = vadd.f32 0.0, %v3353
    %v3355 = vpop.f32.mrb[0].mxu0
    %3356 = vmatprep.mubr.bf16.mxu0 0
    %3357 = vmatmul.mubr.bf16.gmra.mrb[0].mxu0 %v2832
    %v3358 = vpop.f32.mrb[0].mxu0
    %v3359 = vadd.f32 0.0, %v3358
    %v3360 = vpop.f32.mrb[0].mxu0
    %v3361 = vpop.f32.mrb[0].mxu0
    %v3362 = vadd.f32 0.0, %v3361
    %v3363 = vpop.f32.mrb[0].mxu0
    %3364 = vmatprep.mubr.bf16.mxu0 0
    %3365 = vmatmul.mubr.bf16.gmra.mrb[0].mxu0 %v2833
    %v3366 = vpop.f32.mrb[0].mxu0
    %v3367 = vadd.f32 0.0, %v3366
    %v3368 = vpop.f32.mrb[0].mxu0
    %v3369 = vpop.f32.mrb[0].mxu0
    %v3370 = vadd.f32 0.0, %v3369
    %v3371 = vpop.f32.mrb[0].mxu0
    %3372 = vmatprep.mubr.bf16.mxu0 0
    %3373 = vmatmul.mubr.bf16.gmra.mrb[0].mxu0 %v2834
    %v3374 = vpop.f32.mrb[0].mxu0
    %v3375 = vadd.f32 0.0, %v3374
    %v3376 = vpop.f32.mrb[0].mxu0
    %v3377 = vpop.f32.mrb[0].mxu0
    %v3378 = vadd.f32 0.0, %v3377
    %v3379 = vpop.f32.mrb[0].mxu0
    %3380 = vmatprep.mubr.bf16.mxu0 0
    %3381 = vmatmul.mubr.bf16.gmra.mrb[0].mxu0 %v2835
    %v3382 = vpop.f32.mrb[0].mxu0
    %v3383 = vadd.f32 0.0, %v3382
    %v3384 = vpop.f32.mrb[0].mxu0
    %v3385 = vpop.f32.mrb[0].mxu0
    %v3386 = vadd.f32 0.0, %v3385
    %v3387 = vpop.f32.mrb[0].mxu0
    %3388 = vmatprep.mubr.bf16.mxu0 0
    %3389 = vmatmul.mubr.bf16.gmra.mrb[0].mxu0 %v2836
    %v3390 = vpop.f32.mrb[0].mxu0
    %v3391 = vadd.f32 0.0, %v3390
    %v3392 = vpop.f32.mrb[0].mxu0
    %v3393 = vpop.f32.mrb[0].mxu0
    %v3394 = vadd.f32 0.0, %v3393
    %v3395 = vpop.f32.mrb[0].mxu0
    %3396 = vmatprep.mubr.bf16.mxu0 0
    %3397 = vmatmul.mubr.bf16.gmra.mrb[0].mxu0 %v2837
    %v3398 = vpop.f32.mrb[0].mxu0
    %v3399 = vadd.f32 0.0, %v3398
    %v3400 = vpop.f32.mrb[0].mxu0
    %v3401 = vpop.f32.mrb[0].mxu0
    %v3402 = vadd.f32 0.0, %v3401
    %v3403 = vpop.f32.mrb[0].mxu0
    %3404 = vmatprep.mubr.bf16.mxu0 0
    %3405 = vmatmul.mubr.bf16.gmra.mrb[0].mxu0 %v2838
    %v3406 = vpop.f32.mrb[0].mxu0
    %v3407 = vadd.f32 0.0, %v3406
    %v3408 = vpop.f32.mrb[0].mxu0
    %v3409 = vpop.f32.mrb[0].mxu0
    %v3410 = vadd.f32 0.0, %v3409
    %v3411 = vpop.f32.mrb[0].mxu0
    %3412 = vmatprep.mubr.bf16.mxu0 0
    %3413 = vmatmul.mubr.bf16.gmra.mrb[0].mxu0 %v2839
    %v3414 = vpop.f32.mrb[0].mxu0
    %v3415 = vadd.f32 0.0, %v3414
    %v3416 = vpop.f32.mrb[0].mxu0
    %v3417 = vpop.f32.mrb[0].mxu0
    %v3418 = vadd.f32 0.0, %v3417
    %v3419 = vpop.f32.mrb[0].mxu0
    %3420 = vmatprep.mubr.bf16.mxu0 0
    %3421 = vmatmul.mubr.bf16.gmra.mrb[0].mxu0 %v2840
    %v3422 = vpop.f32.mrb[0].mxu0
    %v3423 = vadd.f32 0.0, %v3422
    %v3424 = vpop.f32.mrb[0].mxu0
    %v3425 = vpop.f32.mrb[0].mxu0
    %v3426 = vadd.f32 0.0, %v3425
    %v3427 = vpop.f32.mrb[0].mxu0
    %3428 = vmatprep.mubr.bf16.mxu0 0
    %3429 = vmatmul.mubr.bf16.gmra.mrb[0].mxu0 %v2841
    %v3430 = vpop.f32.mrb[0].mxu0
    %v3431 = vadd.f32 0.0, %v3430
    %v3432 = vpop.f32.mrb[0].mxu0
    %v3433 = vpop.f32.mrb[0].mxu0
    %v3434 = vadd.f32 0.0, %v3433
    %v3435 = vpop.f32.mrb[0].mxu0
    %3436 = vmatprep.mubr.bf16.mxu0 0
    %3437 = vmatmul.mubr.bf16.gmra.mrb[0].mxu0 %v2842
    %v3438 = vpop.f32.mrb[0].mxu0
    %v3439 = vadd.f32 0.0, %v3438
    %v3440 = vpop.f32.mrb[0].mxu0
    %v3441 = vpop.f32.mrb[0].mxu0
    %v3442 = vadd.f32 0.0, %v3441
    %v3443 = vpop.f32.mrb[0].mxu0
    %3444 = vmatprep.mubr.bf16.mxu0 0
    %3445 = vmatmul.mubr.bf16.gmra.mrb[0].mxu0 %v2843
    %v3446 = vpop.f32.mrb[0].mxu0
    %v3447 = vadd.f32 0.0, %v3446
    %v3448 = vpop.f32.mrb[0].mxu0
    %v3449 = vpop.f32.mrb[0].mxu0
    %v3450 = vadd.f32 0.0, %v3449
    %v3451 = vpop.f32.mrb[0].mxu0
    %3452 = vdwg.mxu0
    %vm3453 = vcmask 64512
    %v3454 = vsel %vm3453, %v2943, -inf
    %v3455 = vsel %vm3453, %v3071, -inf
    %v3456 = vmax.f32 %v3454, %v3455
    %v3457 = vsel %vm3453, %v3199, -inf
    %v3458 = vmax.f32 %v3456, %v3457
    %v3459 = vsel %vm3453, %v3327, -inf
    %v3460 = vmax.f32 %v3458, %v3459
    %v3461 = vsel %vm3453, %v2946, -inf
    %v3462 = vsel %vm3453, %v3074, -inf
    %v3463 = vmax.f32 %v3461, %v3462
    %v3464 = vsel %vm3453, %v3202, -inf
    %v3465 = vmax.f32 %v3463, %v3464
    %v3466 = vsel %vm3453, %v3330, -inf
    %v3467 = vmax.f32 %v3465, %v3466
    %v3468 = vsel %vm3453, %v2951, -inf
    %v3469 = vsel %vm3453, %v3079, -inf
    %v3470 = vmax.f32 %v3468, %v3469
    %v3471 = vsel %vm3453, %v3207, -inf
    %v3472 = vmax.f32 %v3470, %v3471
    %v3473 = vsel %vm3453, %v3335, -inf
    %v3474 = vmax.f32 %v3472, %v3473
    %v3475 = vsel %vm3453, %v2954, -inf
    %v3476 = vsel %vm3453, %v3082, -inf
    %v3477 = vmax.f32 %v3475, %v3476
    %v3478 = vsel %vm3453, %v3210, -inf
    %v3479 = vmax.f32 %v3477, %v3478
    %v3480 = vsel %vm3453, %v3338, -inf
    %v3481 = vmax.f32 %v3479, %v3480
    %v3482 = vsel %vm3453, %v2959, -inf
    %v3483 = vsel %vm3453, %v3087, -inf
    %v3484 = vmax.f32 %v3482, %v3483
    %v3485 = vsel %vm3453, %v3215, -inf
    %v3486 = vmax.f32 %v3484, %v3485
    %v3487 = vsel %vm3453, %v3343, -inf
    %v3488 = vmax.f32 %v3486, %v3487
    %v3489 = vsel %vm3453, %v2962, -inf
    %v3490 = vsel %vm3453, %v3090, -inf
    %v3491 = vmax.f32 %v3489, %v3490
    %v3492 = vsel %vm3453, %v3218, -inf
    %v3493 = vmax.f32 %v3491, %v3492
    %v3494 = vsel %vm3453, %v3346, -inf
    %v3495 = vmax.f32 %v3493, %v3494
    %v3496 = vsel %vm3453, %v2967, -inf
    %v3497 = vsel %vm3453, %v3095, -inf
    %v3498 = vmax.f32 %v3496, %v3497
    %v3499 = vsel %vm3453, %v3223, -inf
    %v3500 = vmax.f32 %v3498, %v3499
    %v3501 = vsel %vm3453, %v3351, -inf
    %v3502 = vmax.f32 %v3500, %v3501
    %v3503 = vsel %vm3453, %v2970, -inf
    %v3504 = vsel %vm3453, %v3098, -inf
    %v3505 = vmax.f32 %v3503, %v3504
    %v3506 = vsel %vm3453, %v3226, -inf
    %v3507 = vmax.f32 %v3505, %v3506
    %v3508 = vsel %vm3453, %v3354, -inf
    %v3509 = vmax.f32 %v3507, %v3508
    %v3510 = vsel %vm3453, %v2975, -inf
    %v3511 = vsel %vm3453, %v3103, -inf
    %v3512 = vmax.f32 %v3510, %v3511
    %v3513 = vsel %vm3453, %v3231, -inf
    %v3514 = vmax.f32 %v3512, %v3513
    %v3515 = vsel %vm3453, %v3359, -inf
    %v3516 = vmax.f32 %v3514, %v3515
    %v3517 = vsel %vm3453, %v2978, -inf
    %v3518 = vsel %vm3453, %v3106, -inf
    %v3519 = vmax.f32 %v3517, %v3518
    %v3520 = vsel %vm3453, %v3234, -inf
    %v3521 = vmax.f32 %v3519, %v3520
    %v3522 = vsel %vm3453, %v3362, -inf
    %v3523 = vmax.f32 %v3521, %v3522
    %v3524 = vsel %vm3453, %v2983, -inf
    %v3525 = vsel %vm3453, %v3111, -inf
    %v3526 = vmax.f32 %v3524, %v3525
    %v3527 = vsel %vm3453, %v3239, -inf
    %v3528 = vmax.f32 %v3526, %v3527
    %v3529 = vsel %vm3453, %v3367, -inf
    %v3530 = vmax.f32 %v3528, %v3529
    %v3531 = vsel %vm3453, %v2986, -inf
    %v3532 = vsel %vm3453, %v3114, -inf
    %v3533 = vmax.f32 %v3531, %v3532
    %v3534 = vsel %vm3453, %v3242, -inf
    %v3535 = vmax.f32 %v3533, %v3534
    %v3536 = vsel %vm3453, %v3370, -inf
    %v3537 = vmax.f32 %v3535, %v3536
    %v3538 = vsel %vm3453, %v2991, -inf
    %v3539 = vsel %vm3453, %v3119, -inf
    %v3540 = vmax.f32 %v3538, %v3539
    %v3541 = vsel %vm3453, %v3247, -inf
    %v3542 = vmax.f32 %v3540, %v3541
    %v3543 = vsel %vm3453, %v3375, -inf
    %v3544 = vmax.f32 %v3542, %v3543
    %v3545 = vsel %vm3453, %v2994, -inf
    %v3546 = vsel %vm3453, %v3122, -inf
    %v3547 = vmax.f32 %v3545, %v3546
    %v3548 = vsel %vm3453, %v3250, -inf
    %v3549 = vmax.f32 %v3547, %v3548
    %v3550 = vsel %vm3453, %v3378, -inf
    %v3551 = vmax.f32 %v3549, %v3550
    %v3552 = vsel %vm3453, %v2999, -inf
    %v3553 = vsel %vm3453, %v3127, -inf
    %v3554 = vmax.f32 %v3552, %v3553
    %v3555 = vsel %vm3453, %v3255, -inf
    %v3556 = vmax.f32 %v3554, %v3555
    %v3557 = vsel %vm3453, %v3383, -inf
    %v3558 = vmax.f32 %v3556, %v3557
    %v3559 = vsel %vm3453, %v3002, -inf
    %v3560 = vsel %vm3453, %v3130, -inf
    %v3561 = vmax.f32 %v3559, %v3560
    %v3562 = vsel %vm3453, %v3258, -inf
    %v3563 = vmax.f32 %v3561, %v3562
    %v3564 = vsel %vm3453, %v3386, -inf
    %v3565 = vmax.f32 %v3563, %v3564
    %v3566 = vsel %vm3453, %v3007, -inf
    %v3567 = vsel %vm3453, %v3135, -inf
    %v3568 = vmax.f32 %v3566, %v3567
    %v3569 = vsel %vm3453, %v3263, -inf
    %v3570 = vmax.f32 %v3568, %v3569
    %v3571 = vsel %vm3453, %v3391, -inf
    %v3572 = vmax.f32 %v3570, %v3571
    %v3573 = vsel %vm3453, %v3010, -inf
    %v3574 = vsel %vm3453, %v3138, -inf
    %v3575 = vmax.f32 %v3573, %v3574
    %v3576 = vsel %vm3453, %v3266, -inf
    %v3577 = vmax.f32 %v3575, %v3576
    %v3578 = vsel %vm3453, %v3394, -inf
    %v3579 = vmax.f32 %v3577, %v3578
    %v3580 = vsel %vm3453, %v3015, -inf
    %v3581 = vsel %vm3453, %v3143, -inf
    %v3582 = vmax.f32 %v3580, %v3581
    %v3583 = vsel %vm3453, %v3271, -inf
    %v3584 = vmax.f32 %v3582, %v3583
    %v3585 = vsel %vm3453, %v3399, -inf
    %v3586 = vmax.f32 %v3584, %v3585
    %v3587 = vsel %vm3453, %v3018, -inf
    %v3588 = vsel %vm3453, %v3146, -inf
    %v3589 = vmax.f32 %v3587, %v3588
    %v3590 = vsel %vm3453, %v3274, -inf
    %v3591 = vmax.f32 %v3589, %v3590
    %v3592 = vsel %vm3453, %v3402, -inf
    %v3593 = vmax.f32 %v3591, %v3592
    %v3594 = vsel %vm3453, %v3023, -inf
    %v3595 = vsel %vm3453, %v3151, -inf
    %v3596 = vmax.f32 %v3594, %v3595
    %v3597 = vsel %vm3453, %v3279, -inf
    %v3598 = vmax.f32 %v3596, %v3597
    %v3599 = vsel %vm3453, %v3407, -inf
    %v3600 = vmax.f32 %v3598, %v3599
    %v3601 = vsel %vm3453, %v3026, -inf
    %v3602 = vsel %vm3453, %v3154, -inf
    %v3603 = vmax.f32 %v3601, %v3602
    %v3604 = vsel %vm3453, %v3282, -inf
    %v3605 = vmax.f32 %v3603, %v3604
    %v3606 = vsel %vm3453, %v3410, -inf
    %v3607 = vmax.f32 %v3605, %v3606
    %v3608 = vsel %vm3453, %v3031, -inf
    %v3609 = vsel %vm3453, %v3159, -inf
    %v3610 = vmax.f32 %v3608, %v3609
    %v3611 = vsel %vm3453, %v3287, -inf
    %v3612 = vmax.f32 %v3610, %v3611
    %v3613 = vsel %vm3453, %v3415, -inf
    %v3614 = vmax.f32 %v3612, %v3613
    %v3615 = vsel %vm3453, %v3034, -inf
    %v3616 = vsel %vm3453, %v3162, -inf
    %v3617 = vmax.f32 %v3615, %v3616
    %v3618 = vsel %vm3453, %v3290, -inf
    %v3619 = vmax.f32 %v3617, %v3618
    %v3620 = vsel %vm3453, %v3418, -inf
    %v3621 = vmax.f32 %v3619, %v3620
    %v3622 = vsel %vm3453, %v3039, -inf
    %v3623 = vsel %vm3453, %v3167, -inf
    %v3624 = vmax.f32 %v3622, %v3623
    %v3625 = vsel %vm3453, %v3295, -inf
    %v3626 = vmax.f32 %v3624, %v3625
    %v3627 = vsel %vm3453, %v3423, -inf
    %v3628 = vmax.f32 %v3626, %v3627
    %v3629 = vsel %vm3453, %v3042, -inf
    %v3630 = vsel %vm3453, %v3170, -inf
    %v3631 = vmax.f32 %v3629, %v3630
    %v3632 = vsel %vm3453, %v3298, -inf
    %v3633 = vmax.f32 %v3631, %v3632
    %v3634 = vsel %vm3453, %v3426, -inf
    %v3635 = vmax.f32 %v3633, %v3634
    %v3636 = vsel %vm3453, %v3047, -inf
    %v3637 = vsel %vm3453, %v3175, -inf
    %v3638 = vmax.f32 %v3636, %v3637
    %v3639 = vsel %vm3453, %v3303, -inf
    %v3640 = vmax.f32 %v3638, %v3639
    %v3641 = vsel %vm3453, %v3431, -inf
    %v3642 = vmax.f32 %v3640, %v3641
    %v3643 = vsel %vm3453, %v3050, -inf
    %v3644 = vsel %vm3453, %v3178, -inf
    %v3645 = vmax.f32 %v3643, %v3644
    %v3646 = vsel %vm3453, %v3306, -inf
    %v3647 = vmax.f32 %v3645, %v3646
    %v3648 = vsel %vm3453, %v3434, -inf
    %v3649 = vmax.f32 %v3647, %v3648
    %v3650 = vsel %vm3453, %v3055, -inf
    %v3651 = vsel %vm3453, %v3183, -inf
    %v3652 = vmax.f32 %v3650, %v3651
    %v3653 = vsel %vm3453, %v3311, -inf
    %v3654 = vmax.f32 %v3652, %v3653
    %v3655 = vsel %vm3453, %v3439, -inf
    %v3656 = vmax.f32 %v3654, %v3655
    %v3657 = vsel %vm3453, %v3058, -inf
    %v3658 = vsel %vm3453, %v3186, -inf
    %v3659 = vmax.f32 %v3657, %v3658
    %v3660 = vsel %vm3453, %v3314, -inf
    %v3661 = vmax.f32 %v3659, %v3660
    %v3662 = vsel %vm3453, %v3442, -inf
    %v3663 = vmax.f32 %v3661, %v3662
    %v3664 = vsel %vm3453, %v3063, -inf
    %v3665 = vsel %vm3453, %v3191, -inf
    %v3666 = vmax.f32 %v3664, %v3665
    %v3667 = vsel %vm3453, %v3319, -inf
    %v3668 = vmax.f32 %v3666, %v3667
    %v3669 = vsel %vm3453, %v3447, -inf
    %v3670 = vmax.f32 %v3668, %v3669
    %v3671 = vsel %vm3453, %v3066, -inf
    %v3672 = vsel %vm3453, %v3194, -inf
    %v3673 = vmax.f32 %v3671, %v3672
    %v3674 = vsel %vm3453, %v3322, -inf
    %v3675 = vmax.f32 %v3673, %v3674
    %v3676 = vsel %vm3453, %v3450, -inf
    %v3677 = vmax.f32 %v3675, %v3676
    %v3678 = vsub.f32 %v2943, %v3460
    %v3679 = vsub.f32 %v2946, %v3467
    %v3680 = vsub.f32 %v2951, %v3474
    %v3681 = vsub.f32 %v2954, %v3481
    %v3682 = vsub.f32 %v2959, %v3488
    %v3683 = vsub.f32 %v2962, %v3495
    %v3684 = vsub.f32 %v2967, %v3502
    %v3685 = vsub.f32 %v2970, %v3509
    %v3686 = vsub.f32 %v2975, %v3516
    %v3687 = vsub.f32 %v2978, %v3523
    %v3688 = vsub.f32 %v2983, %v3530
    %v3689 = vsub.f32 %v2986, %v3537
    %v3690 = vsub.f32 %v2991, %v3544
    %v3691 = vsub.f32 %v2994, %v3551
    %v3692 = vsub.f32 %v2999, %v3558
    %v3693 = vsub.f32 %v3002, %v3565
    %v3694 = vsub.f32 %v3007, %v3572
    %v3695 = vsub.f32 %v3010, %v3579
    %v3696 = vsub.f32 %v3015, %v3586
    %v3697 = vsub.f32 %v3018, %v3593
    %v3698 = vsub.f32 %v3023, %v3600
    %v3699 = vsub.f32 %v3026, %v3607
    %v3700 = vsub.f32 %v3031, %v3614
    %v3701 = vsub.f32 %v3034, %v3621
    %v3702 = vsub.f32 %v3039, %v3628
    %v3703 = vsub.f32 %v3042, %v3635
    %v3704 = vsub.f32 %v3047, %v3642
    %v3705 = vsub.f32 %v3050, %v3649
    %v3706 = vsub.f32 %v3055, %v3656
    %v3707 = vsub.f32 %v3058, %v3663
    %v3708 = vsub.f32 %v3063, %v3670
    %v3709 = vsub.f32 %v3066, %v3677
    %v3710 = vsub.f32 %v3071, %v3460
    %v3711 = vsub.f32 %v3074, %v3467
    %v3712 = vsub.f32 %v3079, %v3474
    %v3713 = vsub.f32 %v3082, %v3481
    %v3714 = vsub.f32 %v3087, %v3488
    %v3715 = vsub.f32 %v3090, %v3495
    %v3716 = vsub.f32 %v3095, %v3502
    %v3717 = vsub.f32 %v3098, %v3509
    %v3718 = vsub.f32 %v3103, %v3516
    %v3719 = vsub.f32 %v3106, %v3523
    %v3720 = vsub.f32 %v3111, %v3530
    %v3721 = vsub.f32 %v3114, %v3537
    %v3722 = vsub.f32 %v3119, %v3544
    %v3723 = vsub.f32 %v3122, %v3551
    %v3724 = vsub.f32 %v3127, %v3558
    %v3725 = vsub.f32 %v3130, %v3565
    %v3726 = vsub.f32 %v3135, %v3572
    %v3727 = vsub.f32 %v3138, %v3579
    %v3728 = vsub.f32 %v3143, %v3586
    %v3729 = vsub.f32 %v3146, %v3593
    %v3730 = vsub.f32 %v3151, %v3600
    %v3731 = vsub.f32 %v3154, %v3607
    %v3732 = vsub.f32 %v3159, %v3614
    %v3733 = vsub.f32 %v3162, %v3621
    %v3734 = vsub.f32 %v3167, %v3628
    %v3735 = vsub.f32 %v3170, %v3635
    %v3736 = vsub.f32 %v3175, %v3642
    %v3737 = vsub.f32 %v3178, %v3649
    %v3738 = vsub.f32 %v3183, %v3656
    %v3739 = vsub.f32 %v3186, %v3663
    %v3740 = vsub.f32 %v3191, %v3670
    %v3741 = vsub.f32 %v3194, %v3677
    %v3742 = vsub.f32 %v3199, %v3460
    %v3743 = vsub.f32 %v3202, %v3467
    %v3744 = vsub.f32 %v3207, %v3474
    %v3745 = vsub.f32 %v3210, %v3481
    %v3746 = vsub.f32 %v3215, %v3488
    %v3747 = vsub.f32 %v3218, %v3495
    %v3748 = vsub.f32 %v3223, %v3502
    %v3749 = vsub.f32 %v3226, %v3509
    %v3750 = vsub.f32 %v3231, %v3516
    %v3751 = vsub.f32 %v3234, %v3523
    %v3752 = vsub.f32 %v3239, %v3530
    %v3753 = vsub.f32 %v3242, %v3537
    %v3754 = vsub.f32 %v3247, %v3544
    %v3755 = vsub.f32 %v3250, %v3551
    %v3756 = vsub.f32 %v3255, %v3558
    %v3757 = vsub.f32 %v3258, %v3565
    %v3758 = vsub.f32 %v3263, %v3572
    %v3759 = vsub.f32 %v3266, %v3579
    %v3760 = vsub.f32 %v3271, %v3586
    %v3761 = vsub.f32 %v3274, %v3593
    %v3762 = vsub.f32 %v3279, %v3600
    %v3763 = vsub.f32 %v3282, %v3607
    %v3764 = vsub.f32 %v3287, %v3614
    %v3765 = vsub.f32 %v3290, %v3621
    %v3766 = vsub.f32 %v3295, %v3628
    %v3767 = vsub.f32 %v3298, %v3635
    %v3768 = vsub.f32 %v3303, %v3642
    %v3769 = vsub.f32 %v3306, %v3649
    %v3770 = vsub.f32 %v3311, %v3656
    %v3771 = vsub.f32 %v3314, %v3663
    %v3772 = vsub.f32 %v3319, %v3670
    %v3773 = vsub.f32 %v3322, %v3677
    %v3774 = vsub.f32 %v3327, %v3460
    %v3775 = vsub.f32 %v3330, %v3467
    %v3776 = vsub.f32 %v3335, %v3474
    %v3777 = vsub.f32 %v3338, %v3481
    %v3778 = vsub.f32 %v3343, %v3488
    %v3779 = vsub.f32 %v3346, %v3495
    %v3780 = vsub.f32 %v3351, %v3502
    %v3781 = vsub.f32 %v3354, %v3509
    %v3782 = vsub.f32 %v3359, %v3516
    %v3783 = vsub.f32 %v3362, %v3523
    %v3784 = vsub.f32 %v3367, %v3530
    %v3785 = vsub.f32 %v3370, %v3537
    %v3786 = vsub.f32 %v3375, %v3544
    %v3787 = vsub.f32 %v3378, %v3551
    %v3788 = vsub.f32 %v3383, %v3558
    %v3789 = vsub.f32 %v3386, %v3565
    %v3790 = vsub.f32 %v3391, %v3572
    %v3791 = vsub.f32 %v3394, %v3579
    %v3792 = vsub.f32 %v3399, %v3586
    %v3793 = vsub.f32 %v3402, %v3593
    %v3794 = vsub.f32 %v3407, %v3600
    %v3795 = vsub.f32 %v3410, %v3607
    %v3796 = vsub.f32 %v3415, %v3614
    %v3797 = vsub.f32 %v3418, %v3621
    %v3798 = vsub.f32 %v3423, %v3628
    %v3799 = vsub.f32 %v3426, %v3635
    %v3800 = vsub.f32 %v3431, %v3642
    %v3801 = vsub.f32 %v3434, %v3649
    %v3802 = vsub.f32 %v3439, %v3656
    %v3803 = vsub.f32 %v3442, %v3663
    %v3804 = vsub.f32 %v3447, %v3670
    %v3805 = vsub.f32 %v3450, %v3677
    %v3806 = vmul.f32 %v3678, 1.442695
    %v3807 = vpow.pop %v3806
    %v3808 = vmul.f32 %v3679, 1.442695
    %v3809 = vpow.pop %v3808
    %v3810 = vmul.f32 %v3680, 1.442695
    %v3811 = vpow.pop %v3810
    %v3812 = vmul.f32 %v3681, 1.442695
    %v3813 = vpow.pop %v3812
    %v3814 = vmul.f32 %v3682, 1.442695
    %v3815 = vpow.pop %v3814
    %v3816 = vmul.f32 %v3683, 1.442695
    %v3817 = vpow.pop %v3816
    %v3818 = vmul.f32 %v3684, 1.442695
    %v3819 = vpow.pop %v3818
    %v3820 = vmul.f32 %v3685, 1.442695
    %v3821 = vpow.pop %v3820
    %v3822 = vmul.f32 %v3686, 1.442695
    %v3823 = vpow.pop %v3822
    %v3824 = vmul.f32 %v3687, 1.442695
    %v3825 = vpow.pop %v3824
    %v3826 = vmul.f32 %v3688, 1.442695
    %v3827 = vpow.pop %v3826
    %v3828 = vmul.f32 %v3689, 1.442695
    %v3829 = vpow.pop %v3828
    %v3830 = vmul.f32 %v3690, 1.442695
    %v3831 = vpow.pop %v3830
    %v3832 = vmul.f32 %v3691, 1.442695
    %v3833 = vpow.pop %v3832
    %v3834 = vmul.f32 %v3692, 1.442695
    %v3835 = vpow.pop %v3834
    %v3836 = vmul.f32 %v3693, 1.442695
    %v3837 = vpow.pop %v3836
    %v3838 = vmul.f32 %v3694, 1.442695
    %v3839 = vpow.pop %v3838
    %v3840 = vmul.f32 %v3695, 1.442695
    %v3841 = vpow.pop %v3840
    %v3842 = vmul.f32 %v3696, 1.442695
    %v3843 = vpow.pop %v3842
    %v3844 = vmul.f32 %v3697, 1.442695
    %v3845 = vpow.pop %v3844
    %v3846 = vmul.f32 %v3698, 1.442695
    %v3847 = vpow.pop %v3846
    %v3848 = vmul.f32 %v3699, 1.442695
    %v3849 = vpow.pop %v3848
    %v3850 = vmul.f32 %v3700, 1.442695
    %v3851 = vpow.pop %v3850
    %v3852 = vmul.f32 %v3701, 1.442695
    %v3853 = vpow.pop %v3852
    %v3854 = vmul.f32 %v3702, 1.442695
    %v3855 = vpow.pop %v3854
    %v3856 = vmul.f32 %v3703, 1.442695
    %v3857 = vpow.pop %v3856
    %v3858 = vmul.f32 %v3704, 1.442695
    %v3859 = vpow.pop %v3858
    %v3860 = vmul.f32 %v3705, 1.442695
    %v3861 = vpow.pop %v3860
    %v3862 = vmul.f32 %v3706, 1.442695
    %v3863 = vpow.pop %v3862
    %v3864 = vmul.f32 %v3707, 1.442695
    %v3865 = vpow.pop %v3864
    %v3866 = vmul.f32 %v3708, 1.442695
    %v3867 = vpow.pop %v3866
    %v3868 = vmul.f32 %v3709, 1.442695
    %v3869 = vpow.pop %v3868
    %v3870 = vmul.f32 %v3710, 1.442695
    %v3871 = vpow.pop %v3870
    %v3872 = vmul.f32 %v3711, 1.442695
    %v3873 = vpow.pop %v3872
    %v3874 = vmul.f32 %v3712, 1.442695
    %v3875 = vpow.pop %v3874
    %v3876 = vmul.f32 %v3713, 1.442695
    %v3877 = vpow.pop %v3876
    %v3878 = vmul.f32 %v3714, 1.442695
    %v3879 = vpow.pop %v3878
    %v3880 = vmul.f32 %v3715, 1.442695
    %v3881 = vpow.pop %v3880
    %v3882 = vmul.f32 %v3716, 1.442695
    %v3883 = vpow.pop %v3882
    %v3884 = vmul.f32 %v3717, 1.442695
    %v3885 = vpow.pop %v3884
    %v3886 = vmul.f32 %v3718, 1.442695
    %v3887 = vpow.pop %v3886
    %v3888 = vmul.f32 %v3719, 1.442695
    %v3889 = vpow.pop %v3888
    %v3890 = vmul.f32 %v3720, 1.442695
    %v3891 = vpow.pop %v3890
    %v3892 = vmul.f32 %v3721, 1.442695
    %v3893 = vpow.pop %v3892
    %v3894 = vmul.f32 %v3722, 1.442695
    %v3895 = vpow.pop %v3894
    %v3896 = vmul.f32 %v3723, 1.442695
    %v3897 = vpow.pop %v3896
    %v3898 = vmul.f32 %v3724, 1.442695
    %v3899 = vpow.pop %v3898
    %v3900 = vmul.f32 %v3725, 1.442695
    %v3901 = vpow.pop %v3900
    %v3902 = vmul.f32 %v3726, 1.442695
    %v3903 = vpow.pop %v3902
    %v3904 = vmul.f32 %v3727, 1.442695
    %v3905 = vpow.pop %v3904
    %v3906 = vmul.f32 %v3728, 1.442695
    %v3907 = vpow.pop %v3906
    %v3908 = vmul.f32 %v3729, 1.442695
    %v3909 = vpow.pop %v3908
    %v3910 = vmul.f32 %v3730, 1.442695
    %v3911 = vpow.pop %v3910
    %v3912 = vmul.f32 %v3731, 1.442695
    %v3913 = vpow.pop %v3912
    %v3914 = vmul.f32 %v3732, 1.442695
    %v3915 = vpow.pop %v3914
    %v3916 = vmul.f32 %v3733, 1.442695
    %v3917 = vpow.pop %v3916
    %v3918 = vmul.f32 %v3734, 1.442695
    %v3919 = vpow.pop %v3918
    %v3920 = vmul.f32 %v3735, 1.442695
    %v3921 = vpow.pop %v3920
    %v3922 = vmul.f32 %v3736, 1.442695
    %v3923 = vpow.pop %v3922
    %v3924 = vmul.f32 %v3737, 1.442695
    %v3925 = vpow.pop %v3924
    %v3926 = vmul.f32 %v3738, 1.442695
    %v3927 = vpow.pop %v3926
    %v3928 = vmul.f32 %v3739, 1.442695
    %v3929 = vpow.pop %v3928
    %v3930 = vmul.f32 %v3740, 1.442695
    %v3931 = vpow.pop %v3930
    %v3932 = vmul.f32 %v3741, 1.442695
    %v3933 = vpow.pop %v3932
    %v3934 = vmul.f32 %v3742, 1.442695
    %v3935 = vpow.pop %v3934
    %v3936 = vmul.f32 %v3743, 1.442695
    %v3937 = vpow.pop %v3936
    %v3938 = vmul.f32 %v3744, 1.442695
    %v3939 = vpow.pop %v3938
    %v3940 = vmul.f32 %v3745, 1.442695
    %v3941 = vpow.pop %v3940
    %v3942 = vmul.f32 %v3746, 1.442695
    %v3943 = vpow.pop %v3942
    %v3944 = vmul.f32 %v3747, 1.442695
    %v3945 = vpow.pop %v3944
    %v3946 = vmul.f32 %v3748, 1.442695
    %v3947 = vpow.pop %v3946
    %v3948 = vmul.f32 %v3749, 1.442695
    %v3949 = vpow.pop %v3948
    %v3950 = vmul.f32 %v3750, 1.442695
    %v3951 = vpow.pop %v3950
    %v3952 = vmul.f32 %v3751, 1.442695
    %v3953 = vpow.pop %v3952
    %v3954 = vmul.f32 %v3752, 1.442695
    %v3955 = vpow.pop %v3954
    %v3956 = vmul.f32 %v3753, 1.442695
    %v3957 = vpow.pop %v3956
    %v3958 = vmul.f32 %v3754, 1.442695
    %v3959 = vpow.pop %v3958
    %v3960 = vmul.f32 %v3755, 1.442695
    %v3961 = vpow.pop %v3960
    %v3962 = vmul.f32 %v3756, 1.442695
    %v3963 = vpow.pop %v3962
    %v3964 = vmul.f32 %v3757, 1.442695
    %v3965 = vpow.pop %v3964
    %v3966 = vmul.f32 %v3758, 1.442695
    %v3967 = vpow.pop %v3966
    %v3968 = vmul.f32 %v3759, 1.442695
    %v3969 = vpow.pop %v3968
    %v3970 = vmul.f32 %v3760, 1.442695
    %v3971 = vpow.pop %v3970
    %v3972 = vmul.f32 %v3761, 1.442695
    %v3973 = vpow.pop %v3972
    %v3974 = vmul.f32 %v3762, 1.442695
    %v3975 = vpow.pop %v3974
    %v3976 = vmul.f32 %v3763, 1.442695
    %v3977 = vpow.pop %v3976
    %v3978 = vmul.f32 %v3764, 1.442695
    %v3979 = vpow.pop %v3978
    %v3980 = vmul.f32 %v3765, 1.442695
    %v3981 = vpow.pop %v3980
    %v3982 = vmul.f32 %v3766, 1.442695
    %v3983 = vpow.pop %v3982
    %v3984 = vmul.f32 %v3767, 1.442695
    %v3985 = vpow.pop %v3984
    %v3986 = vmul.f32 %v3768, 1.442695
    %v3987 = vpow.pop %v3986
    %v3988 = vmul.f32 %v3769, 1.442695
    %v3989 = vpow.pop %v3988
    %v3990 = vmul.f32 %v3770, 1.442695
    %v3991 = vpow.pop %v3990
    %v3992 = vmul.f32 %v3771, 1.442695
    %v3993 = vpow.pop %v3992
    %v3994 = vmul.f32 %v3772, 1.442695
    %v3995 = vpow.pop %v3994
    %v3996 = vmul.f32 %v3773, 1.442695
    %v3997 = vpow.pop %v3996
    %v3998 = vmul.f32 %v3774, 1.442695
    %v3999 = vpow.pop %v3998
    %v4000 = vmul.f32 %v3775, 1.442695
    %v4001 = vpow.pop %v4000
    %v4002 = vmul.f32 %v3776, 1.442695
    %v4003 = vpow.pop %v4002
    %v4004 = vmul.f32 %v3777, 1.442695
    %v4005 = vpow.pop %v4004
    %v4006 = vmul.f32 %v3778, 1.442695
    %v4007 = vpow.pop %v4006
    %v4008 = vmul.f32 %v3779, 1.442695
    %v4009 = vpow.pop %v4008
    %v4010 = vmul.f32 %v3780, 1.442695
    %v4011 = vpow.pop %v4010
    %v4012 = vmul.f32 %v3781, 1.442695
    %v4013 = vpow.pop %v4012
    %v4014 = vmul.f32 %v3782, 1.442695
    %v4015 = vpow.pop %v4014
    %v4016 = vmul.f32 %v3783, 1.442695
    %v4017 = vpow.pop %v4016
    %v4018 = vmul.f32 %v3784, 1.442695
    %v4019 = vpow.pop %v4018
    %v4020 = vmul.f32 %v3785, 1.442695
    %v4021 = vpow.pop %v4020
    %v4022 = vmul.f32 %v3786, 1.442695
    %v4023 = vpow.pop %v4022
    %v4024 = vmul.f32 %v3787, 1.442695
    %v4025 = vpow.pop %v4024
    %v4026 = vmul.f32 %v3788, 1.442695
    %v4027 = vpow.pop %v4026
    %v4028 = vmul.f32 %v3789, 1.442695
    %v4029 = vpow.pop %v4028
    %v4030 = vmul.f32 %v3790, 1.442695
    %v4031 = vpow.pop %v4030
    %v4032 = vmul.f32 %v3791, 1.442695
    %v4033 = vpow.pop %v4032
    %v4034 = vmul.f32 %v3792, 1.442695
    %v4035 = vpow.pop %v4034
    %v4036 = vmul.f32 %v3793, 1.442695
    %v4037 = vpow.pop %v4036
    %v4038 = vmul.f32 %v3794, 1.442695
    %v4039 = vpow.pop %v4038
    %v4040 = vmul.f32 %v3795, 1.442695
    %v4041 = vpow.pop %v4040
    %v4042 = vmul.f32 %v3796, 1.442695
    %v4043 = vpow.pop %v4042
    %v4044 = vmul.f32 %v3797, 1.442695
    %v4045 = vpow.pop %v4044
    %v4046 = vmul.f32 %v3798, 1.442695
    %v4047 = vpow.pop %v4046
    %v4048 = vmul.f32 %v3799, 1.442695
    %v4049 = vpow.pop %v4048
    %v4050 = vmul.f32 %v3800, 1.442695
    %v4051 = vpow.pop %v4050
    %v4052 = vmul.f32 %v3801, 1.442695
    %v4053 = vpow.pop %v4052
    %v4054 = vmul.f32 %v3802, 1.442695
    %v4055 = vpow.pop %v4054
    %v4056 = vmul.f32 %v3803, 1.442695
    %v4057 = vpow.pop %v4056
    %v4058 = vmul.f32 %v3804, 1.442695
    %v4059 = vpow.pop %v4058
    %v4060 = vmul.f32 %v3805, 1.442695
    %v4061 = vpow.pop %v4060
    %v4062 = vsel %vm3453, %v3807, 0.0
    %v4063 = vsel %vm3453, %v3871, 0.0
    %v4064 = vadd.f32 %v4062, %v4063
    %v4065 = vsel %vm3453, %v3935, 0.0
    %v4066 = vadd.f32 %v4064, %v4065
    %v4067 = vsel %vm3453, %v3999, 0.0
    %v4068 = vadd.f32 %v4066, %v4067
    %v4069 = vsel %vm3453, %v3809, 0.0
    %v4070 = vsel %vm3453, %v3873, 0.0
    %v4071 = vadd.f32 %v4069, %v4070
    %v4072 = vsel %vm3453, %v3937, 0.0
    %v4073 = vadd.f32 %v4071, %v4072
    %v4074 = vsel %vm3453, %v4001, 0.0
    %v4075 = vadd.f32 %v4073, %v4074
    %v4076 = vsel %vm3453, %v3811, 0.0
    %v4077 = vsel %vm3453, %v3875, 0.0
    %v4078 = vadd.f32 %v4076, %v4077
    %v4079 = vsel %vm3453, %v3939, 0.0
    %v4080 = vadd.f32 %v4078, %v4079
    %v4081 = vsel %vm3453, %v4003, 0.0
    %v4082 = vadd.f32 %v4080, %v4081
    %v4083 = vsel %vm3453, %v3813, 0.0
    %v4084 = vsel %vm3453, %v3877, 0.0
    %v4085 = vadd.f32 %v4083, %v4084
    %v4086 = vsel %vm3453, %v3941, 0.0
    %v4087 = vadd.f32 %v4085, %v4086
    %v4088 = vsel %vm3453, %v4005, 0.0
    %v4089 = vadd.f32 %v4087, %v4088
    %v4090 = vsel %vm3453, %v3815, 0.0
    %v4091 = vsel %vm3453, %v3879, 0.0
    %v4092 = vadd.f32 %v4090, %v4091
    %v4093 = vsel %vm3453, %v3943, 0.0
    %v4094 = vadd.f32 %v4092, %v4093
    %v4095 = vsel %vm3453, %v4007, 0.0
    %v4096 = vadd.f32 %v4094, %v4095
    %v4097 = vsel %vm3453, %v3817, 0.0
    %v4098 = vsel %vm3453, %v3881, 0.0
    %v4099 = vadd.f32 %v4097, %v4098
    %v4100 = vsel %vm3453, %v3945, 0.0
    %v4101 = vadd.f32 %v4099, %v4100
    %v4102 = vsel %vm3453, %v4009, 0.0
    %v4103 = vadd.f32 %v4101, %v4102
    %v4104 = vsel %vm3453, %v3819, 0.0
    %v4105 = vsel %vm3453, %v3883, 0.0
    %v4106 = vadd.f32 %v4104, %v4105
    %v4107 = vsel %vm3453, %v3947, 0.0
    %v4108 = vadd.f32 %v4106, %v4107
    %v4109 = vsel %vm3453, %v4011, 0.0
    %v4110 = vadd.f32 %v4108, %v4109
    %v4111 = vsel %vm3453, %v3821, 0.0
    %v4112 = vsel %vm3453, %v3885, 0.0
    %v4113 = vadd.f32 %v4111, %v4112
    %v4114 = vsel %vm3453, %v3949, 0.0
    %v4115 = vadd.f32 %v4113, %v4114
    %v4116 = vsel %vm3453, %v4013, 0.0
    %v4117 = vadd.f32 %v4115, %v4116
    %v4118 = vsel %vm3453, %v3823, 0.0
    %v4119 = vsel %vm3453, %v3887, 0.0
    %v4120 = vadd.f32 %v4118, %v4119
    %v4121 = vsel %vm3453, %v3951, 0.0
    %v4122 = vadd.f32 %v4120, %v4121
    %v4123 = vsel %vm3453, %v4015, 0.0
    %v4124 = vadd.f32 %v4122, %v4123
    %v4125 = vsel %vm3453, %v3825, 0.0
    %v4126 = vsel %vm3453, %v3889, 0.0
    %v4127 = vadd.f32 %v4125, %v4126
    %v4128 = vsel %vm3453, %v3953, 0.0
    %v4129 = vadd.f32 %v4127, %v4128
    %v4130 = vsel %vm3453, %v4017, 0.0
    %v4131 = vadd.f32 %v4129, %v4130
    %v4132 = vsel %vm3453, %v3827, 0.0
    %v4133 = vsel %vm3453, %v3891, 0.0
    %v4134 = vadd.f32 %v4132, %v4133
    %v4135 = vsel %vm3453, %v3955, 0.0
    %v4136 = vadd.f32 %v4134, %v4135
    %v4137 = vsel %vm3453, %v4019, 0.0
    %v4138 = vadd.f32 %v4136, %v4137
    %v4139 = vsel %vm3453, %v3829, 0.0
    %v4140 = vsel %vm3453, %v3893, 0.0
    %v4141 = vadd.f32 %v4139, %v4140
    %v4142 = vsel %vm3453, %v3957, 0.0
    %v4143 = vadd.f32 %v4141, %v4142
    %v4144 = vsel %vm3453, %v4021, 0.0
    %v4145 = vadd.f32 %v4143, %v4144
    %v4146 = vsel %vm3453, %v3831, 0.0
    %v4147 = vsel %vm3453, %v3895, 0.0
    %v4148 = vadd.f32 %v4146, %v4147
    %v4149 = vsel %vm3453, %v3959, 0.0
    %v4150 = vadd.f32 %v4148, %v4149
    %v4151 = vsel %vm3453, %v4023, 0.0
    %v4152 = vadd.f32 %v4150, %v4151
    %v4153 = vsel %vm3453, %v3833, 0.0
    %v4154 = vsel %vm3453, %v3897, 0.0
    %v4155 = vadd.f32 %v4153, %v4154
    %v4156 = vsel %vm3453, %v3961, 0.0
    %v4157 = vadd.f32 %v4155, %v4156
    %v4158 = vsel %vm3453, %v4025, 0.0
    %v4159 = vadd.f32 %v4157, %v4158
    %v4160 = vsel %vm3453, %v3835, 0.0
    %v4161 = vsel %vm3453, %v3899, 0.0
    %v4162 = vadd.f32 %v4160, %v4161
    %v4163 = vsel %vm3453, %v3963, 0.0
    %v4164 = vadd.f32 %v4162, %v4163
    %v4165 = vsel %vm3453, %v4027, 0.0
    %v4166 = vadd.f32 %v4164, %v4165
    %v4167 = vsel %vm3453, %v3837, 0.0
    %v4168 = vsel %vm3453, %v3901, 0.0
    %v4169 = vadd.f32 %v4167, %v4168
    %v4170 = vsel %vm3453, %v3965, 0.0
    %v4171 = vadd.f32 %v4169, %v4170
    %v4172 = vsel %vm3453, %v4029, 0.0
    %v4173 = vadd.f32 %v4171, %v4172
    %v4174 = vsel %vm3453, %v3839, 0.0
    %v4175 = vsel %vm3453, %v3903, 0.0
    %v4176 = vadd.f32 %v4174, %v4175
    %v4177 = vsel %vm3453, %v3967, 0.0
    %v4178 = vadd.f32 %v4176, %v4177
    %v4179 = vsel %vm3453, %v4031, 0.0
    %v4180 = vadd.f32 %v4178, %v4179
    %v4181 = vsel %vm3453, %v3841, 0.0
    %v4182 = vsel %vm3453, %v3905, 0.0
    %v4183 = vadd.f32 %v4181, %v4182
    %v4184 = vsel %vm3453, %v3969, 0.0
    %v4185 = vadd.f32 %v4183, %v4184
    %v4186 = vsel %vm3453, %v4033, 0.0
    %v4187 = vadd.f32 %v4185, %v4186
    %v4188 = vsel %vm3453, %v3843, 0.0
    %v4189 = vsel %vm3453, %v3907, 0.0
    %v4190 = vadd.f32 %v4188, %v4189
    %v4191 = vsel %vm3453, %v3971, 0.0
    %v4192 = vadd.f32 %v4190, %v4191
    %v4193 = vsel %vm3453, %v4035, 0.0
    %v4194 = vadd.f32 %v4192, %v4193
    %v4195 = vsel %vm3453, %v3845, 0.0
    %v4196 = vsel %vm3453, %v3909, 0.0
    %v4197 = vadd.f32 %v4195, %v4196
    %v4198 = vsel %vm3453, %v3973, 0.0
    %v4199 = vadd.f32 %v4197, %v4198
    %v4200 = vsel %vm3453, %v4037, 0.0
    %v4201 = vadd.f32 %v4199, %v4200
    %v4202 = vsel %vm3453, %v3847, 0.0
    %v4203 = vsel %vm3453, %v3911, 0.0
    %v4204 = vadd.f32 %v4202, %v4203
    %v4205 = vsel %vm3453, %v3975, 0.0
    %v4206 = vadd.f32 %v4204, %v4205
    %v4207 = vsel %vm3453, %v4039, 0.0
    %v4208 = vadd.f32 %v4206, %v4207
    %v4209 = vsel %vm3453, %v3849, 0.0
    %v4210 = vsel %vm3453, %v3913, 0.0
    %v4211 = vadd.f32 %v4209, %v4210
    %v4212 = vsel %vm3453, %v3977, 0.0
    %v4213 = vadd.f32 %v4211, %v4212
    %v4214 = vsel %vm3453, %v4041, 0.0
    %v4215 = vadd.f32 %v4213, %v4214
    %v4216 = vsel %vm3453, %v3851, 0.0
    %v4217 = vsel %vm3453, %v3915, 0.0
    %v4218 = vadd.f32 %v4216, %v4217
    %v4219 = vsel %vm3453, %v3979, 0.0
    %v4220 = vadd.f32 %v4218, %v4219
    %v4221 = vsel %vm3453, %v4043, 0.0
    %v4222 = vadd.f32 %v4220, %v4221
    %v4223 = vsel %vm3453, %v3853, 0.0
    %v4224 = vsel %vm3453, %v3917, 0.0
    %v4225 = vadd.f32 %v4223, %v4224
    %v4226 = vsel %vm3453, %v3981, 0.0
    %v4227 = vadd.f32 %v4225, %v4226
    %v4228 = vsel %vm3453, %v4045, 0.0
    %v4229 = vadd.f32 %v4227, %v4228
    %v4230 = vsel %vm3453, %v3855, 0.0
    %v4231 = vsel %vm3453, %v3919, 0.0
    %v4232 = vadd.f32 %v4230, %v4231
    %v4233 = vsel %vm3453, %v3983, 0.0
    %v4234 = vadd.f32 %v4232, %v4233
    %v4235 = vsel %vm3453, %v4047, 0.0
    %v4236 = vadd.f32 %v4234, %v4235
    %v4237 = vsel %vm3453, %v3857, 0.0
    %v4238 = vsel %vm3453, %v3921, 0.0
    %v4239 = vadd.f32 %v4237, %v4238
    %v4240 = vsel %vm3453, %v3985, 0.0
    %v4241 = vadd.f32 %v4239, %v4240
    %v4242 = vsel %vm3453, %v4049, 0.0
    %v4243 = vadd.f32 %v4241, %v4242
    %v4244 = vsel %vm3453, %v3859, 0.0
    %v4245 = vsel %vm3453, %v3923, 0.0
    %v4246 = vadd.f32 %v4244, %v4245
    %v4247 = vsel %vm3453, %v3987, 0.0
    %v4248 = vadd.f32 %v4246, %v4247
    %v4249 = vsel %vm3453, %v4051, 0.0
    %v4250 = vadd.f32 %v4248, %v4249
    %v4251 = vsel %vm3453, %v3861, 0.0
    %v4252 = vsel %vm3453, %v3925, 0.0
    %v4253 = vadd.f32 %v4251, %v4252
    %v4254 = vsel %vm3453, %v3989, 0.0
    %v4255 = vadd.f32 %v4253, %v4254
    %v4256 = vsel %vm3453, %v4053, 0.0
    %v4257 = vadd.f32 %v4255, %v4256
    %v4258 = vsel %vm3453, %v3863, 0.0
    %v4259 = vsel %vm3453, %v3927, 0.0
    %v4260 = vadd.f32 %v4258, %v4259
    %v4261 = vsel %vm3453, %v3991, 0.0
    %v4262 = vadd.f32 %v4260, %v4261
    %v4263 = vsel %vm3453, %v4055, 0.0
    %v4264 = vadd.f32 %v4262, %v4263
    %v4265 = vsel %vm3453, %v3865, 0.0
    %v4266 = vsel %vm3453, %v3929, 0.0
    %v4267 = vadd.f32 %v4265, %v4266
    %v4268 = vsel %vm3453, %v3993, 0.0
    %v4269 = vadd.f32 %v4267, %v4268
    %v4270 = vsel %vm3453, %v4057, 0.0
    %v4271 = vadd.f32 %v4269, %v4270
    %v4272 = vsel %vm3453, %v3867, 0.0
    %v4273 = vsel %vm3453, %v3931, 0.0
    %v4274 = vadd.f32 %v4272, %v4273
    %v4275 = vsel %vm3453, %v3995, 0.0
    %v4276 = vadd.f32 %v4274, %v4275
    %v4277 = vsel %vm3453, %v4059, 0.0
    %v4278 = vadd.f32 %v4276, %v4277
    %v4279 = vsel %vm3453, %v3869, 0.0
    %v4280 = vsel %vm3453, %v3933, 0.0
    %v4281 = vadd.f32 %v4279, %v4280
    %v4282 = vsel %vm3453, %v3997, 0.0
    %v4283 = vadd.f32 %v4281, %v4282
    %v4284 = vsel %vm3453, %v4061, 0.0
    %v4285 = vadd.f32 %v4283, %v4284
    %v4286 = vrcp.pop %v4068
    %v4287 = vrcp.pop %v4075
    %v4288 = vrcp.pop %v4082
    %v4289 = vrcp.pop %v4089
    %v4290 = vrcp.pop %v4096
    %v4291 = vrcp.pop %v4103
    %v4292 = vrcp.pop %v4110
    %v4293 = vrcp.pop %v4117
    %v4294 = vrcp.pop %v4124
    %v4295 = vrcp.pop %v4131
    %v4296 = vrcp.pop %v4138
    %v4297 = vrcp.pop %v4145
    %v4298 = vrcp.pop %v4152
    %v4299 = vrcp.pop %v4159
    %v4300 = vrcp.pop %v4166
    %v4301 = vrcp.pop %v4173
    %v4302 = vrcp.pop %v4180
    %v4303 = vrcp.pop %v4187
    %v4304 = vrcp.pop %v4194
    %v4305 = vrcp.pop %v4201
    %v4306 = vrcp.pop %v4208
    %v4307 = vrcp.pop %v4215
    %v4308 = vrcp.pop %v4222
    %v4309 = vrcp.pop %v4229
    %v4310 = vrcp.pop %v4236
    %v4311 = vrcp.pop %v4243
    %v4312 = vrcp.pop %v4250
    %v4313 = vrcp.pop %v4257
    %v4314 = vrcp.pop %v4264
    %v4315 = vrcp.pop %v4271
    %v4316 = vrcp.pop %v4278
    %v4317 = vrcp.pop %v4285
    %v4318 = vmul.f32 %v3807, %v4286
    %v4319 = vmul.f32 %v3809, %v4287
    %v4320 = vmul.f32 %v3811, %v4288
    %v4321 = vmul.f32 %v3813, %v4289
    %v4322 = vmul.f32 %v3815, %v4290
    %v4323 = vmul.f32 %v3817, %v4291
    %v4324 = vmul.f32 %v3819, %v4292
    %v4325 = vmul.f32 %v3821, %v4293
    %v4326 = vmul.f32 %v3823, %v4294
    %v4327 = vmul.f32 %v3825, %v4295
    %v4328 = vmul.f32 %v3827, %v4296
    %v4329 = vmul.f32 %v3829, %v4297
    %v4330 = vmul.f32 %v3831, %v4298
    %v4331 = vmul.f32 %v3833, %v4299
    %v4332 = vmul.f32 %v3835, %v4300
    %v4333 = vmul.f32 %v3837, %v4301
    %v4334 = vmul.f32 %v3839, %v4302
    %v4335 = vmul.f32 %v3841, %v4303
    %v4336 = vmul.f32 %v3843, %v4304
    %v4337 = vmul.f32 %v3845, %v4305
    %v4338 = vmul.f32 %v3847, %v4306
    %v4339 = vmul.f32 %v3849, %v4307
    %v4340 = vmul.f32 %v3851, %v4308
    %v4341 = vmul.f32 %v3853, %v4309
    %v4342 = vmul.f32 %v3855, %v4310
    %v4343 = vmul.f32 %v3857, %v4311
    %v4344 = vmul.f32 %v3859, %v4312
    %v4345 = vmul.f32 %v3861, %v4313
    %v4346 = vmul.f32 %v3863, %v4314
    %v4347 = vmul.f32 %v3865, %v4315
    %v4348 = vmul.f32 %v3867, %v4316
    %v4349 = vmul.f32 %v3869, %v4317
    %v4350 = vmul.f32 %v3871, %v4286
    %v4351 = vmul.f32 %v3873, %v4287
    %v4352 = vmul.f32 %v3875, %v4288
    %v4353 = vmul.f32 %v3877, %v4289
    %v4354 = vmul.f32 %v3879, %v4290
    %v4355 = vmul.f32 %v3881, %v4291
    %v4356 = vmul.f32 %v3883, %v4292
    %v4357 = vmul.f32 %v3885, %v4293
    %v4358 = vmul.f32 %v3887, %v4294
    %v4359 = vmul.f32 %v3889, %v4295
    %v4360 = vmul.f32 %v3891, %v4296
    %v4361 = vmul.f32 %v3893, %v4297
    %v4362 = vmul.f32 %v3895, %v4298
    %v4363 = vmul.f32 %v3897, %v4299
    %v4364 = vmul.f32 %v3899, %v4300
    %v4365 = vmul.f32 %v3901, %v4301
    %v4366 = vmul.f32 %v3903, %v4302
    %v4367 = vmul.f32 %v3905, %v4303
    %v4368 = vmul.f32 %v3907, %v4304
    %v4369 = vmul.f32 %v3909, %v4305
    %v4370 = vmul.f32 %v3911, %v4306
    %v4371 = vmul.f32 %v3913, %v4307
    %v4372 = vmul.f32 %v3915, %v4308
    %v4373 = vmul.f32 %v3917, %v4309
    %v4374 = vmul.f32 %v3919, %v4310
    %v4375 = vmul.f32 %v3921, %v4311
    %v4376 = vmul.f32 %v3923, %v4312
    %v4377 = vmul.f32 %v3925, %v4313
    %v4378 = vmul.f32 %v3927, %v4314
    %v4379 = vmul.f32 %v3929, %v4315
    %v4380 = vmul.f32 %v3931, %v4316
    %v4381 = vmul.f32 %v3933, %v4317
    %v4382 = vmul.f32 %v3935, %v4286
    %v4383 = vmul.f32 %v3937, %v4287
    %v4384 = vmul.f32 %v3939, %v4288
    %v4385 = vmul.f32 %v3941, %v4289
    %v4386 = vmul.f32 %v3943, %v4290
    %v4387 = vmul.f32 %v3945, %v4291
    %v4388 = vmul.f32 %v3947, %v4292
    %v4389 = vmul.f32 %v3949, %v4293
    %v4390 = vmul.f32 %v3951, %v4294
    %v4391 = vmul.f32 %v3953, %v4295
    %v4392 = vmul.f32 %v3955, %v4296
    %v4393 = vmul.f32 %v3957, %v4297
    %v4394 = vmul.f32 %v3959, %v4298
    %v4395 = vmul.f32 %v3961, %v4299
    %v4396 = vmul.f32 %v3963, %v4300
    %v4397 = vmul.f32 %v3965, %v4301
    %v4398 = vmul.f32 %v3967, %v4302
    %v4399 = vmul.f32 %v3969, %v4303
    %v4400 = vmul.f32 %v3971, %v4304
    %v4401 = vmul.f32 %v3973, %v4305
    %v4402 = vmul.f32 %v3975, %v4306
    %v4403 = vmul.f32 %v3977, %v4307
    %v4404 = vmul.f32 %v3979, %v4308
    %v4405 = vmul.f32 %v3981, %v4309
    %v4406 = vmul.f32 %v3983, %v4310
    %v4407 = vmul.f32 %v3985, %v4311
    %v4408 = vmul.f32 %v3987, %v4312
    %v4409 = vmul.f32 %v3989, %v4313
    %v4410 = vmul.f32 %v3991, %v4314
    %v4411 = vmul.f32 %v3993, %v4315
    %v4412 = vmul.f32 %v3995, %v4316
    %v4413 = vmul.f32 %v3997, %v4317
    %v4414 = vmul.f32 %v3999, %v4286
    %v4415 = vmul.f32 %v4001, %v4287
    %v4416 = vmul.f32 %v4003, %v4288
    %v4417 = vmul.f32 %v4005, %v4289
    %v4418 = vmul.f32 %v4007, %v4290
    %v4419 = vmul.f32 %v4009, %v4291
    %v4420 = vmul.f32 %v4011, %v4292
    %v4421 = vmul.f32 %v4013, %v4293
    %v4422 = vmul.f32 %v4015, %v4294
    %v4423 = vmul.f32 %v4017, %v4295
    %v4424 = vmul.f32 %v4019, %v4296
    %v4425 = vmul.f32 %v4021, %v4297
    %v4426 = vmul.f32 %v4023, %v4298
    %v4427 = vmul.f32 %v4025, %v4299
    %v4428 = vmul.f32 %v4027, %v4300
    %v4429 = vmul.f32 %v4029, %v4301
    %v4430 = vmul.f32 %v4031, %v4302
    %v4431 = vmul.f32 %v4033, %v4303
    %v4432 = vmul.f32 %v4035, %v4304
    %v4433 = vmul.f32 %v4037, %v4305
    %v4434 = vmul.f32 %v4039, %v4306
    %v4435 = vmul.f32 %v4041, %v4307
    %v4436 = vmul.f32 %v4043, %v4308
    %v4437 = vmul.f32 %v4045, %v4309
    %v4438 = vmul.f32 %v4047, %v4310
    %v4439 = vmul.f32 %v4049, %v4311
    %v4440 = vmul.f32 %v4051, %v4312
    %v4441 = vmul.f32 %v4053, %v4313
    %v4442 = vmul.f32 %v4055, %v4314
    %v4443 = vmul.f32 %v4057, %v4315
    %v4444 = vmul.f32 %v4059, %v4316
    %v4445 = vmul.f32 %v4061, %v4317
    %v4446 = vpack.c.bf16 %v4319, %v4318
    %v4447 = vpack.c.bf16 %v4321, %v4320
    %v4448 = vpack.c.bf16 %v4323, %v4322
    %v4449 = vpack.c.bf16 %v4325, %v4324
    %v4450 = vpack.c.bf16 %v4327, %v4326
    %v4451 = vpack.c.bf16 %v4329, %v4328
    %v4452 = vpack.c.bf16 %v4331, %v4330
    %v4453 = vpack.c.bf16 %v4333, %v4332
    %v4454 = vpack.c.bf16 %v4335, %v4334
    %v4455 = vpack.c.bf16 %v4337, %v4336
    %v4456 = vpack.c.bf16 %v4339, %v4338
    %v4457 = vpack.c.bf16 %v4341, %v4340
    %v4458 = vpack.c.bf16 %v4343, %v4342
    %v4459 = vpack.c.bf16 %v4345, %v4344
    %v4460 = vpack.c.bf16 %v4347, %v4346
    %v4461 = vpack.c.bf16 %v4349, %v4348
    %v4462 = vpack.c.bf16 %v4351, %v4350
    %v4463 = vpack.c.bf16 %v4353, %v4352
    %v4464 = vpack.c.bf16 %v4355, %v4354
    %v4465 = vpack.c.bf16 %v4357, %v4356
    %v4466 = vpack.c.bf16 %v4359, %v4358
    %v4467 = vpack.c.bf16 %v4361, %v4360
    %v4468 = vpack.c.bf16 %v4363, %v4362
    %v4469 = vpack.c.bf16 %v4365, %v4364
    %v4470 = vpack.c.bf16 %v4367, %v4366
    %v4471 = vpack.c.bf16 %v4369, %v4368
    %v4472 = vpack.c.bf16 %v4371, %v4370
    %v4473 = vpack.c.bf16 %v4373, %v4372
    %v4474 = vpack.c.bf16 %v4375, %v4374
    %v4475 = vpack.c.bf16 %v4377, %v4376
    %v4476 = vpack.c.bf16 %v4379, %v4378
    %v4477 = vpack.c.bf16 %v4381, %v4380
    %v4478 = vpack.c.bf16 %v4383, %v4382
    %v4479 = vpack.c.bf16 %v4385, %v4384
    %v4480 = vpack.c.bf16 %v4387, %v4386
    %v4481 = vpack.c.bf16 %v4389, %v4388
    %v4482 = vpack.c.bf16 %v4391, %v4390
    %v4483 = vpack.c.bf16 %v4393, %v4392
    %v4484 = vpack.c.bf16 %v4395, %v4394
    %v4485 = vpack.c.bf16 %v4397, %v4396
    %v4486 = vpack.c.bf16 %v4399, %v4398
    %v4487 = vpack.c.bf16 %v4401, %v4400
    %v4488 = vpack.c.bf16 %v4403, %v4402
    %v4489 = vpack.c.bf16 %v4405, %v4404
    %v4490 = vpack.c.bf16 %v4407, %v4406
    %v4491 = vpack.c.bf16 %v4409, %v4408
    %v4492 = vpack.c.bf16 %v4411, %v4410
    %v4493 = vpack.c.bf16 %v4413, %v4412
    %v4494 = vpack.c.bf16 %v4415, %v4414
    %v4495 = vpack.c.bf16 %v4417, %v4416
    %v4496 = vpack.c.bf16 %v4419, %v4418
    %v4497 = vpack.c.bf16 %v4421, %v4420
    %v4498 = vpack.c.bf16 %v4423, %v4422
    %v4499 = vpack.c.bf16 %v4425, %v4424
    %v4500 = vpack.c.bf16 %v4427, %v4426
    %v4501 = vpack.c.bf16 %v4429, %v4428
    %v4502 = vpack.c.bf16 %v4431, %v4430
    %v4503 = vpack.c.bf16 %v4433, %v4432
    %v4504 = vpack.c.bf16 %v4435, %v4434
    %v4505 = vpack.c.bf16 %v4437, %v4436
    %v4506 = vpack.c.bf16 %v4439, %v4438
    %v4507 = vpack.c.bf16 %v4441, %v4440
    %v4508 = vpack.c.bf16 %v4443, %v4442
    %v4509 = vpack.c.bf16 %v4445, %v4444
    %v4510 = vld [vmem:[%s4] sm:$0xf]
    %v4512 = vsel %vm3453, %v4446, 0
    %v4515 = vsel %vm3453, %v4447, 0
    %v4518 = vsel %vm3453, %v4448, 0
    %v4521 = vsel %vm3453, %v4449, 0
    %v4524 = vsel %vm3453, %v4450, 0
    %v4527 = vsel %vm3453, %v4451, 0
    %v4530 = vsel %vm3453, %v4452, 0
    %v4533 = vsel %vm3453, %v4453, 0
    %v4536 = vsel %vm3453, %v4454, 0
    %v4539 = vsel %vm3453, %v4455, 0
    %v4542 = vsel %vm3453, %v4456, 0
    %v4545 = vsel %vm3453, %v4457, 0
    %v4548 = vsel %vm3453, %v4458, 0
    %v4551 = vsel %vm3453, %v4459, 0
    %v4554 = vsel %vm3453, %v4460, 0
    %v4557 = vsel %vm3453, %v4461, 0
    %v4560 = vsel %vm3453, %v4462, 0
    %v4563 = vsel %vm3453, %v4463, 0
    %v4566 = vsel %vm3453, %v4464, 0
    %v4569 = vsel %vm3453, %v4465, 0
    %v4572 = vsel %vm3453, %v4466, 0
    %v4575 = vsel %vm3453, %v4467, 0
    %v4578 = vsel %vm3453, %v4468, 0
    %v4581 = vsel %vm3453, %v4469, 0
    %v4584 = vsel %vm3453, %v4470, 0
    %v4587 = vsel %vm3453, %v4471, 0
    %v4590 = vsel %vm3453, %v4472, 0
    %v4593 = vsel %vm3453, %v4473, 0
    %v4596 = vsel %vm3453, %v4474, 0
    %v4599 = vsel %vm3453, %v4475, 0
    %v4602 = vsel %vm3453, %v4476, 0
    %v4605 = vsel %vm3453, %v4477, 0
    %v4608 = vsel %vm3453, %v4478, 0
    %v4611 = vsel %vm3453, %v4479, 0
    %v4614 = vsel %vm3453, %v4480, 0
    %v4617 = vsel %vm3453, %v4481, 0
    %v4620 = vsel %vm3453, %v4482, 0
    %v4623 = vsel %vm3453, %v4483, 0
    %v4626 = vsel %vm3453, %v4484, 0
    %v4629 = vsel %vm3453, %v4485, 0
    %v4632 = vsel %vm3453, %v4486, 0
    %v4635 = vsel %vm3453, %v4487, 0
    %v4638 = vsel %vm3453, %v4488, 0
    %v4641 = vsel %vm3453, %v4489, 0
    %v4644 = vsel %vm3453, %v4490, 0
    %v4647 = vsel %vm3453, %v4491, 0
    %v4650 = vsel %vm3453, %v4492, 0
    %v4653 = vsel %vm3453, %v4493, 0
    %v4656 = vsel %vm3453, %v4494, 0
    %v4659 = vsel %vm3453, %v4495, 0
    %v4662 = vsel %vm3453, %v4496, 0
    %v4665 = vsel %vm3453, %v4497, 0
    %v4668 = vsel %vm3453, %v4498, 0
    %v4671 = vsel %vm3453, %v4499, 0
    %v4674 = vsel %vm3453, %v4500, 0
    %v4677 = vsel %vm3453, %v4501, 0
    %v4680 = vsel %vm3453, %v4502, 0
    %v4683 = vsel %vm3453, %v4503, 0
    %v4686 = vsel %vm3453, %v4504, 0
    %v4689 = vsel %vm3453, %v4505, 0
    %v4692 = vsel %vm3453, %v4506, 0
    %v4695 = vsel %vm3453, %v4507, 0
    %v4698 = vsel %vm3453, %v4508, 0
    %v4701 = vsel %vm3453, %v4509, 0
    %vm4703 = vcmask 1043456
    %v4705 = vsel %vm4703, %v4510, 0
    %4707 = vmatprep.subr.bf16.mxu0 0
    %4708 = vmatpush1.bf16.msra.mxu0 %v4705
    %4709 = vmatprep.subr.bf16.mxu0 0
    %4710 = vmatpush1.bf16.msra.mxu0 0
    %4711 = vmatprep.subr.bf16.mxu0 0
    %4712 = vmatpush1.bf16.msra.mxu0 0
    %4713 = vmatprep.subr.bf16.mxu0 0
    %4714 = vmatpush1.bf16.msra.mxu0 0
    %4715 = vmatprep.subr.bf16.mxu0 0
    %4716 = vmatpush1.bf16.msra.mxu0 0
    %4717 = vmatprep.subr.bf16.mxu0 0
    %4718 = vmatpush1.bf16.msra.mxu0 0
    %4719 = vmatprep.subr.bf16.mxu0 0
    %4720 = vmatpush1.bf16.msra.mxu0 0
    %4721 = vmatprep.subr.bf16.mxu0 0
    %4722 = vmatpush1.bf16.msra.mxu0 0
    %4723 = vmatprep.subr.bf16.mxu0 0
    %4724 = vmatpush1.bf16.msra.mxu0 0
    %4725 = vmatprep.subr.bf16.mxu0 0
    %4726 = vmatpush1.bf16.msra.mxu0 0
    %4727 = vmatprep.subr.bf16.mxu0 0
    %4728 = vmatpush1.bf16.msra.mxu0 0
    %4729 = vmatprep.subr.bf16.mxu0 0
    %4730 = vmatpush1.bf16.msra.mxu0 0
    %4731 = vmatprep.subr.bf16.mxu0 0
    %4732 = vmatpush1.bf16.msra.mxu0 0
    %4733 = vmatprep.subr.bf16.mxu0 0
    %4734 = vmatpush1.bf16.msra.mxu0 0
    %4735 = vmatprep.subr.bf16.mxu0 0
    %4736 = vmatpush1.bf16.msra.mxu0 0
    %4737 = vmatprep.subr.bf16.mxu0 0
    %4738 = vmatpush1.bf16.msra.mxu0 0
    %4739 = vmatprep.mubr.bf16.mxu0 0
    %4740 = vmatmul.mubr.bf16.gmra.mrb[0].mxu0 %v4512
    %v4741 = vpop.f32.mrb[0].mxu0
    %v4742 = vadd.f32 0.0, %v4741
    %v4743 = vpop.f32.mrb[0].mxu0
    %v4744 = vpop.f32.mrb[0].mxu0
    %v4745 = vadd.f32 0.0, %v4744
    %v4746 = vpop.f32.mrb[0].mxu0
    %4747 = vmatprep.mubr.bf16.mxu0 0
    %4748 = vmatmul.mubr.bf16.gmra.mrb[0].mxu0 %v4515
    %v4749 = vpop.f32.mrb[0].mxu0
    %v4750 = vadd.f32 0.0, %v4749
    %v4751 = vpop.f32.mrb[0].mxu0
    %v4752 = vpop.f32.mrb[0].mxu0
    %v4753 = vadd.f32 0.0, %v4752
    %v4754 = vpop.f32.mrb[0].mxu0
    %4755 = vmatprep.mubr.bf16.mxu0 0
    %4756 = vmatmul.mubr.bf16.gmra.mrb[0].mxu0 %v4518
    %v4757 = vpop.f32.mrb[0].mxu0
    %v4758 = vadd.f32 0.0, %v4757
    %v4759 = vpop.f32.mrb[0].mxu0
    %v4760 = vpop.f32.mrb[0].mxu0
    %v4761 = vadd.f32 0.0, %v4760
    %v4762 = vpop.f32.mrb[0].mxu0
    %4763 = vmatprep.mubr.bf16.mxu0 0
    %4764 = vmatmul.mubr.bf16.gmra.mrb[0].mxu0 %v4521
    %v4765 = vpop.f32.mrb[0].mxu0
    %v4766 = vadd.f32 0.0, %v4765
    %v4767 = vpop.f32.mrb[0].mxu0
    %v4768 = vpop.f32.mrb[0].mxu0
    %v4769 = vadd.f32 0.0, %v4768
    %v4770 = vpop.f32.mrb[0].mxu0
    %4771 = vmatprep.mubr.bf16.mxu0 0
    %4772 = vmatmul.mubr.bf16.gmra.mrb[0].mxu0 %v4524
    %v4773 = vpop.f32.mrb[0].mxu0
    %v4774 = vadd.f32 0.0, %v4773
    %v4775 = vpop.f32.mrb[0].mxu0
    %v4776 = vpop.f32.mrb[0].mxu0
    %v4777 = vadd.f32 0.0, %v4776
    %v4778 = vpop.f32.mrb[0].mxu0
    %4779 = vmatprep.mubr.bf16.mxu0 0
    %4780 = vmatmul.mubr.bf16.gmra.mrb[0].mxu0 %v4527
    %v4781 = vpop.f32.mrb[0].mxu0
    %v4782 = vadd.f32 0.0, %v4781
    %v4783 = vpop.f32.mrb[0].mxu0
    %v4784 = vpop.f32.mrb[0].mxu0
    %v4785 = vadd.f32 0.0, %v4784
    %v4786 = vpop.f32.mrb[0].mxu0
    %4787 = vmatprep.mubr.bf16.mxu0 0
    %4788 = vmatmul.mubr.bf16.gmra.mrb[0].mxu0 %v4530
    %v4789 = vpop.f32.mrb[0].mxu0
    %v4790 = vadd.f32 0.0, %v4789
    %v4791 = vpop.f32.mrb[0].mxu0
    %v4792 = vpop.f32.mrb[0].mxu0
    %v4793 = vadd.f32 0.0, %v4792
    %v4794 = vpop.f32.mrb[0].mxu0
    %4795 = vmatprep.mubr.bf16.mxu0 0
    %4796 = vmatmul.mubr.bf16.gmra.mrb[0].mxu0 %v4533
    %v4797 = vpop.f32.mrb[0].mxu0
    %v4798 = vadd.f32 0.0, %v4797
    %v4799 = vpop.f32.mrb[0].mxu0
    %v4800 = vpop.f32.mrb[0].mxu0
    %v4801 = vadd.f32 0.0, %v4800
    %v4802 = vpop.f32.mrb[0].mxu0
    %4803 = vmatprep.mubr.bf16.mxu0 0
    %4804 = vmatmul.mubr.bf16.gmra.mrb[0].mxu0 %v4536
    %v4805 = vpop.f32.mrb[0].mxu0
    %v4806 = vadd.f32 0.0, %v4805
    %v4807 = vpop.f32.mrb[0].mxu0
    %v4808 = vpop.f32.mrb[0].mxu0
    %v4809 = vadd.f32 0.0, %v4808
    %v4810 = vpop.f32.mrb[0].mxu0
    %4811 = vmatprep.mubr.bf16.mxu0 0
    %4812 = vmatmul.mubr.bf16.gmra.mrb[0].mxu0 %v4539
    %v4813 = vpop.f32.mrb[0].mxu0
    %v4814 = vadd.f32 0.0, %v4813
    %v4815 = vpop.f32.mrb[0].mxu0
    %v4816 = vpop.f32.mrb[0].mxu0
    %v4817 = vadd.f32 0.0, %v4816
    %v4818 = vpop.f32.mrb[0].mxu0
    %4819 = vmatprep.mubr.bf16.mxu0 0
    %4820 = vmatmul.mubr.bf16.gmra.mrb[0].mxu0 %v4542
    %v4821 = vpop.f32.mrb[0].mxu0
    %v4822 = vadd.f32 0.0, %v4821
    %v4823 = vpop.f32.mrb[0].mxu0
    %v4824 = vpop.f32.mrb[0].mxu0
    %v4825 = vadd.f32 0.0, %v4824
    %v4826 = vpop.f32.mrb[0].mxu0
    %4827 = vmatprep.mubr.bf16.mxu0 0
    %4828 = vmatmul.mubr.bf16.gmra.mrb[0].mxu0 %v4545
    %v4829 = vpop.f32.mrb[0].mxu0
    %v4830 = vadd.f32 0.0, %v4829
    %v4831 = vpop.f32.mrb[0].mxu0
    %v4832 = vpop.f32.mrb[0].mxu0
    %v4833 = vadd.f32 0.0, %v4832
    %v4834 = vpop.f32.mrb[0].mxu0
    %4835 = vmatprep.mubr.bf16.mxu0 0
    %4836 = vmatmul.mubr.bf16.gmra.mrb[0].mxu0 %v4548
    %v4837 = vpop.f32.mrb[0].mxu0
    %v4838 = vadd.f32 0.0, %v4837
    %v4839 = vpop.f32.mrb[0].mxu0
    %v4840 = vpop.f32.mrb[0].mxu0
    %v4841 = vadd.f32 0.0, %v4840
    %v4842 = vpop.f32.mrb[0].mxu0
    %4843 = vmatprep.mubr.bf16.mxu0 0
    %4844 = vmatmul.mubr.bf16.gmra.mrb[0].mxu0 %v4551
    %v4845 = vpop.f32.mrb[0].mxu0
    %v4846 = vadd.f32 0.0, %v4845
    %v4847 = vpop.f32.mrb[0].mxu0
    %v4848 = vpop.f32.mrb[0].mxu0
    %v4849 = vadd.f32 0.0, %v4848
    %v4850 = vpop.f32.mrb[0].mxu0
    %4851 = vmatprep.mubr.bf16.mxu0 0
    %4852 = vmatmul.mubr.bf16.gmra.mrb[0].mxu0 %v4554
    %v4853 = vpop.f32.mrb[0].mxu0
    %v4854 = vadd.f32 0.0, %v4853
    %v4855 = vpop.f32.mrb[0].mxu0
    %v4856 = vpop.f32.mrb[0].mxu0
    %v4857 = vadd.f32 0.0, %v4856
    %v4858 = vpop.f32.mrb[0].mxu0
    %4859 = vmatprep.mubr.bf16.mxu0 0
    %4860 = vmatmul.mubr.bf16.gmra.mrb[0].mxu0 %v4557
    %v4861 = vpop.f32.mrb[0].mxu0
    %v4862 = vadd.f32 0.0, %v4861
    %v4863 = vpop.f32.mrb[0].mxu0
    %v4864 = vpop.f32.mrb[0].mxu0
    %v4865 = vadd.f32 0.0, %v4864
    %v4866 = vpop.f32.mrb[0].mxu0
    %4867 = vmatprep.mubr.bf16.mxu0 0
    %4868 = vmatmul.mubr.bf16.gmra.mrb[0].mxu0 %v4560
    %v4869 = vpop.f32.mrb[0].mxu0
    %v4870 = vadd.f32 0.0, %v4869
    %v4871 = vpop.f32.mrb[0].mxu0
    %v4872 = vpop.f32.mrb[0].mxu0
    %v4873 = vadd.f32 0.0, %v4872
    %v4874 = vpop.f32.mrb[0].mxu0
    %4875 = vmatprep.mubr.bf16.mxu0 0
    %4876 = vmatmul.mubr.bf16.gmra.mrb[0].mxu0 %v4563
    %v4877 = vpop.f32.mrb[0].mxu0
    %v4878 = vadd.f32 0.0, %v4877
    %v4879 = vpop.f32.mrb[0].mxu0
    %v4880 = vpop.f32.mrb[0].mxu0
    %v4881 = vadd.f32 0.0, %v4880
    %v4882 = vpop.f32.mrb[0].mxu0
    %4883 = vmatprep.mubr.bf16.mxu0 0
    %4884 = vmatmul.mubr.bf16.gmra.mrb[0].mxu0 %v4566
    %v4885 = vpop.f32.mrb[0].mxu0
    %v4886 = vadd.f32 0.0, %v4885
    %v4887 = vpop.f32.mrb[0].mxu0
    %v4888 = vpop.f32.mrb[0].mxu0
    %v4889 = vadd.f32 0.0, %v4888
    %v4890 = vpop.f32.mrb[0].mxu0
    %4891 = vmatprep.mubr.bf16.mxu0 0
    %4892 = vmatmul.mubr.bf16.gmra.mrb[0].mxu0 %v4569
    %v4893 = vpop.f32.mrb[0].mxu0
    %v4894 = vadd.f32 0.0, %v4893
    %v4895 = vpop.f32.mrb[0].mxu0
    %v4896 = vpop.f32.mrb[0].mxu0
    %v4897 = vadd.f32 0.0, %v4896
    %v4898 = vpop.f32.mrb[0].mxu0
    %4899 = vmatprep.mubr.bf16.mxu0 0
    %4900 = vmatmul.mubr.bf16.gmra.mrb[0].mxu0 %v4572
    %v4901 = vpop.f32.mrb[0].mxu0
    %v4902 = vadd.f32 0.0, %v4901
    %v4903 = vpop.f32.mrb[0].mxu0
    %v4904 = vpop.f32.mrb[0].mxu0
    %v4905 = vadd.f32 0.0, %v4904
    %v4906 = vpop.f32.mrb[0].mxu0
    %4907 = vmatprep.mubr.bf16.mxu0 0
    %4908 = vmatmul.mubr.bf16.gmra.mrb[0].mxu0 %v4575
    %v4909 = vpop.f32.mrb[0].mxu0
    %v4910 = vadd.f32 0.0, %v4909
    %v4911 = vpop.f32.mrb[0].mxu0
    %v4912 = vpop.f32.mrb[0].mxu0
    %v4913 = vadd.f32 0.0, %v4912
    %v4914 = vpop.f32.mrb[0].mxu0
    %4915 = vmatprep.mubr.bf16.mxu0 0
    %4916 = vmatmul.mubr.bf16.gmra.mrb[0].mxu0 %v4578
    %v4917 = vpop.f32.mrb[0].mxu0
    %v4918 = vadd.f32 0.0, %v4917
    %v4919 = vpop.f32.mrb[0].mxu0
    %v4920 = vpop.f32.mrb[0].mxu0
    %v4921 = vadd.f32 0.0, %v4920
    %v4922 = vpop.f32.mrb[0].mxu0
    %4923 = vmatprep.mubr.bf16.mxu0 0
    %4924 = vmatmul.mubr.bf16.gmra.mrb[0].mxu0 %v4581
    %v4925 = vpop.f32.mrb[0].mxu0
    %v4926 = vadd.f32 0.0, %v4925
    %v4927 = vpop.f32.mrb[0].mxu0
    %v4928 = vpop.f32.mrb[0].mxu0
    %v4929 = vadd.f32 0.0, %v4928
    %v4930 = vpop.f32.mrb[0].mxu0
    %4931 = vmatprep.mubr.bf16.mxu0 0
    %4932 = vmatmul.mubr.bf16.gmra.mrb[0].mxu0 %v4584
    %v4933 = vpop.f32.mrb[0].mxu0
    %v4934 = vadd.f32 0.0, %v4933
    %v4935 = vpop.f32.mrb[0].mxu0
    %v4936 = vpop.f32.mrb[0].mxu0
    %v4937 = vadd.f32 0.0, %v4936
    %v4938 = vpop.f32.mrb[0].mxu0
    %4939 = vmatprep.mubr.bf16.mxu0 0
    %4940 = vmatmul.mubr.bf16.gmra.mrb[0].mxu0 %v4587
    %v4941 = vpop.f32.mrb[0].mxu0
    %v4942 = vadd.f32 0.0, %v4941
    %v4943 = vpop.f32.mrb[0].mxu0
    %v4944 = vpop.f32.mrb[0].mxu0
    %v4945 = vadd.f32 0.0, %v4944
    %v4946 = vpop.f32.mrb[0].mxu0
    %4947 = vmatprep.mubr.bf16.mxu0 0
    %4948 = vmatmul.mubr.bf16.gmra.mrb[0].mxu0 %v4590
    %v4949 = vpop.f32.mrb[0].mxu0
    %v4950 = vadd.f32 0.0, %v4949
    %v4951 = vpop.f32.mrb[0].mxu0
    %v4952 = vpop.f32.mrb[0].mxu0
    %v4953 = vadd.f32 0.0, %v4952
    %v4954 = vpop.f32.mrb[0].mxu0
    %4955 = vmatprep.mubr.bf16.mxu0 0
    %4956 = vmatmul.mubr.bf16.gmra.mrb[0].mxu0 %v4593
    %v4957 = vpop.f32.mrb[0].mxu0
    %v4958 = vadd.f32 0.0, %v4957
    %v4959 = vpop.f32.mrb[0].mxu0
    %v4960 = vpop.f32.mrb[0].mxu0
    %v4961 = vadd.f32 0.0, %v4960
    %v4962 = vpop.f32.mrb[0].mxu0
    %4963 = vmatprep.mubr.bf16.mxu0 0
    %4964 = vmatmul.mubr.bf16.gmra.mrb[0].mxu0 %v4596
    %v4965 = vpop.f32.mrb[0].mxu0
    %v4966 = vadd.f32 0.0, %v4965
    %v4967 = vpop.f32.mrb[0].mxu0
    %v4968 = vpop.f32.mrb[0].mxu0
    %v4969 = vadd.f32 0.0, %v4968
    %v4970 = vpop.f32.mrb[0].mxu0
    %4971 = vmatprep.mubr.bf16.mxu0 0
    %4972 = vmatmul.mubr.bf16.gmra.mrb[0].mxu0 %v4599
    %v4973 = vpop.f32.mrb[0].mxu0
    %v4974 = vadd.f32 0.0, %v4973
    %v4975 = vpop.f32.mrb[0].mxu0
    %v4976 = vpop.f32.mrb[0].mxu0
    %v4977 = vadd.f32 0.0, %v4976
    %v4978 = vpop.f32.mrb[0].mxu0
    %4979 = vmatprep.mubr.bf16.mxu0 0
    %4980 = vmatmul.mubr.bf16.gmra.mrb[0].mxu0 %v4602
    %v4981 = vpop.f32.mrb[0].mxu0
    %v4982 = vadd.f32 0.0, %v4981
    %v4983 = vpop.f32.mrb[0].mxu0
    %v4984 = vpop.f32.mrb[0].mxu0
    %v4985 = vadd.f32 0.0, %v4984
    %v4986 = vpop.f32.mrb[0].mxu0
    %4987 = vmatprep.mubr.bf16.mxu0 0
    %4988 = vmatmul.mubr.bf16.gmra.mrb[0].mxu0 %v4605
    %v4989 = vpop.f32.mrb[0].mxu0
    %v4990 = vadd.f32 0.0, %v4989
    %v4991 = vpop.f32.mrb[0].mxu0
    %v4992 = vpop.f32.mrb[0].mxu0
    %v4993 = vadd.f32 0.0, %v4992
    %v4994 = vpop.f32.mrb[0].mxu0
    %4995 = vmatprep.mubr.bf16.mxu0 0
    %4996 = vmatmul.mubr.bf16.gmra.mrb[0].mxu0 %v4608
    %v4997 = vpop.f32.mrb[0].mxu0
    %v4998 = vadd.f32 0.0, %v4997
    %v4999 = vpop.f32.mrb[0].mxu0
    %v5000 = vpop.f32.mrb[0].mxu0
    %v5001 = vadd.f32 0.0, %v5000
    %v5002 = vpop.f32.mrb[0].mxu0
    %5003 = vmatprep.mubr.bf16.mxu0 0
    %5004 = vmatmul.mubr.bf16.gmra.mrb[0].mxu0 %v4611
    %v5005 = vpop.f32.mrb[0].mxu0
    %v5006 = vadd.f32 0.0, %v5005
    %v5007 = vpop.f32.mrb[0].mxu0
    %v5008 = vpop.f32.mrb[0].mxu0
    %v5009 = vadd.f32 0.0, %v5008
    %v5010 = vpop.f32.mrb[0].mxu0
    %5011 = vmatprep.mubr.bf16.mxu0 0
    %5012 = vmatmul.mubr.bf16.gmra.mrb[0].mxu0 %v4614
    %v5013 = vpop.f32.mrb[0].mxu0
    %v5014 = vadd.f32 0.0, %v5013
    %v5015 = vpop.f32.mrb[0].mxu0
    %v5016 = vpop.f32.mrb[0].mxu0
    %v5017 = vadd.f32 0.0, %v5016
    %v5018 = vpop.f32.mrb[0].mxu0
    %5019 = vmatprep.mubr.bf16.mxu0 0
    %5020 = vmatmul.mubr.bf16.gmra.mrb[0].mxu0 %v4617
    %v5021 = vpop.f32.mrb[0].mxu0
    %v5022 = vadd.f32 0.0, %v5021
    %v5023 = vpop.f32.mrb[0].mxu0
    %v5024 = vpop.f32.mrb[0].mxu0
    %v5025 = vadd.f32 0.0, %v5024
    %v5026 = vpop.f32.mrb[0].mxu0
    %5027 = vmatprep.mubr.bf16.mxu0 0
    %5028 = vmatmul.mubr.bf16.gmra.mrb[0].mxu0 %v4620
    %v5029 = vpop.f32.mrb[0].mxu0
    %v5030 = vadd.f32 0.0, %v5029
    %v5031 = vpop.f32.mrb[0].mxu0
    %v5032 = vpop.f32.mrb[0].mxu0
    %v5033 = vadd.f32 0.0, %v5032
    %v5034 = vpop.f32.mrb[0].mxu0
    %5035 = vmatprep.mubr.bf16.mxu0 0
    %5036 = vmatmul.mubr.bf16.gmra.mrb[0].mxu0 %v4623
    %v5037 = vpop.f32.mrb[0].mxu0
    %v5038 = vadd.f32 0.0, %v5037
    %v5039 = vpop.f32.mrb[0].mxu0
    %v5040 = vpop.f32.mrb[0].mxu0
    %v5041 = vadd.f32 0.0, %v5040
    %v5042 = vpop.f32.mrb[0].mxu0
    %5043 = vmatprep.mubr.bf16.mxu0 0
    %5044 = vmatmul.mubr.bf16.gmra.mrb[0].mxu0 %v4626
    %v5045 = vpop.f32.mrb[0].mxu0
    %v5046 = vadd.f32 0.0, %v5045
    %v5047 = vpop.f32.mrb[0].mxu0
    %v5048 = vpop.f32.mrb[0].mxu0
    %v5049 = vadd.f32 0.0, %v5048
    %v5050 = vpop.f32.mrb[0].mxu0
    %5051 = vmatprep.mubr.bf16.mxu0 0
    %5052 = vmatmul.mubr.bf16.gmra.mrb[0].mxu0 %v4629
    %v5053 = vpop.f32.mrb[0].mxu0
    %v5054 = vadd.f32 0.0, %v5053
    %v5055 = vpop.f32.mrb[0].mxu0
    %v5056 = vpop.f32.mrb[0].mxu0
    %v5057 = vadd.f32 0.0, %v5056
    %v5058 = vpop.f32.mrb[0].mxu0
    %5059 = vmatprep.mubr.bf16.mxu0 0
    %5060 = vmatmul.mubr.bf16.gmra.mrb[0].mxu0 %v4632
    %v5061 = vpop.f32.mrb[0].mxu0
    %v5062 = vadd.f32 0.0, %v5061
    %v5063 = vpop.f32.mrb[0].mxu0
    %v5064 = vpop.f32.mrb[0].mxu0
    %v5065 = vadd.f32 0.0, %v5064
    %v5066 = vpop.f32.mrb[0].mxu0
    %5067 = vmatprep.mubr.bf16.mxu0 0
    %5068 = vmatmul.mubr.bf16.gmra.mrb[0].mxu0 %v4635
    %v5069 = vpop.f32.mrb[0].mxu0
    %v5070 = vadd.f32 0.0, %v5069
    %v5071 = vpop.f32.mrb[0].mxu0
    %v5072 = vpop.f32.mrb[0].mxu0
    %v5073 = vadd.f32 0.0, %v5072
    %v5074 = vpop.f32.mrb[0].mxu0
    %5075 = vmatprep.mubr.bf16.mxu0 0
    %5076 = vmatmul.mubr.bf16.gmra.mrb[0].mxu0 %v4638
    %v5077 = vpop.f32.mrb[0].mxu0
    %v5078 = vadd.f32 0.0, %v5077
    %v5079 = vpop.f32.mrb[0].mxu0
    %v5080 = vpop.f32.mrb[0].mxu0
    %v5081 = vadd.f32 0.0, %v5080
    %v5082 = vpop.f32.mrb[0].mxu0
    %5083 = vmatprep.mubr.bf16.mxu0 0
    %5084 = vmatmul.mubr.bf16.gmra.mrb[0].mxu0 %v4641
    %v5085 = vpop.f32.mrb[0].mxu0
    %v5086 = vadd.f32 0.0, %v5085
    %v5087 = vpop.f32.mrb[0].mxu0
    %v5088 = vpop.f32.mrb[0].mxu0
    %v5089 = vadd.f32 0.0, %v5088
    %v5090 = vpop.f32.mrb[0].mxu0
    %5091 = vmatprep.mubr.bf16.mxu0 0
    %5092 = vmatmul.mubr.bf16.gmra.mrb[0].mxu0 %v4644
    %v5093 = vpop.f32.mrb[0].mxu0
    %v5094 = vadd.f32 0.0, %v5093
    %v5095 = vpop.f32.mrb[0].mxu0
    %v5096 = vpop.f32.mrb[0].mxu0
    %v5097 = vadd.f32 0.0, %v5096
    %v5098 = vpop.f32.mrb[0].mxu0
    %5099 = vmatprep.mubr.bf16.mxu0 0
    %5100 = vmatmul.mubr.bf16.gmra.mrb[0].mxu0 %v4647
    %v5101 = vpop.f32.mrb[0].mxu0
    %v5102 = vadd.f32 0.0, %v5101
    %v5103 = vpop.f32.mrb[0].mxu0
    %v5104 = vpop.f32.mrb[0].mxu0
    %v5105 = vadd.f32 0.0, %v5104
    %v5106 = vpop.f32.mrb[0].mxu0
    %5107 = vmatprep.mubr.bf16.mxu0 0
    %5108 = vmatmul.mubr.bf16.gmra.mrb[0].mxu0 %v4650
    %v5109 = vpop.f32.mrb[0].mxu0
    %v5110 = vadd.f32 0.0, %v5109
    %v5111 = vpop.f32.mrb[0].mxu0
    %v5112 = vpop.f32.mrb[0].mxu0
    %v5113 = vadd.f32 0.0, %v5112
    %v5114 = vpop.f32.mrb[0].mxu0
    %5115 = vmatprep.mubr.bf16.mxu0 0
    %5116 = vmatmul.mubr.bf16.gmra.mrb[0].mxu0 %v4653
    %v5117 = vpop.f32.mrb[0].mxu0
    %v5118 = vadd.f32 0.0, %v5117
    %v5119 = vpop.f32.mrb[0].mxu0
    %v5120 = vpop.f32.mrb[0].mxu0
    %v5121 = vadd.f32 0.0, %v5120
    %v5122 = vpop.f32.mrb[0].mxu0
    %5123 = vmatprep.mubr.bf16.mxu0 0
    %5124 = vmatmul.mubr.bf16.gmra.mrb[0].mxu0 %v4656
    %v5125 = vpop.f32.mrb[0].mxu0
    %v5126 = vadd.f32 0.0, %v5125
    %v5127 = vpop.f32.mrb[0].mxu0
    %v5128 = vpop.f32.mrb[0].mxu0
    %v5129 = vadd.f32 0.0, %v5128
    %v5130 = vpop.f32.mrb[0].mxu0
    %5131 = vmatprep.mubr.bf16.mxu0 0
    %5132 = vmatmul.mubr.bf16.gmra.mrb[0].mxu0 %v4659
    %v5133 = vpop.f32.mrb[0].mxu0
    %v5134 = vadd.f32 0.0, %v5133
    %v5135 = vpop.f32.mrb[0].mxu0
    %v5136 = vpop.f32.mrb[0].mxu0
    %v5137 = vadd.f32 0.0, %v5136
    %v5138 = vpop.f32.mrb[0].mxu0
    %5139 = vmatprep.mubr.bf16.mxu0 0
    %5140 = vmatmul.mubr.bf16.gmra.mrb[0].mxu0 %v4662
    %v5141 = vpop.f32.mrb[0].mxu0
    %v5142 = vadd.f32 0.0, %v5141
    %v5143 = vpop.f32.mrb[0].mxu0
    %v5144 = vpop.f32.mrb[0].mxu0
    %v5145 = vadd.f32 0.0, %v5144
    %v5146 = vpop.f32.mrb[0].mxu0
    %5147 = vmatprep.mubr.bf16.mxu0 0
    %5148 = vmatmul.mubr.bf16.gmra.mrb[0].mxu0 %v4665
    %v5149 = vpop.f32.mrb[0].mxu0
    %v5150 = vadd.f32 0.0, %v5149
    %v5151 = vpop.f32.mrb[0].mxu0
    %v5152 = vpop.f32.mrb[0].mxu0
    %v5153 = vadd.f32 0.0, %v5152
    %v5154 = vpop.f32.mrb[0].mxu0
    %5155 = vmatprep.mubr.bf16.mxu0 0
    %5156 = vmatmul.mubr.bf16.gmra.mrb[0].mxu0 %v4668
    %v5157 = vpop.f32.mrb[0].mxu0
    %v5158 = vadd.f32 0.0, %v5157
    %v5159 = vpop.f32.mrb[0].mxu0
    %v5160 = vpop.f32.mrb[0].mxu0
    %v5161 = vadd.f32 0.0, %v5160
    %v5162 = vpop.f32.mrb[0].mxu0
    %5163 = vmatprep.mubr.bf16.mxu0 0
    %5164 = vmatmul.mubr.bf16.gmra.mrb[0].mxu0 %v4671
    %v5165 = vpop.f32.mrb[0].mxu0
    %v5166 = vadd.f32 0.0, %v5165
    %v5167 = vpop.f32.mrb[0].mxu0
    %v5168 = vpop.f32.mrb[0].mxu0
    %v5169 = vadd.f32 0.0, %v5168
    %v5170 = vpop.f32.mrb[0].mxu0
    %5171 = vmatprep.mubr.bf16.mxu0 0
    %5172 = vmatmul.mubr.bf16.gmra.mrb[0].mxu0 %v4674
    %v5173 = vpop.f32.mrb[0].mxu0
    %v5174 = vadd.f32 0.0, %v5173
    %v5175 = vpop.f32.mrb[0].mxu0
    %v5176 = vpop.f32.mrb[0].mxu0
    %v5177 = vadd.f32 0.0, %v5176
    %v5178 = vpop.f32.mrb[0].mxu0
    %5179 = vmatprep.mubr.bf16.mxu0 0
    %5180 = vmatmul.mubr.bf16.gmra.mrb[0].mxu0 %v4677
    %v5181 = vpop.f32.mrb[0].mxu0
    %v5182 = vadd.f32 0.0, %v5181
    %v5183 = vpop.f32.mrb[0].mxu0
    %v5184 = vpop.f32.mrb[0].mxu0
    %v5185 = vadd.f32 0.0, %v5184
    %v5186 = vpop.f32.mrb[0].mxu0
    %5187 = vmatprep.mubr.bf16.mxu0 0
    %5188 = vmatmul.mubr.bf16.gmra.mrb[0].mxu0 %v4680
    %v5189 = vpop.f32.mrb[0].mxu0
    %v5190 = vadd.f32 0.0, %v5189
    %v5191 = vpop.f32.mrb[0].mxu0
    %v5192 = vpop.f32.mrb[0].mxu0
    %v5193 = vadd.f32 0.0, %v5192
    %v5194 = vpop.f32.mrb[0].mxu0
    %5195 = vmatprep.mubr.bf16.mxu0 0
    %5196 = vmatmul.mubr.bf16.gmra.mrb[0].mxu0 %v4683
    %v5197 = vpop.f32.mrb[0].mxu0
    %v5198 = vadd.f32 0.0, %v5197
    %v5199 = vpop.f32.mrb[0].mxu0
    %v5200 = vpop.f32.mrb[0].mxu0
    %v5201 = vadd.f32 0.0, %v5200
    %v5202 = vpop.f32.mrb[0].mxu0
    %5203 = vmatprep.mubr.bf16.mxu0 0
    %5204 = vmatmul.mubr.bf16.gmra.mrb[0].mxu0 %v4686
    %v5205 = vpop.f32.mrb[0].mxu0
    %v5206 = vadd.f32 0.0, %v5205
    %v5207 = vpop.f32.mrb[0].mxu0
    %v5208 = vpop.f32.mrb[0].mxu0
    %v5209 = vadd.f32 0.0, %v5208
    %v5210 = vpop.f32.mrb[0].mxu0
    %5211 = vmatprep.mubr.bf16.mxu0 0
    %5212 = vmatmul.mubr.bf16.gmra.mrb[0].mxu0 %v4689
    %v5213 = vpop.f32.mrb[0].mxu0
    %v5214 = vadd.f32 0.0, %v5213
    %v5215 = vpop.f32.mrb[0].mxu0
    %v5216 = vpop.f32.mrb[0].mxu0
    %v5217 = vadd.f32 0.0, %v5216
    %v5218 = vpop.f32.mrb[0].mxu0
    %5219 = vmatprep.mubr.bf16.mxu0 0
    %5220 = vmatmul.mubr.bf16.gmra.mrb[0].mxu0 %v4692
    %v5221 = vpop.f32.mrb[0].mxu0
    %v5222 = vadd.f32 0.0, %v5221
    %v5223 = vpop.f32.mrb[0].mxu0
    %v5224 = vpop.f32.mrb[0].mxu0
    %v5225 = vadd.f32 0.0, %v5224
    %v5226 = vpop.f32.mrb[0].mxu0
    %5227 = vmatprep.mubr.bf16.mxu0 0
    %5228 = vmatmul.mubr.bf16.gmra.mrb[0].mxu0 %v4695
    %v5229 = vpop.f32.mrb[0].mxu0
    %v5230 = vadd.f32 0.0, %v5229
    %v5231 = vpop.f32.mrb[0].mxu0
    %v5232 = vpop.f32.mrb[0].mxu0
    %v5233 = vadd.f32 0.0, %v5232
    %v5234 = vpop.f32.mrb[0].mxu0
    %5235 = vmatprep.mubr.bf16.mxu0 0
    %5236 = vmatmul.mubr.bf16.gmra.mrb[0].mxu0 %v4698
    %v5237 = vpop.f32.mrb[0].mxu0
    %v5238 = vadd.f32 0.0, %v5237
    %v5239 = vpop.f32.mrb[0].mxu0
    %v5240 = vpop.f32.mrb[0].mxu0
    %v5241 = vadd.f32 0.0, %v5240
    %v5242 = vpop.f32.mrb[0].mxu0
    %5243 = vmatprep.mubr.bf16.mxu0 0
    %5244 = vmatmul.mubr.bf16.gmra.mrb[0].mxu0 %v4701
    %v5245 = vpop.f32.mrb[0].mxu0
    %v5246 = vadd.f32 0.0, %v5245
    %v5247 = vpop.f32.mrb[0].mxu0
    %v5248 = vpop.f32.mrb[0].mxu0
    %v5249 = vadd.f32 0.0, %v5248
    %v5250 = vpop.f32.mrb[0].mxu0
    %5251 = vdwg.mxu0
    %v5252 = vmul.f32 %v4742, %v2142
    %v5253 = vmul.f32 %v4745, %v2145
    %v5254 = vmul.f32 %v4750, %v2150
    %v5255 = vmul.f32 %v4753, %v2153
    %v5256 = vmul.f32 %v4758, %v2158
    %v5257 = vmul.f32 %v4761, %v2161
    %v5258 = vmul.f32 %v4766, %v2166
    %v5259 = vmul.f32 %v4769, %v2169
    %v5260 = vmul.f32 %v4774, %v2174
    %v5261 = vmul.f32 %v4777, %v2177
    %v5262 = vmul.f32 %v4782, %v2182
    %v5263 = vmul.f32 %v4785, %v2185
    %v5264 = vmul.f32 %v4790, %v2190
    %v5265 = vmul.f32 %v4793, %v2193
    %v5266 = vmul.f32 %v4798, %v2198
    %v5267 = vmul.f32 %v4801, %v2201
    %v5268 = vmul.f32 %v4806, %v2206
    %v5269 = vmul.f32 %v4809, %v2209
    %v5270 = vmul.f32 %v4814, %v2214
    %v5271 = vmul.f32 %v4817, %v2217
    %v5272 = vmul.f32 %v4822, %v2222
    %v5273 = vmul.f32 %v4825, %v2225
    %v5274 = vmul.f32 %v4830, %v2230
    %v5275 = vmul.f32 %v4833, %v2233
    %v5276 = vmul.f32 %v4838, %v2238
    %v5277 = vmul.f32 %v4841, %v2241
    %v5278 = vmul.f32 %v4846, %v2246
    %v5279 = vmul.f32 %v4849, %v2249
    %v5280 = vmul.f32 %v4854, %v2254
    %v5281 = vmul.f32 %v4857, %v2257
    %v5282 = vmul.f32 %v4862, %v2262
    %v5283 = vmul.f32 %v4865, %v2265
    %v5284 = vmul.f32 %v4870, %v2270
    %v5285 = vmul.f32 %v4873, %v2273
    %v5286 = vmul.f32 %v4878, %v2278
    %v5287 = vmul.f32 %v4881, %v2281
    %v5288 = vmul.f32 %v4886, %v2286
    %v5289 = vmul.f32 %v4889, %v2289
    %v5290 = vmul.f32 %v4894, %v2294
    %v5291 = vmul.f32 %v4897, %v2297
    %v5292 = vmul.f32 %v4902, %v2302
    %v5293 = vmul.f32 %v4905, %v2305
    %v5294 = vmul.f32 %v4910, %v2310
    %v5295 = vmul.f32 %v4913, %v2313
    %v5296 = vmul.f32 %v4918, %v2318
    %v5297 = vmul.f32 %v4921, %v2321
    %v5298 = vmul.f32 %v4926, %v2326
    %v5299 = vmul.f32 %v4929, %v2329
    %v5300 = vmul.f32 %v4934, %v2334
    %v5301 = vmul.f32 %v4937, %v2337
    %v5302 = vmul.f32 %v4942, %v2342
    %v5303 = vmul.f32 %v4945, %v2345
    %v5304 = vmul.f32 %v4950, %v2350
    %v5305 = vmul.f32 %v4953, %v2353
    %v5306 = vmul.f32 %v4958, %v2358
    %v5307 = vmul.f32 %v4961, %v2361
    %v5308 = vmul.f32 %v4966, %v2366
    %v5309 = vmul.f32 %v4969, %v2369
    %v5310 = vmul.f32 %v4974, %v2374
    %v5311 = vmul.f32 %v4977, %v2377
    %v5312 = vmul.f32 %v4982, %v2382
    %v5313 = vmul.f32 %v4985, %v2385
    %v5314 = vmul.f32 %v4990, %v2390
    %v5315 = vmul.f32 %v4993, %v2393
    %v5316 = vmul.f32 %v4998, %v2398
    %v5317 = vmul.f32 %v5001, %v2401
    %v5318 = vmul.f32 %v5006, %v2406
    %v5319 = vmul.f32 %v5009, %v2409
    %v5320 = vmul.f32 %v5014, %v2414
    %v5321 = vmul.f32 %v5017, %v2417
    %v5322 = vmul.f32 %v5022, %v2422
    %v5323 = vmul.f32 %v5025, %v2425
    %v5324 = vmul.f32 %v5030, %v2430
    %v5325 = vmul.f32 %v5033, %v2433
    %v5326 = vmul.f32 %v5038, %v2438
    %v5327 = vmul.f32 %v5041, %v2441
    %v5328 = vmul.f32 %v5046, %v2446
    %v5329 = vmul.f32 %v5049, %v2449
    %v5330 = vmul.f32 %v5054, %v2454
    %v5331 = vmul.f32 %v5057, %v2457
    %v5332 = vmul.f32 %v5062, %v2462
    %v5333 = vmul.f32 %v5065, %v2465
    %v5334 = vmul.f32 %v5070, %v2470
    %v5335 = vmul.f32 %v5073, %v2473
    %v5336 = vmul.f32 %v5078, %v2478
    %v5337 = vmul.f32 %v5081, %v2481
    %v5338 = vmul.f32 %v5086, %v2486
    %v5339 = vmul.f32 %v5089, %v2489
    %v5340 = vmul.f32 %v5094, %v2494
    %v5341 = vmul.f32 %v5097, %v2497
    %v5342 = vmul.f32 %v5102, %v2502
    %v5343 = vmul.f32 %v5105, %v2505
    %v5344 = vmul.f32 %v5110, %v2510
    %v5345 = vmul.f32 %v5113, %v2513
    %v5346 = vmul.f32 %v5118, %v2518
    %v5347 = vmul.f32 %v5121, %v2521
    %v5348 = vmul.f32 %v5126, %v2526
    %v5349 = vmul.f32 %v5129, %v2529
    %v5350 = vmul.f32 %v5134, %v2534
    %v5351 = vmul.f32 %v5137, %v2537
    %v5352 = vmul.f32 %v5142, %v2542
    %v5353 = vmul.f32 %v5145, %v2545
    %v5354 = vmul.f32 %v5150, %v2550
    %v5355 = vmul.f32 %v5153, %v2553
    %v5356 = vmul.f32 %v5158, %v2558
    %v5357 = vmul.f32 %v5161, %v2561
    %v5358 = vmul.f32 %v5166, %v2566
    %v5359 = vmul.f32 %v5169, %v2569
    %v5360 = vmul.f32 %v5174, %v2574
    %v5361 = vmul.f32 %v5177, %v2577
    %v5362 = vmul.f32 %v5182, %v2582
    %v5363 = vmul.f32 %v5185, %v2585
    %v5364 = vmul.f32 %v5190, %v2590
    %v5365 = vmul.f32 %v5193, %v2593
    %v5366 = vmul.f32 %v5198, %v2598
    %v5367 = vmul.f32 %v5201, %v2601
    %v5368 = vmul.f32 %v5206, %v2606
    %v5369 = vmul.f32 %v5209, %v2609
    %v5370 = vmul.f32 %v5214, %v2614
    %v5371 = vmul.f32 %v5217, %v2617
    %v5372 = vmul.f32 %v5222, %v2622
    %v5373 = vmul.f32 %v5225, %v2625
    %v5374 = vmul.f32 %v5230, %v2630
    %v5375 = vmul.f32 %v5233, %v2633
    %v5376 = vmul.f32 %v5238, %v2638
    %v5377 = vmul.f32 %v5241, %v2641
    %v5378 = vmul.f32 %v5246, %v2646
    %v5379 = vmul.f32 %v5249, %v2649
    %v5380 = vadd.f32 %v5252, %v5284
    %v5381 = vadd.f32 %v5380, %v5316
    %v5382 = vadd.f32 %v5381, %v5348
    %v5383 = vadd.f32 %v5253, %v5285
    %v5384 = vadd.f32 %v5383, %v5317
    %v5385 = vadd.f32 %v5384, %v5349
    %v5386 = vadd.f32 %v5254, %v5286
    %v5387 = vadd.f32 %v5386, %v5318
    %v5388 = vadd.f32 %v5387, %v5350
    %v5389 = vadd.f32 %v5255, %v5287
    %v5390 = vadd.f32 %v5389, %v5319
    %v5391 = vadd.f32 %v5390, %v5351
    %v5392 = vadd.f32 %v5256, %v5288
    %v5393 = vadd.f32 %v5392, %v5320
    %v5394 = vadd.f32 %v5393, %v5352
    %v5395 = vadd.f32 %v5257, %v5289
    %v5396 = vadd.f32 %v5395, %v5321
    %v5397 = vadd.f32 %v5396, %v5353
    %v5398 = vadd.f32 %v5258, %v5290
    %v5399 = vadd.f32 %v5398, %v5322
    %v5400 = vadd.f32 %v5399, %v5354
    %v5401 = vadd.f32 %v5259, %v5291
    %v5402 = vadd.f32 %v5401, %v5323
    %v5403 = vadd.f32 %v5402, %v5355
    %v5404 = vadd.f32 %v5260, %v5292
    %v5405 = vadd.f32 %v5404, %v5324
    %v5406 = vadd.f32 %v5405, %v5356
    %v5407 = vadd.f32 %v5261, %v5293
    %v5408 = vadd.f32 %v5407, %v5325
    %v5409 = vadd.f32 %v5408, %v5357
    %v5410 = vadd.f32 %v5262, %v5294
    %v5411 = vadd.f32 %v5410, %v5326
    %v5412 = vadd.f32 %v5411, %v5358
    %v5413 = vadd.f32 %v5263, %v5295
    %v5414 = vadd.f32 %v5413, %v5327
    %v5415 = vadd.f32 %v5414, %v5359
    %v5416 = vadd.f32 %v5264, %v5296
    %v5417 = vadd.f32 %v5416, %v5328
    %v5418 = vadd.f32 %v5417, %v5360
    %v5419 = vadd.f32 %v5265, %v5297
    %v5420 = vadd.f32 %v5419, %v5329
    %v5421 = vadd.f32 %v5420, %v5361
    %v5422 = vadd.f32 %v5266, %v5298
    %v5423 = vadd.f32 %v5422, %v5330
    %v5424 = vadd.f32 %v5423, %v5362
    %v5425 = vadd.f32 %v5267, %v5299
    %v5426 = vadd.f32 %v5425, %v5331
    %v5427 = vadd.f32 %v5426, %v5363
    %v5428 = vadd.f32 %v5268, %v5300
    %v5429 = vadd.f32 %v5428, %v5332
    %v5430 = vadd.f32 %v5429, %v5364
    %v5431 = vadd.f32 %v5269, %v5301
    %v5432 = vadd.f32 %v5431, %v5333
    %v5433 = vadd.f32 %v5432, %v5365
    %v5434 = vadd.f32 %v5270, %v5302
    %v5435 = vadd.f32 %v5434, %v5334
    %v5436 = vadd.f32 %v5435, %v5366
    %v5437 = vadd.f32 %v5271, %v5303
    %v5438 = vadd.f32 %v5437, %v5335
    %v5439 = vadd.f32 %v5438, %v5367
    %v5440 = vadd.f32 %v5272, %v5304
    %v5441 = vadd.f32 %v5440, %v5336
    %v5442 = vadd.f32 %v5441, %v5368
    %v5443 = vadd.f32 %v5273, %v5305
    %v5444 = vadd.f32 %v5443, %v5337
    %v5445 = vadd.f32 %v5444, %v5369
    %v5446 = vadd.f32 %v5274, %v5306
    %v5447 = vadd.f32 %v5446, %v5338
    %v5448 = vadd.f32 %v5447, %v5370
    %v5449 = vadd.f32 %v5275, %v5307
    %v5450 = vadd.f32 %v5449, %v5339
    %v5451 = vadd.f32 %v5450, %v5371
    %v5452 = vadd.f32 %v5276, %v5308
    %v5453 = vadd.f32 %v5452, %v5340
    %v5454 = vadd.f32 %v5453, %v5372
    %v5455 = vadd.f32 %v5277, %v5309
    %v5456 = vadd.f32 %v5455, %v5341
    %v5457 = vadd.f32 %v5456, %v5373
    %v5458 = vadd.f32 %v5278, %v5310
    %v5459 = vadd.f32 %v5458, %v5342
    %v5460 = vadd.f32 %v5459, %v5374
    %v5461 = vadd.f32 %v5279, %v5311
    %v5462 = vadd.f32 %v5461, %v5343
    %v5463 = vadd.f32 %v5462, %v5375
    %v5464 = vadd.f32 %v5280, %v5312
    %v5465 = vadd.f32 %v5464, %v5344
    %v5466 = vadd.f32 %v5465, %v5376
    %v5467 = vadd.f32 %v5281, %v5313
    %v5468 = vadd.f32 %v5467, %v5345
    %v5469 = vadd.f32 %v5468, %v5377
    %v5470 = vadd.f32 %v5282, %v5314
    %v5471 = vadd.f32 %v5470, %v5346
    %v5472 = vadd.f32 %v5471, %v5378
    %v5473 = vadd.f32 %v5283, %v5315
    %v5474 = vadd.f32 %v5473, %v5347
    %v5475 = vadd.f32 %v5474, %v5379
    %v5476 = vlaneseq
    %v5477 = vshrl.u32 %v5476, 7
    %v5478 = vsub.s32 1, %v5477
    %v5479 = vrot.slane %v179, %v5478
    %v5480 = vadd.f32 %v5382, %v5479
    %v5481 = vadd.f32 %v5385, %v5479
    %v5482 = vadd.f32 %v5388, %v5479
    %v5483 = vadd.f32 %v5391, %v5479
    %v5484 = vadd.f32 %v5394, %v5479
    %v5485 = vadd.f32 %v5397, %v5479
    %v5486 = vadd.f32 %v5400, %v5479
    %v5487 = vadd.f32 %v5403, %v5479
    %v5488 = vadd.f32 %v5406, %v5479
    %v5489 = vadd.f32 %v5409, %v5479
    %v5490 = vadd.f32 %v5412, %v5479
    %v5491 = vadd.f32 %v5415, %v5479
    %v5492 = vadd.f32 %v5418, %v5479
    %v5493 = vadd.f32 %v5421, %v5479
    %v5494 = vadd.f32 %v5424, %v5479
    %v5495 = vadd.f32 %v5427, %v5479
    %v5496 = vadd.f32 %v5430, %v5479
    %v5497 = vadd.f32 %v5433, %v5479
    %v5498 = vadd.f32 %v5436, %v5479
    %v5499 = vadd.f32 %v5439, %v5479
    %v5500 = vadd.f32 %v5442, %v5479
    %v5501 = vadd.f32 %v5445, %v5479
    %v5502 = vadd.f32 %v5448, %v5479
    %v5503 = vadd.f32 %v5451, %v5479
    %v5504 = vadd.f32 %v5454, %v5479
    %v5505 = vadd.f32 %v5457, %v5479
    %v5506 = vadd.f32 %v5460, %v5479
    %v5507 = vadd.f32 %v5463, %v5479
    %v5508 = vadd.f32 %v5466, %v5479
    %v5509 = vadd.f32 %v5469, %v5479
    %v5510 = vadd.f32 %v5472, %v5479
    %v5511 = vadd.f32 %v5475, %v5479
    %v5512 = vpack.c.bf16 %v5481, %v5480
    %v5513 = vpack.c.bf16 %v5483, %v5482
    %v5514 = vpack.c.bf16 %v5485, %v5484
    %v5515 = vpack.c.bf16 %v5487, %v5486
    %v5516 = vpack.c.bf16 %v5489, %v5488
    %v5517 = vpack.c.bf16 %v5491, %v5490
    %v5518 = vpack.c.bf16 %v5493, %v5492
    %v5519 = vpack.c.bf16 %v5495, %v5494
    %v5520 = vpack.c.bf16 %v5497, %v5496
    %v5521 = vpack.c.bf16 %v5499, %v5498
    %v5522 = vpack.c.bf16 %v5501, %v5500
    %v5523 = vpack.c.bf16 %v5503, %v5502
    %v5524 = vpack.c.bf16 %v5505, %v5504
    %v5525 = vpack.c.bf16 %v5507, %v5506
    %v5526 = vpack.c.bf16 %v5509, %v5508
    %v5527 = vpack.c.bf16 %v5511, %v5510
    %v5528 = vlaneseq
    %v5529 = vshrl.u32 %v5528, 7
    %v5530 = vsub.s32 2, %v5529
    %v5531 = vrot.slane %v179, %v5530
    %v5548 = vunpack.c.l.b16 %v131
    %v5549 = vunpack.c.l.b16 %v132
    %v5550 = vunpack.c.l.b16 %v133
    %v5551 = vunpack.c.l.b16 %v134
    %v5552 = vunpack.c.l.b16 %v135
    %v5553 = vunpack.c.l.b16 %v136
    %v5554 = vunpack.c.l.b16 %v137
    %v5555 = vunpack.c.l.b16 %v138
    %v5556 = vunpack.c.l.b16 %v139
    %v5557 = vunpack.c.l.b16 %v140
    %v5558 = vunpack.c.l.b16 %v141
    %v5559 = vunpack.c.l.b16 %v142
    %v5560 = vunpack.c.l.b16 %v143
    %v5561 = vunpack.c.l.b16 %v144
    %v5562 = vunpack.c.l.b16 %v145
    %v5563 = vunpack.c.l.b16 %v146
    %v5564 = vpack.c.b16 %v5549, %v5548
    %v5565 = vpack.c.b16 %v5551, %v5550
    %v5566 = vpack.c.b16 %v5553, %v5552
    %v5567 = vpack.c.b16 %v5555, %v5554
    %v5568 = vpack.c.b16 %v5557, %v5556
    %v5569 = vpack.c.b16 %v5559, %v5558
    %v5570 = vpack.c.b16 %v5561, %v5560
    %v5571 = vpack.c.b16 %v5563, %v5562
    %5580 = vmatprep.subr.bf16.mxu0 0
    %5581 = vmatpush1.bf16.msra.mxu0 %v5564
    %5582 = vmatprep.subr.bf16.mxu0 0
    %5583 = vmatpush1.bf16.msra.mxu0 %v5565
    %5584 = vmatprep.subr.bf16.mxu0 0
    %5585 = vmatpush1.bf16.msra.mxu0 %v5566
    %5586 = vmatprep.subr.bf16.mxu0 0
    %5587 = vmatpush1.bf16.msra.mxu0 %v5567
    %5588 = vmatprep.subr.bf16.mxu0 0
    %5589 = vmatpush1.bf16.msra.mxu0 %v5568
    %5590 = vmatprep.subr.bf16.mxu0 0
    %5591 = vmatpush1.bf16.msra.mxu0 %v5569
    %5592 = vmatprep.subr.bf16.mxu0 0
    %5593 = vmatpush1.bf16.msra.mxu0 %v5570
    %5594 = vmatprep.subr.bf16.mxu0 0
    %5595 = vmatpush1.bf16.msra.mxu0 %v5571
    %5596 = vmatprep.subr.bf16.mxu0 0
    %5597 = vmatpush1.bf16.msra.mxu0 0
    %5598 = vmatprep.subr.bf16.mxu0 0
    %5599 = vmatpush1.bf16.msra.mxu0 0
    %5600 = vmatprep.subr.bf16.mxu0 0
    %5601 = vmatpush1.bf16.msra.mxu0 0
    %5602 = vmatprep.subr.bf16.mxu0 0
    %5603 = vmatpush1.bf16.msra.mxu0 0
    %5604 = vmatprep.subr.bf16.mxu0 0
    %5605 = vmatpush1.bf16.msra.mxu0 0
    %5606 = vmatprep.subr.bf16.mxu0 0
    %5607 = vmatpush1.bf16.msra.mxu0 0
    %5608 = vmatprep.subr.bf16.mxu0 0
    %5609 = vmatpush1.bf16.msra.mxu0 0
    %5610 = vmatprep.subr.bf16.mxu0 0
    %5611 = vmatpush1.bf16.msra.mxu0 0
    %5612 = vmatprep.mubr.bf16.mxu0 0
    %5613 = vmatmul.mubr.bf16.gmra.mrb[0].mxu0 %v5512
    %v5614 = vpop.f32.mrb[0].mxu0
    %v5615 = vadd.f32 %v5531, %v5614
    %v5616 = vpop.f32.mrb[0].mxu0
    %v5617 = vpop.f32.mrb[0].mxu0
    %v5618 = vadd.f32 %v5531, %v5617
    %v5619 = vpop.f32.mrb[0].mxu0
    %5620 = vmatprep.mubr.bf16.mxu0 0
    %5621 = vmatmul.mubr.bf16.gmra.mrb[0].mxu0 %v5513
    %v5622 = vpop.f32.mrb[0].mxu0
    %v5623 = vadd.f32 %v5531, %v5622
    %v5624 = vpop.f32.mrb[0].mxu0
    %v5625 = vpop.f32.mrb[0].mxu0
    %v5626 = vadd.f32 %v5531, %v5625
    %v5627 = vpop.f32.mrb[0].mxu0
    %5628 = vmatprep.mubr.bf16.mxu0 0
    %5629 = vmatmul.mubr.bf16.gmra.mrb[0].mxu0 %v5514
    %v5630 = vpop.f32.mrb[0].mxu0
    %v5631 = vadd.f32 %v5531, %v5630
    %v5632 = vpop.f32.mrb[0].mxu0
    %v5633 = vpop.f32.mrb[0].mxu0
    %v5634 = vadd.f32 %v5531, %v5633
    %v5635 = vpop.f32.mrb[0].mxu0
    %5636 = vmatprep.mubr.bf16.mxu0 0
    %5637 = vmatmul.mubr.bf16.gmra.mrb[0].mxu0 %v5515
    %v5638 = vpop.f32.mrb[0].mxu0
    %v5639 = vadd.f32 %v5531, %v5638
    %v5640 = vpop.f32.mrb[0].mxu0
    %v5641 = vpop.f32.mrb[0].mxu0
    %v5642 = vadd.f32 %v5531, %v5641
    %v5643 = vpop.f32.mrb[0].mxu0
    %5644 = vmatprep.mubr.bf16.mxu0 0
    %5645 = vmatmul.mubr.bf16.gmra.mrb[0].mxu0 %v5516
    %v5646 = vpop.f32.mrb[0].mxu0
    %v5647 = vadd.f32 %v5531, %v5646
    %v5648 = vpop.f32.mrb[0].mxu0
    %v5649 = vpop.f32.mrb[0].mxu0
    %v5650 = vadd.f32 %v5531, %v5649
    %v5651 = vpop.f32.mrb[0].mxu0
    %5652 = vmatprep.mubr.bf16.mxu0 0
    %5653 = vmatmul.mubr.bf16.gmra.mrb[0].mxu0 %v5517
    %v5654 = vpop.f32.mrb[0].mxu0
    %v5655 = vadd.f32 %v5531, %v5654
    %v5656 = vpop.f32.mrb[0].mxu0
    %v5657 = vpop.f32.mrb[0].mxu0
    %v5658 = vadd.f32 %v5531, %v5657
    %v5659 = vpop.f32.mrb[0].mxu0
    %5660 = vmatprep.mubr.bf16.mxu0 0
    %5661 = vmatmul.mubr.bf16.gmra.mrb[0].mxu0 %v5518
    %v5662 = vpop.f32.mrb[0].mxu0
    %v5663 = vadd.f32 %v5531, %v5662
    %v5664 = vpop.f32.mrb[0].mxu0
    %v5665 = vpop.f32.mrb[0].mxu0
    %v5666 = vadd.f32 %v5531, %v5665
    %v5667 = vpop.f32.mrb[0].mxu0
    %5668 = vmatprep.mubr.bf16.mxu0 0
    %5669 = vmatmul.mubr.bf16.gmra.mrb[0].mxu0 %v5519
    %v5670 = vpop.f32.mrb[0].mxu0
    %v5671 = vadd.f32 %v5531, %v5670
    %v5672 = vpop.f32.mrb[0].mxu0
    %v5673 = vpop.f32.mrb[0].mxu0
    %v5674 = vadd.f32 %v5531, %v5673
    %v5675 = vpop.f32.mrb[0].mxu0
    %5676 = vmatprep.mubr.bf16.mxu0 0
    %5677 = vmatmul.mubr.bf16.gmra.mrb[0].mxu0 %v5520
    %v5678 = vpop.f32.mrb[0].mxu0
    %v5679 = vadd.f32 %v5531, %v5678
    %v5680 = vpop.f32.mrb[0].mxu0
    %v5681 = vpop.f32.mrb[0].mxu0
    %v5682 = vadd.f32 %v5531, %v5681
    %v5683 = vpop.f32.mrb[0].mxu0
    %5684 = vmatprep.mubr.bf16.mxu0 0
    %5685 = vmatmul.mubr.bf16.gmra.mrb[0].mxu0 %v5521
    %v5686 = vpop.f32.mrb[0].mxu0
    %v5687 = vadd.f32 %v5531, %v5686
    %v5688 = vpop.f32.mrb[0].mxu0
    %v5689 = vpop.f32.mrb[0].mxu0
    %v5690 = vadd.f32 %v5531, %v5689
    %v5691 = vpop.f32.mrb[0].mxu0
    %5692 = vmatprep.mubr.bf16.mxu0 0
    %5693 = vmatmul.mubr.bf16.gmra.mrb[0].mxu0 %v5522
    %v5694 = vpop.f32.mrb[0].mxu0
    %v5695 = vadd.f32 %v5531, %v5694
    %v5696 = vpop.f32.mrb[0].mxu0
    %v5697 = vpop.f32.mrb[0].mxu0
    %v5698 = vadd.f32 %v5531, %v5697
    %v5699 = vpop.f32.mrb[0].mxu0
    %5700 = vmatprep.mubr.bf16.mxu0 0
    %5701 = vmatmul.mubr.bf16.gmra.mrb[0].mxu0 %v5523
    %v5702 = vpop.f32.mrb[0].mxu0
    %v5703 = vadd.f32 %v5531, %v5702
    %v5704 = vpop.f32.mrb[0].mxu0
    %v5705 = vpop.f32.mrb[0].mxu0
    %v5706 = vadd.f32 %v5531, %v5705
    %v5707 = vpop.f32.mrb[0].mxu0
    %5708 = vmatprep.mubr.bf16.mxu0 0
    %5709 = vmatmul.mubr.bf16.gmra.mrb[0].mxu0 %v5524
    %v5710 = vpop.f32.mrb[0].mxu0
    %v5711 = vadd.f32 %v5531, %v5710
    %v5712 = vpop.f32.mrb[0].mxu0
    %v5713 = vpop.f32.mrb[0].mxu0
    %v5714 = vadd.f32 %v5531, %v5713
    %v5715 = vpop.f32.mrb[0].mxu0
    %5716 = vmatprep.mubr.bf16.mxu0 0
    %5717 = vmatmul.mubr.bf16.gmra.mrb[0].mxu0 %v5525
    %v5718 = vpop.f32.mrb[0].mxu0
    %v5719 = vadd.f32 %v5531, %v5718
    %v5720 = vpop.f32.mrb[0].mxu0
    %v5721 = vpop.f32.mrb[0].mxu0
    %v5722 = vadd.f32 %v5531, %v5721
    %v5723 = vpop.f32.mrb[0].mxu0
    %5724 = vmatprep.mubr.bf16.mxu0 0
    %5725 = vmatmul.mubr.bf16.gmra.mrb[0].mxu0 %v5526
    %v5726 = vpop.f32.mrb[0].mxu0
    %v5727 = vadd.f32 %v5531, %v5726
    %v5728 = vpop.f32.mrb[0].mxu0
    %v5729 = vpop.f32.mrb[0].mxu0
    %v5730 = vadd.f32 %v5531, %v5729
    %v5731 = vpop.f32.mrb[0].mxu0
    %5732 = vmatprep.mubr.bf16.mxu0 0
    %5733 = vmatmul.mubr.bf16.gmra.mrb[0].mxu0 %v5527
    %v5734 = vpop.f32.mrb[0].mxu0
    %v5735 = vadd.f32 %v5531, %v5734
    %v5736 = vpop.f32.mrb[0].mxu0
    %v5737 = vpop.f32.mrb[0].mxu0
    %v5738 = vadd.f32 %v5531, %v5737
    %v5739 = vpop.f32.mrb[0].mxu0
    %5740 = vdwg.mxu0
    %v5741 = vadd.f32 %v181, %v5615
    %v5742 = vadd.f32 %v182, %v5618
    %v5743 = vadd.f32 %v183, %v5623
    %v5744 = vadd.f32 %v184, %v5626
    %v5745 = vadd.f32 %v185, %v5631
    %v5746 = vadd.f32 %v186, %v5634
    %v5747 = vadd.f32 %v187, %v5639
    %v5748 = vadd.f32 %v188, %v5642
    %v5749 = vadd.f32 %v189, %v5647
    %v5750 = vadd.f32 %v190, %v5650
    %v5751 = vadd.f32 %v191, %v5655
    %v5752 = vadd.f32 %v192, %v5658
    %v5753 = vadd.f32 %v193, %v5663
    %v5754 = vadd.f32 %v194, %v5666
    %v5755 = vadd.f32 %v195, %v5671
    %v5756 = vadd.f32 %v196, %v5674
    %v5757 = vadd.f32 %v197, %v5679
    %v5758 = vadd.f32 %v198, %v5682
    %v5759 = vadd.f32 %v199, %v5687
    %v5760 = vadd.f32 %v200, %v5690
    %v5761 = vadd.f32 %v201, %v5695
    %v5762 = vadd.f32 %v202, %v5698
    %v5763 = vadd.f32 %v203, %v5703
    %v5764 = vadd.f32 %v204, %v5706
    %v5765 = vadd.f32 %v205, %v5711
    %v5766 = vadd.f32 %v206, %v5714
    %v5767 = vadd.f32 %v207, %v5719
    %v5768 = vadd.f32 %v208, %v5722
    %v5769 = vadd.f32 %v209, %v5727
    %v5770 = vadd.f32 %v210, %v5730
    %v5771 = vadd.f32 %v211, %v5735
    %v5772 = vadd.f32 %v212, %v5738
    %5773 = vadd.xlane.f32.xlu0 %v5741
    %v5774 = vpop.xlane.xlu0 %5773
    %5775 = vadd.xlane.f32.xlu0 %v5742
    %v5776 = vpop.xlane.xlu0 %5775
    %5777 = vadd.xlane.f32.xlu0 %v5743
    %v5778 = vpop.xlane.xlu0 %5777
    %5779 = vadd.xlane.f32.xlu0 %v5744
    %v5780 = vpop.xlane.xlu0 %5779
    %5781 = vadd.xlane.f32.xlu0 %v5745
    %v5782 = vpop.xlane.xlu0 %5781
    %5783 = vadd.xlane.f32.xlu0 %v5746
    %v5784 = vpop.xlane.xlu0 %5783
    %5785 = vadd.xlane.f32.xlu0 %v5747
    %v5786 = vpop.xlane.xlu0 %5785
    %5787 = vadd.xlane.f32.xlu0 %v5748
    %v5788 = vpop.xlane.xlu0 %5787
    %5789 = vadd.xlane.f32.xlu0 %v5749
    %v5790 = vpop.xlane.xlu0 %5789
    %5791 = vadd.xlane.f32.xlu0 %v5750
    %v5792 = vpop.xlane.xlu0 %5791
    %5793 = vadd.xlane.f32.xlu0 %v5751
    %v5794 = vpop.xlane.xlu0 %5793
    %5795 = vadd.xlane.f32.xlu0 %v5752
    %v5796 = vpop.xlane.xlu0 %5795
    %5797 = vadd.xlane.f32.xlu0 %v5753
    %v5798 = vpop.xlane.xlu0 %5797
    %5799 = vadd.xlane.f32.xlu0 %v5754
    %v5800 = vpop.xlane.xlu0 %5799
    %5801 = vadd.xlane.f32.xlu0 %v5755
    %v5802 = vpop.xlane.xlu0 %5801
    %5803 = vadd.xlane.f32.xlu0 %v5756
    %v5804 = vpop.xlane.xlu0 %5803
    %5805 = vadd.xlane.f32.xlu0 %v5757
    %v5806 = vpop.xlane.xlu0 %5805
    %5807 = vadd.xlane.f32.xlu0 %v5758
    %v5808 = vpop.xlane.xlu0 %5807
    %5809 = vadd.xlane.f32.xlu0 %v5759
    %v5810 = vpop.xlane.xlu0 %5809
    %5811 = vadd.xlane.f32.xlu0 %v5760
    %v5812 = vpop.xlane.xlu0 %5811
    %5813 = vadd.xlane.f32.xlu0 %v5761
    %v5814 = vpop.xlane.xlu0 %5813
    %5815 = vadd.xlane.f32.xlu0 %v5762
    %v5816 = vpop.xlane.xlu0 %5815
    %5817 = vadd.xlane.f32.xlu0 %v5763
    %v5818 = vpop.xlane.xlu0 %5817
    %5819 = vadd.xlane.f32.xlu0 %v5764
    %v5820 = vpop.xlane.xlu0 %5819
    %5821 = vadd.xlane.f32.xlu0 %v5765
    %v5822 = vpop.xlane.xlu0 %5821
    %5823 = vadd.xlane.f32.xlu0 %v5766
    %v5824 = vpop.xlane.xlu0 %5823
    %5825 = vadd.xlane.f32.xlu0 %v5767
    %v5826 = vpop.xlane.xlu0 %5825
    %5827 = vadd.xlane.f32.xlu0 %v5768
    %v5828 = vpop.xlane.xlu0 %5827
    %5829 = vadd.xlane.f32.xlu0 %v5769
    %v5830 = vpop.xlane.xlu0 %5829
    %5831 = vadd.xlane.f32.xlu0 %v5770
    %v5832 = vpop.xlane.xlu0 %5831
    %5833 = vadd.xlane.f32.xlu0 %v5771
    %v5834 = vpop.xlane.xlu0 %5833
    %5835 = vadd.xlane.f32.xlu0 %v5772
    %v5836 = vpop.xlane.xlu0 %5835
    %v5837 = vrcp.pop 128.0
    %v5838 = vmul.f32 %v5774, %v5837
    %v5839 = vmul.f32 %v5776, %v5837
    %v5840 = vmul.f32 %v5778, %v5837
    %v5841 = vmul.f32 %v5780, %v5837
    %v5842 = vmul.f32 %v5782, %v5837
    %v5843 = vmul.f32 %v5784, %v5837
    %v5844 = vmul.f32 %v5786, %v5837
    %v5845 = vmul.f32 %v5788, %v5837
    %v5846 = vmul.f32 %v5790, %v5837
    %v5847 = vmul.f32 %v5792, %v5837
    %v5848 = vmul.f32 %v5794, %v5837
    %v5849 = vmul.f32 %v5796, %v5837
    %v5850 = vmul.f32 %v5798, %v5837
    %v5851 = vmul.f32 %v5800, %v5837
    %v5852 = vmul.f32 %v5802, %v5837
    %v5853 = vmul.f32 %v5804, %v5837
    %v5854 = vmul.f32 %v5806, %v5837
    %v5855 = vmul.f32 %v5808, %v5837
    %v5856 = vmul.f32 %v5810, %v5837
    %v5857 = vmul.f32 %v5812, %v5837
    %v5858 = vmul.f32 %v5814, %v5837
    %v5859 = vmul.f32 %v5816, %v5837
    %v5860 = vmul.f32 %v5818, %v5837
    %v5861 = vmul.f32 %v5820, %v5837
    %v5862 = vmul.f32 %v5822, %v5837
    %v5863 = vmul.f32 %v5824, %v5837
    %v5864 = vmul.f32 %v5826, %v5837
    %v5865 = vmul.f32 %v5828, %v5837
    %v5866 = vmul.f32 %v5830, %v5837
    %v5867 = vmul.f32 %v5832, %v5837
    %v5868 = vmul.f32 %v5834, %v5837
    %v5869 = vmul.f32 %v5836, %v5837
    %v5870 = vsub.f32 %v5741, %v5838
    %v5871 = vsub.f32 %v5742, %v5839
    %v5872 = vsub.f32 %v5743, %v5840
    %v5873 = vsub.f32 %v5744, %v5841
    %v5874 = vsub.f32 %v5745, %v5842
    %v5875 = vsub.f32 %v5746, %v5843
    %v5876 = vsub.f32 %v5747, %v5844
    %v5877 = vsub.f32 %v5748, %v5845
    %v5878 = vsub.f32 %v5749, %v5846
    %v5879 = vsub.f32 %v5750, %v5847
    %v5880 = vsub.f32 %v5751, %v5848
    %v5881 = vsub.f32 %v5752, %v5849
    %v5882 = vsub.f32 %v5753, %v5850
    %v5883 = vsub.f32 %v5754, %v5851
    %v5884 = vsub.f32 %v5755, %v5852
    %v5885 = vsub.f32 %v5756, %v5853
    %v5886 = vsub.f32 %v5757, %v5854
    %v5887 = vsub.f32 %v5758, %v5855
    %v5888 = vsub.f32 %v5759, %v5856
    %v5889 = vsub.f32 %v5760, %v5857
    %v5890 = vsub.f32 %v5761, %v5858
    %v5891 = vsub.f32 %v5762, %v5859
    %v5892 = vsub.f32 %v5763, %v5860
    %v5893 = vsub.f32 %v5764, %v5861
    %v5894 = vsub.f32 %v5765, %v5862
    %v5895 = vsub.f32 %v5766, %v5863
    %v5896 = vsub.f32 %v5767, %v5864
    %v5897 = vsub.f32 %v5768, %v5865
    %v5898 = vsub.f32 %v5769, %v5866
    %v5899 = vsub.f32 %v5770, %v5867
    %v5900 = vsub.f32 %v5771, %v5868
    %v5901 = vsub.f32 %v5772, %v5869
    %v5902 = vmul.f32 %v5870, %v5870
    %v5903 = vmul.f32 %v5871, %v5871
    %v5904 = vmul.f32 %v5872, %v5872
    %v5905 = vmul.f32 %v5873, %v5873
    %v5906 = vmul.f32 %v5874, %v5874
    %v5907 = vmul.f32 %v5875, %v5875
    %v5908 = vmul.f32 %v5876, %v5876
    %v5909 = vmul.f32 %v5877, %v5877
    %v5910 = vmul.f32 %v5878, %v5878
    %v5911 = vmul.f32 %v5879, %v5879
    %v5912 = vmul.f32 %v5880, %v5880
    %v5913 = vmul.f32 %v5881, %v5881
    %v5914 = vmul.f32 %v5882, %v5882
    %v5915 = vmul.f32 %v5883, %v5883
    %v5916 = vmul.f32 %v5884, %v5884
    %v5917 = vmul.f32 %v5885, %v5885
    %v5918 = vmul.f32 %v5886, %v5886
    %v5919 = vmul.f32 %v5887, %v5887
    %v5920 = vmul.f32 %v5888, %v5888
    %v5921 = vmul.f32 %v5889, %v5889
    %v5922 = vmul.f32 %v5890, %v5890
    %v5923 = vmul.f32 %v5891, %v5891
    %v5924 = vmul.f32 %v5892, %v5892
    %v5925 = vmul.f32 %v5893, %v5893
    %v5926 = vmul.f32 %v5894, %v5894
    %v5927 = vmul.f32 %v5895, %v5895
    %v5928 = vmul.f32 %v5896, %v5896
    %v5929 = vmul.f32 %v5897, %v5897
    %v5930 = vmul.f32 %v5898, %v5898
    %v5931 = vmul.f32 %v5899, %v5899
    %v5932 = vmul.f32 %v5900, %v5900
    %v5933 = vmul.f32 %v5901, %v5901
    %5934 = vadd.xlane.f32.xlu0 %v5902
    %v5935 = vpop.xlane.xlu0 %5934
    %5936 = vadd.xlane.f32.xlu0 %v5903
    %v5937 = vpop.xlane.xlu0 %5936
    %5938 = vadd.xlane.f32.xlu0 %v5904
    %v5939 = vpop.xlane.xlu0 %5938
    %5940 = vadd.xlane.f32.xlu0 %v5905
    %v5941 = vpop.xlane.xlu0 %5940
    %5942 = vadd.xlane.f32.xlu0 %v5906
    %v5943 = vpop.xlane.xlu0 %5942
    %5944 = vadd.xlane.f32.xlu0 %v5907
    %v5945 = vpop.xlane.xlu0 %5944
    %5946 = vadd.xlane.f32.xlu0 %v5908
    %v5947 = vpop.xlane.xlu0 %5946
    %5948 = vadd.xlane.f32.xlu0 %v5909
    %v5949 = vpop.xlane.xlu0 %5948
    %5950 = vadd.xlane.f32.xlu0 %v5910
    %v5951 = vpop.xlane.xlu0 %5950
    %5952 = vadd.xlane.f32.xlu0 %v5911
    %v5953 = vpop.xlane.xlu0 %5952
    %5954 = vadd.xlane.f32.xlu0 %v5912
    %v5955 = vpop.xlane.xlu0 %5954
    %5956 = vadd.xlane.f32.xlu0 %v5913
    %v5957 = vpop.xlane.xlu0 %5956
    %5958 = vadd.xlane.f32.xlu0 %v5914
    %v5959 = vpop.xlane.xlu0 %5958
    %5960 = vadd.xlane.f32.xlu0 %v5915
    %v5961 = vpop.xlane.xlu0 %5960
    %5962 = vadd.xlane.f32.xlu0 %v5916
    %v5963 = vpop.xlane.xlu0 %5962
    %5964 = vadd.xlane.f32.xlu0 %v5917
    %v5965 = vpop.xlane.xlu0 %5964
    %5966 = vadd.xlane.f32.xlu0 %v5918
    %v5967 = vpop.xlane.xlu0 %5966
    %5968 = vadd.xlane.f32.xlu0 %v5919
    %v5969 = vpop.xlane.xlu0 %5968
    %5970 = vadd.xlane.f32.xlu0 %v5920
    %v5971 = vpop.xlane.xlu0 %5970
    %5972 = vadd.xlane.f32.xlu0 %v5921
    %v5973 = vpop.xlane.xlu0 %5972
    %5974 = vadd.xlane.f32.xlu0 %v5922
    %v5975 = vpop.xlane.xlu0 %5974
    %5976 = vadd.xlane.f32.xlu0 %v5923
    %v5977 = vpop.xlane.xlu0 %5976
    %5978 = vadd.xlane.f32.xlu0 %v5924
    %v5979 = vpop.xlane.xlu0 %5978
    %5980 = vadd.xlane.f32.xlu0 %v5925
    %v5981 = vpop.xlane.xlu0 %5980
    %5982 = vadd.xlane.f32.xlu0 %v5926
    %v5983 = vpop.xlane.xlu0 %5982
    %5984 = vadd.xlane.f32.xlu0 %v5927
    %v5985 = vpop.xlane.xlu0 %5984
    %5986 = vadd.xlane.f32.xlu0 %v5928
    %v5987 = vpop.xlane.xlu0 %5986
    %5988 = vadd.xlane.f32.xlu0 %v5929
    %v5989 = vpop.xlane.xlu0 %5988
    %5990 = vadd.xlane.f32.xlu0 %v5930
    %v5991 = vpop.xlane.xlu0 %5990
    %5992 = vadd.xlane.f32.xlu0 %v5931
    %v5993 = vpop.xlane.xlu0 %5992
    %5994 = vadd.xlane.f32.xlu0 %v5932
    %v5995 = vpop.xlane.xlu0 %5994
    %5996 = vadd.xlane.f32.xlu0 %v5933
    %v5997 = vpop.xlane.xlu0 %5996
    %v5998 = vmul.f32 %v5935, %v5837
    %v5999 = vmul.f32 %v5937, %v5837
    %v6000 = vmul.f32 %v5939, %v5837
    %v6001 = vmul.f32 %v5941, %v5837
    %v6002 = vmul.f32 %v5943, %v5837
    %v6003 = vmul.f32 %v5945, %v5837
    %v6004 = vmul.f32 %v5947, %v5837
    %v6005 = vmul.f32 %v5949, %v5837
    %v6006 = vmul.f32 %v5951, %v5837
    %v6007 = vmul.f32 %v5953, %v5837
    %v6008 = vmul.f32 %v5955, %v5837
    %v6009 = vmul.f32 %v5957, %v5837
    %v6010 = vmul.f32 %v5959, %v5837
    %v6011 = vmul.f32 %v5961, %v5837
    %v6012 = vmul.f32 %v5963, %v5837
    %v6013 = vmul.f32 %v5965, %v5837
    %v6014 = vmul.f32 %v5967, %v5837
    %v6015 = vmul.f32 %v5969, %v5837
    %v6016 = vmul.f32 %v5971, %v5837
    %v6017 = vmul.f32 %v5973, %v5837
    %v6018 = vmul.f32 %v5975, %v5837
    %v6019 = vmul.f32 %v5977, %v5837
    %v6020 = vmul.f32 %v5979, %v5837
    %v6021 = vmul.f32 %v5981, %v5837
    %v6022 = vmul.f32 %v5983, %v5837
    %v6023 = vmul.f32 %v5985, %v5837
    %v6024 = vmul.f32 %v5987, %v5837
    %v6025 = vmul.f32 %v5989, %v5837
    %v6026 = vmul.f32 %v5991, %v5837
    %v6027 = vmul.f32 %v5993, %v5837
    %v6028 = vmul.f32 %v5995, %v5837
    %v6029 = vmul.f32 %v5997, %v5837
    %v6030 = vadd.f32 %v5998, 1e-05
    %v6031 = vadd.f32 %v5999, 1e-05
    %v6032 = vadd.f32 %v6000, 1e-05
    %v6033 = vadd.f32 %v6001, 1e-05
    %v6034 = vadd.f32 %v6002, 1e-05
    %v6035 = vadd.f32 %v6003, 1e-05
    %v6036 = vadd.f32 %v6004, 1e-05
    %v6037 = vadd.f32 %v6005, 1e-05
    %v6038 = vadd.f32 %v6006, 1e-05
    %v6039 = vadd.f32 %v6007, 1e-05
    %v6040 = vadd.f32 %v6008, 1e-05
    %v6041 = vadd.f32 %v6009, 1e-05
    %v6042 = vadd.f32 %v6010, 1e-05
    %v6043 = vadd.f32 %v6011, 1e-05
    %v6044 = vadd.f32 %v6012, 1e-05
    %v6045 = vadd.f32 %v6013, 1e-05
    %v6046 = vadd.f32 %v6014, 1e-05
    %v6047 = vadd.f32 %v6015, 1e-05
    %v6048 = vadd.f32 %v6016, 1e-05
    %v6049 = vadd.f32 %v6017, 1e-05
    %v6050 = vadd.f32 %v6018, 1e-05
    %v6051 = vadd.f32 %v6019, 1e-05
    %v6052 = vadd.f32 %v6020, 1e-05
    %v6053 = vadd.f32 %v6021, 1e-05
    %v6054 = vadd.f32 %v6022, 1e-05
    %v6055 = vadd.f32 %v6023, 1e-05
    %v6056 = vadd.f32 %v6024, 1e-05
    %v6057 = vadd.f32 %v6025, 1e-05
    %v6058 = vadd.f32 %v6026, 1e-05
    %v6059 = vadd.f32 %v6027, 1e-05
    %v6060 = vadd.f32 %v6028, 1e-05
    %v6061 = vadd.f32 %v6029, 1e-05
    %v6062 = vrsqrt.pop %v6030
    %v6063 = vrsqrt.pop %v6031
    %v6064 = vrsqrt.pop %v6032
    %v6065 = vrsqrt.pop %v6033
    %v6066 = vrsqrt.pop %v6034
    %v6067 = vrsqrt.pop %v6035
    %v6068 = vrsqrt.pop %v6036
    %v6069 = vrsqrt.pop %v6037
    %v6070 = vrsqrt.pop %v6038
    %v6071 = vrsqrt.pop %v6039
    %v6072 = vrsqrt.pop %v6040
    %v6073 = vrsqrt.pop %v6041
    %v6074 = vrsqrt.pop %v6042
    %v6075 = vrsqrt.pop %v6043
    %v6076 = vrsqrt.pop %v6044
    %v6077 = vrsqrt.pop %v6045
    %v6078 = vrsqrt.pop %v6046
    %v6079 = vrsqrt.pop %v6047
    %v6080 = vrsqrt.pop %v6048
    %v6081 = vrsqrt.pop %v6049
    %v6082 = vrsqrt.pop %v6050
    %v6083 = vrsqrt.pop %v6051
    %v6084 = vrsqrt.pop %v6052
    %v6085 = vrsqrt.pop %v6053
    %v6086 = vrsqrt.pop %v6054
    %v6087 = vrsqrt.pop %v6055
    %v6088 = vrsqrt.pop %v6056
    %v6089 = vrsqrt.pop %v6057
    %v6090 = vrsqrt.pop %v6058
    %v6091 = vrsqrt.pop %v6059
    %v6092 = vrsqrt.pop %v6060
    %v6093 = vrsqrt.pop %v6061
    %v6094 = vmul.f32 %v5870, %v6062
    %v6095 = vmul.f32 %v5871, %v6063
    %v6096 = vmul.f32 %v5872, %v6064
    %v6097 = vmul.f32 %v5873, %v6065
    %v6098 = vmul.f32 %v5874, %v6066
    %v6099 = vmul.f32 %v5875, %v6067
    %v6100 = vmul.f32 %v5876, %v6068
    %v6101 = vmul.f32 %v5877, %v6069
    %v6102 = vmul.f32 %v5878, %v6070
    %v6103 = vmul.f32 %v5879, %v6071
    %v6104 = vmul.f32 %v5880, %v6072
    %v6105 = vmul.f32 %v5881, %v6073
    %v6106 = vmul.f32 %v5882, %v6074
    %v6107 = vmul.f32 %v5883, %v6075
    %v6108 = vmul.f32 %v5884, %v6076
    %v6109 = vmul.f32 %v5885, %v6077
    %v6110 = vmul.f32 %v5886, %v6078
    %v6111 = vmul.f32 %v5887, %v6079
    %v6112 = vmul.f32 %v5888, %v6080
    %v6113 = vmul.f32 %v5889, %v6081
    %v6114 = vmul.f32 %v5890, %v6082
    %v6115 = vmul.f32 %v5891, %v6083
    %v6116 = vmul.f32 %v5892, %v6084
    %v6117 = vmul.f32 %v5893, %v6085
    %v6118 = vmul.f32 %v5894, %v6086
    %v6119 = vmul.f32 %v5895, %v6087
    %v6120 = vmul.f32 %v5896, %v6088
    %v6121 = vmul.f32 %v5897, %v6089
    %v6122 = vmul.f32 %v5898, %v6090
    %v6123 = vmul.f32 %v5899, %v6091
    %v6124 = vmul.f32 %v5900, %v6092
    %v6125 = vmul.f32 %v5901, %v6093
    %v6126 = vlaneseq
    %v6127 = vshrl.u32 %v6126, 7
    %v6128 = vsub.s32 3, %v6127
    %v6129 = vrot.slane %v179, %v6128
    %v6130 = vmul.f32 %v6094, %v6129
    %v6131 = vmul.f32 %v6095, %v6129
    %v6132 = vmul.f32 %v6096, %v6129
    %v6133 = vmul.f32 %v6097, %v6129
    %v6134 = vmul.f32 %v6098, %v6129
    %v6135 = vmul.f32 %v6099, %v6129
    %v6136 = vmul.f32 %v6100, %v6129
    %v6137 = vmul.f32 %v6101, %v6129
    %v6138 = vmul.f32 %v6102, %v6129
    %v6139 = vmul.f32 %v6103, %v6129
    %v6140 = vmul.f32 %v6104, %v6129
    %v6141 = vmul.f32 %v6105, %v6129
    %v6142 = vmul.f32 %v6106, %v6129
    %v6143 = vmul.f32 %v6107, %v6129
    %v6144 = vmul.f32 %v6108, %v6129
    %v6145 = vmul.f32 %v6109, %v6129
    %v6146 = vmul.f32 %v6110, %v6129
    %v6147 = vmul.f32 %v6111, %v6129
    %v6148 = vmul.f32 %v6112, %v6129
    %v6149 = vmul.f32 %v6113, %v6129
    %v6150 = vmul.f32 %v6114, %v6129
    %v6151 = vmul.f32 %v6115, %v6129
    %v6152 = vmul.f32 %v6116, %v6129
    %v6153 = vmul.f32 %v6117, %v6129
    %v6154 = vmul.f32 %v6118, %v6129
    %v6155 = vmul.f32 %v6119, %v6129
    %v6156 = vmul.f32 %v6120, %v6129
    %v6157 = vmul.f32 %v6121, %v6129
    %v6158 = vmul.f32 %v6122, %v6129
    %v6159 = vmul.f32 %v6123, %v6129
    %v6160 = vmul.f32 %v6124, %v6129
    %v6161 = vmul.f32 %v6125, %v6129
    %v6162 = vlaneseq
    %v6163 = vshrl.u32 %v6162, 7
    %v6164 = vsub.s32 4, %v6163
    %v6165 = vrot.slane %v179, %v6164
    %v6166 = vadd.f32 %v6130, %v6165
    %v6167 = vadd.f32 %v6131, %v6165
    %v6168 = vadd.f32 %v6132, %v6165
    %v6169 = vadd.f32 %v6133, %v6165
    %v6170 = vadd.f32 %v6134, %v6165
    %v6171 = vadd.f32 %v6135, %v6165
    %v6172 = vadd.f32 %v6136, %v6165
    %v6173 = vadd.f32 %v6137, %v6165
    %v6174 = vadd.f32 %v6138, %v6165
    %v6175 = vadd.f32 %v6139, %v6165
    %v6176 = vadd.f32 %v6140, %v6165
    %v6177 = vadd.f32 %v6141, %v6165
    %v6178 = vadd.f32 %v6142, %v6165
    %v6179 = vadd.f32 %v6143, %v6165
    %v6180 = vadd.f32 %v6144, %v6165
    %v6181 = vadd.f32 %v6145, %v6165
    %v6182 = vadd.f32 %v6146, %v6165
    %v6183 = vadd.f32 %v6147, %v6165
    %v6184 = vadd.f32 %v6148, %v6165
    %v6185 = vadd.f32 %v6149, %v6165
    %v6186 = vadd.f32 %v6150, %v6165
    %v6187 = vadd.f32 %v6151, %v6165
    %v6188 = vadd.f32 %v6152, %v6165
    %v6189 = vadd.f32 %v6153, %v6165
    %v6190 = vadd.f32 %v6154, %v6165
    %v6191 = vadd.f32 %v6155, %v6165
    %v6192 = vadd.f32 %v6156, %v6165
    %v6193 = vadd.f32 %v6157, %v6165
    %v6194 = vadd.f32 %v6158, %v6165
    %v6195 = vadd.f32 %v6159, %v6165
    %v6196 = vadd.f32 %v6160, %v6165
    %v6197 = vadd.f32 %v6161, %v6165
    %v6198 = vpack.c.bf16 %v6167, %v6166
    %v6199 = vpack.c.bf16 %v6169, %v6168
    %v6200 = vpack.c.bf16 %v6171, %v6170
    %v6201 = vpack.c.bf16 %v6173, %v6172
    %v6202 = vpack.c.bf16 %v6175, %v6174
    %v6203 = vpack.c.bf16 %v6177, %v6176
    %v6204 = vpack.c.bf16 %v6179, %v6178
    %v6205 = vpack.c.bf16 %v6181, %v6180
    %v6206 = vpack.c.bf16 %v6183, %v6182
    %v6207 = vpack.c.bf16 %v6185, %v6184
    %v6208 = vpack.c.bf16 %v6187, %v6186
    %v6209 = vpack.c.bf16 %v6189, %v6188
    %v6210 = vpack.c.bf16 %v6191, %v6190
    %v6211 = vpack.c.bf16 %v6193, %v6192
    %v6212 = vpack.c.bf16 %v6195, %v6194
    %v6213 = vpack.c.bf16 %v6197, %v6196
    %v6214 = vlaneseq
    %v6215 = vshrl.u32 %v6214, 7
    %v6216 = vsub.s32 5, %v6215
    %v6217 = vrot.slane %v179, %v6216
    %v6234 = vunpack.c.l.b16 %v147
    %v6235 = vunpack.c.l.b16 %v148
    %v6236 = vunpack.c.l.b16 %v149
    %v6237 = vunpack.c.l.b16 %v150
    %v6238 = vunpack.c.l.b16 %v151
    %v6239 = vunpack.c.l.b16 %v152
    %v6240 = vunpack.c.l.b16 %v153
    %v6241 = vunpack.c.l.b16 %v154
    %v6242 = vunpack.c.l.b16 %v155
    %v6243 = vunpack.c.l.b16 %v156
    %v6244 = vunpack.c.l.b16 %v157
    %v6245 = vunpack.c.l.b16 %v158
    %v6246 = vunpack.c.l.b16 %v159
    %v6247 = vunpack.c.l.b16 %v160
    %v6248 = vunpack.c.l.b16 %v161
    %v6249 = vunpack.c.l.b16 %v162
    %v6250 = vpack.c.b16 %v6235, %v6234
    %v6251 = vpack.c.b16 %v6237, %v6236
    %v6252 = vpack.c.b16 %v6239, %v6238
    %v6253 = vpack.c.b16 %v6241, %v6240
    %v6254 = vpack.c.b16 %v6243, %v6242
    %v6255 = vpack.c.b16 %v6245, %v6244
    %v6256 = vpack.c.b16 %v6247, %v6246
    %v6257 = vpack.c.b16 %v6249, %v6248
    %6266 = vmatprep.subr.bf16.mxu0 0
    %6267 = vmatpush1.bf16.msra.mxu0 %v6250
    %6268 = vmatprep.subr.bf16.mxu0 0
    %6269 = vmatpush1.bf16.msra.mxu0 %v6251
    %6270 = vmatprep.subr.bf16.mxu0 0
    %6271 = vmatpush1.bf16.msra.mxu0 %v6252
    %6272 = vmatprep.subr.bf16.mxu0 0
    %6273 = vmatpush1.bf16.msra.mxu0 %v6253
    %6274 = vmatprep.subr.bf16.mxu0 0
    %6275 = vmatpush1.bf16.msra.mxu0 %v6254
    %6276 = vmatprep.subr.bf16.mxu0 0
    %6277 = vmatpush1.bf16.msra.mxu0 %v6255
    %6278 = vmatprep.subr.bf16.mxu0 0
    %6279 = vmatpush1.bf16.msra.mxu0 %v6256
    %6280 = vmatprep.subr.bf16.mxu0 0
    %6281 = vmatpush1.bf16.msra.mxu0 %v6257
    %6282 = vmatprep.subr.bf16.mxu0 0
    %6283 = vmatpush1.bf16.msra.mxu0 0
    %6284 = vmatprep.subr.bf16.mxu0 0
    %6285 = vmatpush1.bf16.msra.mxu0 0
    %6286 = vmatprep.subr.bf16.mxu0 0
    %6287 = vmatpush1.bf16.msra.mxu0 0
    %6288 = vmatprep.subr.bf16.mxu0 0
    %6289 = vmatpush1.bf16.msra.mxu0 0
    %6290 = vmatprep.subr.bf16.mxu0 0
    %6291 = vmatpush1.bf16.msra.mxu0 0
    %6292 = vmatprep.subr.bf16.mxu0 0
    %6293 = vmatpush1.bf16.msra.mxu0 0
    %6294 = vmatprep.subr.bf16.mxu0 0
    %6295 = vmatpush1.bf16.msra.mxu0 0
    %6296 = vmatprep.subr.bf16.mxu0 0
    %6297 = vmatpush1.bf16.msra.mxu0 0
    %6298 = vmatprep.mubr.bf16.mxu0 0
    %6299 = vmatmul.mubr.bf16.gmra.mrb[0].mxu0 %v6198
    %v6300 = vpop.f32.mrb[0].mxu0
    %v6301 = vadd.f32 %v6217, %v6300
    %v6302 = vpop.f32.mrb[0].mxu0
    %v6303 = vpop.f32.mrb[0].mxu0
    %v6304 = vadd.f32 %v6217, %v6303
    %v6305 = vpop.f32.mrb[0].mxu0
    %6306 = vmatprep.mubr.bf16.mxu0 0
    %6307 = vmatmul.mubr.bf16.gmra.mrb[0].mxu0 %v6199
    %v6308 = vpop.f32.mrb[0].mxu0
    %v6309 = vadd.f32 %v6217, %v6308
    %v6310 = vpop.f32.mrb[0].mxu0
    %v6311 = vpop.f32.mrb[0].mxu0
    %v6312 = vadd.f32 %v6217, %v6311
    %v6313 = vpop.f32.mrb[0].mxu0
    %6314 = vmatprep.mubr.bf16.mxu0 0
    %6315 = vmatmul.mubr.bf16.gmra.mrb[0].mxu0 %v6200
    %v6316 = vpop.f32.mrb[0].mxu0
    %v6317 = vadd.f32 %v6217, %v6316
    %v6318 = vpop.f32.mrb[0].mxu0
    %v6319 = vpop.f32.mrb[0].mxu0
    %v6320 = vadd.f32 %v6217, %v6319
    %v6321 = vpop.f32.mrb[0].mxu0
    %6322 = vmatprep.mubr.bf16.mxu0 0
    %6323 = vmatmul.mubr.bf16.gmra.mrb[0].mxu0 %v6201
    %v6324 = vpop.f32.mrb[0].mxu0
    %v6325 = vadd.f32 %v6217, %v6324
    %v6326 = vpop.f32.mrb[0].mxu0
    %v6327 = vpop.f32.mrb[0].mxu0
    %v6328 = vadd.f32 %v6217, %v6327
    %v6329 = vpop.f32.mrb[0].mxu0
    %6330 = vmatprep.mubr.bf16.mxu0 0
    %6331 = vmatmul.mubr.bf16.gmra.mrb[0].mxu0 %v6202
    %v6332 = vpop.f32.mrb[0].mxu0
    %v6333 = vadd.f32 %v6217, %v6332
    %v6334 = vpop.f32.mrb[0].mxu0
    %v6335 = vpop.f32.mrb[0].mxu0
    %v6336 = vadd.f32 %v6217, %v6335
    %v6337 = vpop.f32.mrb[0].mxu0
    %6338 = vmatprep.mubr.bf16.mxu0 0
    %6339 = vmatmul.mubr.bf16.gmra.mrb[0].mxu0 %v6203
    %v6340 = vpop.f32.mrb[0].mxu0
    %v6341 = vadd.f32 %v6217, %v6340
    %v6342 = vpop.f32.mrb[0].mxu0
    %v6343 = vpop.f32.mrb[0].mxu0
    %v6344 = vadd.f32 %v6217, %v6343
    %v6345 = vpop.f32.mrb[0].mxu0
    %6346 = vmatprep.mubr.bf16.mxu0 0
    %6347 = vmatmul.mubr.bf16.gmra.mrb[0].mxu0 %v6204
    %v6348 = vpop.f32.mrb[0].mxu0
    %v6349 = vadd.f32 %v6217, %v6348
    %v6350 = vpop.f32.mrb[0].mxu0
    %v6351 = vpop.f32.mrb[0].mxu0
    %v6352 = vadd.f32 %v6217, %v6351
    %v6353 = vpop.f32.mrb[0].mxu0
    %6354 = vmatprep.mubr.bf16.mxu0 0
    %6355 = vmatmul.mubr.bf16.gmra.mrb[0].mxu0 %v6205
    %v6356 = vpop.f32.mrb[0].mxu0
    %v6357 = vadd.f32 %v6217, %v6356
    %v6358 = vpop.f32.mrb[0].mxu0
    %v6359 = vpop.f32.mrb[0].mxu0
    %v6360 = vadd.f32 %v6217, %v6359
    %v6361 = vpop.f32.mrb[0].mxu0
    %6362 = vmatprep.mubr.bf16.mxu0 0
    %6363 = vmatmul.mubr.bf16.gmra.mrb[0].mxu0 %v6206
    %v6364 = vpop.f32.mrb[0].mxu0
    %v6365 = vadd.f32 %v6217, %v6364
    %v6366 = vpop.f32.mrb[0].mxu0
    %v6367 = vpop.f32.mrb[0].mxu0
    %v6368 = vadd.f32 %v6217, %v6367
    %v6369 = vpop.f32.mrb[0].mxu0
    %6370 = vmatprep.mubr.bf16.mxu0 0
    %6371 = vmatmul.mubr.bf16.gmra.mrb[0].mxu0 %v6207
    %v6372 = vpop.f32.mrb[0].mxu0
    %v6373 = vadd.f32 %v6217, %v6372
    %v6374 = vpop.f32.mrb[0].mxu0
    %v6375 = vpop.f32.mrb[0].mxu0
    %v6376 = vadd.f32 %v6217, %v6375
    %v6377 = vpop.f32.mrb[0].mxu0
    %6378 = vmatprep.mubr.bf16.mxu0 0
    %6379 = vmatmul.mubr.bf16.gmra.mrb[0].mxu0 %v6208
    %v6380 = vpop.f32.mrb[0].mxu0
    %v6381 = vadd.f32 %v6217, %v6380
    %v6382 = vpop.f32.mrb[0].mxu0
    %v6383 = vpop.f32.mrb[0].mxu0
    %v6384 = vadd.f32 %v6217, %v6383
    %v6385 = vpop.f32.mrb[0].mxu0
    %6386 = vmatprep.mubr.bf16.mxu0 0
    %6387 = vmatmul.mubr.bf16.gmra.mrb[0].mxu0 %v6209
    %v6388 = vpop.f32.mrb[0].mxu0
    %v6389 = vadd.f32 %v6217, %v6388
    %v6390 = vpop.f32.mrb[0].mxu0
    %v6391 = vpop.f32.mrb[0].mxu0
    %v6392 = vadd.f32 %v6217, %v6391
    %v6393 = vpop.f32.mrb[0].mxu0
    %6394 = vmatprep.mubr.bf16.mxu0 0
    %6395 = vmatmul.mubr.bf16.gmra.mrb[0].mxu0 %v6210
    %v6396 = vpop.f32.mrb[0].mxu0
    %v6397 = vadd.f32 %v6217, %v6396
    %v6398 = vpop.f32.mrb[0].mxu0
    %v6399 = vpop.f32.mrb[0].mxu0
    %v6400 = vadd.f32 %v6217, %v6399
    %v6401 = vpop.f32.mrb[0].mxu0
    %6402 = vmatprep.mubr.bf16.mxu0 0
    %6403 = vmatmul.mubr.bf16.gmra.mrb[0].mxu0 %v6211
    %v6404 = vpop.f32.mrb[0].mxu0
    %v6405 = vadd.f32 %v6217, %v6404
    %v6406 = vpop.f32.mrb[0].mxu0
    %v6407 = vpop.f32.mrb[0].mxu0
    %v6408 = vadd.f32 %v6217, %v6407
    %v6409 = vpop.f32.mrb[0].mxu0
    %6410 = vmatprep.mubr.bf16.mxu0 0
    %6411 = vmatmul.mubr.bf16.gmra.mrb[0].mxu0 %v6212
    %v6412 = vpop.f32.mrb[0].mxu0
    %v6413 = vadd.f32 %v6217, %v6412
    %v6414 = vpop.f32.mrb[0].mxu0
    %v6415 = vpop.f32.mrb[0].mxu0
    %v6416 = vadd.f32 %v6217, %v6415
    %v6417 = vpop.f32.mrb[0].mxu0
    %6418 = vmatprep.mubr.bf16.mxu0 0
    %6419 = vmatmul.mubr.bf16.gmra.mrb[0].mxu0 %v6213
    %v6420 = vpop.f32.mrb[0].mxu0
    %v6421 = vadd.f32 %v6217, %v6420
    %v6422 = vpop.f32.mrb[0].mxu0
    %v6423 = vpop.f32.mrb[0].mxu0
    %v6424 = vadd.f32 %v6217, %v6423
    %v6425 = vpop.f32.mrb[0].mxu0
    %6426 = vdwg.mxu0
    %v6427 = vmax.f32 %v6301, 0.0
    %v6428 = vmax.f32 %v6304, 0.0
    %v6429 = vmax.f32 %v6309, 0.0
    %v6430 = vmax.f32 %v6312, 0.0
    %v6431 = vmax.f32 %v6317, 0.0
    %v6432 = vmax.f32 %v6320, 0.0
    %v6433 = vmax.f32 %v6325, 0.0
    %v6434 = vmax.f32 %v6328, 0.0
    %v6435 = vmax.f32 %v6333, 0.0
    %v6436 = vmax.f32 %v6336, 0.0
    %v6437 = vmax.f32 %v6341, 0.0
    %v6438 = vmax.f32 %v6344, 0.0
    %v6439 = vmax.f32 %v6349, 0.0
    %v6440 = vmax.f32 %v6352, 0.0
    %v6441 = vmax.f32 %v6357, 0.0
    %v6442 = vmax.f32 %v6360, 0.0
    %v6443 = vmax.f32 %v6365, 0.0
    %v6444 = vmax.f32 %v6368, 0.0
    %v6445 = vmax.f32 %v6373, 0.0
    %v6446 = vmax.f32 %v6376, 0.0
    %v6447 = vmax.f32 %v6381, 0.0
    %v6448 = vmax.f32 %v6384, 0.0
    %v6449 = vmax.f32 %v6389, 0.0
    %v6450 = vmax.f32 %v6392, 0.0
    %v6451 = vmax.f32 %v6397, 0.0
    %v6452 = vmax.f32 %v6400, 0.0
    %v6453 = vmax.f32 %v6405, 0.0
    %v6454 = vmax.f32 %v6408, 0.0
    %v6455 = vmax.f32 %v6413, 0.0
    %v6456 = vmax.f32 %v6416, 0.0
    %v6457 = vmax.f32 %v6421, 0.0
    %v6458 = vmax.f32 %v6424, 0.0
    %v6459 = vpack.c.bf16 %v6428, %v6427
    %v6460 = vpack.c.bf16 %v6430, %v6429
    %v6461 = vpack.c.bf16 %v6432, %v6431
    %v6462 = vpack.c.bf16 %v6434, %v6433
    %v6463 = vpack.c.bf16 %v6436, %v6435
    %v6464 = vpack.c.bf16 %v6438, %v6437
    %v6465 = vpack.c.bf16 %v6440, %v6439
    %v6466 = vpack.c.bf16 %v6442, %v6441
    %v6467 = vpack.c.bf16 %v6444, %v6443
    %v6468 = vpack.c.bf16 %v6446, %v6445
    %v6469 = vpack.c.bf16 %v6448, %v6447
    %v6470 = vpack.c.bf16 %v6450, %v6449
    %v6471 = vpack.c.bf16 %v6452, %v6451
    %v6472 = vpack.c.bf16 %v6454, %v6453
    %v6473 = vpack.c.bf16 %v6456, %v6455
    %v6474 = vpack.c.bf16 %v6458, %v6457
    %v6475 = vlaneseq
    %v6476 = vshrl.u32 %v6475, 7
    %v6477 = vsub.s32 6, %v6476
    %v6478 = vrot.slane %v179, %v6477
    %v6495 = vunpack.c.l.b16 %v163
    %v6496 = vunpack.c.l.b16 %v164
    %v6497 = vunpack.c.l.b16 %v165
    %v6498 = vunpack.c.l.b16 %v166
    %v6499 = vunpack.c.l.b16 %v167
    %v6500 = vunpack.c.l.b16 %v168
    %v6501 = vunpack.c.l.b16 %v169
    %v6502 = vunpack.c.l.b16 %v170
    %v6503 = vunpack.c.l.b16 %v171
    %v6504 = vunpack.c.l.b16 %v172
    %v6505 = vunpack.c.l.b16 %v173
    %v6506 = vunpack.c.l.b16 %v174
    %v6507 = vunpack.c.l.b16 %v175
    %v6508 = vunpack.c.l.b16 %v176
    %v6509 = vunpack.c.l.b16 %v177
    %v6510 = vunpack.c.l.b16 %v178
    %v6511 = vpack.c.b16 %v6496, %v6495
    %v6512 = vpack.c.b16 %v6498, %v6497
    %v6513 = vpack.c.b16 %v6500, %v6499
    %v6514 = vpack.c.b16 %v6502, %v6501
    %v6515 = vpack.c.b16 %v6504, %v6503
    %v6516 = vpack.c.b16 %v6506, %v6505
    %v6517 = vpack.c.b16 %v6508, %v6507
    %v6518 = vpack.c.b16 %v6510, %v6509
    %6527 = vmatprep.subr.bf16.mxu0 0
    %6528 = vmatpush1.bf16.msra.mxu0 %v6511
    %6529 = vmatprep.subr.bf16.mxu0 0
    %6530 = vmatpush1.bf16.msra.mxu0 %v6512
    %6531 = vmatprep.subr.bf16.mxu0 0
    %6532 = vmatpush1.bf16.msra.mxu0 %v6513
    %6533 = vmatprep.subr.bf16.mxu0 0
    %6534 = vmatpush1.bf16.msra.mxu0 %v6514
    %6535 = vmatprep.subr.bf16.mxu0 0
    %6536 = vmatpush1.bf16.msra.mxu0 %v6515
    %6537 = vmatprep.subr.bf16.mxu0 0
    %6538 = vmatpush1.bf16.msra.mxu0 %v6516
    %6539 = vmatprep.subr.bf16.mxu0 0
    %6540 = vmatpush1.bf16.msra.mxu0 %v6517
    %6541 = vmatprep.subr.bf16.mxu0 0
    %6542 = vmatpush1.bf16.msra.mxu0 %v6518
    %6543 = vmatprep.subr.bf16.mxu0 0
    %6544 = vmatpush1.bf16.msra.mxu0 0
    %6545 = vmatprep.subr.bf16.mxu0 0
    %6546 = vmatpush1.bf16.msra.mxu0 0
    %6547 = vmatprep.subr.bf16.mxu0 0
    %6548 = vmatpush1.bf16.msra.mxu0 0
    %6549 = vmatprep.subr.bf16.mxu0 0
    %6550 = vmatpush1.bf16.msra.mxu0 0
    %6551 = vmatprep.subr.bf16.mxu0 0
    %6552 = vmatpush1.bf16.msra.mxu0 0
    %6553 = vmatprep.subr.bf16.mxu0 0
    %6554 = vmatpush1.bf16.msra.mxu0 0
    %6555 = vmatprep.subr.bf16.mxu0 0
    %6556 = vmatpush1.bf16.msra.mxu0 0
    %6557 = vmatprep.subr.bf16.mxu0 0
    %6558 = vmatpush1.bf16.msra.mxu0 0
    %6559 = vmatprep.mubr.bf16.mxu0 0
    %6560 = vmatmul.mubr.bf16.gmra.mrb[0].mxu0 %v6459
    %v6561 = vpop.f32.mrb[0].mxu0
    %v6562 = vadd.f32 %v6478, %v6561
    %v6563 = vpop.f32.mrb[0].mxu0
    %v6564 = vpop.f32.mrb[0].mxu0
    %v6565 = vadd.f32 %v6478, %v6564
    %v6566 = vpop.f32.mrb[0].mxu0
    %6567 = vmatprep.mubr.bf16.mxu0 0
    %6568 = vmatmul.mubr.bf16.gmra.mrb[0].mxu0 %v6460
    %v6569 = vpop.f32.mrb[0].mxu0
    %v6570 = vadd.f32 %v6478, %v6569
    %v6571 = vpop.f32.mrb[0].mxu0
    %v6572 = vpop.f32.mrb[0].mxu0
    %v6573 = vadd.f32 %v6478, %v6572
    %v6574 = vpop.f32.mrb[0].mxu0
    %6575 = vmatprep.mubr.bf16.mxu0 0
    %6576 = vmatmul.mubr.bf16.gmra.mrb[0].mxu0 %v6461
    %v6577 = vpop.f32.mrb[0].mxu0
    %v6578 = vadd.f32 %v6478, %v6577
    %v6579 = vpop.f32.mrb[0].mxu0
    %v6580 = vpop.f32.mrb[0].mxu0
    %v6581 = vadd.f32 %v6478, %v6580
    %v6582 = vpop.f32.mrb[0].mxu0
    %6583 = vmatprep.mubr.bf16.mxu0 0
    %6584 = vmatmul.mubr.bf16.gmra.mrb[0].mxu0 %v6462
    %v6585 = vpop.f32.mrb[0].mxu0
    %v6586 = vadd.f32 %v6478, %v6585
    %v6587 = vpop.f32.mrb[0].mxu0
    %v6588 = vpop.f32.mrb[0].mxu0
    %v6589 = vadd.f32 %v6478, %v6588
    %v6590 = vpop.f32.mrb[0].mxu0
    %6591 = vmatprep.mubr.bf16.mxu0 0
    %6592 = vmatmul.mubr.bf16.gmra.mrb[0].mxu0 %v6463
    %v6593 = vpop.f32.mrb[0].mxu0
    %v6594 = vadd.f32 %v6478, %v6593
    %v6595 = vpop.f32.mrb[0].mxu0
    %v6596 = vpop.f32.mrb[0].mxu0
    %v6597 = vadd.f32 %v6478, %v6596
    %v6598 = vpop.f32.mrb[0].mxu0
    %6599 = vmatprep.mubr.bf16.mxu0 0
    %6600 = vmatmul.mubr.bf16.gmra.mrb[0].mxu0 %v6464
    %v6601 = vpop.f32.mrb[0].mxu0
    %v6602 = vadd.f32 %v6478, %v6601
    %v6603 = vpop.f32.mrb[0].mxu0
    %v6604 = vpop.f32.mrb[0].mxu0
    %v6605 = vadd.f32 %v6478, %v6604
    %v6606 = vpop.f32.mrb[0].mxu0
    %6607 = vmatprep.mubr.bf16.mxu0 0
    %6608 = vmatmul.mubr.bf16.gmra.mrb[0].mxu0 %v6465
    %v6609 = vpop.f32.mrb[0].mxu0
    %v6610 = vadd.f32 %v6478, %v6609
    %v6611 = vpop.f32.mrb[0].mxu0
    %v6612 = vpop.f32.mrb[0].mxu0
    %v6613 = vadd.f32 %v6478, %v6612
    %v6614 = vpop.f32.mrb[0].mxu0
    %6615 = vmatprep.mubr.bf16.mxu0 0
    %6616 = vmatmul.mubr.bf16.gmra.mrb[0].mxu0 %v6466
    %v6617 = vpop.f32.mrb[0].mxu0
    %v6618 = vadd.f32 %v6478, %v6617
    %v6619 = vpop.f32.mrb[0].mxu0
    %v6620 = vpop.f32.mrb[0].mxu0
    %v6621 = vadd.f32 %v6478, %v6620
    %v6622 = vpop.f32.mrb[0].mxu0
    %6623 = vmatprep.mubr.bf16.mxu0 0
    %6624 = vmatmul.mubr.bf16.gmra.mrb[0].mxu0 %v6467
    %v6625 = vpop.f32.mrb[0].mxu0
    %v6626 = vadd.f32 %v6478, %v6625
    %v6627 = vpop.f32.mrb[0].mxu0
    %v6628 = vpop.f32.mrb[0].mxu0
    %v6629 = vadd.f32 %v6478, %v6628
    %v6630 = vpop.f32.mrb[0].mxu0
    %6631 = vmatprep.mubr.bf16.mxu0 0
    %6632 = vmatmul.mubr.bf16.gmra.mrb[0].mxu0 %v6468
    %v6633 = vpop.f32.mrb[0].mxu0
    %v6634 = vadd.f32 %v6478, %v6633
    %v6635 = vpop.f32.mrb[0].mxu0
    %v6636 = vpop.f32.mrb[0].mxu0
    %v6637 = vadd.f32 %v6478, %v6636
    %v6638 = vpop.f32.mrb[0].mxu0
    %6639 = vmatprep.mubr.bf16.mxu0 0
    %6640 = vmatmul.mubr.bf16.gmra.mrb[0].mxu0 %v6469
    %v6641 = vpop.f32.mrb[0].mxu0
    %v6642 = vadd.f32 %v6478, %v6641
    %v6643 = vpop.f32.mrb[0].mxu0
    %v6644 = vpop.f32.mrb[0].mxu0
    %v6645 = vadd.f32 %v6478, %v6644
    %v6646 = vpop.f32.mrb[0].mxu0
    %6647 = vmatprep.mubr.bf16.mxu0 0
    %6648 = vmatmul.mubr.bf16.gmra.mrb[0].mxu0 %v6470
    %v6649 = vpop.f32.mrb[0].mxu0
    %v6650 = vadd.f32 %v6478, %v6649
    %v6651 = vpop.f32.mrb[0].mxu0
    %v6652 = vpop.f32.mrb[0].mxu0
    %v6653 = vadd.f32 %v6478, %v6652
    %v6654 = vpop.f32.mrb[0].mxu0
    %6655 = vmatprep.mubr.bf16.mxu0 0
    %6656 = vmatmul.mubr.bf16.gmra.mrb[0].mxu0 %v6471
    %v6657 = vpop.f32.mrb[0].mxu0
    %v6658 = vadd.f32 %v6478, %v6657
    %v6659 = vpop.f32.mrb[0].mxu0
    %v6660 = vpop.f32.mrb[0].mxu0
    %v6661 = vadd.f32 %v6478, %v6660
    %v6662 = vpop.f32.mrb[0].mxu0
    %6663 = vmatprep.mubr.bf16.mxu0 0
    %6664 = vmatmul.mubr.bf16.gmra.mrb[0].mxu0 %v6472
    %v6665 = vpop.f32.mrb[0].mxu0
    %v6666 = vadd.f32 %v6478, %v6665
    %v6667 = vpop.f32.mrb[0].mxu0
    %v6668 = vpop.f32.mrb[0].mxu0
    %v6669 = vadd.f32 %v6478, %v6668
    %v6670 = vpop.f32.mrb[0].mxu0
    %6671 = vmatprep.mubr.bf16.mxu0 0
    %6672 = vmatmul.mubr.bf16.gmra.mrb[0].mxu0 %v6473
    %v6673 = vpop.f32.mrb[0].mxu0
    %v6674 = vadd.f32 %v6478, %v6673
    %v6675 = vpop.f32.mrb[0].mxu0
    %v6676 = vpop.f32.mrb[0].mxu0
    %v6677 = vadd.f32 %v6478, %v6676
    %v6678 = vpop.f32.mrb[0].mxu0
    %6679 = vmatprep.mubr.bf16.mxu0 0
    %6680 = vmatmul.mubr.bf16.gmra.mrb[0].mxu0 %v6474
    %v6681 = vpop.f32.mrb[0].mxu0
    %v6682 = vadd.f32 %v6478, %v6681
    %v6683 = vpop.f32.mrb[0].mxu0
    %v6684 = vpop.f32.mrb[0].mxu0
    %v6685 = vadd.f32 %v6478, %v6684
    %v6686 = vpop.f32.mrb[0].mxu0
    %6687 = vdwg.mxu0
    %v6688 = vadd.f32 %v6166, %v6562
    %v6689 = vadd.f32 %v6167, %v6565
    %v6690 = vadd.f32 %v6168, %v6570
    %v6691 = vadd.f32 %v6169, %v6573
    %v6692 = vadd.f32 %v6170, %v6578
    %v6693 = vadd.f32 %v6171, %v6581
    %v6694 = vadd.f32 %v6172, %v6586
    %v6695 = vadd.f32 %v6173, %v6589
    %v6696 = vadd.f32 %v6174, %v6594
    %v6697 = vadd.f32 %v6175, %v6597
    %v6698 = vadd.f32 %v6176, %v6602
    %v6699 = vadd.f32 %v6177, %v6605
    %v6700 = vadd.f32 %v6178, %v6610
    %v6701 = vadd.f32 %v6179, %v6613
    %v6702 = vadd.f32 %v6180, %v6618
    %v6703 = vadd.f32 %v6181, %v6621
    %v6704 = vadd.f32 %v6182, %v6626
    %v6705 = vadd.f32 %v6183, %v6629
    %v6706 = vadd.f32 %v6184, %v6634
    %v6707 = vadd.f32 %v6185, %v6637
    %v6708 = vadd.f32 %v6186, %v6642
    %v6709 = vadd.f32 %v6187, %v6645
    %v6710 = vadd.f32 %v6188, %v6650
    %v6711 = vadd.f32 %v6189, %v6653
    %v6712 = vadd.f32 %v6190, %v6658
    %v6713 = vadd.f32 %v6191, %v6661
    %v6714 = vadd.f32 %v6192, %v6666
    %v6715 = vadd.f32 %v6193, %v6669
    %v6716 = vadd.f32 %v6194, %v6674
    %v6717 = vadd.f32 %v6195, %v6677
    %v6718 = vadd.f32 %v6196, %v6682
    %v6719 = vadd.f32 %v6197, %v6685
    %6720 = vadd.xlane.f32.xlu0 %v6688
    %v6721 = vpop.xlane.xlu0 %6720
    %6722 = vadd.xlane.f32.xlu0 %v6689
    %v6723 = vpop.xlane.xlu0 %6722
    %6724 = vadd.xlane.f32.xlu0 %v6690
    %v6725 = vpop.xlane.xlu0 %6724
    %6726 = vadd.xlane.f32.xlu0 %v6691
    %v6727 = vpop.xlane.xlu0 %6726
    %6728 = vadd.xlane.f32.xlu0 %v6692
    %v6729 = vpop.xlane.xlu0 %6728
    %6730 = vadd.xlane.f32.xlu0 %v6693
    %v6731 = vpop.xlane.xlu0 %6730
    %6732 = vadd.xlane.f32.xlu0 %v6694
    %v6733 = vpop.xlane.xlu0 %6732
    %6734 = vadd.xlane.f32.xlu0 %v6695
    %v6735 = vpop.xlane.xlu0 %6734
    %6736 = vadd.xlane.f32.xlu0 %v6696
    %v6737 = vpop.xlane.xlu0 %6736
    %6738 = vadd.xlane.f32.xlu0 %v6697
    %v6739 = vpop.xlane.xlu0 %6738
    %6740 = vadd.xlane.f32.xlu0 %v6698
    %v6741 = vpop.xlane.xlu0 %6740
    %6742 = vadd.xlane.f32.xlu0 %v6699
    %v6743 = vpop.xlane.xlu0 %6742
    %6744 = vadd.xlane.f32.xlu0 %v6700
    %v6745 = vpop.xlane.xlu0 %6744
    %6746 = vadd.xlane.f32.xlu0 %v6701
    %v6747 = vpop.xlane.xlu0 %6746
    %6748 = vadd.xlane.f32.xlu0 %v6702
    %v6749 = vpop.xlane.xlu0 %6748
    %6750 = vadd.xlane.f32.xlu0 %v6703
    %v6751 = vpop.xlane.xlu0 %6750
    %6752 = vadd.xlane.f32.xlu0 %v6704
    %v6753 = vpop.xlane.xlu0 %6752
    %6754 = vadd.xlane.f32.xlu0 %v6705
    %v6755 = vpop.xlane.xlu0 %6754
    %6756 = vadd.xlane.f32.xlu0 %v6706
    %v6757 = vpop.xlane.xlu0 %6756
    %6758 = vadd.xlane.f32.xlu0 %v6707
    %v6759 = vpop.xlane.xlu0 %6758
    %6760 = vadd.xlane.f32.xlu0 %v6708
    %v6761 = vpop.xlane.xlu0 %6760
    %6762 = vadd.xlane.f32.xlu0 %v6709
    %v6763 = vpop.xlane.xlu0 %6762
    %6764 = vadd.xlane.f32.xlu0 %v6710
    %v6765 = vpop.xlane.xlu0 %6764
    %6766 = vadd.xlane.f32.xlu0 %v6711
    %v6767 = vpop.xlane.xlu0 %6766
    %6768 = vadd.xlane.f32.xlu0 %v6712
    %v6769 = vpop.xlane.xlu0 %6768
    %6770 = vadd.xlane.f32.xlu0 %v6713
    %v6771 = vpop.xlane.xlu0 %6770
    %6772 = vadd.xlane.f32.xlu0 %v6714
    %v6773 = vpop.xlane.xlu0 %6772
    %6774 = vadd.xlane.f32.xlu0 %v6715
    %v6775 = vpop.xlane.xlu0 %6774
    %6776 = vadd.xlane.f32.xlu0 %v6716
    %v6777 = vpop.xlane.xlu0 %6776
    %6778 = vadd.xlane.f32.xlu0 %v6717
    %v6779 = vpop.xlane.xlu0 %6778
    %6780 = vadd.xlane.f32.xlu0 %v6718
    %v6781 = vpop.xlane.xlu0 %6780
    %6782 = vadd.xlane.f32.xlu0 %v6719
    %v6783 = vpop.xlane.xlu0 %6782
    %v6784 = vmul.f32 %v6721, %v5837
    %v6785 = vmul.f32 %v6723, %v5837
    %v6786 = vmul.f32 %v6725, %v5837
    %v6787 = vmul.f32 %v6727, %v5837
    %v6788 = vmul.f32 %v6729, %v5837
    %v6789 = vmul.f32 %v6731, %v5837
    %v6790 = vmul.f32 %v6733, %v5837
    %v6791 = vmul.f32 %v6735, %v5837
    %v6792 = vmul.f32 %v6737, %v5837
    %v6793 = vmul.f32 %v6739, %v5837
    %v6794 = vmul.f32 %v6741, %v5837
    %v6795 = vmul.f32 %v6743, %v5837
    %v6796 = vmul.f32 %v6745, %v5837
    %v6797 = vmul.f32 %v6747, %v5837
    %v6798 = vmul.f32 %v6749, %v5837
    %v6799 = vmul.f32 %v6751, %v5837
    %v6800 = vmul.f32 %v6753, %v5837
    %v6801 = vmul.f32 %v6755, %v5837
    %v6802 = vmul.f32 %v6757, %v5837
    %v6803 = vmul.f32 %v6759, %v5837
    %v6804 = vmul.f32 %v6761, %v5837
    %v6805 = vmul.f32 %v6763, %v5837
    %v6806 = vmul.f32 %v6765, %v5837
    %v6807 = vmul.f32 %v6767, %v5837
    %v6808 = vmul.f32 %v6769, %v5837
    %v6809 = vmul.f32 %v6771, %v5837
    %v6810 = vmul.f32 %v6773, %v5837
    %v6811 = vmul.f32 %v6775, %v5837
    %v6812 = vmul.f32 %v6777, %v5837
    %v6813 = vmul.f32 %v6779, %v5837
    %v6814 = vmul.f32 %v6781, %v5837
    %v6815 = vmul.f32 %v6783, %v5837
    %v6816 = vsub.f32 %v6688, %v6784
    %v6817 = vsub.f32 %v6689, %v6785
    %v6818 = vsub.f32 %v6690, %v6786
    %v6819 = vsub.f32 %v6691, %v6787
    %v6820 = vsub.f32 %v6692, %v6788
    %v6821 = vsub.f32 %v6693, %v6789
    %v6822 = vsub.f32 %v6694, %v6790
    %v6823 = vsub.f32 %v6695, %v6791
    %v6824 = vsub.f32 %v6696, %v6792
    %v6825 = vsub.f32 %v6697, %v6793
    %v6826 = vsub.f32 %v6698, %v6794
    %v6827 = vsub.f32 %v6699, %v6795
    %v6828 = vsub.f32 %v6700, %v6796
    %v6829 = vsub.f32 %v6701, %v6797
    %v6830 = vsub.f32 %v6702, %v6798
    %v6831 = vsub.f32 %v6703, %v6799
    %v6832 = vsub.f32 %v6704, %v6800
    %v6833 = vsub.f32 %v6705, %v6801
    %v6834 = vsub.f32 %v6706, %v6802
    %v6835 = vsub.f32 %v6707, %v6803
    %v6836 = vsub.f32 %v6708, %v6804
    %v6837 = vsub.f32 %v6709, %v6805
    %v6838 = vsub.f32 %v6710, %v6806
    %v6839 = vsub.f32 %v6711, %v6807
    %v6840 = vsub.f32 %v6712, %v6808
    %v6841 = vsub.f32 %v6713, %v6809
    %v6842 = vsub.f32 %v6714, %v6810
    %v6843 = vsub.f32 %v6715, %v6811
    %v6844 = vsub.f32 %v6716, %v6812
    %v6845 = vsub.f32 %v6717, %v6813
    %v6846 = vsub.f32 %v6718, %v6814
    %v6847 = vsub.f32 %v6719, %v6815
    %v6848 = vmul.f32 %v6816, %v6816
    %v6849 = vmul.f32 %v6817, %v6817
    %v6850 = vmul.f32 %v6818, %v6818
    %v6851 = vmul.f32 %v6819, %v6819
    %v6852 = vmul.f32 %v6820, %v6820
    %v6853 = vmul.f32 %v6821, %v6821
    %v6854 = vmul.f32 %v6822, %v6822
    %v6855 = vmul.f32 %v6823, %v6823
    %v6856 = vmul.f32 %v6824, %v6824
    %v6857 = vmul.f32 %v6825, %v6825
    %v6858 = vmul.f32 %v6826, %v6826
    %v6859 = vmul.f32 %v6827, %v6827
    %v6860 = vmul.f32 %v6828, %v6828
    %v6861 = vmul.f32 %v6829, %v6829
    %v6862 = vmul.f32 %v6830, %v6830
    %v6863 = vmul.f32 %v6831, %v6831
    %v6864 = vmul.f32 %v6832, %v6832
    %v6865 = vmul.f32 %v6833, %v6833
    %v6866 = vmul.f32 %v6834, %v6834
    %v6867 = vmul.f32 %v6835, %v6835
    %v6868 = vmul.f32 %v6836, %v6836
    %v6869 = vmul.f32 %v6837, %v6837
    %v6870 = vmul.f32 %v6838, %v6838
    %v6871 = vmul.f32 %v6839, %v6839
    %v6872 = vmul.f32 %v6840, %v6840
    %v6873 = vmul.f32 %v6841, %v6841
    %v6874 = vmul.f32 %v6842, %v6842
    %v6875 = vmul.f32 %v6843, %v6843
    %v6876 = vmul.f32 %v6844, %v6844
    %v6877 = vmul.f32 %v6845, %v6845
    %v6878 = vmul.f32 %v6846, %v6846
    %v6879 = vmul.f32 %v6847, %v6847
    %6880 = vadd.xlane.f32.xlu0 %v6848
    %v6881 = vpop.xlane.xlu0 %6880
    %6882 = vadd.xlane.f32.xlu0 %v6849
    %v6883 = vpop.xlane.xlu0 %6882
    %6884 = vadd.xlane.f32.xlu0 %v6850
    %v6885 = vpop.xlane.xlu0 %6884
    %6886 = vadd.xlane.f32.xlu0 %v6851
    %v6887 = vpop.xlane.xlu0 %6886
    %6888 = vadd.xlane.f32.xlu0 %v6852
    %v6889 = vpop.xlane.xlu0 %6888
    %6890 = vadd.xlane.f32.xlu0 %v6853
    %v6891 = vpop.xlane.xlu0 %6890
    %6892 = vadd.xlane.f32.xlu0 %v6854
    %v6893 = vpop.xlane.xlu0 %6892
    %6894 = vadd.xlane.f32.xlu0 %v6855
    %v6895 = vpop.xlane.xlu0 %6894
    %6896 = vadd.xlane.f32.xlu0 %v6856
    %v6897 = vpop.xlane.xlu0 %6896
    %6898 = vadd.xlane.f32.xlu0 %v6857
    %v6899 = vpop.xlane.xlu0 %6898
    %6900 = vadd.xlane.f32.xlu0 %v6858
    %v6901 = vpop.xlane.xlu0 %6900
    %6902 = vadd.xlane.f32.xlu0 %v6859
    %v6903 = vpop.xlane.xlu0 %6902
    %6904 = vadd.xlane.f32.xlu0 %v6860
    %v6905 = vpop.xlane.xlu0 %6904
    %6906 = vadd.xlane.f32.xlu0 %v6861
    %v6907 = vpop.xlane.xlu0 %6906
    %6908 = vadd.xlane.f32.xlu0 %v6862
    %v6909 = vpop.xlane.xlu0 %6908
    %6910 = vadd.xlane.f32.xlu0 %v6863
    %v6911 = vpop.xlane.xlu0 %6910
    %6912 = vadd.xlane.f32.xlu0 %v6864
    %v6913 = vpop.xlane.xlu0 %6912
    %6914 = vadd.xlane.f32.xlu0 %v6865
    %v6915 = vpop.xlane.xlu0 %6914
    %6916 = vadd.xlane.f32.xlu0 %v6866
    %v6917 = vpop.xlane.xlu0 %6916
    %6918 = vadd.xlane.f32.xlu0 %v6867
    %v6919 = vpop.xlane.xlu0 %6918
    %6920 = vadd.xlane.f32.xlu0 %v6868
    %v6921 = vpop.xlane.xlu0 %6920
    %6922 = vadd.xlane.f32.xlu0 %v6869
    %v6923 = vpop.xlane.xlu0 %6922
    %6924 = vadd.xlane.f32.xlu0 %v6870
    %v6925 = vpop.xlane.xlu0 %6924
    %6926 = vadd.xlane.f32.xlu0 %v6871
    %v6927 = vpop.xlane.xlu0 %6926
    %6928 = vadd.xlane.f32.xlu0 %v6872
    %v6929 = vpop.xlane.xlu0 %6928
    %6930 = vadd.xlane.f32.xlu0 %v6873
    %v6931 = vpop.xlane.xlu0 %6930
    %6932 = vadd.xlane.f32.xlu0 %v6874
    %v6933 = vpop.xlane.xlu0 %6932
    %6934 = vadd.xlane.f32.xlu0 %v6875
    %v6935 = vpop.xlane.xlu0 %6934
    %6936 = vadd.xlane.f32.xlu0 %v6876
    %v6937 = vpop.xlane.xlu0 %6936
    %6938 = vadd.xlane.f32.xlu0 %v6877
    %v6939 = vpop.xlane.xlu0 %6938
    %6940 = vadd.xlane.f32.xlu0 %v6878
    %v6941 = vpop.xlane.xlu0 %6940
    %6942 = vadd.xlane.f32.xlu0 %v6879
    %v6943 = vpop.xlane.xlu0 %6942
    %v6944 = vmul.f32 %v6881, %v5837
    %v6945 = vmul.f32 %v6883, %v5837
    %v6946 = vmul.f32 %v6885, %v5837
    %v6947 = vmul.f32 %v6887, %v5837
    %v6948 = vmul.f32 %v6889, %v5837
    %v6949 = vmul.f32 %v6891, %v5837
    %v6950 = vmul.f32 %v6893, %v5837
    %v6951 = vmul.f32 %v6895, %v5837
    %v6952 = vmul.f32 %v6897, %v5837
    %v6953 = vmul.f32 %v6899, %v5837
    %v6954 = vmul.f32 %v6901, %v5837
    %v6955 = vmul.f32 %v6903, %v5837
    %v6956 = vmul.f32 %v6905, %v5837
    %v6957 = vmul.f32 %v6907, %v5837
    %v6958 = vmul.f32 %v6909, %v5837
    %v6959 = vmul.f32 %v6911, %v5837
    %v6960 = vmul.f32 %v6913, %v5837
    %v6961 = vmul.f32 %v6915, %v5837
    %v6962 = vmul.f32 %v6917, %v5837
    %v6963 = vmul.f32 %v6919, %v5837
    %v6964 = vmul.f32 %v6921, %v5837
    %v6965 = vmul.f32 %v6923, %v5837
    %v6966 = vmul.f32 %v6925, %v5837
    %v6967 = vmul.f32 %v6927, %v5837
    %v6968 = vmul.f32 %v6929, %v5837
    %v6969 = vmul.f32 %v6931, %v5837
    %v6970 = vmul.f32 %v6933, %v5837
    %v6971 = vmul.f32 %v6935, %v5837
    %v6972 = vmul.f32 %v6937, %v5837
    %v6973 = vmul.f32 %v6939, %v5837
    %v6974 = vmul.f32 %v6941, %v5837
    %v6975 = vmul.f32 %v6943, %v5837
    %v6976 = vadd.f32 %v6944, 1e-05
    %v6977 = vadd.f32 %v6945, 1e-05
    %v6978 = vadd.f32 %v6946, 1e-05
    %v6979 = vadd.f32 %v6947, 1e-05
    %v6980 = vadd.f32 %v6948, 1e-05
    %v6981 = vadd.f32 %v6949, 1e-05
    %v6982 = vadd.f32 %v6950, 1e-05
    %v6983 = vadd.f32 %v6951, 1e-05
    %v6984 = vadd.f32 %v6952, 1e-05
    %v6985 = vadd.f32 %v6953, 1e-05
    %v6986 = vadd.f32 %v6954, 1e-05
    %v6987 = vadd.f32 %v6955, 1e-05
    %v6988 = vadd.f32 %v6956, 1e-05
    %v6989 = vadd.f32 %v6957, 1e-05
    %v6990 = vadd.f32 %v6958, 1e-05
    %v6991 = vadd.f32 %v6959, 1e-05
    %v6992 = vadd.f32 %v6960, 1e-05
    %v6993 = vadd.f32 %v6961, 1e-05
    %v6994 = vadd.f32 %v6962, 1e-05
    %v6995 = vadd.f32 %v6963, 1e-05
    %v6996 = vadd.f32 %v6964, 1e-05
    %v6997 = vadd.f32 %v6965, 1e-05
    %v6998 = vadd.f32 %v6966, 1e-05
    %v6999 = vadd.f32 %v6967, 1e-05
    %v7000 = vadd.f32 %v6968, 1e-05
    %v7001 = vadd.f32 %v6969, 1e-05
    %v7002 = vadd.f32 %v6970, 1e-05
    %v7003 = vadd.f32 %v6971, 1e-05
    %v7004 = vadd.f32 %v6972, 1e-05
    %v7005 = vadd.f32 %v6973, 1e-05
    %v7006 = vadd.f32 %v6974, 1e-05
    %v7007 = vadd.f32 %v6975, 1e-05
    %v7008 = vrsqrt.pop %v6976
    %v7009 = vrsqrt.pop %v6977
    %v7010 = vrsqrt.pop %v6978
    %v7011 = vrsqrt.pop %v6979
    %v7012 = vrsqrt.pop %v6980
    %v7013 = vrsqrt.pop %v6981
    %v7014 = vrsqrt.pop %v6982
    %v7015 = vrsqrt.pop %v6983
    %v7016 = vrsqrt.pop %v6984
    %v7017 = vrsqrt.pop %v6985
    %v7018 = vrsqrt.pop %v6986
    %v7019 = vrsqrt.pop %v6987
    %v7020 = vrsqrt.pop %v6988
    %v7021 = vrsqrt.pop %v6989
    %v7022 = vrsqrt.pop %v6990
    %v7023 = vrsqrt.pop %v6991
    %v7024 = vrsqrt.pop %v6992
    %v7025 = vrsqrt.pop %v6993
    %v7026 = vrsqrt.pop %v6994
    %v7027 = vrsqrt.pop %v6995
    %v7028 = vrsqrt.pop %v6996
    %v7029 = vrsqrt.pop %v6997
    %v7030 = vrsqrt.pop %v6998
    %v7031 = vrsqrt.pop %v6999
    %v7032 = vrsqrt.pop %v7000
    %v7033 = vrsqrt.pop %v7001
    %v7034 = vrsqrt.pop %v7002
    %v7035 = vrsqrt.pop %v7003
    %v7036 = vrsqrt.pop %v7004
    %v7037 = vrsqrt.pop %v7005
    %v7038 = vrsqrt.pop %v7006
    %v7039 = vrsqrt.pop %v7007
    %v7040 = vmul.f32 %v6816, %v7008
    %v7041 = vmul.f32 %v6817, %v7009
    %v7042 = vmul.f32 %v6818, %v7010
    %v7043 = vmul.f32 %v6819, %v7011
    %v7044 = vmul.f32 %v6820, %v7012
    %v7045 = vmul.f32 %v6821, %v7013
    %v7046 = vmul.f32 %v6822, %v7014
    %v7047 = vmul.f32 %v6823, %v7015
    %v7048 = vmul.f32 %v6824, %v7016
    %v7049 = vmul.f32 %v6825, %v7017
    %v7050 = vmul.f32 %v6826, %v7018
    %v7051 = vmul.f32 %v6827, %v7019
    %v7052 = vmul.f32 %v6828, %v7020
    %v7053 = vmul.f32 %v6829, %v7021
    %v7054 = vmul.f32 %v6830, %v7022
    %v7055 = vmul.f32 %v6831, %v7023
    %v7056 = vmul.f32 %v6832, %v7024
    %v7057 = vmul.f32 %v6833, %v7025
    %v7058 = vmul.f32 %v6834, %v7026
    %v7059 = vmul.f32 %v6835, %v7027
    %v7060 = vmul.f32 %v6836, %v7028
    %v7061 = vmul.f32 %v6837, %v7029
    %v7062 = vmul.f32 %v6838, %v7030
    %v7063 = vmul.f32 %v6839, %v7031
    %v7064 = vmul.f32 %v6840, %v7032
    %v7065 = vmul.f32 %v6841, %v7033
    %v7066 = vmul.f32 %v6842, %v7034
    %v7067 = vmul.f32 %v6843, %v7035
    %v7068 = vmul.f32 %v6844, %v7036
    %v7069 = vmul.f32 %v6845, %v7037
    %v7070 = vmul.f32 %v6846, %v7038
    %v7071 = vmul.f32 %v6847, %v7039
    %v7072 = vlaneseq
    %v7073 = vshrl.u32 %v7072, 7
    %v7074 = vsub.s32 7, %v7073
    %v7075 = vrot.slane %v179, %v7074
    %v7076 = vmul.f32 %v7040, %v7075
    %v7077 = vmul.f32 %v7041, %v7075
    %v7078 = vmul.f32 %v7042, %v7075
    %v7079 = vmul.f32 %v7043, %v7075
    %v7080 = vmul.f32 %v7044, %v7075
    %v7081 = vmul.f32 %v7045, %v7075
    %v7082 = vmul.f32 %v7046, %v7075
    %v7083 = vmul.f32 %v7047, %v7075
    %v7084 = vmul.f32 %v7048, %v7075
    %v7085 = vmul.f32 %v7049, %v7075
    %v7086 = vmul.f32 %v7050, %v7075
    %v7087 = vmul.f32 %v7051, %v7075
    %v7088 = vmul.f32 %v7052, %v7075
    %v7089 = vmul.f32 %v7053, %v7075
    %v7090 = vmul.f32 %v7054, %v7075
    %v7091 = vmul.f32 %v7055, %v7075
    %v7092 = vmul.f32 %v7056, %v7075
    %v7093 = vmul.f32 %v7057, %v7075
    %v7094 = vmul.f32 %v7058, %v7075
    %v7095 = vmul.f32 %v7059, %v7075
    %v7096 = vmul.f32 %v7060, %v7075
    %v7097 = vmul.f32 %v7061, %v7075
    %v7098 = vmul.f32 %v7062, %v7075
    %v7099 = vmul.f32 %v7063, %v7075
    %v7100 = vmul.f32 %v7064, %v7075
    %v7101 = vmul.f32 %v7065, %v7075
    %v7102 = vmul.f32 %v7066, %v7075
    %v7103 = vmul.f32 %v7067, %v7075
    %v7104 = vmul.f32 %v7068, %v7075
    %v7105 = vmul.f32 %v7069, %v7075
    %v7106 = vmul.f32 %v7070, %v7075
    %v7107 = vmul.f32 %v7071, %v7075
    %v7108 = vlaneseq
    %v7109 = vshrl.u32 %v7108, 7
    %v7110 = vsub.s32 0, %v7109
    %v7111 = vrot.slane %v180, %v7110
    %v7112 = vadd.f32 %v7076, %v7111
    %v7113 = vadd.f32 %v7077, %v7111
    %v7114 = vadd.f32 %v7078, %v7111
    %v7115 = vadd.f32 %v7079, %v7111
    %v7116 = vadd.f32 %v7080, %v7111
    %v7117 = vadd.f32 %v7081, %v7111
    %v7118 = vadd.f32 %v7082, %v7111
    %v7119 = vadd.f32 %v7083, %v7111
    %v7120 = vadd.f32 %v7084, %v7111
    %v7121 = vadd.f32 %v7085, %v7111
    %v7122 = vadd.f32 %v7086, %v7111
    %v7123 = vadd.f32 %v7087, %v7111
    %v7124 = vadd.f32 %v7088, %v7111
    %v7125 = vadd.f32 %v7089, %v7111
    %v7126 = vadd.f32 %v7090, %v7111
    %v7127 = vadd.f32 %v7091, %v7111
    %v7128 = vadd.f32 %v7092, %v7111
    %v7129 = vadd.f32 %v7093, %v7111
    %v7130 = vadd.f32 %v7094, %v7111
    %v7131 = vadd.f32 %v7095, %v7111
    %v7132 = vadd.f32 %v7096, %v7111
    %v7133 = vadd.f32 %v7097, %v7111
    %v7134 = vadd.f32 %v7098, %v7111
    %v7135 = vadd.f32 %v7099, %v7111
    %v7136 = vadd.f32 %v7100, %v7111
    %v7137 = vadd.f32 %v7101, %v7111
    %v7138 = vadd.f32 %v7102, %v7111
    %v7139 = vadd.f32 %v7103, %v7111
    %v7140 = vadd.f32 %v7104, %v7111
    %v7141 = vadd.f32 %v7105, %v7111
    %v7142 = vadd.f32 %v7106, %v7111
    %v7143 = vadd.f32 %v7107, %v7111
    %7144 = vst [vmem:[#allocation10] sm:$0xff] %v7112
    %7145 = vst [vmem:[#allocation10 + $0x8] sm:$0xff] %v7113
    %7146 = vst [vmem:[#allocation10 + $0x10] sm:$0xff] %v7114
    %7147 = vst [vmem:[#allocation10 + $0x18] sm:$0xff] %v7115
    %7148 = vst [vmem:[#allocation10 + $0x20] sm:$0xff] %v7116
    %7149 = vst [vmem:[#allocation10 + $0x28] sm:$0xff] %v7117
    %7150 = vst [vmem:[#allocation10 + $0x30] sm:$0xff] %v7118
    %7151 = vst [vmem:[#allocation10 + $0x38] sm:$0xff] %v7119
    %7152 = vst [vmem:[#allocation10 + $0x40] sm:$0xff] %v7120
    %7153 = vst [vmem:[#allocation10 + $0x48] sm:$0xff] %v7121
    %7154 = vst [vmem:[#allocation10 + $0x50] sm:$0xff] %v7122
    %7155 = vst [vmem:[#allocation10 + $0x58] sm:$0xff] %v7123
    %7156 = vst [vmem:[#allocation10 + $0x60] sm:$0xff] %v7124
    %7157 = vst [vmem:[#allocation10 + $0x68] sm:$0xff] %v7125
    %7158 = vst [vmem:[#allocation10 + $0x70] sm:$0xff] %v7126
    %7159 = vst [vmem:[#allocation10 + $0x78] sm:$0xff] %v7127
    %7160 = vst [vmem:[#allocation10 + $0x80] sm:$0xff] %v7128
    %7161 = vst [vmem:[#allocation10 + $0x88] sm:$0xff] %v7129
    %7162 = vst [vmem:[#allocation10 + $0x90] sm:$0xff] %v7130
    %7163 = vst [vmem:[#allocation10 + $0x98] sm:$0xff] %v7131
    %7164 = vst [vmem:[#allocation10 + $0xa0] sm:$0xff] %v7132
    %7165 = vst [vmem:[#allocation10 + $0xa8] sm:$0xff] %v7133
    %7166 = vst [vmem:[#allocation10 + $0xb0] sm:$0xff] %v7134
    %7167 = vst [vmem:[#allocation10 + $0xb8] sm:$0xff] %v7135
    %7168 = vst [vmem:[#allocation10 + $0xc0] sm:$0xff] %v7136
    %7169 = vst [vmem:[#allocation10 + $0xc8] sm:$0xff] %v7137
    %7170 = vst [vmem:[#allocation10 + $0xd0] sm:$0xff] %v7138
    %7171 = vst [vmem:[#allocation10 + $0xd8] sm:$0xff] %v7139
    %7172 = vst [vmem:[#allocation10 + $0xe0] sm:$0xff] %v7140
    %7173 = vst [vmem:[#allocation10 + $0xe8] sm:$0xff] %v7141
    %7174 = vst [vmem:[#allocation10 + $0xf0] sm:$0xff] %v7142
    %7175 = vst [vmem:[#allocation10 + $0xf8] sm:$0xff] %v7143
    // Predicated region
    $region46: #{tpu_custom_call.1} parent=1 // pred_check
      _
    $region47: #{tpu_custom_call.1} parent=1 // pred_check_branch
      %7177 = sbr.rel (0) target = $region49
    $region48: #{tpu_custom_call.1} parent=1 // pred_region
      %s7179 = ssub.s32 4096, 4096
      %7180 = vsyncadd [#allocation4], %s7179
      %s7181 = sshll.u32 [#allocation10], 4
      %s7182 = int_to_ptr.vmem [resolvable:$true] %s7181
      %7187 = dma.vmem_to_hbm [thread:$0]  %s7182, 4096, %s7, [#allocation4], 128, 128, 8
    $region49: #{tpu_custom_call.1} parent=1 // pred_fallthru
      _
    // Predicated region
    $region50: #{tpu_custom_call.1} parent=1 // pred_check
      _
    $region51: #{tpu_custom_call.1} parent=1 // pred_check_branch
      %7189 = sbr.rel (0) target = $region53
    $region52: #{tpu_custom_call.1} parent=1 // pred_region
      %7190 = dma.done [#allocation4], 4096
    $region53: #{tpu_custom_call.1} parent=1 // pred_fallthru
      _
    %7191 = vsyncpa [#allocation3], 1
    %7192 = vsyncpa [#allocation6], 1
    %7193 = vsyncpa [#allocation9], 1
    %7194 = vsyncpa [#allocation4], 1

</llo_original>
